<compile_context>
chip_gen: v6e
topology: v6e:2x2x1
jax: 0.10.0
libtpu: 0.0.40
codegen_flags: <defaults>
</compile_context>

<pallas_src>
import functools
import math

import jax
import jax.numpy as jnp
from jax.experimental import pallas as pl
from jax.experimental.pallas import tpu as pltpu


# ----------------------------- model config -----------------------------

VOCAB = 100
HIDDEN = 32
N_HEADS = 4
HEAD_DIM = HIDDEN // N_HEADS
INTERMEDIATE = 64
MAX_LEN = 16
ENC_NUM = 2          # number of encoder layers (enc_num > 0 path of the module)
TYPE_VOCAB = 2
LN_EPS = 1e-12


# ----------------------------- fused Pallas kernel -----------------------------

def _bert_fused_kernel(emb_ref, mask_ref, emb_g_ref, emb_b_ref,
                       wq_ref, wk_ref, wv_ref, bq_ref, bk_ref, bv_ref,
                       wo_ref, bo_ref, ln1_g_ref, ln1_b_ref,
                       w1_ref, b1_ref, w2_ref, b2_ref,
                       ln2_g_ref, ln2_b_ref, o_ref,
                       *, n_layers, n_heads, eps, scale):
    """Whole BERT encoder forward for one batch element (S rows) per grid step.

    All per-layer / per-head weights live in VMEM and are indexed on leading ref
    axes (zero-cost) -- no sub-128-lane slicing, no concatenation over heads.
    All statistics / accumulation in f32.
    """

    def ln(y, g, b):
        mu = jnp.mean(y, axis=-1, keepdims=True)
        yc = y - mu
        var = jnp.mean(yc * yc, axis=-1, keepdims=True)
        return yc * jax.lax.rsqrt(var + eps) * g + b

    x = ln(emb_ref[...].astype(jnp.float32),
           emb_g_ref[...].astype(jnp.float32),
           emb_b_ref[...].astype(jnp.float32))                    # (S, H) f32
    mask_bias = mask_ref[...].astype(jnp.float32)                 # (1, S) f32

    for l in range(n_layers):                                     # static unroll
        # ---------------- self-attention (head-blocked weights) ----------------
        attn = None
        for h in range(n_heads):                                  # static unroll
            q = jnp.dot(x, wq_ref[l, h], preferred_element_type=jnp.float32) + bq_ref[l, h]
            k = jnp.dot(x, wk_ref[l, h], preferred_element_type=jnp.float32) + bk_ref[l, h]
            v = jnp.dot(x, wv_ref[l, h], preferred_element_type=jnp.float32) + bv_ref[l, h]
            # scores = q @ k^T   (contract last dims; no explicit transpose)
            s = jax.lax.dot_general(q, k, (((1,), (1,)), ((), ())),
                                    preferred_element_type=jnp.float32)
            s = s * scale + mask_bias                             # f32 only: -1e9 safe
            s = s - jnp.max(s, axis=-1, keepdims=True)
            p = jnp.exp(s)
            p = p * pl.reciprocal(jnp.sum(p, axis=-1, keepdims=True), approx=True)
            ctx = jnp.dot(p, v, preferred_element_type=jnp.float32)        # (S, hd)
            # fold the head straight through its slice of the output projection:
            part = jnp.dot(ctx, wo_ref[l, h], preferred_element_type=jnp.float32)  # (S, H)
            attn = part if attn is None else attn + part
        x = ln(attn + bo_ref[l] + x, ln1_g_ref[l], ln1_b_ref[l])

        # ------------------------------- FFN -------------------------------
        ff = jnp.dot(x, w1_ref[l], preferred_element_type=jnp.float32) + b1_ref[l]
        # exact (erf) GELU -- HF BERT default.  (tanh-approx would use the EUP on
        # v5e, but we keep HF parity.)
        ff = 0.5 * ff * (1.0 + jax.lax.erf(ff * (1.0 / math.sqrt(2.0))))
        ff2 = jnp.dot(ff, w2_ref[l], preferred_element_type=jnp.float32) + b2_ref[l]
        x = ln(ff2 + x, ln2_g_ref[l], ln2_b_ref[l])

    o_ref[...] = x.astype(o_ref.dtype)
    # TODO(synk): at production S / H, switch the in-kernel attention to a
    # flash-style S-tiled loop and pad matmul output dims to multiples of 128
    # lanes (here everything fits in a handful of vregs, so neither matters).


def bert_encoder_pallas(params, emb, mask_bias):
    """emb: (B, S, H) f32 summed embeddings; mask_bias: (B, 1, S) f32 additive bias."""
    B, S, H = emb.shape
    L = params["wq"].shape[0]
    NH, hd, I = N_HEADS, HEAD_DIM, INTERMEDIATE

    kernel = functools.partial(_bert_fused_kernel, n_layers=L, n_heads=NH,
                               eps=LN_EPS, scale=1.0 / math.sqrt(hd))

    def const_spec(shape):
        nd = len(shape)
        return pl.BlockSpec(shape, lambda b, _nd=nd: (0,) * _nd)

    operands = (
        emb, mask_bias,
        params["emb_ln_g"], params["emb_ln_b"],
        params["wq"], params["wk"], params["wv"],
        params["bq"], params["bk"], params["bv"],
        params["wo"], params["bo"], params["ln1_g"], params["ln1_b"],
        params["w1"], params["b1"], params["w2"], params["b2"],
        params["ln2_g"], params["ln2_b"],
    )

    in_specs = [
        pl.BlockSpec((None, S, H), lambda b: (b, 0, 0)),      # emb (per batch)
        pl.BlockSpec((None, 1, S), lambda b: (b, 0, 0)),      # mask bias (per batch)
    ] + [const_spec(op.shape) for op in operands[2:]]          # weights: whole arrays

    matmul_flops = 2 * B * S * L * (3 * H * H              # QKV
                                    + 2 * NH * S * hd      # scores + ctx
                                    + H * H                # out projection
                                    + 2 * H * I)           # FFN
    cost = pl.CostEstimate(
        flops=int(matmul_flops),
        transcendentals=int(B * S * L * (I + NH * S)),
        bytes_accessed=int(sum(op.nbytes for op in operands) + B * S * H * 4))

    return pl.pallas_call(
        kernel,
        out_shape=jax.ShapeDtypeStruct((B, S, H), jnp.float32),
        grid=(B,),
        in_specs=in_specs,
        out_specs=pl.BlockSpec((None, S, H), lambda b: (b, 0, 0)),
        compiler_params=pltpu.CompilerParams(
            dimension_semantics=("parallel",)),   # one batch per core on v7x
        cost_estimate=cost,
    )(*operands)


# ----------------------------- model definition -----------------------------

def init_params(key):
    std = 0.02
    L, H, I, NH, hd = ENC_NUM, HIDDEN, INTERMEDIATE, N_HEADS, HEAD_DIM
    ks = jax.random.split(key, 15)

    def nrm(k, shape):
        return jax.random.normal(k, shape, jnp.float32) * std

    return {
        "word_emb": nrm(ks[0], (VOCAB, H)),
        "pos_emb": nrm(ks[1], (MAX_LEN, H)),
        "type_emb": nrm(ks[2], (TYPE_VOCAB, H)),
        "emb_ln_g": jnp.ones((1, H), jnp.float32),
        "emb_ln_b": jnp.zeros((1, H), jnp.float32),
        # per-head-blocked projection weights: leading (layer, head) axes
        "wq": nrm(ks[3], (L, NH, H, hd)),
        "wk": nrm(ks[4], (L, NH, H, hd)),
        "wv": nrm(ks[5], (L, NH, H, hd)),
        "bq": nrm(ks[9], (L, NH, 1, hd)),
        "bk": nrm(ks[10], (L, NH, 1, hd)),
        "bv": nrm(ks[11], (L, NH, 1, hd)),
        # output projection split per head on its contraction axis
        "wo": nrm(ks[6], (L, NH, hd, H)),
        "bo": nrm(ks[12], (L, 1, H)),
        "ln1_g": jnp.ones((L, 1, H), jnp.float32),
        "ln1_b": jnp.zeros((L, 1, H), jnp.float32),
        "w1": nrm(ks[7], (L, H, I)),
        "b1": nrm(ks[13], (L, 1, I)),
        "w2": nrm(ks[8], (L, I, H)),
        "b2": nrm(ks[14], (L, 1, H)),
        "ln2_g": jnp.ones((L, 1, H), jnp.float32),
        "ln2_b": jnp.zeros((L, 1, H), jnp.float32),
    }


def bert_forward(params, input_ids, attention_mask, enc_num=ENC_NUM):
    """Mirrors BERT.forward: returns (last_hidden_state, inverted bool mask)."""
    B, S = input_ids.shape
    H = HIDDEN

    if enc_num > 0:
        # embedding-table gathers are data-dependent gathers: plain-JAX glue.
        word = params["word_emb"][input_ids]                       # (B, S, H)
        pos = params["pos_emb"][:S][None, :, :]
        tok = params["type_emb"][0][None, None, :]                 # token_type_ids=None -> 0
        emb = (word + pos + tok).astype(jnp.float32)
        # additive attention-mask bias: 0 for real tokens, -1e9 for padding (f32 only)
        mask_bias = ((1.0 - attention_mask.astype(jnp.float32)) * (-1e9))[:, None, :]
        xs = bert_encoder_pallas(params, emb, mask_bias)           # one fused kernel
    else:
        xs = params["word_emb"][input_ids]

    inv_mask = jnp.logical_not(attention_mask.astype(bool))        # ~mask
    return xs, inv_mask


# ----------------------------- pure-JAX reference -----------------------------

def _ln_ref(x, g, b):
    mu = x.mean(-1, keepdims=True)
    var = ((x - mu) ** 2).mean(-1, keepdims=True)
    return (x - mu) * jax.lax.rsqrt(var + LN_EPS) * g + b


def bert_reference(params, input_ids, attention_mask):
    B, S = input_ids.shape
    word = params["word_emb"][input_ids]
    pos = params["pos_emb"][:S][None, :, :]
    tok = params["type_emb"][0][None, None, :]
    x = _ln_ref(word + pos + tok, params["emb_ln_g"], params["emb_ln_b"])
    bias = ((1.0 - attention_mask.astype(jnp.float32)) * (-1e9))[:, None, None, :]
    scale = 1.0 / math.sqrt(HEAD_DIM)
    L = params["wq"].shape[0]
    for l in range(L):
        q = jnp.einsum("bsh,nhd->bnsd", x, params["wq"][l]) + params["bq"][l][None]
        k = jnp.einsum("bsh,nhd->bnsd", x, params["wk"][l]) + params["bk"][l][None]
        v = jnp.einsum("bsh,nhd->bnsd", x, params["wv"][l]) + params["bv"][l][None]
        s = jnp.einsum("bnqd,bnkd->bnqk", q, k) * scale + bias
        p = jax.nn.softmax(s, axis=-1)
        ctx = jnp.einsum("bnqk,bnkd->bnqd", p, v)
        attn = jnp.einsum("bnsd,ndh->bsh", ctx, params["wo"][l]) + params["bo"][l]
        x = _ln_ref(attn + x, params["ln1_g"][l], params["ln1_b"][l])
        ff = jnp.einsum("bsh,hi->bsi", x, params["w1"][l]) + params["b1"][l]
        ff = 0.5 * ff * (1.0 + jax.lax.erf(ff * (1.0 / math.sqrt(2.0))))
        ff2 = jnp.einsum("bsi,ih->bsh", ff, params["w2"][l]) + params["b2"][l]
        x = _ln_ref(ff2 + x, params["ln2_g"][l], params["ln2_b"][l])
    return x


# ----------------------------- main -----------------------------

if __name__ == "__main__":
    key = jax.random.PRNGKey(0)
    k_param, k_ids = jax.random.split(key)

    B, S = 2, 8
    params = init_params(k_param)

    input_ids = jax.random.randint(k_ids, (B, S), 0, VOCAB, dtype=jnp.int32)
    # attention_mask: 1 = real token, 0 = padding (second sequence has 2 pad tokens)
    attention_mask = jnp.array(
        [[1, 1, 1, 1, 1, 1, 1, 1],
         [1, 1, 1, 1, 1, 1, 0, 0]], dtype=jnp.int32)

    fwd = jax.jit(functools.partial(bert_forward, enc_num=ENC_NUM))
    xs, out_mask = fwd(params, input_ids, attention_mask)
    jax.block_until_ready((xs, out_mask))

    assert xs.shape == (B, S, HIDDEN) and xs.dtype == jnp.float32
    assert out_mask.shape == (B, S) and out_mask.dtype == jnp.bool_
    assert bool(jnp.all(jnp.isfinite(xs)))

    # tolerance check vs pure-JAX reference (covers approx-reciprocal softmax /
    # MXU accumulation differences)
    ref = bert_reference(params, input_ids, attention_mask)
    err = float(jnp.max(jnp.abs(xs - ref)))
    assert err < 2e-2, f"max abs error vs reference: {err}"

    expected_mask = jnp.logical_not(attention_mask.astype(bool))
    assert bool(jnp.all(out_mask == expected_mask))

    print("KERNEL_OK")
</pallas_src>

<mosaic_0001>
module attributes {stable_mosaic.version = 11 : i64} {
  func.func @_bert_fused_kernel(%arg0: i32, %arg1: memref<1x8x32xf32, #tpu.memory_space<vmem>>, %arg2: memref<1x1x8xf32, #tpu.memory_space<vmem>>, %arg3: memref<1x32xf32, #tpu.memory_space<vmem>>, %arg4: memref<1x32xf32, #tpu.memory_space<vmem>>, %arg5: memref<2x4x32x8xf32, #tpu.memory_space<vmem>>, %arg6: memref<2x4x32x8xf32, #tpu.memory_space<vmem>>, %arg7: memref<2x4x32x8xf32, #tpu.memory_space<vmem>>, %arg8: memref<2x4x1x8xf32, #tpu.memory_space<vmem>>, %arg9: memref<2x4x1x8xf32, #tpu.memory_space<vmem>>, %arg10: memref<2x4x1x8xf32, #tpu.memory_space<vmem>>, %arg11: memref<2x4x8x32xf32, #tpu.memory_space<vmem>>, %arg12: memref<2x1x32xf32, #tpu.memory_space<vmem>>, %arg13: memref<2x1x32xf32, #tpu.memory_space<vmem>>, %arg14: memref<2x1x32xf32, #tpu.memory_space<vmem>>, %arg15: memref<2x32x64xf32, #tpu.memory_space<vmem>>, %arg16: memref<2x1x64xf32, #tpu.memory_space<vmem>>, %arg17: memref<2x64x32xf32, #tpu.memory_space<vmem>>, %arg18: memref<2x1x32xf32, #tpu.memory_space<vmem>>, %arg19: memref<2x1x32xf32, #tpu.memory_space<vmem>>, %arg20: memref<2x1x32xf32, #tpu.memory_space<vmem>>, %arg21: memref<1x8x32xf32, #tpu.memory_space<vmem>>) attributes {dimension_semantics = [#tpu.dimension_semantics<parallel>], iteration_bounds = array<i64: 2>, scalar_prefetch = 0 : i64, scratch_operands = 0 : i64, tpu.core_type = #tpu.core_type<tc>, window_params = [{transform_indices = @transform_0, window_bounds = array<i64: 1, 8, 32>}, {transform_indices = @transform_1, window_bounds = array<i64: 1, 1, 8>}, {pipeline_mode = #tpu.pipeline_mode<synchronous>, transform_indices = @transform_2, window_bounds = array<i64: 1, 32>}, {pipeline_mode = #tpu.pipeline_mode<synchronous>, transform_indices = @transform_3, window_bounds = array<i64: 1, 32>}, {pipeline_mode = #tpu.pipeline_mode<synchronous>, transform_indices = @transform_4, window_bounds = array<i64: 2, 4, 32, 8>}, {pipeline_mode = #tpu.pipeline_mode<synchronous>, transform_indices = @transform_5, window_bounds = array<i64: 2, 4, 32, 8>}, {pipeline_mode = #tpu.pipeline_mode<synchronous>, transform_indices = @transform_6, window_bounds = array<i64: 2, 4, 32, 8>}, {pipeline_mode = #tpu.pipeline_mode<synchronous>, transform_indices = @transform_7, window_bounds = array<i64: 2, 4, 1, 8>}, {pipeline_mode = #tpu.pipeline_mode<synchronous>, transform_indices = @transform_8, window_bounds = array<i64: 2, 4, 1, 8>}, {pipeline_mode = #tpu.pipeline_mode<synchronous>, transform_indices = @transform_9, window_bounds = array<i64: 2, 4, 1, 8>}, {pipeline_mode = #tpu.pipeline_mode<synchronous>, transform_indices = @transform_10, window_bounds = array<i64: 2, 4, 8, 32>}, {pipeline_mode = #tpu.pipeline_mode<synchronous>, transform_indices = @transform_11, window_bounds = array<i64: 2, 1, 32>}, {pipeline_mode = #tpu.pipeline_mode<synchronous>, transform_indices = @transform_12, window_bounds = array<i64: 2, 1, 32>}, {pipeline_mode = #tpu.pipeline_mode<synchronous>, transform_indices = @transform_13, window_bounds = array<i64: 2, 1, 32>}, {pipeline_mode = #tpu.pipeline_mode<synchronous>, transform_indices = @transform_14, window_bounds = array<i64: 2, 32, 64>}, {pipeline_mode = #tpu.pipeline_mode<synchronous>, transform_indices = @transform_15, window_bounds = array<i64: 2, 1, 64>}, {pipeline_mode = #tpu.pipeline_mode<synchronous>, transform_indices = @transform_16, window_bounds = array<i64: 2, 64, 32>}, {pipeline_mode = #tpu.pipeline_mode<synchronous>, transform_indices = @transform_17, window_bounds = array<i64: 2, 1, 32>}, {pipeline_mode = #tpu.pipeline_mode<synchronous>, transform_indices = @transform_18, window_bounds = array<i64: 2, 1, 32>}, {pipeline_mode = #tpu.pipeline_mode<synchronous>, transform_indices = @transform_19, window_bounds = array<i64: 2, 1, 32>}, {transform_indices = @transform_20, window_bounds = array<i64: 1, 8, 32>}]} {
    %c0 = arith.constant 0 : index
    %c0_0 = arith.constant 0 : index
    %c0_1 = arith.constant 0 : index
    %0 = vector.load %arg1[%c0, %c0_0, %c0_1] : memref<1x8x32xf32, #tpu.memory_space<vmem>>, vector<1x8x32xf32>
    %1 = vector.shape_cast %0 : vector<1x8x32xf32> to vector<8x32xf32>
    %c0_2 = arith.constant 0 : index
    %c0_3 = arith.constant 0 : index
    %2 = vector.load %arg3[%c0_2, %c0_3] : memref<1x32xf32, #tpu.memory_space<vmem>>, vector<1x32xf32>
    %c0_4 = arith.constant 0 : index
    %c0_5 = arith.constant 0 : index
    %3 = vector.load %arg4[%c0_4, %c0_5] : memref<1x32xf32, #tpu.memory_space<vmem>>, vector<1x32xf32>
    %cst = arith.constant dense<0.000000e+00> : vector<8xf32>
    %4 = vector.multi_reduction <add>, %1, %cst [1] : vector<8x32xf32> to vector<8xf32>
    %5 = vector.shape_cast %4 : vector<8xf32> to vector<8x1xf32>
    %cst_6 = arith.constant 3.200000e+01 : f32
    %6 = vector.broadcast %cst_6 : f32 to vector<8x1xf32>
    %7 = arith.divf %5, %6 : vector<8x1xf32>
    %8 = vector.broadcast %7 : vector<8x1xf32> to vector<8x32xf32>
    %9 = arith.subf %1, %8 : vector<8x32xf32>
    %10 = arith.mulf %9, %9 : vector<8x32xf32>
    %cst_7 = arith.constant dense<0.000000e+00> : vector<8xf32>
    %11 = vector.multi_reduction <add>, %10, %cst_7 [1] : vector<8x32xf32> to vector<8xf32>
    %12 = vector.shape_cast %11 : vector<8xf32> to vector<8x1xf32>
    %cst_8 = arith.constant 3.200000e+01 : f32
    %13 = vector.broadcast %cst_8 : f32 to vector<8x1xf32>
    %14 = arith.divf %12, %13 : vector<8x1xf32>
    %cst_9 = arith.constant 9.99999996E-13 : f32
    %15 = vector.broadcast %cst_9 : f32 to vector<8x1xf32>
    %16 = arith.addf %14, %15 : vector<8x1xf32>
    %17 = math.rsqrt %16 : vector<8x1xf32>
    %18 = vector.broadcast %17 : vector<8x1xf32> to vector<8x32xf32>
    %19 = arith.mulf %9, %18 : vector<8x32xf32>
    %20 = vector.broadcast %2 : vector<1x32xf32> to vector<8x32xf32>
    %21 = arith.mulf %19, %20 : vector<8x32xf32>
    %22 = vector.broadcast %3 : vector<1x32xf32> to vector<8x32xf32>
    %23 = arith.addf %21, %22 : vector<8x32xf32>
    %c0_10 = arith.constant 0 : index
    %c0_11 = arith.constant 0 : index
    %c0_12 = arith.constant 0 : index
    %24 = vector.load %arg2[%c0_10, %c0_11, %c0_12] : memref<1x1x8xf32, #tpu.memory_space<vmem>>, vector<1x1x8xf32>
    %25 = vector.shape_cast %24 : vector<1x1x8xf32> to vector<1x8xf32>
    %c0_13 = arith.constant 0 : index
    %c0_14 = arith.constant 0 : index
    %c0_15 = arith.constant 0 : index
    %c0_16 = arith.constant 0 : index
    %26 = vector.load %arg5[%c0_13, %c0_14, %c0_15, %c0_16] : memref<2x4x32x8xf32, #tpu.memory_space<vmem>>, vector<1x1x32x8xf32>
    %27 = vector.shape_cast %26 : vector<1x1x32x8xf32> to vector<32x8xf32>
    %cst_17 = arith.constant dense<0.000000e+00> : vector<8x8xf32>
    %28 = tpu.matmul %23, %27, %cst_17 {dimension_numbers = #tpu.dot_dimension_numbers<[1], [0], [0], [1], [0, 0, 1, 1], [], []>} : vector<8x32xf32>, vector<32x8xf32>, vector<8x8xf32> -> vector<8x8xf32>
    %c0_18 = arith.constant 0 : index
    %c0_19 = arith.constant 0 : index
    %c0_20 = arith.constant 0 : index
    %c0_21 = arith.constant 0 : index
    %29 = vector.load %arg8[%c0_18, %c0_19, %c0_20, %c0_21] : memref<2x4x1x8xf32, #tpu.memory_space<vmem>>, vector<1x1x1x8xf32>
    %30 = vector.shape_cast %29 : vector<1x1x1x8xf32> to vector<1x8xf32>
    %31 = vector.broadcast %30 : vector<1x8xf32> to vector<8x8xf32>
    %32 = arith.addf %28, %31 : vector<8x8xf32>
    %c0_22 = arith.constant 0 : index
    %c0_23 = arith.constant 0 : index
    %c0_24 = arith.constant 0 : index
    %c0_25 = arith.constant 0 : index
    %33 = vector.load %arg6[%c0_22, %c0_23, %c0_24, %c0_25] : memref<2x4x32x8xf32, #tpu.memory_space<vmem>>, vector<1x1x32x8xf32>
    %34 = vector.shape_cast %33 : vector<1x1x32x8xf32> to vector<32x8xf32>
    %cst_26 = arith.constant dense<0.000000e+00> : vector<8x8xf32>
    %35 = tpu.matmul %23, %34, %cst_26 {dimension_numbers = #tpu.dot_dimension_numbers<[1], [0], [0], [1], [0, 0, 1, 1], [], []>} : vector<8x32xf32>, vector<32x8xf32>, vector<8x8xf32> -> vector<8x8xf32>
    %c0_27 = arith.constant 0 : index
    %c0_28 = arith.constant 0 : index
    %c0_29 = arith.constant 0 : index
    %c0_30 = arith.constant 0 : index
    %36 = vector.load %arg9[%c0_27, %c0_28, %c0_29, %c0_30] : memref<2x4x1x8xf32, #tpu.memory_space<vmem>>, vector<1x1x1x8xf32>
    %37 = vector.shape_cast %36 : vector<1x1x1x8xf32> to vector<1x8xf32>
    %38 = vector.broadcast %37 : vector<1x8xf32> to vector<8x8xf32>
    %39 = arith.addf %35, %38 : vector<8x8xf32>
    %c0_31 = arith.constant 0 : index
    %c0_32 = arith.constant 0 : index
    %c0_33 = arith.constant 0 : index
    %c0_34 = arith.constant 0 : index
    %40 = vector.load %arg7[%c0_31, %c0_32, %c0_33, %c0_34] : memref<2x4x32x8xf32, #tpu.memory_space<vmem>>, vector<1x1x32x8xf32>
    %41 = vector.shape_cast %40 : vector<1x1x32x8xf32> to vector<32x8xf32>
    %cst_35 = arith.constant dense<0.000000e+00> : vector<8x8xf32>
    %42 = tpu.matmul %23, %41, %cst_35 {dimension_numbers = #tpu.dot_dimension_numbers<[1], [0], [0], [1], [0, 0, 1, 1], [], []>} : vector<8x32xf32>, vector<32x8xf32>, vector<8x8xf32> -> vector<8x8xf32>
    %c0_36 = arith.constant 0 : index
    %c0_37 = arith.constant 0 : index
    %c0_38 = arith.constant 0 : index
    %c0_39 = arith.constant 0 : index
    %43 = vector.load %arg10[%c0_36, %c0_37, %c0_38, %c0_39] : memref<2x4x1x8xf32, #tpu.memory_space<vmem>>, vector<1x1x1x8xf32>
    %44 = vector.shape_cast %43 : vector<1x1x1x8xf32> to vector<1x8xf32>
    %45 = vector.broadcast %44 : vector<1x8xf32> to vector<8x8xf32>
    %46 = arith.addf %42, %45 : vector<8x8xf32>
    %cst_40 = arith.constant dense<0.000000e+00> : vector<8x8xf32>
    %47 = tpu.matmul %32, %39, %cst_40 {dimension_numbers = #tpu.dot_dimension_numbers<[1], [1], [0], [0], [0, 0, 1, 0], [], []>} : vector<8x8xf32>, vector<8x8xf32>, vector<8x8xf32> -> vector<8x8xf32>
    %cst_41 = arith.constant 0.353553385 : f32
    %48 = vector.broadcast %cst_41 : f32 to vector<8x8xf32>
    %49 = arith.mulf %47, %48 : vector<8x8xf32>
    %50 = vector.broadcast %25 : vector<1x8xf32> to vector<8x8xf32>
    %51 = arith.addf %49, %50 : vector<8x8xf32>
    %cst_42 = arith.constant dense<0xFF800000> : vector<8xf32>
    %52 = vector.multi_reduction <maximumf>, %51, %cst_42 [1] : vector<8x8xf32> to vector<8xf32>
    %53 = vector.shape_cast %52 : vector<8xf32> to vector<8x1xf32>
    %54 = vector.broadcast %53 : vector<8x1xf32> to vector<8x8xf32>
    %55 = arith.subf %51, %54 : vector<8x8xf32>
    %56 = math.exp %55 : vector<8x8xf32>
    %cst_43 = arith.constant dense<0.000000e+00> : vector<8xf32>
    %57 = vector.multi_reduction <add>, %56, %cst_43 [1] : vector<8x8xf32> to vector<8xf32>
    %58 = vector.shape_cast %57 : vector<8xf32> to vector<8x1xf32>
    %59 = tpu.reciprocal %58 {approx = true} : vector<8x1xf32> -> vector<8x1xf32>
    %60 = vector.broadcast %59 : vector<8x1xf32> to vector<8x8xf32>
    %61 = arith.mulf %56, %60 : vector<8x8xf32>
    %cst_44 = arith.constant dense<0.000000e+00> : vector<8x8xf32>
    %62 = tpu.matmul %61, %46, %cst_44 {dimension_numbers = #tpu.dot_dimension_numbers<[1], [0], [0], [1], [0, 0, 1, 1], [], []>} : vector<8x8xf32>, vector<8x8xf32>, vector<8x8xf32> -> vector<8x8xf32>
    %c0_45 = arith.constant 0 : index
    %c0_46 = arith.constant 0 : index
    %c0_47 = arith.constant 0 : index
    %c0_48 = arith.constant 0 : index
    %63 = vector.load %arg11[%c0_45, %c0_46, %c0_47, %c0_48] : memref<2x4x8x32xf32, #tpu.memory_space<vmem>>, vector<1x1x8x32xf32>
    %64 = vector.shape_cast %63 : vector<1x1x8x32xf32> to vector<8x32xf32>
    %cst_49 = arith.constant dense<0.000000e+00> : vector<8x32xf32>
    %65 = tpu.matmul %62, %64, %cst_49 {dimension_numbers = #tpu.dot_dimension_numbers<[1], [0], [0], [1], [0, 0, 1, 1], [], []>} : vector<8x8xf32>, vector<8x32xf32>, vector<8x32xf32> -> vector<8x32xf32>
    %c0_50 = arith.constant 0 : index
    %c1 = arith.constant 1 : index
    %c0_51 = arith.constant 0 : index
    %c0_52 = arith.constant 0 : index
    %66 = vector.load %arg5[%c0_50, %c1, %c0_51, %c0_52] : memref<2x4x32x8xf32, #tpu.memory_space<vmem>>, vector<1x1x32x8xf32>
    %67 = vector.shape_cast %66 : vector<1x1x32x8xf32> to vector<32x8xf32>
    %cst_53 = arith.constant dense<0.000000e+00> : vector<8x8xf32>
    %68 = tpu.matmul %23, %67, %cst_53 {dimension_numbers = #tpu.dot_dimension_numbers<[1], [0], [0], [1], [0, 0, 1, 1], [], []>} : vector<8x32xf32>, vector<32x8xf32>, vector<8x8xf32> -> vector<8x8xf32>
    %c0_54 = arith.constant 0 : index
    %c1_55 = arith.constant 1 : index
    %c0_56 = arith.constant 0 : index
    %c0_57 = arith.constant 0 : index
    %69 = vector.load %arg8[%c0_54, %c1_55, %c0_56, %c0_57] : memref<2x4x1x8xf32, #tpu.memory_space<vmem>>, vector<1x1x1x8xf32>
    %70 = vector.shape_cast %69 : vector<1x1x1x8xf32> to vector<1x8xf32>
    %71 = vector.broadcast %70 : vector<1x8xf32> to vector<8x8xf32>
    %72 = arith.addf %68, %71 : vector<8x8xf32>
    %c0_58 = arith.constant 0 : index
    %c1_59 = arith.constant 1 : index
    %c0_60 = arith.constant 0 : index
    %c0_61 = arith.constant 0 : index
    %73 = vector.load %arg6[%c0_58, %c1_59, %c0_60, %c0_61] : memref<2x4x32x8xf32, #tpu.memory_space<vmem>>, vector<1x1x32x8xf32>
    %74 = vector.shape_cast %73 : vector<1x1x32x8xf32> to vector<32x8xf32>
    %cst_62 = arith.constant dense<0.000000e+00> : vector<8x8xf32>
    %75 = tpu.matmul %23, %74, %cst_62 {dimension_numbers = #tpu.dot_dimension_numbers<[1], [0], [0], [1], [0, 0, 1, 1], [], []>} : vector<8x32xf32>, vector<32x8xf32>, vector<8x8xf32> -> vector<8x8xf32>
    %c0_63 = arith.constant 0 : index
    %c1_64 = arith.constant 1 : index
    %c0_65 = arith.constant 0 : index
    %c0_66 = arith.constant 0 : index
    %76 = vector.load %arg9[%c0_63, %c1_64, %c0_65, %c0_66] : memref<2x4x1x8xf32, #tpu.memory_space<vmem>>, vector<1x1x1x8xf32>
    %77 = vector.shape_cast %76 : vector<1x1x1x8xf32> to vector<1x8xf32>
    %78 = vector.broadcast %77 : vector<1x8xf32> to vector<8x8xf32>
    %79 = arith.addf %75, %78 : vector<8x8xf32>
    %c0_67 = arith.constant 0 : index
    %c1_68 = arith.constant 1 : index
    %c0_69 = arith.constant 0 : index
    %c0_70 = arith.constant 0 : index
    %80 = vector.load %arg7[%c0_67, %c1_68, %c0_69, %c0_70] : memref<2x4x32x8xf32, #tpu.memory_space<vmem>>, vector<1x1x32x8xf32>
    %81 = vector.shape_cast %80 : vector<1x1x32x8xf32> to vector<32x8xf32>
    %cst_71 = arith.constant dense<0.000000e+00> : vector<8x8xf32>
    %82 = tpu.matmul %23, %81, %cst_71 {dimension_numbers = #tpu.dot_dimension_numbers<[1], [0], [0], [1], [0, 0, 1, 1], [], []>} : vector<8x32xf32>, vector<32x8xf32>, vector<8x8xf32> -> vector<8x8xf32>
    %c0_72 = arith.constant 0 : index
    %c1_73 = arith.constant 1 : index
    %c0_74 = arith.constant 0 : index
    %c0_75 = arith.constant 0 : index
    %83 = vector.load %arg10[%c0_72, %c1_73, %c0_74, %c0_75] : memref<2x4x1x8xf32, #tpu.memory_space<vmem>>, vector<1x1x1x8xf32>
    %84 = vector.shape_cast %83 : vector<1x1x1x8xf32> to vector<1x8xf32>
    %85 = vector.broadcast %84 : vector<1x8xf32> to vector<8x8xf32>
    %86 = arith.addf %82, %85 : vector<8x8xf32>
    %cst_76 = arith.constant dense<0.000000e+00> : vector<8x8xf32>
    %87 = tpu.matmul %72, %79, %cst_76 {dimension_numbers = #tpu.dot_dimension_numbers<[1], [1], [0], [0], [0, 0, 1, 0], [], []>} : vector<8x8xf32>, vector<8x8xf32>, vector<8x8xf32> -> vector<8x8xf32>
    %cst_77 = arith.constant 0.353553385 : f32
    %88 = vector.broadcast %cst_77 : f32 to vector<8x8xf32>
    %89 = arith.mulf %87, %88 : vector<8x8xf32>
    %90 = vector.broadcast %25 : vector<1x8xf32> to vector<8x8xf32>
    %91 = arith.addf %89, %90 : vector<8x8xf32>
    %cst_78 = arith.constant dense<0xFF800000> : vector<8xf32>
    %92 = vector.multi_reduction <maximumf>, %91, %cst_78 [1] : vector<8x8xf32> to vector<8xf32>
    %93 = vector.shape_cast %92 : vector<8xf32> to vector<8x1xf32>
    %94 = vector.broadcast %93 : vector<8x1xf32> to vector<8x8xf32>
    %95 = arith.subf %91, %94 : vector<8x8xf32>
    %96 = math.exp %95 : vector<8x8xf32>
    %cst_79 = arith.constant dense<0.000000e+00> : vector<8xf32>
    %97 = vector.multi_reduction <add>, %96, %cst_79 [1] : vector<8x8xf32> to vector<8xf32>
    %98 = vector.shape_cast %97 : vector<8xf32> to vector<8x1xf32>
    %99 = tpu.reciprocal %98 {approx = true} : vector<8x1xf32> -> vector<8x1xf32>
    %100 = vector.broadcast %99 : vector<8x1xf32> to vector<8x8xf32>
    %101 = arith.mulf %96, %100 : vector<8x8xf32>
    %cst_80 = arith.constant dense<0.000000e+00> : vector<8x8xf32>
    %102 = tpu.matmul %101, %86, %cst_80 {dimension_numbers = #tpu.dot_dimension_numbers<[1], [0], [0], [1], [0, 0, 1, 1], [], []>} : vector<8x8xf32>, vector<8x8xf32>, vector<8x8xf32> -> vector<8x8xf32>
    %c0_81 = arith.constant 0 : index
    %c1_82 = arith.constant 1 : index
    %c0_83 = arith.constant 0 : index
    %c0_84 = arith.constant 0 : index
    %103 = vector.load %arg11[%c0_81, %c1_82, %c0_83, %c0_84] : memref<2x4x8x32xf32, #tpu.memory_space<vmem>>, vector<1x1x8x32xf32>
    %104 = vector.shape_cast %103 : vector<1x1x8x32xf32> to vector<8x32xf32>
    %cst_85 = arith.constant dense<0.000000e+00> : vector<8x32xf32>
    %105 = tpu.matmul %102, %104, %cst_85 {dimension_numbers = #tpu.dot_dimension_numbers<[1], [0], [0], [1], [0, 0, 1, 1], [], []>} : vector<8x8xf32>, vector<8x32xf32>, vector<8x32xf32> -> vector<8x32xf32>
    %106 = arith.addf %65, %105 : vector<8x32xf32>
    %c0_86 = arith.constant 0 : index
    %c2 = arith.constant 2 : index
    %c0_87 = arith.constant 0 : index
    %c0_88 = arith.constant 0 : index
    %107 = vector.load %arg5[%c0_86, %c2, %c0_87, %c0_88] : memref<2x4x32x8xf32, #tpu.memory_space<vmem>>, vector<1x1x32x8xf32>
    %108 = vector.shape_cast %107 : vector<1x1x32x8xf32> to vector<32x8xf32>
    %cst_89 = arith.constant dense<0.000000e+00> : vector<8x8xf32>
    %109 = tpu.matmul %23, %108, %cst_89 {dimension_numbers = #tpu.dot_dimension_numbers<[1], [0], [0], [1], [0, 0, 1, 1], [], []>} : vector<8x32xf32>, vector<32x8xf32>, vector<8x8xf32> -> vector<8x8xf32>
    %c0_90 = arith.constant 0 : index
    %c2_91 = arith.constant 2 : index
    %c0_92 = arith.constant 0 : index
    %c0_93 = arith.constant 0 : index
    %110 = vector.load %arg8[%c0_90, %c2_91, %c0_92, %c0_93] : memref<2x4x1x8xf32, #tpu.memory_space<vmem>>, vector<1x1x1x8xf32>
    %111 = vector.shape_cast %110 : vector<1x1x1x8xf32> to vector<1x8xf32>
    %112 = vector.broadcast %111 : vector<1x8xf32> to vector<8x8xf32>
    %113 = arith.addf %109, %112 : vector<8x8xf32>
    %c0_94 = arith.constant 0 : index
    %c2_95 = arith.constant 2 : index
    %c0_96 = arith.constant 0 : index
    %c0_97 = arith.constant 0 : index
    %114 = vector.load %arg6[%c0_94, %c2_95, %c0_96, %c0_97] : memref<2x4x32x8xf32, #tpu.memory_space<vmem>>, vector<1x1x32x8xf32>
    %115 = vector.shape_cast %114 : vector<1x1x32x8xf32> to vector<32x8xf32>
    %cst_98 = arith.constant dense<0.000000e+00> : vector<8x8xf32>
    %116 = tpu.matmul %23, %115, %cst_98 {dimension_numbers = #tpu.dot_dimension_numbers<[1], [0], [0], [1], [0, 0, 1, 1], [], []>} : vector<8x32xf32>, vector<32x8xf32>, vector<8x8xf32> -> vector<8x8xf32>
    %c0_99 = arith.constant 0 : index
    %c2_100 = arith.constant 2 : index
    %c0_101 = arith.constant 0 : index
    %c0_102 = arith.constant 0 : index
    %117 = vector.load %arg9[%c0_99, %c2_100, %c0_101, %c0_102] : memref<2x4x1x8xf32, #tpu.memory_space<vmem>>, vector<1x1x1x8xf32>
    %118 = vector.shape_cast %117 : vector<1x1x1x8xf32> to vector<1x8xf32>
    %119 = vector.broadcast %118 : vector<1x8xf32> to vector<8x8xf32>
    %120 = arith.addf %116, %119 : vector<8x8xf32>
    %c0_103 = arith.constant 0 : index
    %c2_104 = arith.constant 2 : index
    %c0_105 = arith.constant 0 : index
    %c0_106 = arith.constant 0 : index
    %121 = vector.load %arg7[%c0_103, %c2_104, %c0_105, %c0_106] : memref<2x4x32x8xf32, #tpu.memory_space<vmem>>, vector<1x1x32x8xf32>
    %122 = vector.shape_cast %121 : vector<1x1x32x8xf32> to vector<32x8xf32>
    %cst_107 = arith.constant dense<0.000000e+00> : vector<8x8xf32>
    %123 = tpu.matmul %23, %122, %cst_107 {dimension_numbers = #tpu.dot_dimension_numbers<[1], [0], [0], [1], [0, 0, 1, 1], [], []>} : vector<8x32xf32>, vector<32x8xf32>, vector<8x8xf32> -> vector<8x8xf32>
    %c0_108 = arith.constant 0 : index
    %c2_109 = arith.constant 2 : index
    %c0_110 = arith.constant 0 : index
    %c0_111 = arith.constant 0 : index
    %124 = vector.load %arg10[%c0_108, %c2_109, %c0_110, %c0_111] : memref<2x4x1x8xf32, #tpu.memory_space<vmem>>, vector<1x1x1x8xf32>
    %125 = vector.shape_cast %124 : vector<1x1x1x8xf32> to vector<1x8xf32>
    %126 = vector.broadcast %125 : vector<1x8xf32> to vector<8x8xf32>
    %127 = arith.addf %123, %126 : vector<8x8xf32>
    %cst_112 = arith.constant dense<0.000000e+00> : vector<8x8xf32>
    %128 = tpu.matmul %113, %120, %cst_112 {dimension_numbers = #tpu.dot_dimension_numbers<[1], [1], [0], [0], [0, 0, 1, 0], [], []>} : vector<8x8xf32>, vector<8x8xf32>, vector<8x8xf32> -> vector<8x8xf32>
    %cst_113 = arith.constant 0.353553385 : f32
    %129 = vector.broadcast %cst_113 : f32 to vector<8x8xf32>
    %130 = arith.mulf %128, %129 : vector<8x8xf32>
    %131 = vector.broadcast %25 : vector<1x8xf32> to vector<8x8xf32>
    %132 = arith.addf %130, %131 : vector<8x8xf32>
    %cst_114 = arith.constant dense<0xFF800000> : vector<8xf32>
    %133 = vector.multi_reduction <maximumf>, %132, %cst_114 [1] : vector<8x8xf32> to vector<8xf32>
    %134 = vector.shape_cast %133 : vector<8xf32> to vector<8x1xf32>
    %135 = vector.broadcast %134 : vector<8x1xf32> to vector<8x8xf32>
    %136 = arith.subf %132, %135 : vector<8x8xf32>
    %137 = math.exp %136 : vector<8x8xf32>
    %cst_115 = arith.constant dense<0.000000e+00> : vector<8xf32>
    %138 = vector.multi_reduction <add>, %137, %cst_115 [1] : vector<8x8xf32> to vector<8xf32>
    %139 = vector.shape_cast %138 : vector<8xf32> to vector<8x1xf32>
    %140 = tpu.reciprocal %139 {approx = true} : vector<8x1xf32> -> vector<8x1xf32>
    %141 = vector.broadcast %140 : vector<8x1xf32> to vector<8x8xf32>
    %142 = arith.mulf %137, %141 : vector<8x8xf32>
    %cst_116 = arith.constant dense<0.000000e+00> : vector<8x8xf32>
    %143 = tpu.matmul %142, %127, %cst_116 {dimension_numbers = #tpu.dot_dimension_numbers<[1], [0], [0], [1], [0, 0, 1, 1], [], []>} : vector<8x8xf32>, vector<8x8xf32>, vector<8x8xf32> -> vector<8x8xf32>
    %c0_117 = arith.constant 0 : index
    %c2_118 = arith.constant 2 : index
    %c0_119 = arith.constant 0 : index
    %c0_120 = arith.constant 0 : index
    %144 = vector.load %arg11[%c0_117, %c2_118, %c0_119, %c0_120] : memref<2x4x8x32xf32, #tpu.memory_space<vmem>>, vector<1x1x8x32xf32>
    %145 = vector.shape_cast %144 : vector<1x1x8x32xf32> to vector<8x32xf32>
    %cst_121 = arith.constant dense<0.000000e+00> : vector<8x32xf32>
    %146 = tpu.matmul %143, %145, %cst_121 {dimension_numbers = #tpu.dot_dimension_numbers<[1], [0], [0], [1], [0, 0, 1, 1], [], []>} : vector<8x8xf32>, vector<8x32xf32>, vector<8x32xf32> -> vector<8x32xf32>
    %147 = arith.addf %106, %146 : vector<8x32xf32>
    %c0_122 = arith.constant 0 : index
    %c3 = arith.constant 3 : index
    %c0_123 = arith.constant 0 : index
    %c0_124 = arith.constant 0 : index
    %148 = vector.load %arg5[%c0_122, %c3, %c0_123, %c0_124] : memref<2x4x32x8xf32, #tpu.memory_space<vmem>>, vector<1x1x32x8xf32>
    %149 = vector.shape_cast %148 : vector<1x1x32x8xf32> to vector<32x8xf32>
    %cst_125 = arith.constant dense<0.000000e+00> : vector<8x8xf32>
    %150 = tpu.matmul %23, %149, %cst_125 {dimension_numbers = #tpu.dot_dimension_numbers<[1], [0], [0], [1], [0, 0, 1, 1], [], []>} : vector<8x32xf32>, vector<32x8xf32>, vector<8x8xf32> -> vector<8x8xf32>
    %c0_126 = arith.constant 0 : index
    %c3_127 = arith.constant 3 : index
    %c0_128 = arith.constant 0 : index
    %c0_129 = arith.constant 0 : index
    %151 = vector.load %arg8[%c0_126, %c3_127, %c0_128, %c0_129] : memref<2x4x1x8xf32, #tpu.memory_space<vmem>>, vector<1x1x1x8xf32>
    %152 = vector.shape_cast %151 : vector<1x1x1x8xf32> to vector<1x8xf32>
    %153 = vector.broadcast %152 : vector<1x8xf32> to vector<8x8xf32>
    %154 = arith.addf %150, %153 : vector<8x8xf32>
    %c0_130 = arith.constant 0 : index
    %c3_131 = arith.constant 3 : index
    %c0_132 = arith.constant 0 : index
    %c0_133 = arith.constant 0 : index
    %155 = vector.load %arg6[%c0_130, %c3_131, %c0_132, %c0_133] : memref<2x4x32x8xf32, #tpu.memory_space<vmem>>, vector<1x1x32x8xf32>
    %156 = vector.shape_cast %155 : vector<1x1x32x8xf32> to vector<32x8xf32>
    %cst_134 = arith.constant dense<0.000000e+00> : vector<8x8xf32>
    %157 = tpu.matmul %23, %156, %cst_134 {dimension_numbers = #tpu.dot_dimension_numbers<[1], [0], [0], [1], [0, 0, 1, 1], [], []>} : vector<8x32xf32>, vector<32x8xf32>, vector<8x8xf32> -> vector<8x8xf32>
    %c0_135 = arith.constant 0 : index
    %c3_136 = arith.constant 3 : index
    %c0_137 = arith.constant 0 : index
    %c0_138 = arith.constant 0 : index
    %158 = vector.load %arg9[%c0_135, %c3_136, %c0_137, %c0_138] : memref<2x4x1x8xf32, #tpu.memory_space<vmem>>, vector<1x1x1x8xf32>
    %159 = vector.shape_cast %158 : vector<1x1x1x8xf32> to vector<1x8xf32>
    %160 = vector.broadcast %159 : vector<1x8xf32> to vector<8x8xf32>
    %161 = arith.addf %157, %160 : vector<8x8xf32>
    %c0_139 = arith.constant 0 : index
    %c3_140 = arith.constant 3 : index
    %c0_141 = arith.constant 0 : index
    %c0_142 = arith.constant 0 : index
    %162 = vector.load %arg7[%c0_139, %c3_140, %c0_141, %c0_142] : memref<2x4x32x8xf32, #tpu.memory_space<vmem>>, vector<1x1x32x8xf32>
    %163 = vector.shape_cast %162 : vector<1x1x32x8xf32> to vector<32x8xf32>
    %cst_143 = arith.constant dense<0.000000e+00> : vector<8x8xf32>
    %164 = tpu.matmul %23, %163, %cst_143 {dimension_numbers = #tpu.dot_dimension_numbers<[1], [0], [0], [1], [0, 0, 1, 1], [], []>} : vector<8x32xf32>, vector<32x8xf32>, vector<8x8xf32> -> vector<8x8xf32>
    %c0_144 = arith.constant 0 : index
    %c3_145 = arith.constant 3 : index
    %c0_146 = arith.constant 0 : index
    %c0_147 = arith.constant 0 : index
    %165 = vector.load %arg10[%c0_144, %c3_145, %c0_146, %c0_147] : memref<2x4x1x8xf32, #tpu.memory_space<vmem>>, vector<1x1x1x8xf32>
    %166 = vector.shape_cast %165 : vector<1x1x1x8xf32> to vector<1x8xf32>
    %167 = vector.broadcast %166 : vector<1x8xf32> to vector<8x8xf32>
    %168 = arith.addf %164, %167 : vector<8x8xf32>
    %cst_148 = arith.constant dense<0.000000e+00> : vector<8x8xf32>
    %169 = tpu.matmul %154, %161, %cst_148 {dimension_numbers = #tpu.dot_dimension_numbers<[1], [1], [0], [0], [0, 0, 1, 0], [], []>} : vector<8x8xf32>, vector<8x8xf32>, vector<8x8xf32> -> vector<8x8xf32>
    %cst_149 = arith.constant 0.353553385 : f32
    %170 = vector.broadcast %cst_149 : f32 to vector<8x8xf32>
    %171 = arith.mulf %169, %170 : vector<8x8xf32>
    %172 = vector.broadcast %25 : vector<1x8xf32> to vector<8x8xf32>
    %173 = arith.addf %171, %172 : vector<8x8xf32>
    %cst_150 = arith.constant dense<0xFF800000> : vector<8xf32>
    %174 = vector.multi_reduction <maximumf>, %173, %cst_150 [1] : vector<8x8xf32> to vector<8xf32>
    %175 = vector.shape_cast %174 : vector<8xf32> to vector<8x1xf32>
    %176 = vector.broadcast %175 : vector<8x1xf32> to vector<8x8xf32>
    %177 = arith.subf %173, %176 : vector<8x8xf32>
    %178 = math.exp %177 : vector<8x8xf32>
    %cst_151 = arith.constant dense<0.000000e+00> : vector<8xf32>
    %179 = vector.multi_reduction <add>, %178, %cst_151 [1] : vector<8x8xf32> to vector<8xf32>
    %180 = vector.shape_cast %179 : vector<8xf32> to vector<8x1xf32>
    %181 = tpu.reciprocal %180 {approx = true} : vector<8x1xf32> -> vector<8x1xf32>
    %182 = vector.broadcast %181 : vector<8x1xf32> to vector<8x8xf32>
    %183 = arith.mulf %178, %182 : vector<8x8xf32>
    %cst_152 = arith.constant dense<0.000000e+00> : vector<8x8xf32>
    %184 = tpu.matmul %183, %168, %cst_152 {dimension_numbers = #tpu.dot_dimension_numbers<[1], [0], [0], [1], [0, 0, 1, 1], [], []>} : vector<8x8xf32>, vector<8x8xf32>, vector<8x8xf32> -> vector<8x8xf32>
    %c0_153 = arith.constant 0 : index
    %c3_154 = arith.constant 3 : index
    %c0_155 = arith.constant 0 : index
    %c0_156 = arith.constant 0 : index
    %185 = vector.load %arg11[%c0_153, %c3_154, %c0_155, %c0_156] : memref<2x4x8x32xf32, #tpu.memory_space<vmem>>, vector<1x1x8x32xf32>
    %186 = vector.shape_cast %185 : vector<1x1x8x32xf32> to vector<8x32xf32>
    %cst_157 = arith.constant dense<0.000000e+00> : vector<8x32xf32>
    %187 = tpu.matmul %184, %186, %cst_157 {dimension_numbers = #tpu.dot_dimension_numbers<[1], [0], [0], [1], [0, 0, 1, 1], [], []>} : vector<8x8xf32>, vector<8x32xf32>, vector<8x32xf32> -> vector<8x32xf32>
    %188 = arith.addf %147, %187 : vector<8x32xf32>
    %c0_158 = arith.constant 0 : index
    %c0_159 = arith.constant 0 : index
    %c0_160 = arith.constant 0 : index
    %189 = vector.load %arg12[%c0_158, %c0_159, %c0_160] : memref<2x1x32xf32, #tpu.memory_space<vmem>>, vector<1x1x32xf32>
    %190 = vector.shape_cast %189 : vector<1x1x32xf32> to vector<1x32xf32>
    %191 = vector.broadcast %190 : vector<1x32xf32> to vector<8x32xf32>
    %192 = arith.addf %188, %191 : vector<8x32xf32>
    %193 = arith.addf %192, %23 : vector<8x32xf32>
    %c0_161 = arith.constant 0 : index
    %c0_162 = arith.constant 0 : index
    %c0_163 = arith.constant 0 : index
    %194 = vector.load %arg13[%c0_161, %c0_162, %c0_163] : memref<2x1x32xf32, #tpu.memory_space<vmem>>, vector<1x1x32xf32>
    %195 = vector.shape_cast %194 : vector<1x1x32xf32> to vector<1x32xf32>
    %c0_164 = arith.constant 0 : index
    %c0_165 = arith.constant 0 : index
    %c0_166 = arith.constant 0 : index
    %196 = vector.load %arg14[%c0_164, %c0_165, %c0_166] : memref<2x1x32xf32, #tpu.memory_space<vmem>>, vector<1x1x32xf32>
    %197 = vector.shape_cast %196 : vector<1x1x32xf32> to vector<1x32xf32>
    %cst_167 = arith.constant dense<0.000000e+00> : vector<8xf32>
    %198 = vector.multi_reduction <add>, %193, %cst_167 [1] : vector<8x32xf32> to vector<8xf32>
    %199 = vector.shape_cast %198 : vector<8xf32> to vector<8x1xf32>
    %cst_168 = arith.constant 3.200000e+01 : f32
    %200 = vector.broadcast %cst_168 : f32 to vector<8x1xf32>
    %201 = arith.divf %199, %200 : vector<8x1xf32>
    %202 = vector.broadcast %201 : vector<8x1xf32> to vector<8x32xf32>
    %203 = arith.subf %193, %202 : vector<8x32xf32>
    %204 = arith.mulf %203, %203 : vector<8x32xf32>
    %cst_169 = arith.constant dense<0.000000e+00> : vector<8xf32>
    %205 = vector.multi_reduction <add>, %204, %cst_169 [1] : vector<8x32xf32> to vector<8xf32>
    %206 = vector.shape_cast %205 : vector<8xf32> to vector<8x1xf32>
    %cst_170 = arith.constant 3.200000e+01 : f32
    %207 = vector.broadcast %cst_170 : f32 to vector<8x1xf32>
    %208 = arith.divf %206, %207 : vector<8x1xf32>
    %cst_171 = arith.constant 9.99999996E-13 : f32
    %209 = vector.broadcast %cst_171 : f32 to vector<8x1xf32>
    %210 = arith.addf %208, %209 : vector<8x1xf32>
    %211 = math.rsqrt %210 : vector<8x1xf32>
    %212 = vector.broadcast %211 : vector<8x1xf32> to vector<8x32xf32>
    %213 = arith.mulf %203, %212 : vector<8x32xf32>
    %214 = vector.broadcast %195 : vector<1x32xf32> to vector<8x32xf32>
    %215 = arith.mulf %213, %214 : vector<8x32xf32>
    %216 = vector.broadcast %197 : vector<1x32xf32> to vector<8x32xf32>
    %217 = arith.addf %215, %216 : vector<8x32xf32>
    %c0_172 = arith.constant 0 : index
    %c0_173 = arith.constant 0 : index
    %c0_174 = arith.constant 0 : index
    %218 = vector.load %arg15[%c0_172, %c0_173, %c0_174] : memref<2x32x64xf32, #tpu.memory_space<vmem>>, vector<1x32x64xf32>
    %219 = vector.shape_cast %218 : vector<1x32x64xf32> to vector<32x64xf32>
    %cst_175 = arith.constant dense<0.000000e+00> : vector<8x64xf32>
    %220 = tpu.matmul %217, %219, %cst_175 {dimension_numbers = #tpu.dot_dimension_numbers<[1], [0], [0], [1], [0, 0, 1, 1], [], []>} : vector<8x32xf32>, vector<32x64xf32>, vector<8x64xf32> -> vector<8x64xf32>
    %c0_176 = arith.constant 0 : index
    %c0_177 = arith.constant 0 : index
    %c0_178 = arith.constant 0 : index
    %221 = vector.load %arg16[%c0_176, %c0_177, %c0_178] : memref<2x1x64xf32, #tpu.memory_space<vmem>>, vector<1x1x64xf32>
    %222 = vector.shape_cast %221 : vector<1x1x64xf32> to vector<1x64xf32>
    %223 = vector.broadcast %222 : vector<1x64xf32> to vector<8x64xf32>
    %224 = arith.addf %220, %223 : vector<8x64xf32>
    %cst_179 = arith.constant 5.000000e-01 : f32
    %225 = vector.broadcast %cst_179 : f32 to vector<8x64xf32>
    %226 = arith.mulf %225, %224 : vector<8x64xf32>
    %cst_180 = arith.constant 0.707106769 : f32
    %227 = vector.broadcast %cst_180 : f32 to vector<8x64xf32>
    %228 = arith.mulf %224, %227 : vector<8x64xf32>
    %229 = math.erf %228 : vector<8x64xf32>
    %cst_181 = arith.constant 1.000000e+00 : f32
    %230 = vector.broadcast %cst_181 : f32 to vector<8x64xf32>
    %231 = arith.addf %230, %229 : vector<8x64xf32>
    %232 = arith.mulf %226, %231 : vector<8x64xf32>
    %c0_182 = arith.constant 0 : index
    %c0_183 = arith.constant 0 : index
    %c0_184 = arith.constant 0 : index
    %233 = vector.load %arg17[%c0_182, %c0_183, %c0_184] : memref<2x64x32xf32, #tpu.memory_space<vmem>>, vector<1x64x32xf32>
    %234 = vector.shape_cast %233 : vector<1x64x32xf32> to vector<64x32xf32>
    %cst_185 = arith.constant dense<0.000000e+00> : vector<8x32xf32>
    %235 = tpu.matmul %232, %234, %cst_185 {dimension_numbers = #tpu.dot_dimension_numbers<[1], [0], [0], [1], [0, 0, 1, 1], [], []>} : vector<8x64xf32>, vector<64x32xf32>, vector<8x32xf32> -> vector<8x32xf32>
    %c0_186 = arith.constant 0 : index
    %c0_187 = arith.constant 0 : index
    %c0_188 = arith.constant 0 : index
    %236 = vector.load %arg18[%c0_186, %c0_187, %c0_188] : memref<2x1x32xf32, #tpu.memory_space<vmem>>, vector<1x1x32xf32>
    %237 = vector.shape_cast %236 : vector<1x1x32xf32> to vector<1x32xf32>
    %238 = vector.broadcast %237 : vector<1x32xf32> to vector<8x32xf32>
    %239 = arith.addf %235, %238 : vector<8x32xf32>
    %240 = arith.addf %239, %217 : vector<8x32xf32>
    %c0_189 = arith.constant 0 : index
    %c0_190 = arith.constant 0 : index
    %c0_191 = arith.constant 0 : index
    %241 = vector.load %arg19[%c0_189, %c0_190, %c0_191] : memref<2x1x32xf32, #tpu.memory_space<vmem>>, vector<1x1x32xf32>
    %242 = vector.shape_cast %241 : vector<1x1x32xf32> to vector<1x32xf32>
    %c0_192 = arith.constant 0 : index
    %c0_193 = arith.constant 0 : index
    %c0_194 = arith.constant 0 : index
    %243 = vector.load %arg20[%c0_192, %c0_193, %c0_194] : memref<2x1x32xf32, #tpu.memory_space<vmem>>, vector<1x1x32xf32>
    %244 = vector.shape_cast %243 : vector<1x1x32xf32> to vector<1x32xf32>
    %cst_195 = arith.constant dense<0.000000e+00> : vector<8xf32>
    %245 = vector.multi_reduction <add>, %240, %cst_195 [1] : vector<8x32xf32> to vector<8xf32>
    %246 = vector.shape_cast %245 : vector<8xf32> to vector<8x1xf32>
    %cst_196 = arith.constant 3.200000e+01 : f32
    %247 = vector.broadcast %cst_196 : f32 to vector<8x1xf32>
    %248 = arith.divf %246, %247 : vector<8x1xf32>
    %249 = vector.broadcast %248 : vector<8x1xf32> to vector<8x32xf32>
    %250 = arith.subf %240, %249 : vector<8x32xf32>
    %251 = arith.mulf %250, %250 : vector<8x32xf32>
    %cst_197 = arith.constant dense<0.000000e+00> : vector<8xf32>
    %252 = vector.multi_reduction <add>, %251, %cst_197 [1] : vector<8x32xf32> to vector<8xf32>
    %253 = vector.shape_cast %252 : vector<8xf32> to vector<8x1xf32>
    %cst_198 = arith.constant 3.200000e+01 : f32
    %254 = vector.broadcast %cst_198 : f32 to vector<8x1xf32>
    %255 = arith.divf %253, %254 : vector<8x1xf32>
    %cst_199 = arith.constant 9.99999996E-13 : f32
    %256 = vector.broadcast %cst_199 : f32 to vector<8x1xf32>
    %257 = arith.addf %255, %256 : vector<8x1xf32>
    %258 = math.rsqrt %257 : vector<8x1xf32>
    %259 = vector.broadcast %258 : vector<8x1xf32> to vector<8x32xf32>
    %260 = arith.mulf %250, %259 : vector<8x32xf32>
    %261 = vector.broadcast %242 : vector<1x32xf32> to vector<8x32xf32>
    %262 = arith.mulf %260, %261 : vector<8x32xf32>
    %263 = vector.broadcast %244 : vector<1x32xf32> to vector<8x32xf32>
    %264 = arith.addf %262, %263 : vector<8x32xf32>
    %c1_200 = arith.constant 1 : index
    %c0_201 = arith.constant 0 : index
    %c0_202 = arith.constant 0 : index
    %c0_203 = arith.constant 0 : index
    %265 = vector.load %arg5[%c1_200, %c0_201, %c0_202, %c0_203] : memref<2x4x32x8xf32, #tpu.memory_space<vmem>>, vector<1x1x32x8xf32>
    %266 = vector.shape_cast %265 : vector<1x1x32x8xf32> to vector<32x8xf32>
    %cst_204 = arith.constant dense<0.000000e+00> : vector<8x8xf32>
    %267 = tpu.matmul %264, %266, %cst_204 {dimension_numbers = #tpu.dot_dimension_numbers<[1], [0], [0], [1], [0, 0, 1, 1], [], []>} : vector<8x32xf32>, vector<32x8xf32>, vector<8x8xf32> -> vector<8x8xf32>
    %c1_205 = arith.constant 1 : index
    %c0_206 = arith.constant 0 : index
    %c0_207 = arith.constant 0 : index
    %c0_208 = arith.constant 0 : index
    %268 = vector.load %arg8[%c1_205, %c0_206, %c0_207, %c0_208] : memref<2x4x1x8xf32, #tpu.memory_space<vmem>>, vector<1x1x1x8xf32>
    %269 = vector.shape_cast %268 : vector<1x1x1x8xf32> to vector<1x8xf32>
    %270 = vector.broadcast %269 : vector<1x8xf32> to vector<8x8xf32>
    %271 = arith.addf %267, %270 : vector<8x8xf32>
    %c1_209 = arith.constant 1 : index
    %c0_210 = arith.constant 0 : index
    %c0_211 = arith.constant 0 : index
    %c0_212 = arith.constant 0 : index
    %272 = vector.load %arg6[%c1_209, %c0_210, %c0_211, %c0_212] : memref<2x4x32x8xf32, #tpu.memory_space<vmem>>, vector<1x1x32x8xf32>
    %273 = vector.shape_cast %272 : vector<1x1x32x8xf32> to vector<32x8xf32>
    %cst_213 = arith.constant dense<0.000000e+00> : vector<8x8xf32>
    %274 = tpu.matmul %264, %273, %cst_213 {dimension_numbers = #tpu.dot_dimension_numbers<[1], [0], [0], [1], [0, 0, 1, 1], [], []>} : vector<8x32xf32>, vector<32x8xf32>, vector<8x8xf32> -> vector<8x8xf32>
    %c1_214 = arith.constant 1 : index
    %c0_215 = arith.constant 0 : index
    %c0_216 = arith.constant 0 : index
    %c0_217 = arith.constant 0 : index
    %275 = vector.load %arg9[%c1_214, %c0_215, %c0_216, %c0_217] : memref<2x4x1x8xf32, #tpu.memory_space<vmem>>, vector<1x1x1x8xf32>
    %276 = vector.shape_cast %275 : vector<1x1x1x8xf32> to vector<1x8xf32>
    %277 = vector.broadcast %276 : vector<1x8xf32> to vector<8x8xf32>
    %278 = arith.addf %274, %277 : vector<8x8xf32>
    %c1_218 = arith.constant 1 : index
    %c0_219 = arith.constant 0 : index
    %c0_220 = arith.constant 0 : index
    %c0_221 = arith.constant 0 : index
    %279 = vector.load %arg7[%c1_218, %c0_219, %c0_220, %c0_221] : memref<2x4x32x8xf32, #tpu.memory_space<vmem>>, vector<1x1x32x8xf32>
    %280 = vector.shape_cast %279 : vector<1x1x32x8xf32> to vector<32x8xf32>
    %cst_222 = arith.constant dense<0.000000e+00> : vector<8x8xf32>
    %281 = tpu.matmul %264, %280, %cst_222 {dimension_numbers = #tpu.dot_dimension_numbers<[1], [0], [0], [1], [0, 0, 1, 1], [], []>} : vector<8x32xf32>, vector<32x8xf32>, vector<8x8xf32> -> vector<8x8xf32>
    %c1_223 = arith.constant 1 : index
    %c0_224 = arith.constant 0 : index
    %c0_225 = arith.constant 0 : index
    %c0_226 = arith.constant 0 : index
    %282 = vector.load %arg10[%c1_223, %c0_224, %c0_225, %c0_226] : memref<2x4x1x8xf32, #tpu.memory_space<vmem>>, vector<1x1x1x8xf32>
    %283 = vector.shape_cast %282 : vector<1x1x1x8xf32> to vector<1x8xf32>
    %284 = vector.broadcast %283 : vector<1x8xf32> to vector<8x8xf32>
    %285 = arith.addf %281, %284 : vector<8x8xf32>
    %cst_227 = arith.constant dense<0.000000e+00> : vector<8x8xf32>
    %286 = tpu.matmul %271, %278, %cst_227 {dimension_numbers = #tpu.dot_dimension_numbers<[1], [1], [0], [0], [0, 0, 1, 0], [], []>} : vector<8x8xf32>, vector<8x8xf32>, vector<8x8xf32> -> vector<8x8xf32>
    %cst_228 = arith.constant 0.353553385 : f32
    %287 = vector.broadcast %cst_228 : f32 to vector<8x8xf32>
    %288 = arith.mulf %286, %287 : vector<8x8xf32>
    %289 = vector.broadcast %25 : vector<1x8xf32> to vector<8x8xf32>
    %290 = arith.addf %288, %289 : vector<8x8xf32>
    %cst_229 = arith.constant dense<0xFF800000> : vector<8xf32>
    %291 = vector.multi_reduction <maximumf>, %290, %cst_229 [1] : vector<8x8xf32> to vector<8xf32>
    %292 = vector.shape_cast %291 : vector<8xf32> to vector<8x1xf32>
    %293 = vector.broadcast %292 : vector<8x1xf32> to vector<8x8xf32>
    %294 = arith.subf %290, %293 : vector<8x8xf32>
    %295 = math.exp %294 : vector<8x8xf32>
    %cst_230 = arith.constant dense<0.000000e+00> : vector<8xf32>
    %296 = vector.multi_reduction <add>, %295, %cst_230 [1] : vector<8x8xf32> to vector<8xf32>
    %297 = vector.shape_cast %296 : vector<8xf32> to vector<8x1xf32>
    %298 = tpu.reciprocal %297 {approx = true} : vector<8x1xf32> -> vector<8x1xf32>
    %299 = vector.broadcast %298 : vector<8x1xf32> to vector<8x8xf32>
    %300 = arith.mulf %295, %299 : vector<8x8xf32>
    %cst_231 = arith.constant dense<0.000000e+00> : vector<8x8xf32>
    %301 = tpu.matmul %300, %285, %cst_231 {dimension_numbers = #tpu.dot_dimension_numbers<[1], [0], [0], [1], [0, 0, 1, 1], [], []>} : vector<8x8xf32>, vector<8x8xf32>, vector<8x8xf32> -> vector<8x8xf32>
    %c1_232 = arith.constant 1 : index
    %c0_233 = arith.constant 0 : index
    %c0_234 = arith.constant 0 : index
    %c0_235 = arith.constant 0 : index
    %302 = vector.load %arg11[%c1_232, %c0_233, %c0_234, %c0_235] : memref<2x4x8x32xf32, #tpu.memory_space<vmem>>, vector<1x1x8x32xf32>
    %303 = vector.shape_cast %302 : vector<1x1x8x32xf32> to vector<8x32xf32>
    %cst_236 = arith.constant dense<0.000000e+00> : vector<8x32xf32>
    %304 = tpu.matmul %301, %303, %cst_236 {dimension_numbers = #tpu.dot_dimension_numbers<[1], [0], [0], [1], [0, 0, 1, 1], [], []>} : vector<8x8xf32>, vector<8x32xf32>, vector<8x32xf32> -> vector<8x32xf32>
    %c1_237 = arith.constant 1 : index
    %c1_238 = arith.constant 1 : index
    %c0_239 = arith.constant 0 : index
    %c0_240 = arith.constant 0 : index
    %305 = vector.load %arg5[%c1_237, %c1_238, %c0_239, %c0_240] : memref<2x4x32x8xf32, #tpu.memory_space<vmem>>, vector<1x1x32x8xf32>
    %306 = vector.shape_cast %305 : vector<1x1x32x8xf32> to vector<32x8xf32>
    %cst_241 = arith.constant dense<0.000000e+00> : vector<8x8xf32>
    %307 = tpu.matmul %264, %306, %cst_241 {dimension_numbers = #tpu.dot_dimension_numbers<[1], [0], [0], [1], [0, 0, 1, 1], [], []>} : vector<8x32xf32>, vector<32x8xf32>, vector<8x8xf32> -> vector<8x8xf32>
    %c1_242 = arith.constant 1 : index
    %c1_243 = arith.constant 1 : index
    %c0_244 = arith.constant 0 : index
    %c0_245 = arith.constant 0 : index
    %308 = vector.load %arg8[%c1_242, %c1_243, %c0_244, %c0_245] : memref<2x4x1x8xf32, #tpu.memory_space<vmem>>, vector<1x1x1x8xf32>
    %309 = vector.shape_cast %308 : vector<1x1x1x8xf32> to vector<1x8xf32>
    %310 = vector.broadcast %309 : vector<1x8xf32> to vector<8x8xf32>
    %311 = arith.addf %307, %310 : vector<8x8xf32>
    %c1_246 = arith.constant 1 : index
    %c1_247 = arith.constant 1 : index
    %c0_248 = arith.constant 0 : index
    %c0_249 = arith.constant 0 : index
    %312 = vector.load %arg6[%c1_246, %c1_247, %c0_248, %c0_249] : memref<2x4x32x8xf32, #tpu.memory_space<vmem>>, vector<1x1x32x8xf32>
    %313 = vector.shape_cast %312 : vector<1x1x32x8xf32> to vector<32x8xf32>
    %cst_250 = arith.constant dense<0.000000e+00> : vector<8x8xf32>
    %314 = tpu.matmul %264, %313, %cst_250 {dimension_numbers = #tpu.dot_dimension_numbers<[1], [0], [0], [1], [0, 0, 1, 1], [], []>} : vector<8x32xf32>, vector<32x8xf32>, vector<8x8xf32> -> vector<8x8xf32>
    %c1_251 = arith.constant 1 : index
    %c1_252 = arith.constant 1 : index
    %c0_253 = arith.constant 0 : index
    %c0_254 = arith.constant 0 : index
    %315 = vector.load %arg9[%c1_251, %c1_252, %c0_253, %c0_254] : memref<2x4x1x8xf32, #tpu.memory_space<vmem>>, vector<1x1x1x8xf32>
    %316 = vector.shape_cast %315 : vector<1x1x1x8xf32> to vector<1x8xf32>
    %317 = vector.broadcast %316 : vector<1x8xf32> to vector<8x8xf32>
    %318 = arith.addf %314, %317 : vector<8x8xf32>
    %c1_255 = arith.constant 1 : index
    %c1_256 = arith.constant 1 : index
    %c0_257 = arith.constant 0 : index
    %c0_258 = arith.constant 0 : index
    %319 = vector.load %arg7[%c1_255, %c1_256, %c0_257, %c0_258] : memref<2x4x32x8xf32, #tpu.memory_space<vmem>>, vector<1x1x32x8xf32>
    %320 = vector.shape_cast %319 : vector<1x1x32x8xf32> to vector<32x8xf32>
    %cst_259 = arith.constant dense<0.000000e+00> : vector<8x8xf32>
    %321 = tpu.matmul %264, %320, %cst_259 {dimension_numbers = #tpu.dot_dimension_numbers<[1], [0], [0], [1], [0, 0, 1, 1], [], []>} : vector<8x32xf32>, vector<32x8xf32>, vector<8x8xf32> -> vector<8x8xf32>
    %c1_260 = arith.constant 1 : index
    %c1_261 = arith.constant 1 : index
    %c0_262 = arith.constant 0 : index
    %c0_263 = arith.constant 0 : index
    %322 = vector.load %arg10[%c1_260, %c1_261, %c0_262, %c0_263] : memref<2x4x1x8xf32, #tpu.memory_space<vmem>>, vector<1x1x1x8xf32>
    %323 = vector.shape_cast %322 : vector<1x1x1x8xf32> to vector<1x8xf32>
    %324 = vector.broadcast %323 : vector<1x8xf32> to vector<8x8xf32>
    %325 = arith.addf %321, %324 : vector<8x8xf32>
    %cst_264 = arith.constant dense<0.000000e+00> : vector<8x8xf32>
    %326 = tpu.matmul %311, %318, %cst_264 {dimension_numbers = #tpu.dot_dimension_numbers<[1], [1], [0], [0], [0, 0, 1, 0], [], []>} : vector<8x8xf32>, vector<8x8xf32>, vector<8x8xf32> -> vector<8x8xf32>
    %cst_265 = arith.constant 0.353553385 : f32
    %327 = vector.broadcast %cst_265 : f32 to vector<8x8xf32>
    %328 = arith.mulf %326, %327 : vector<8x8xf32>
    %329 = vector.broadcast %25 : vector<1x8xf32> to vector<8x8xf32>
    %330 = arith.addf %328, %329 : vector<8x8xf32>
    %cst_266 = arith.constant dense<0xFF800000> : vector<8xf32>
    %331 = vector.multi_reduction <maximumf>, %330, %cst_266 [1] : vector<8x8xf32> to vector<8xf32>
    %332 = vector.shape_cast %331 : vector<8xf32> to vector<8x1xf32>
    %333 = vector.broadcast %332 : vector<8x1xf32> to vector<8x8xf32>
    %334 = arith.subf %330, %333 : vector<8x8xf32>
    %335 = math.exp %334 : vector<8x8xf32>
    %cst_267 = arith.constant dense<0.000000e+00> : vector<8xf32>
    %336 = vector.multi_reduction <add>, %335, %cst_267 [1] : vector<8x8xf32> to vector<8xf32>
    %337 = vector.shape_cast %336 : vector<8xf32> to vector<8x1xf32>
    %338 = tpu.reciprocal %337 {approx = true} : vector<8x1xf32> -> vector<8x1xf32>
    %339 = vector.broadcast %338 : vector<8x1xf32> to vector<8x8xf32>
    %340 = arith.mulf %335, %339 : vector<8x8xf32>
    %cst_268 = arith.constant dense<0.000000e+00> : vector<8x8xf32>
    %341 = tpu.matmul %340, %325, %cst_268 {dimension_numbers = #tpu.dot_dimension_numbers<[1], [0], [0], [1], [0, 0, 1, 1], [], []>} : vector<8x8xf32>, vector<8x8xf32>, vector<8x8xf32> -> vector<8x8xf32>
    %c1_269 = arith.constant 1 : index
    %c1_270 = arith.constant 1 : index
    %c0_271 = arith.constant 0 : index
    %c0_272 = arith.constant 0 : index
    %342 = vector.load %arg11[%c1_269, %c1_270, %c0_271, %c0_272] : memref<2x4x8x32xf32, #tpu.memory_space<vmem>>, vector<1x1x8x32xf32>
    %343 = vector.shape_cast %342 : vector<1x1x8x32xf32> to vector<8x32xf32>
    %cst_273 = arith.constant dense<0.000000e+00> : vector<8x32xf32>
    %344 = tpu.matmul %341, %343, %cst_273 {dimension_numbers = #tpu.dot_dimension_numbers<[1], [0], [0], [1], [0, 0, 1, 1], [], []>} : vector<8x8xf32>, vector<8x32xf32>, vector<8x32xf32> -> vector<8x32xf32>
    %345 = arith.addf %304, %344 : vector<8x32xf32>
    %c1_274 = arith.constant 1 : index
    %c2_275 = arith.constant 2 : index
    %c0_276 = arith.constant 0 : index
    %c0_277 = arith.constant 0 : index
    %346 = vector.load %arg5[%c1_274, %c2_275, %c0_276, %c0_277] : memref<2x4x32x8xf32, #tpu.memory_space<vmem>>, vector<1x1x32x8xf32>
    %347 = vector.shape_cast %346 : vector<1x1x32x8xf32> to vector<32x8xf32>
    %cst_278 = arith.constant dense<0.000000e+00> : vector<8x8xf32>
    %348 = tpu.matmul %264, %347, %cst_278 {dimension_numbers = #tpu.dot_dimension_numbers<[1], [0], [0], [1], [0, 0, 1, 1], [], []>} : vector<8x32xf32>, vector<32x8xf32>, vector<8x8xf32> -> vector<8x8xf32>
    %c1_279 = arith.constant 1 : index
    %c2_280 = arith.constant 2 : index
    %c0_281 = arith.constant 0 : index
    %c0_282 = arith.constant 0 : index
    %349 = vector.load %arg8[%c1_279, %c2_280, %c0_281, %c0_282] : memref<2x4x1x8xf32, #tpu.memory_space<vmem>>, vector<1x1x1x8xf32>
    %350 = vector.shape_cast %349 : vector<1x1x1x8xf32> to vector<1x8xf32>
    %351 = vector.broadcast %350 : vector<1x8xf32> to vector<8x8xf32>
    %352 = arith.addf %348, %351 : vector<8x8xf32>
    %c1_283 = arith.constant 1 : index
    %c2_284 = arith.constant 2 : index
    %c0_285 = arith.constant 0 : index
    %c0_286 = arith.constant 0 : index
    %353 = vector.load %arg6[%c1_283, %c2_284, %c0_285, %c0_286] : memref<2x4x32x8xf32, #tpu.memory_space<vmem>>, vector<1x1x32x8xf32>
    %354 = vector.shape_cast %353 : vector<1x1x32x8xf32> to vector<32x8xf32>
    %cst_287 = arith.constant dense<0.000000e+00> : vector<8x8xf32>
    %355 = tpu.matmul %264, %354, %cst_287 {dimension_numbers = #tpu.dot_dimension_numbers<[1], [0], [0], [1], [0, 0, 1, 1], [], []>} : vector<8x32xf32>, vector<32x8xf32>, vector<8x8xf32> -> vector<8x8xf32>
    %c1_288 = arith.constant 1 : index
    %c2_289 = arith.constant 2 : index
    %c0_290 = arith.constant 0 : index
    %c0_291 = arith.constant 0 : index
    %356 = vector.load %arg9[%c1_288, %c2_289, %c0_290, %c0_291] : memref<2x4x1x8xf32, #tpu.memory_space<vmem>>, vector<1x1x1x8xf32>
    %357 = vector.shape_cast %356 : vector<1x1x1x8xf32> to vector<1x8xf32>
    %358 = vector.broadcast %357 : vector<1x8xf32> to vector<8x8xf32>
    %359 = arith.addf %355, %358 : vector<8x8xf32>
    %c1_292 = arith.constant 1 : index
    %c2_293 = arith.constant 2 : index
    %c0_294 = arith.constant 0 : index
    %c0_295 = arith.constant 0 : index
    %360 = vector.load %arg7[%c1_292, %c2_293, %c0_294, %c0_295] : memref<2x4x32x8xf32, #tpu.memory_space<vmem>>, vector<1x1x32x8xf32>
    %361 = vector.shape_cast %360 : vector<1x1x32x8xf32> to vector<32x8xf32>
    %cst_296 = arith.constant dense<0.000000e+00> : vector<8x8xf32>
    %362 = tpu.matmul %264, %361, %cst_296 {dimension_numbers = #tpu.dot_dimension_numbers<[1], [0], [0], [1], [0, 0, 1, 1], [], []>} : vector<8x32xf32>, vector<32x8xf32>, vector<8x8xf32> -> vector<8x8xf32>
    %c1_297 = arith.constant 1 : index
    %c2_298 = arith.constant 2 : index
    %c0_299 = arith.constant 0 : index
    %c0_300 = arith.constant 0 : index
    %363 = vector.load %arg10[%c1_297, %c2_298, %c0_299, %c0_300] : memref<2x4x1x8xf32, #tpu.memory_space<vmem>>, vector<1x1x1x8xf32>
    %364 = vector.shape_cast %363 : vector<1x1x1x8xf32> to vector<1x8xf32>
    %365 = vector.broadcast %364 : vector<1x8xf32> to vector<8x8xf32>
    %366 = arith.addf %362, %365 : vector<8x8xf32>
    %cst_301 = arith.constant dense<0.000000e+00> : vector<8x8xf32>
    %367 = tpu.matmul %352, %359, %cst_301 {dimension_numbers = #tpu.dot_dimension_numbers<[1], [1], [0], [0], [0, 0, 1, 0], [], []>} : vector<8x8xf32>, vector<8x8xf32>, vector<8x8xf32> -> vector<8x8xf32>
    %cst_302 = arith.constant 0.353553385 : f32
    %368 = vector.broadcast %cst_302 : f32 to vector<8x8xf32>
    %369 = arith.mulf %367, %368 : vector<8x8xf32>
    %370 = vector.broadcast %25 : vector<1x8xf32> to vector<8x8xf32>
    %371 = arith.addf %369, %370 : vector<8x8xf32>
    %cst_303 = arith.constant dense<0xFF800000> : vector<8xf32>
    %372 = vector.multi_reduction <maximumf>, %371, %cst_303 [1] : vector<8x8xf32> to vector<8xf32>
    %373 = vector.shape_cast %372 : vector<8xf32> to vector<8x1xf32>
    %374 = vector.broadcast %373 : vector<8x1xf32> to vector<8x8xf32>
    %375 = arith.subf %371, %374 : vector<8x8xf32>
    %376 = math.exp %375 : vector<8x8xf32>
    %cst_304 = arith.constant dense<0.000000e+00> : vector<8xf32>
    %377 = vector.multi_reduction <add>, %376, %cst_304 [1] : vector<8x8xf32> to vector<8xf32>
    %378 = vector.shape_cast %377 : vector<8xf32> to vector<8x1xf32>
    %379 = tpu.reciprocal %378 {approx = true} : vector<8x1xf32> -> vector<8x1xf32>
    %380 = vector.broadcast %379 : vector<8x1xf32> to vector<8x8xf32>
    %381 = arith.mulf %376, %380 : vector<8x8xf32>
    %cst_305 = arith.constant dense<0.000000e+00> : vector<8x8xf32>
    %382 = tpu.matmul %381, %366, %cst_305 {dimension_numbers = #tpu.dot_dimension_numbers<[1], [0], [0], [1], [0, 0, 1, 1], [], []>} : vector<8x8xf32>, vector<8x8xf32>, vector<8x8xf32> -> vector<8x8xf32>
    %c1_306 = arith.constant 1 : index
    %c2_307 = arith.constant 2 : index
    %c0_308 = arith.constant 0 : index
    %c0_309 = arith.constant 0 : index
    %383 = vector.load %arg11[%c1_306, %c2_307, %c0_308, %c0_309] : memref<2x4x8x32xf32, #tpu.memory_space<vmem>>, vector<1x1x8x32xf32>
    %384 = vector.shape_cast %383 : vector<1x1x8x32xf32> to vector<8x32xf32>
    %cst_310 = arith.constant dense<0.000000e+00> : vector<8x32xf32>
    %385 = tpu.matmul %382, %384, %cst_310 {dimension_numbers = #tpu.dot_dimension_numbers<[1], [0], [0], [1], [0, 0, 1, 1], [], []>} : vector<8x8xf32>, vector<8x32xf32>, vector<8x32xf32> -> vector<8x32xf32>
    %386 = arith.addf %345, %385 : vector<8x32xf32>
    %c1_311 = arith.constant 1 : index
    %c3_312 = arith.constant 3 : index
    %c0_313 = arith.constant 0 : index
    %c0_314 = arith.constant 0 : index
    %387 = vector.load %arg5[%c1_311, %c3_312, %c0_313, %c0_314] : memref<2x4x32x8xf32, #tpu.memory_space<vmem>>, vector<1x1x32x8xf32>
    %388 = vector.shape_cast %387 : vector<1x1x32x8xf32> to vector<32x8xf32>
    %cst_315 = arith.constant dense<0.000000e+00> : vector<8x8xf32>
    %389 = tpu.matmul %264, %388, %cst_315 {dimension_numbers = #tpu.dot_dimension_numbers<[1], [0], [0], [1], [0, 0, 1, 1], [], []>} : vector<8x32xf32>, vector<32x8xf32>, vector<8x8xf32> -> vector<8x8xf32>
    %c1_316 = arith.constant 1 : index
    %c3_317 = arith.constant 3 : index
    %c0_318 = arith.constant 0 : index
    %c0_319 = arith.constant 0 : index
    %390 = vector.load %arg8[%c1_316, %c3_317, %c0_318, %c0_319] : memref<2x4x1x8xf32, #tpu.memory_space<vmem>>, vector<1x1x1x8xf32>
    %391 = vector.shape_cast %390 : vector<1x1x1x8xf32> to vector<1x8xf32>
    %392 = vector.broadcast %391 : vector<1x8xf32> to vector<8x8xf32>
    %393 = arith.addf %389, %392 : vector<8x8xf32>
    %c1_320 = arith.constant 1 : index
    %c3_321 = arith.constant 3 : index
    %c0_322 = arith.constant 0 : index
    %c0_323 = arith.constant 0 : index
    %394 = vector.load %arg6[%c1_320, %c3_321, %c0_322, %c0_323] : memref<2x4x32x8xf32, #tpu.memory_space<vmem>>, vector<1x1x32x8xf32>
    %395 = vector.shape_cast %394 : vector<1x1x32x8xf32> to vector<32x8xf32>
    %cst_324 = arith.constant dense<0.000000e+00> : vector<8x8xf32>
    %396 = tpu.matmul %264, %395, %cst_324 {dimension_numbers = #tpu.dot_dimension_numbers<[1], [0], [0], [1], [0, 0, 1, 1], [], []>} : vector<8x32xf32>, vector<32x8xf32>, vector<8x8xf32> -> vector<8x8xf32>
    %c1_325 = arith.constant 1 : index
    %c3_326 = arith.constant 3 : index
    %c0_327 = arith.constant 0 : index
    %c0_328 = arith.constant 0 : index
    %397 = vector.load %arg9[%c1_325, %c3_326, %c0_327, %c0_328] : memref<2x4x1x8xf32, #tpu.memory_space<vmem>>, vector<1x1x1x8xf32>
    %398 = vector.shape_cast %397 : vector<1x1x1x8xf32> to vector<1x8xf32>
    %399 = vector.broadcast %398 : vector<1x8xf32> to vector<8x8xf32>
    %400 = arith.addf %396, %399 : vector<8x8xf32>
    %c1_329 = arith.constant 1 : index
    %c3_330 = arith.constant 3 : index
    %c0_331 = arith.constant 0 : index
    %c0_332 = arith.constant 0 : index
    %401 = vector.load %arg7[%c1_329, %c3_330, %c0_331, %c0_332] : memref<2x4x32x8xf32, #tpu.memory_space<vmem>>, vector<1x1x32x8xf32>
    %402 = vector.shape_cast %401 : vector<1x1x32x8xf32> to vector<32x8xf32>
    %cst_333 = arith.constant dense<0.000000e+00> : vector<8x8xf32>
    %403 = tpu.matmul %264, %402, %cst_333 {dimension_numbers = #tpu.dot_dimension_numbers<[1], [0], [0], [1], [0, 0, 1, 1], [], []>} : vector<8x32xf32>, vector<32x8xf32>, vector<8x8xf32> -> vector<8x8xf32>
    %c1_334 = arith.constant 1 : index
    %c3_335 = arith.constant 3 : index
    %c0_336 = arith.constant 0 : index
    %c0_337 = arith.constant 0 : index
    %404 = vector.load %arg10[%c1_334, %c3_335, %c0_336, %c0_337] : memref<2x4x1x8xf32, #tpu.memory_space<vmem>>, vector<1x1x1x8xf32>
    %405 = vector.shape_cast %404 : vector<1x1x1x8xf32> to vector<1x8xf32>
    %406 = vector.broadcast %405 : vector<1x8xf32> to vector<8x8xf32>
    %407 = arith.addf %403, %406 : vector<8x8xf32>
    %cst_338 = arith.constant dense<0.000000e+00> : vector<8x8xf32>
    %408 = tpu.matmul %393, %400, %cst_338 {dimension_numbers = #tpu.dot_dimension_numbers<[1], [1], [0], [0], [0, 0, 1, 0], [], []>} : vector<8x8xf32>, vector<8x8xf32>, vector<8x8xf32> -> vector<8x8xf32>
    %cst_339 = arith.constant 0.353553385 : f32
    %409 = vector.broadcast %cst_339 : f32 to vector<8x8xf32>
    %410 = arith.mulf %408, %409 : vector<8x8xf32>
    %411 = vector.broadcast %25 : vector<1x8xf32> to vector<8x8xf32>
    %412 = arith.addf %410, %411 : vector<8x8xf32>
    %cst_340 = arith.constant dense<0xFF800000> : vector<8xf32>
    %413 = vector.multi_reduction <maximumf>, %412, %cst_340 [1] : vector<8x8xf32> to vector<8xf32>
    %414 = vector.shape_cast %413 : vector<8xf32> to vector<8x1xf32>
    %415 = vector.broadcast %414 : vector<8x1xf32> to vector<8x8xf32>
    %416 = arith.subf %412, %415 : vector<8x8xf32>
    %417 = math.exp %416 : vector<8x8xf32>
    %cst_341 = arith.constant dense<0.000000e+00> : vector<8xf32>
    %418 = vector.multi_reduction <add>, %417, %cst_341 [1] : vector<8x8xf32> to vector<8xf32>
    %419 = vector.shape_cast %418 : vector<8xf32> to vector<8x1xf32>
    %420 = tpu.reciprocal %419 {approx = true} : vector<8x1xf32> -> vector<8x1xf32>
    %421 = vector.broadcast %420 : vector<8x1xf32> to vector<8x8xf32>
    %422 = arith.mulf %417, %421 : vector<8x8xf32>
    %cst_342 = arith.constant dense<0.000000e+00> : vector<8x8xf32>
    %423 = tpu.matmul %422, %407, %cst_342 {dimension_numbers = #tpu.dot_dimension_numbers<[1], [0], [0], [1], [0, 0, 1, 1], [], []>} : vector<8x8xf32>, vector<8x8xf32>, vector<8x8xf32> -> vector<8x8xf32>
    %c1_343 = arith.constant 1 : index
    %c3_344 = arith.constant 3 : index
    %c0_345 = arith.constant 0 : index
    %c0_346 = arith.constant 0 : index
    %424 = vector.load %arg11[%c1_343, %c3_344, %c0_345, %c0_346] : memref<2x4x8x32xf32, #tpu.memory_space<vmem>>, vector<1x1x8x32xf32>
    %425 = vector.shape_cast %424 : vector<1x1x8x32xf32> to vector<8x32xf32>
    %cst_347 = arith.constant dense<0.000000e+00> : vector<8x32xf32>
    %426 = tpu.matmul %423, %425, %cst_347 {dimension_numbers = #tpu.dot_dimension_numbers<[1], [0], [0], [1], [0, 0, 1, 1], [], []>} : vector<8x8xf32>, vector<8x32xf32>, vector<8x32xf32> -> vector<8x32xf32>
    %427 = arith.addf %386, %426 : vector<8x32xf32>
    %c1_348 = arith.constant 1 : index
    %c0_349 = arith.constant 0 : index
    %c0_350 = arith.constant 0 : index
    %428 = vector.load %arg12[%c1_348, %c0_349, %c0_350] : memref<2x1x32xf32, #tpu.memory_space<vmem>>, vector<1x1x32xf32>
    %429 = vector.shape_cast %428 : vector<1x1x32xf32> to vector<1x32xf32>
    %430 = vector.broadcast %429 : vector<1x32xf32> to vector<8x32xf32>
    %431 = arith.addf %427, %430 : vector<8x32xf32>
    %432 = arith.addf %431, %264 : vector<8x32xf32>
    %c1_351 = arith.constant 1 : index
    %c0_352 = arith.constant 0 : index
    %c0_353 = arith.constant 0 : index
    %433 = vector.load %arg13[%c1_351, %c0_352, %c0_353] : memref<2x1x32xf32, #tpu.memory_space<vmem>>, vector<1x1x32xf32>
    %434 = vector.shape_cast %433 : vector<1x1x32xf32> to vector<1x32xf32>
    %c1_354 = arith.constant 1 : index
    %c0_355 = arith.constant 0 : index
    %c0_356 = arith.constant 0 : index
    %435 = vector.load %arg14[%c1_354, %c0_355, %c0_356] : memref<2x1x32xf32, #tpu.memory_space<vmem>>, vector<1x1x32xf32>
    %436 = vector.shape_cast %435 : vector<1x1x32xf32> to vector<1x32xf32>
    %cst_357 = arith.constant dense<0.000000e+00> : vector<8xf32>
    %437 = vector.multi_reduction <add>, %432, %cst_357 [1] : vector<8x32xf32> to vector<8xf32>
    %438 = vector.shape_cast %437 : vector<8xf32> to vector<8x1xf32>
    %cst_358 = arith.constant 3.200000e+01 : f32
    %439 = vector.broadcast %cst_358 : f32 to vector<8x1xf32>
    %440 = arith.divf %438, %439 : vector<8x1xf32>
    %441 = vector.broadcast %440 : vector<8x1xf32> to vector<8x32xf32>
    %442 = arith.subf %432, %441 : vector<8x32xf32>
    %443 = arith.mulf %442, %442 : vector<8x32xf32>
    %cst_359 = arith.constant dense<0.000000e+00> : vector<8xf32>
    %444 = vector.multi_reduction <add>, %443, %cst_359 [1] : vector<8x32xf32> to vector<8xf32>
    %445 = vector.shape_cast %444 : vector<8xf32> to vector<8x1xf32>
    %cst_360 = arith.constant 3.200000e+01 : f32
    %446 = vector.broadcast %cst_360 : f32 to vector<8x1xf32>
    %447 = arith.divf %445, %446 : vector<8x1xf32>
    %cst_361 = arith.constant 9.99999996E-13 : f32
    %448 = vector.broadcast %cst_361 : f32 to vector<8x1xf32>
    %449 = arith.addf %447, %448 : vector<8x1xf32>
    %450 = math.rsqrt %449 : vector<8x1xf32>
    %451 = vector.broadcast %450 : vector<8x1xf32> to vector<8x32xf32>
    %452 = arith.mulf %442, %451 : vector<8x32xf32>
    %453 = vector.broadcast %434 : vector<1x32xf32> to vector<8x32xf32>
    %454 = arith.mulf %452, %453 : vector<8x32xf32>
    %455 = vector.broadcast %436 : vector<1x32xf32> to vector<8x32xf32>
    %456 = arith.addf %454, %455 : vector<8x32xf32>
    %c1_362 = arith.constant 1 : index
    %c0_363 = arith.constant 0 : index
    %c0_364 = arith.constant 0 : index
    %457 = vector.load %arg15[%c1_362, %c0_363, %c0_364] : memref<2x32x64xf32, #tpu.memory_space<vmem>>, vector<1x32x64xf32>
    %458 = vector.shape_cast %457 : vector<1x32x64xf32> to vector<32x64xf32>
    %cst_365 = arith.constant dense<0.000000e+00> : vector<8x64xf32>
    %459 = tpu.matmul %456, %458, %cst_365 {dimension_numbers = #tpu.dot_dimension_numbers<[1], [0], [0], [1], [0, 0, 1, 1], [], []>} : vector<8x32xf32>, vector<32x64xf32>, vector<8x64xf32> -> vector<8x64xf32>
    %c1_366 = arith.constant 1 : index
    %c0_367 = arith.constant 0 : index
    %c0_368 = arith.constant 0 : index
    %460 = vector.load %arg16[%c1_366, %c0_367, %c0_368] : memref<2x1x64xf32, #tpu.memory_space<vmem>>, vector<1x1x64xf32>
    %461 = vector.shape_cast %460 : vector<1x1x64xf32> to vector<1x64xf32>
    %462 = vector.broadcast %461 : vector<1x64xf32> to vector<8x64xf32>
    %463 = arith.addf %459, %462 : vector<8x64xf32>
    %cst_369 = arith.constant 5.000000e-01 : f32
    %464 = vector.broadcast %cst_369 : f32 to vector<8x64xf32>
    %465 = arith.mulf %464, %463 : vector<8x64xf32>
    %cst_370 = arith.constant 0.707106769 : f32
    %466 = vector.broadcast %cst_370 : f32 to vector<8x64xf32>
    %467 = arith.mulf %463, %466 : vector<8x64xf32>
    %468 = math.erf %467 : vector<8x64xf32>
    %cst_371 = arith.constant 1.000000e+00 : f32
    %469 = vector.broadcast %cst_371 : f32 to vector<8x64xf32>
    %470 = arith.addf %469, %468 : vector<8x64xf32>
    %471 = arith.mulf %465, %470 : vector<8x64xf32>
    %c1_372 = arith.constant 1 : index
    %c0_373 = arith.constant 0 : index
    %c0_374 = arith.constant 0 : index
    %472 = vector.load %arg17[%c1_372, %c0_373, %c0_374] : memref<2x64x32xf32, #tpu.memory_space<vmem>>, vector<1x64x32xf32>
    %473 = vector.shape_cast %472 : vector<1x64x32xf32> to vector<64x32xf32>
    %cst_375 = arith.constant dense<0.000000e+00> : vector<8x32xf32>
    %474 = tpu.matmul %471, %473, %cst_375 {dimension_numbers = #tpu.dot_dimension_numbers<[1], [0], [0], [1], [0, 0, 1, 1], [], []>} : vector<8x64xf32>, vector<64x32xf32>, vector<8x32xf32> -> vector<8x32xf32>
    %c1_376 = arith.constant 1 : index
    %c0_377 = arith.constant 0 : index
    %c0_378 = arith.constant 0 : index
    %475 = vector.load %arg18[%c1_376, %c0_377, %c0_378] : memref<2x1x32xf32, #tpu.memory_space<vmem>>, vector<1x1x32xf32>
    %476 = vector.shape_cast %475 : vector<1x1x32xf32> to vector<1x32xf32>
    %477 = vector.broadcast %476 : vector<1x32xf32> to vector<8x32xf32>
    %478 = arith.addf %474, %477 : vector<8x32xf32>
    %479 = arith.addf %478, %456 : vector<8x32xf32>
    %c1_379 = arith.constant 1 : index
    %c0_380 = arith.constant 0 : index
    %c0_381 = arith.constant 0 : index
    %480 = vector.load %arg19[%c1_379, %c0_380, %c0_381] : memref<2x1x32xf32, #tpu.memory_space<vmem>>, vector<1x1x32xf32>
    %481 = vector.shape_cast %480 : vector<1x1x32xf32> to vector<1x32xf32>
    %c1_382 = arith.constant 1 : index
    %c0_383 = arith.constant 0 : index
    %c0_384 = arith.constant 0 : index
    %482 = vector.load %arg20[%c1_382, %c0_383, %c0_384] : memref<2x1x32xf32, #tpu.memory_space<vmem>>, vector<1x1x32xf32>
    %483 = vector.shape_cast %482 : vector<1x1x32xf32> to vector<1x32xf32>
    %cst_385 = arith.constant dense<0.000000e+00> : vector<8xf32>
    %484 = vector.multi_reduction <add>, %479, %cst_385 [1] : vector<8x32xf32> to vector<8xf32>
    %485 = vector.shape_cast %484 : vector<8xf32> to vector<8x1xf32>
    %cst_386 = arith.constant 3.200000e+01 : f32
    %486 = vector.broadcast %cst_386 : f32 to vector<8x1xf32>
    %487 = arith.divf %485, %486 : vector<8x1xf32>
    %488 = vector.broadcast %487 : vector<8x1xf32> to vector<8x32xf32>
    %489 = arith.subf %479, %488 : vector<8x32xf32>
    %490 = arith.mulf %489, %489 : vector<8x32xf32>
    %cst_387 = arith.constant dense<0.000000e+00> : vector<8xf32>
    %491 = vector.multi_reduction <add>, %490, %cst_387 [1] : vector<8x32xf32> to vector<8xf32>
    %492 = vector.shape_cast %491 : vector<8xf32> to vector<8x1xf32>
    %cst_388 = arith.constant 3.200000e+01 : f32
    %493 = vector.broadcast %cst_388 : f32 to vector<8x1xf32>
    %494 = arith.divf %492, %493 : vector<8x1xf32>
    %cst_389 = arith.constant 9.99999996E-13 : f32
    %495 = vector.broadcast %cst_389 : f32 to vector<8x1xf32>
    %496 = arith.addf %494, %495 : vector<8x1xf32>
    %497 = math.rsqrt %496 : vector<8x1xf32>
    %498 = vector.broadcast %497 : vector<8x1xf32> to vector<8x32xf32>
    %499 = arith.mulf %489, %498 : vector<8x32xf32>
    %500 = vector.broadcast %481 : vector<1x32xf32> to vector<8x32xf32>
    %501 = arith.mulf %499, %500 : vector<8x32xf32>
    %502 = vector.broadcast %483 : vector<1x32xf32> to vector<8x32xf32>
    %503 = arith.addf %501, %502 : vector<8x32xf32>
    %c0_390 = arith.constant 0 : index
    %c0_391 = arith.constant 0 : index
    %c0_392 = arith.constant 0 : index
    %504 = vector.load %arg21[%c0_390, %c0_391, %c0_392] : memref<1x8x32xf32, #tpu.memory_space<vmem>>, vector<1x8x32xf32>
    %505 = vector.shape_cast %504 : vector<1x8x32xf32> to vector<8x32xf32>
    %506 = vector.shape_cast %503 : vector<8x32xf32> to vector<1x8x32xf32>
    tpu.vector_store %arg21[%c0_390, %c0_391, %c0_392], %506 {strides = array<i32>} : memref<1x8x32xf32, #tpu.memory_space<vmem>>, vector<1x8x32xf32>,
    return
  }
  func.func @transform_0(%arg0: i32) -> (i32, i32, i32) {
    %c0_i32 = arith.constant 0 : i32
    %c0_i32_0 = arith.constant 0 : i32
    %c0_i32_1 = arith.constant 0 : i32
    return %arg0, %c0_i32, %c0_i32_0 : i32, i32, i32
  }
  func.func @transform_1(%arg0: i32) -> (i32, i32, i32) {
    %c0_i32 = arith.constant 0 : i32
    %c0_i32_0 = arith.constant 0 : i32
    %c0_i32_1 = arith.constant 0 : i32
    return %arg0, %c0_i32, %c0_i32_0 : i32, i32, i32
  }
  func.func @transform_2(%arg0: i32) -> (i32, i32) {
    %c0_i32 = arith.constant 0 : i32
    %c0_i32_0 = arith.constant 0 : i32
    %c0_i32_1 = arith.constant 0 : i32
    return %c0_i32, %c0_i32_0 : i32, i32
  }
  func.func @transform_3(%arg0: i32) -> (i32, i32) {
    %c0_i32 = arith.constant 0 : i32
    %c0_i32_0 = arith.constant 0 : i32
    %c0_i32_1 = arith.constant 0 : i32
    return %c0_i32, %c0_i32_0 : i32, i32
  }
  func.func @transform_4(%arg0: i32) -> (i32, i32, i32, i32) {
    %c0_i32 = arith.constant 0 : i32
    %c0_i32_0 = arith.constant 0 : i32
    %c0_i32_1 = arith.constant 0 : i32
    %c0_i32_2 = arith.constant 0 : i32
    %c0_i32_3 = arith.constant 0 : i32
    return %c0_i32, %c0_i32_0, %c0_i32_1, %c0_i32_2 : i32, i32, i32, i32
  }
  func.func @transform_5(%arg0: i32) -> (i32, i32, i32, i32) {
    %c0_i32 = arith.constant 0 : i32
    %c0_i32_0 = arith.constant 0 : i32
    %c0_i32_1 = arith.constant 0 : i32
    %c0_i32_2 = arith.constant 0 : i32
    %c0_i32_3 = arith.constant 0 : i32
    return %c0_i32, %c0_i32_0, %c0_i32_1, %c0_i32_2 : i32, i32, i32, i32
  }
  func.func @transform_6(%arg0: i32) -> (i32, i32, i32, i32) {
    %c0_i32 = arith.constant 0 : i32
    %c0_i32_0 = arith.constant 0 : i32
    %c0_i32_1 = arith.constant 0 : i32
    %c0_i32_2 = arith.constant 0 : i32
    %c0_i32_3 = arith.constant 0 : i32
    return %c0_i32, %c0_i32_0, %c0_i32_1, %c0_i32_2 : i32, i32, i32, i32
  }
  func.func @transform_7(%arg0: i32) -> (i32, i32, i32, i32) {
    %c0_i32 = arith.constant 0 : i32
    %c0_i32_0 = arith.constant 0 : i32
    %c0_i32_1 = arith.constant 0 : i32
    %c0_i32_2 = arith.constant 0 : i32
    %c0_i32_3 = arith.constant 0 : i32
    return %c0_i32, %c0_i32_0, %c0_i32_1, %c0_i32_2 : i32, i32, i32, i32
  }
  func.func @transform_8(%arg0: i32) -> (i32, i32, i32, i32) {
    %c0_i32 = arith.constant 0 : i32
    %c0_i32_0 = arith.constant 0 : i32
    %c0_i32_1 = arith.constant 0 : i32
    %c0_i32_2 = arith.constant 0 : i32
    %c0_i32_3 = arith.constant 0 : i32
    return %c0_i32, %c0_i32_0, %c0_i32_1, %c0_i32_2 : i32, i32, i32, i32
  }
  func.func @transform_9(%arg0: i32) -> (i32, i32, i32, i32) {
    %c0_i32 = arith.constant 0 : i32
    %c0_i32_0 = arith.constant 0 : i32
    %c0_i32_1 = arith.constant 0 : i32
    %c0_i32_2 = arith.constant 0 : i32
    %c0_i32_3 = arith.constant 0 : i32
    return %c0_i32, %c0_i32_0, %c0_i32_1, %c0_i32_2 : i32, i32, i32, i32
  }
  func.func @transform_10(%arg0: i32) -> (i32, i32, i32, i32) {
    %c0_i32 = arith.constant 0 : i32
    %c0_i32_0 = arith.constant 0 : i32
    %c0_i32_1 = arith.constant 0 : i32
    %c0_i32_2 = arith.constant 0 : i32
    %c0_i32_3 = arith.constant 0 : i32
    return %c0_i32, %c0_i32_0, %c0_i32_1, %c0_i32_2 : i32, i32, i32, i32
  }
  func.func @transform_11(%arg0: i32) -> (i32, i32, i32) {
    %c0_i32 = arith.constant 0 : i32
    %c0_i32_0 = arith.constant 0 : i32
    %c0_i32_1 = arith.constant 0 : i32
    %c0_i32_2 = arith.constant 0 : i32
    return %c0_i32, %c0_i32_0, %c0_i32_1 : i32, i32, i32
  }
  func.func @transform_12(%arg0: i32) -> (i32, i32, i32) {
    %c0_i32 = arith.constant 0 : i32
    %c0_i32_0 = arith.constant 0 : i32
    %c0_i32_1 = arith.constant 0 : i32
    %c0_i32_2 = arith.constant 0 : i32
    return %c0_i32, %c0_i32_0, %c0_i32_1 : i32, i32, i32
  }
  func.func @transform_13(%arg0: i32) -> (i32, i32, i32) {
    %c0_i32 = arith.constant 0 : i32
    %c0_i32_0 = arith.constant 0 : i32
    %c0_i32_1 = arith.constant 0 : i32
    %c0_i32_2 = arith.constant 0 : i32
    return %c0_i32, %c0_i32_0, %c0_i32_1 : i32, i32, i32
  }
  func.func @transform_14(%arg0: i32) -> (i32, i32, i32) {
    %c0_i32 = arith.constant 0 : i32
    %c0_i32_0 = arith.constant 0 : i32
    %c0_i32_1 = arith.constant 0 : i32
    %c0_i32_2 = arith.constant 0 : i32
    return %c0_i32, %c0_i32_0, %c0_i32_1 : i32, i32, i32
  }
  func.func @transform_15(%arg0: i32) -> (i32, i32, i32) {
    %c0_i32 = arith.constant 0 : i32
    %c0_i32_0 = arith.constant 0 : i32
    %c0_i32_1 = arith.constant 0 : i32
    %c0_i32_2 = arith.constant 0 : i32
    return %c0_i32, %c0_i32_0, %c0_i32_1 : i32, i32, i32
  }
  func.func @transform_16(%arg0: i32) -> (i32, i32, i32) {
    %c0_i32 = arith.constant 0 : i32
    %c0_i32_0 = arith.constant 0 : i32
    %c0_i32_1 = arith.constant 0 : i32
    %c0_i32_2 = arith.constant 0 : i32
    return %c0_i32, %c0_i32_0, %c0_i32_1 : i32, i32, i32
  }
  func.func @transform_17(%arg0: i32) -> (i32, i32, i32) {
    %c0_i32 = arith.constant 0 : i32
    %c0_i32_0 = arith.constant 0 : i32
    %c0_i32_1 = arith.constant 0 : i32
    %c0_i32_2 = arith.constant 0 : i32
    return %c0_i32, %c0_i32_0, %c0_i32_1 : i32, i32, i32
  }
  func.func @transform_18(%arg0: i32) -> (i32, i32, i32) {
    %c0_i32 = arith.constant 0 : i32
    %c0_i32_0 = arith.constant 0 : i32
    %c0_i32_1 = arith.constant 0 : i32
    %c0_i32_2 = arith.constant 0 : i32
    return %c0_i32, %c0_i32_0, %c0_i32_1 : i32, i32, i32
  }
  func.func @transform_19(%arg0: i32) -> (i32, i32, i32) {
    %c0_i32 = arith.constant 0 : i32
    %c0_i32_0 = arith.constant 0 : i32
    %c0_i32_1 = arith.constant 0 : i32
    %c0_i32_2 = arith.constant 0 : i32
    return %c0_i32, %c0_i32_0, %c0_i32_1 : i32, i32, i32
  }
  func.func @transform_20(%arg0: i32) -> (i32, i32, i32) {
    %c0_i32 = arith.constant 0 : i32
    %c0_i32_0 = arith.constant 0 : i32
    %c0_i32_1 = arith.constant 0 : i32
    return %arg0, %c0_i32, %c0_i32_0 : i32, i32, i32
  }
}

</mosaic_0001>

<llo_original>
// kernel: bert_forward.1
$region0: #{bert_forward.1}
  #allocation0 [shape = 'u32[]', space=smem, size = 0x4, offset = 0x4, fixed_abs, tag = 'smem constant byte address 0x4 - core index']
  #allocation1 [shape = 'u32[144,128]{1,0:T(1,128)}', space=vmem, size = 0x12000, scoped, tag = 'internal scratch']
  %s0 = inlined_call_operand.vmem [shape: f32[2,8,32], index: 0, kind: input, shape index: {}]
  %s1 = inlined_call_operand.vmem [shape: f32[2,1,8], index: 1, kind: input, shape index: {}]
  %s2 = inlined_call_operand.vmem [shape: f32[1,32], index: 2, kind: input, shape index: {}]
  %s3 = inlined_call_operand.vmem [shape: f32[1,32], index: 3, kind: input, shape index: {}]
  %s4 = inlined_call_operand.vmem [shape: f32[2,4,32,8], index: 4, kind: input, shape index: {}]
  %s5 = inlined_call_operand.vmem [shape: f32[2,4,32,8], index: 5, kind: input, shape index: {}]
  %s6 = inlined_call_operand.vmem [shape: f32[2,4,32,8], index: 6, kind: input, shape index: {}]
  %s7 = inlined_call_operand.vmem [shape: f32[2,4,1,8], index: 7, kind: input, shape index: {}]
  %s8 = inlined_call_operand.vmem [shape: f32[2,4,1,8], index: 8, kind: input, shape index: {}]
  %s9 = inlined_call_operand.vmem [shape: f32[2,4,1,8], index: 9, kind: input, shape index: {}]
  %s10 = inlined_call_operand.vmem [shape: f32[2,4,8,32], index: 10, kind: input, shape index: {}]
  %s11 = inlined_call_operand.vmem [shape: f32[2,1,32], index: 11, kind: input, shape index: {}]
  %s12 = inlined_call_operand.vmem [shape: f32[2,1,32], index: 12, kind: input, shape index: {}]
  %s13 = inlined_call_operand.vmem [shape: f32[2,1,32], index: 13, kind: input, shape index: {}]
  %s14 = inlined_call_operand.vmem [shape: f32[2,32,64], index: 14, kind: input, shape index: {}]
  %s15 = inlined_call_operand.vmem [shape: f32[2,1,64], index: 15, kind: input, shape index: {}]
  %s16 = inlined_call_operand.vmem [shape: f32[2,64,32], index: 16, kind: input, shape index: {}]
  %s17 = inlined_call_operand.vmem [shape: f32[2,1,32], index: 17, kind: input, shape index: {}]
  %s18 = inlined_call_operand.vmem [shape: f32[2,1,32], index: 18, kind: input, shape index: {}]
  %s19 = inlined_call_operand.vmem [shape: f32[2,1,32], index: 19, kind: input, shape index: {}]
  %s20 = inlined_call_operand.hbm [shape: f32[2,8,32], index: 20, kind: output, shape index: {}]
  %s21 = sld [smem:[#allocation0]]
  $region113: #{bert_forward.1} parent=0
    _
  %s23 = ssub.s32 1, %s21
  %s24 = scalar_select 0, %s23, %s21
  $region1: #{bert_forward.1} parent=0
    #allocation2 [shape = 'u8[8192]{0}', space=vmem, size = 0x2000, scoped, tag = 'output window, operand 0']
    #allocation3 [shape = 's32[2]{0}', space=sflag, size = 0x8, scoped, tag = 'scoped memory for bert_forward.1']
    %25 = vsyncpa [#allocation3], 0
    %s26 = scalar_lea.sflag [#allocation3], 1
    %27 = vsyncpa %s26, 0
    loop: start=0, step=1, limit=4
    $region2: #{bert_forward.1} parent=1 // loop_pre_header
      _
    $region3: #{bert_forward.1} parent=1 // loop_header
      %s29 = sphi 0, %s33
      %p30 = scmp.ge.s32.totalorder %s29, 4
      %s39 = sphi 0, %s41
      %s42 = sphi 0, %s39
      %s43 = sphi 0, %s42
      %s59 = sphi 0, %s43
      %s65 = sphi 0, %s67
      %s68 = sphi 0, %s65
      %s69 = sphi 0, %s68
      %s85 = sphi 0, %s69
      %s89 = sphi 0, %s89
      %s91 = sphi 0, %s89
      %s92 = sphi 0, %s91
      %s106 = sphi 0, %s92
      %s110 = sphi 0, %s110
      %s112 = sphi 0, %s110
      %s113 = sphi 0, %s112
      %s127 = sphi 0, %s113
      %s131 = sphi 0, %s131
      %s133 = sphi 0, %s131
      %s134 = sphi 0, %s133
      %s148 = sphi 0, %s134
      %s152 = sphi 0, %s152
      %s154 = sphi 0, %s152
      %s155 = sphi 0, %s154
      %s169 = sphi 0, %s155
      %s173 = sphi 0, %s173
      %s175 = sphi 0, %s173
      %s176 = sphi 0, %s175
      %s190 = sphi 0, %s176
      %s194 = sphi 0, %s194
      %s196 = sphi 0, %s194
      %s197 = sphi 0, %s196
      %s211 = sphi 0, %s197
      %s215 = sphi 0, %s215
      %s217 = sphi 0, %s215
      %s218 = sphi 0, %s217
      %s232 = sphi 0, %s218
      %s236 = sphi 0, %s236
      %s238 = sphi 0, %s236
      %s239 = sphi 0, %s238
      %s253 = sphi 0, %s239
      %s257 = sphi 0, %s257
      %s259 = sphi 0, %s257
      %s260 = sphi 0, %s259
      %s274 = sphi 0, %s260
      %s278 = sphi 0, %s278
      %s280 = sphi 0, %s278
      %s281 = sphi 0, %s280
      %s295 = sphi 0, %s281
      %s299 = sphi 0, %s299
      %s301 = sphi 0, %s299
      %s302 = sphi 0, %s301
      %s316 = sphi 0, %s302
      %s320 = sphi 0, %s320
      %s322 = sphi 0, %s320
      %s323 = sphi 0, %s322
      %s337 = sphi 0, %s323
      %s341 = sphi 0, %s341
      %s343 = sphi 0, %s341
      %s344 = sphi 0, %s343
      %s358 = sphi 0, %s344
      %s362 = sphi 0, %s362
      %s364 = sphi 0, %s362
      %s365 = sphi 0, %s364
      %s379 = sphi 0, %s365
      %s383 = sphi 0, %s383
      %s385 = sphi 0, %s383
      %s386 = sphi 0, %s385
      %s400 = sphi 0, %s386
      %s404 = sphi 0, %s404
      %s406 = sphi 0, %s404
      %s407 = sphi 0, %s406
      %s421 = sphi 0, %s407
      %s425 = sphi 0, %s425
      %s427 = sphi 0, %s425
      %s428 = sphi 0, %s427
      %s442 = sphi 0, %s428
      %s446 = sphi 0, %s446
      %s448 = sphi 0, %s446
      %s449 = sphi 0, %s448
      %s463 = sphi 0, %s449
      %s469 = sphi 0, %s471
      %s472 = sphi 0, %s469
      %s473 = sphi 0, %s472
      %s489 = sphi 0, %s473
    $region4: #{bert_forward.1} parent=1 // loop_header_branch
      %32 = sbr.rel (%p30) target = $region8
    $region5: #{bert_forward.1} parent=1 // loop_body
      %s34 = ssub.s32 %s29, 1
      %s35 = ssub.s32 %s29, 2
      %s36 = sadd.s32 %s29, 1
      %s37 = ssub.s32 %s29, %s36
      %p38 = scmp.eq.s32.totalorder %s37, 0
      %s40 = sadd.s32 %s39, 1
      %s41 = scalar_select %p38, %s39, %s40
      %p44 = pneg %p38
      %p45 = scmp.eq.s32.totalorder %s29, 1
      %p46 = por %p44, %p45
      %p47 = scmp.ne.s32.totalorder %s39, %s42
      %p48 = scmp.eq.s32.totalorder %s29, 0
      %p49 = por %p47, %p48
      %p50 = scmp.ne.s32.totalorder %s39, %s42
      %p51 = scmp.eq.s32.totalorder %s34, 1
      %p52 = por %p50, %p51
      %p53 = scmp.ne.s32.totalorder %s42, %s43
      %p54 = scmp.eq.s32.totalorder %s34, 0
      %p55 = por %p53, %p54
      %p56 = scmp.ne.s32.totalorder %s42, %s43
      %p57 = scmp.eq.s32.totalorder %s35, 1
      %p58 = por %p56, %p57
      %p60 = scmp.ne.s32.totalorder %s43, %s59
      %p61 = scmp.eq.s32.totalorder %s35, 0
      %p62 = por %p60, %p61
      %s63 = ssub.s32 %s29, %s36
      %p64 = scmp.eq.s32.totalorder %s63, 0
      %s66 = sadd.s32 %s65, 1
      %s67 = scalar_select %p64, %s65, %s66
      %p70 = pneg %p64
      %p71 = scmp.eq.s32.totalorder %s29, 1
      %p72 = por %p70, %p71
      %p73 = scmp.ne.s32.totalorder %s65, %s68
      %p74 = scmp.eq.s32.totalorder %s29, 0
      %p75 = por %p73, %p74
      %p76 = scmp.ne.s32.totalorder %s65, %s68
      %p77 = scmp.eq.s32.totalorder %s34, 1
      %p78 = por %p76, %p77
      %p79 = scmp.ne.s32.totalorder %s68, %s69
      %p80 = scmp.eq.s32.totalorder %s34, 0
      %p81 = por %p79, %p80
      %p82 = scmp.ne.s32.totalorder %s68, %s69
      %p83 = scmp.eq.s32.totalorder %s35, 1
      %p84 = por %p82, %p83
      %p86 = scmp.ne.s32.totalorder %s69, %s85
      %p87 = scmp.eq.s32.totalorder %s35, 0
      %p88 = por %p86, %p87
      %s90 = sadd.s32 %s89, 1
      %p93 = scmp.eq.s32.totalorder %s29, 1
      %p94 = scmp.ne.s32.totalorder %s89, %s91
      %p95 = scmp.eq.s32.totalorder %s29, 0
      %p96 = por %p94, %p95
      %p97 = scmp.ne.s32.totalorder %s89, %s91
      %p98 = scmp.eq.s32.totalorder %s34, 1
      %p99 = por %p97, %p98
      %p100 = scmp.ne.s32.totalorder %s91, %s92
      %p101 = scmp.eq.s32.totalorder %s34, 0
      %p102 = por %p100, %p101
      %p103 = scmp.ne.s32.totalorder %s91, %s92
      %p104 = scmp.eq.s32.totalorder %s35, 1
      %p105 = por %p103, %p104
      %p107 = scmp.ne.s32.totalorder %s92, %s106
      %p108 = scmp.eq.s32.totalorder %s35, 0
      %p109 = por %p107, %p108
      %s111 = sadd.s32 %s110, 1
      %p114 = scmp.eq.s32.totalorder %s29, 1
      %p115 = scmp.ne.s32.totalorder %s110, %s112
      %p116 = scmp.eq.s32.totalorder %s29, 0
      %p117 = por %p115, %p116
      %p118 = scmp.ne.s32.totalorder %s110, %s112
      %p119 = scmp.eq.s32.totalorder %s34, 1
      %p120 = por %p118, %p119
      %p121 = scmp.ne.s32.totalorder %s112, %s113
      %p122 = scmp.eq.s32.totalorder %s34, 0
      %p123 = por %p121, %p122
      %p124 = scmp.ne.s32.totalorder %s112, %s113
      %p125 = scmp.eq.s32.totalorder %s35, 1
      %p126 = por %p124, %p125
      %p128 = scmp.ne.s32.totalorder %s113, %s127
      %p129 = scmp.eq.s32.totalorder %s35, 0
      %p130 = por %p128, %p129
      %s132 = sadd.s32 %s131, 1
      %p135 = scmp.eq.s32.totalorder %s29, 1
      %p136 = scmp.ne.s32.totalorder %s131, %s133
      %p137 = scmp.eq.s32.totalorder %s29, 0
      %p138 = por %p136, %p137
      %p139 = scmp.ne.s32.totalorder %s131, %s133
      %p140 = scmp.eq.s32.totalorder %s34, 1
      %p141 = por %p139, %p140
      %p142 = scmp.ne.s32.totalorder %s133, %s134
      %p143 = scmp.eq.s32.totalorder %s34, 0
      %p144 = por %p142, %p143
      %p145 = scmp.ne.s32.totalorder %s133, %s134
      %p146 = scmp.eq.s32.totalorder %s35, 1
      %p147 = por %p145, %p146
      %p149 = scmp.ne.s32.totalorder %s134, %s148
      %p150 = scmp.eq.s32.totalorder %s35, 0
      %p151 = por %p149, %p150
      %s153 = sadd.s32 %s152, 1
      %p156 = scmp.eq.s32.totalorder %s29, 1
      %p157 = scmp.ne.s32.totalorder %s152, %s154
      %p158 = scmp.eq.s32.totalorder %s29, 0
      %p159 = por %p157, %p158
      %p160 = scmp.ne.s32.totalorder %s152, %s154
      %p161 = scmp.eq.s32.totalorder %s34, 1
      %p162 = por %p160, %p161
      %p163 = scmp.ne.s32.totalorder %s154, %s155
      %p164 = scmp.eq.s32.totalorder %s34, 0
      %p165 = por %p163, %p164
      %p166 = scmp.ne.s32.totalorder %s154, %s155
      %p167 = scmp.eq.s32.totalorder %s35, 1
      %p168 = por %p166, %p167
      %p170 = scmp.ne.s32.totalorder %s155, %s169
      %p171 = scmp.eq.s32.totalorder %s35, 0
      %p172 = por %p170, %p171
      %s174 = sadd.s32 %s173, 1
      %p177 = scmp.eq.s32.totalorder %s29, 1
      %p178 = scmp.ne.s32.totalorder %s173, %s175
      %p179 = scmp.eq.s32.totalorder %s29, 0
      %p180 = por %p178, %p179
      %p181 = scmp.ne.s32.totalorder %s173, %s175
      %p182 = scmp.eq.s32.totalorder %s34, 1
      %p183 = por %p181, %p182
      %p184 = scmp.ne.s32.totalorder %s175, %s176
      %p185 = scmp.eq.s32.totalorder %s34, 0
      %p186 = por %p184, %p185
      %p187 = scmp.ne.s32.totalorder %s175, %s176
      %p188 = scmp.eq.s32.totalorder %s35, 1
      %p189 = por %p187, %p188
      %p191 = scmp.ne.s32.totalorder %s176, %s190
      %p192 = scmp.eq.s32.totalorder %s35, 0
      %p193 = por %p191, %p192
      %s195 = sadd.s32 %s194, 1
      %p198 = scmp.eq.s32.totalorder %s29, 1
      %p199 = scmp.ne.s32.totalorder %s194, %s196
      %p200 = scmp.eq.s32.totalorder %s29, 0
      %p201 = por %p199, %p200
      %p202 = scmp.ne.s32.totalorder %s194, %s196
      %p203 = scmp.eq.s32.totalorder %s34, 1
      %p204 = por %p202, %p203
      %p205 = scmp.ne.s32.totalorder %s196, %s197
      %p206 = scmp.eq.s32.totalorder %s34, 0
      %p207 = por %p205, %p206
      %p208 = scmp.ne.s32.totalorder %s196, %s197
      %p209 = scmp.eq.s32.totalorder %s35, 1
      %p210 = por %p208, %p209
      %p212 = scmp.ne.s32.totalorder %s197, %s211
      %p213 = scmp.eq.s32.totalorder %s35, 0
      %p214 = por %p212, %p213
      %s216 = sadd.s32 %s215, 1
      %p219 = scmp.eq.s32.totalorder %s29, 1
      %p220 = scmp.ne.s32.totalorder %s215, %s217
      %p221 = scmp.eq.s32.totalorder %s29, 0
      %p222 = por %p220, %p221
      %p223 = scmp.ne.s32.totalorder %s215, %s217
      %p224 = scmp.eq.s32.totalorder %s34, 1
      %p225 = por %p223, %p224
      %p226 = scmp.ne.s32.totalorder %s217, %s218
      %p227 = scmp.eq.s32.totalorder %s34, 0
      %p228 = por %p226, %p227
      %p229 = scmp.ne.s32.totalorder %s217, %s218
      %p230 = scmp.eq.s32.totalorder %s35, 1
      %p231 = por %p229, %p230
      %p233 = scmp.ne.s32.totalorder %s218, %s232
      %p234 = scmp.eq.s32.totalorder %s35, 0
      %p235 = por %p233, %p234
      %s237 = sadd.s32 %s236, 1
      %p240 = scmp.eq.s32.totalorder %s29, 1
      %p241 = scmp.ne.s32.totalorder %s236, %s238
      %p242 = scmp.eq.s32.totalorder %s29, 0
      %p243 = por %p241, %p242
      %p244 = scmp.ne.s32.totalorder %s236, %s238
      %p245 = scmp.eq.s32.totalorder %s34, 1
      %p246 = por %p244, %p245
      %p247 = scmp.ne.s32.totalorder %s238, %s239
      %p248 = scmp.eq.s32.totalorder %s34, 0
      %p249 = por %p247, %p248
      %p250 = scmp.ne.s32.totalorder %s238, %s239
      %p251 = scmp.eq.s32.totalorder %s35, 1
      %p252 = por %p250, %p251
      %p254 = scmp.ne.s32.totalorder %s239, %s253
      %p255 = scmp.eq.s32.totalorder %s35, 0
      %p256 = por %p254, %p255
      %s258 = sadd.s32 %s257, 1
      %p261 = scmp.eq.s32.totalorder %s29, 1
      %p262 = scmp.ne.s32.totalorder %s257, %s259
      %p263 = scmp.eq.s32.totalorder %s29, 0
      %p264 = por %p262, %p263
      %p265 = scmp.ne.s32.totalorder %s257, %s259
      %p266 = scmp.eq.s32.totalorder %s34, 1
      %p267 = por %p265, %p266
      %p268 = scmp.ne.s32.totalorder %s259, %s260
      %p269 = scmp.eq.s32.totalorder %s34, 0
      %p270 = por %p268, %p269
      %p271 = scmp.ne.s32.totalorder %s259, %s260
      %p272 = scmp.eq.s32.totalorder %s35, 1
      %p273 = por %p271, %p272
      %p275 = scmp.ne.s32.totalorder %s260, %s274
      %p276 = scmp.eq.s32.totalorder %s35, 0
      %p277 = por %p275, %p276
      %s279 = sadd.s32 %s278, 1
      %p282 = scmp.eq.s32.totalorder %s29, 1
      %p283 = scmp.ne.s32.totalorder %s278, %s280
      %p284 = scmp.eq.s32.totalorder %s29, 0
      %p285 = por %p283, %p284
      %p286 = scmp.ne.s32.totalorder %s278, %s280
      %p287 = scmp.eq.s32.totalorder %s34, 1
      %p288 = por %p286, %p287
      %p289 = scmp.ne.s32.totalorder %s280, %s281
      %p290 = scmp.eq.s32.totalorder %s34, 0
      %p291 = por %p289, %p290
      %p292 = scmp.ne.s32.totalorder %s280, %s281
      %p293 = scmp.eq.s32.totalorder %s35, 1
      %p294 = por %p292, %p293
      %p296 = scmp.ne.s32.totalorder %s281, %s295
      %p297 = scmp.eq.s32.totalorder %s35, 0
      %p298 = por %p296, %p297
      %s300 = sadd.s32 %s299, 1
      %p303 = scmp.eq.s32.totalorder %s29, 1
      %p304 = scmp.ne.s32.totalorder %s299, %s301
      %p305 = scmp.eq.s32.totalorder %s29, 0
      %p306 = por %p304, %p305
      %p307 = scmp.ne.s32.totalorder %s299, %s301
      %p308 = scmp.eq.s32.totalorder %s34, 1
      %p309 = por %p307, %p308
      %p310 = scmp.ne.s32.totalorder %s301, %s302
      %p311 = scmp.eq.s32.totalorder %s34, 0
      %p312 = por %p310, %p311
      %p313 = scmp.ne.s32.totalorder %s301, %s302
      %p314 = scmp.eq.s32.totalorder %s35, 1
      %p315 = por %p313, %p314
      %p317 = scmp.ne.s32.totalorder %s302, %s316
      %p318 = scmp.eq.s32.totalorder %s35, 0
      %p319 = por %p317, %p318
      %s321 = sadd.s32 %s320, 1
      %p324 = scmp.eq.s32.totalorder %s29, 1
      %p325 = scmp.ne.s32.totalorder %s320, %s322
      %p326 = scmp.eq.s32.totalorder %s29, 0
      %p327 = por %p325, %p326
      %p328 = scmp.ne.s32.totalorder %s320, %s322
      %p329 = scmp.eq.s32.totalorder %s34, 1
      %p330 = por %p328, %p329
      %p331 = scmp.ne.s32.totalorder %s322, %s323
      %p332 = scmp.eq.s32.totalorder %s34, 0
      %p333 = por %p331, %p332
      %p334 = scmp.ne.s32.totalorder %s322, %s323
      %p335 = scmp.eq.s32.totalorder %s35, 1
      %p336 = por %p334, %p335
      %p338 = scmp.ne.s32.totalorder %s323, %s337
      %p339 = scmp.eq.s32.totalorder %s35, 0
      %p340 = por %p338, %p339
      %s342 = sadd.s32 %s341, 1
      %p345 = scmp.eq.s32.totalorder %s29, 1
      %p346 = scmp.ne.s32.totalorder %s341, %s343
      %p347 = scmp.eq.s32.totalorder %s29, 0
      %p348 = por %p346, %p347
      %p349 = scmp.ne.s32.totalorder %s341, %s343
      %p350 = scmp.eq.s32.totalorder %s34, 1
      %p351 = por %p349, %p350
      %p352 = scmp.ne.s32.totalorder %s343, %s344
      %p353 = scmp.eq.s32.totalorder %s34, 0
      %p354 = por %p352, %p353
      %p355 = scmp.ne.s32.totalorder %s343, %s344
      %p356 = scmp.eq.s32.totalorder %s35, 1
      %p357 = por %p355, %p356
      %p359 = scmp.ne.s32.totalorder %s344, %s358
      %p360 = scmp.eq.s32.totalorder %s35, 0
      %p361 = por %p359, %p360
      %s363 = sadd.s32 %s362, 1
      %p366 = scmp.eq.s32.totalorder %s29, 1
      %p367 = scmp.ne.s32.totalorder %s362, %s364
      %p368 = scmp.eq.s32.totalorder %s29, 0
      %p369 = por %p367, %p368
      %p370 = scmp.ne.s32.totalorder %s362, %s364
      %p371 = scmp.eq.s32.totalorder %s34, 1
      %p372 = por %p370, %p371
      %p373 = scmp.ne.s32.totalorder %s364, %s365
      %p374 = scmp.eq.s32.totalorder %s34, 0
      %p375 = por %p373, %p374
      %p376 = scmp.ne.s32.totalorder %s364, %s365
      %p377 = scmp.eq.s32.totalorder %s35, 1
      %p378 = por %p376, %p377
      %p380 = scmp.ne.s32.totalorder %s365, %s379
      %p381 = scmp.eq.s32.totalorder %s35, 0
      %p382 = por %p380, %p381
      %s384 = sadd.s32 %s383, 1
      %p387 = scmp.eq.s32.totalorder %s29, 1
      %p388 = scmp.ne.s32.totalorder %s383, %s385
      %p389 = scmp.eq.s32.totalorder %s29, 0
      %p390 = por %p388, %p389
      %p391 = scmp.ne.s32.totalorder %s383, %s385
      %p392 = scmp.eq.s32.totalorder %s34, 1
      %p393 = por %p391, %p392
      %p394 = scmp.ne.s32.totalorder %s385, %s386
      %p395 = scmp.eq.s32.totalorder %s34, 0
      %p396 = por %p394, %p395
      %p397 = scmp.ne.s32.totalorder %s385, %s386
      %p398 = scmp.eq.s32.totalorder %s35, 1
      %p399 = por %p397, %p398
      %p401 = scmp.ne.s32.totalorder %s386, %s400
      %p402 = scmp.eq.s32.totalorder %s35, 0
      %p403 = por %p401, %p402
      %s405 = sadd.s32 %s404, 1
      %p408 = scmp.eq.s32.totalorder %s29, 1
      %p409 = scmp.ne.s32.totalorder %s404, %s406
      %p410 = scmp.eq.s32.totalorder %s29, 0
      %p411 = por %p409, %p410
      %p412 = scmp.ne.s32.totalorder %s404, %s406
      %p413 = scmp.eq.s32.totalorder %s34, 1
      %p414 = por %p412, %p413
      %p415 = scmp.ne.s32.totalorder %s406, %s407
      %p416 = scmp.eq.s32.totalorder %s34, 0
      %p417 = por %p415, %p416
      %p418 = scmp.ne.s32.totalorder %s406, %s407
      %p419 = scmp.eq.s32.totalorder %s35, 1
      %p420 = por %p418, %p419
      %p422 = scmp.ne.s32.totalorder %s407, %s421
      %p423 = scmp.eq.s32.totalorder %s35, 0
      %p424 = por %p422, %p423
      %s426 = sadd.s32 %s425, 1
      %p429 = scmp.eq.s32.totalorder %s29, 1
      %p430 = scmp.ne.s32.totalorder %s425, %s427
      %p431 = scmp.eq.s32.totalorder %s29, 0
      %p432 = por %p430, %p431
      %p433 = scmp.ne.s32.totalorder %s425, %s427
      %p434 = scmp.eq.s32.totalorder %s34, 1
      %p435 = por %p433, %p434
      %p436 = scmp.ne.s32.totalorder %s427, %s428
      %p437 = scmp.eq.s32.totalorder %s34, 0
      %p438 = por %p436, %p437
      %p439 = scmp.ne.s32.totalorder %s427, %s428
      %p440 = scmp.eq.s32.totalorder %s35, 1
      %p441 = por %p439, %p440
      %p443 = scmp.ne.s32.totalorder %s428, %s442
      %p444 = scmp.eq.s32.totalorder %s35, 0
      %p445 = por %p443, %p444
      %s447 = sadd.s32 %s446, 1
      %p450 = scmp.eq.s32.totalorder %s29, 1
      %p451 = scmp.ne.s32.totalorder %s446, %s448
      %p452 = scmp.eq.s32.totalorder %s29, 0
      %p453 = por %p451, %p452
      %p454 = scmp.ne.s32.totalorder %s446, %s448
      %p455 = scmp.eq.s32.totalorder %s34, 1
      %p456 = por %p454, %p455
      %p457 = scmp.ne.s32.totalorder %s448, %s449
      %p458 = scmp.eq.s32.totalorder %s34, 0
      %p459 = por %p457, %p458
      %p460 = scmp.ne.s32.totalorder %s448, %s449
      %p461 = scmp.eq.s32.totalorder %s35, 1
      %p462 = por %p460, %p461
      %p464 = scmp.ne.s32.totalorder %s449, %s463
      %p465 = scmp.eq.s32.totalorder %s35, 0
      %p466 = por %p464, %p465
      %s467 = ssub.s32 %s29, %s36
      %p468 = scmp.eq.s32.totalorder %s467, 0
      %s470 = sadd.s32 %s469, 1
      %s471 = scalar_select %p468, %s469, %s470
      %p474 = pneg %p468
      %p475 = scmp.eq.s32.totalorder %s29, 1
      %p476 = por %p474, %p475
      %p477 = scmp.ne.s32.totalorder %s469, %s472
      %p478 = scmp.eq.s32.totalorder %s29, 0
      %p479 = por %p477, %p478
      %p480 = scmp.ne.s32.totalorder %s469, %s472
      %p481 = scmp.eq.s32.totalorder %s34, 1
      %p482 = por %p480, %p481
      %p483 = scmp.ne.s32.totalorder %s472, %s473
      %p484 = scmp.eq.s32.totalorder %s34, 0
      %p485 = por %p483, %p484
      %p486 = scmp.ne.s32.totalorder %s472, %s473
      %p487 = scmp.eq.s32.totalorder %s35, 1
      %p488 = por %p486, %p487
      %p490 = scmp.ne.s32.totalorder %s473, %s489
      %p491 = scmp.eq.s32.totalorder %s35, 0
      %p492 = por %p490, %p491
      %p493 = scmp.le.s32.totalorder 1, %s29
      %p494 = scmp.lt.s32.totalorder %s29, 3
      %p495 = pnand %p493, %p494
      %p496 = pneg %p495
      // Predicated region
      $region9: #{bert_forward.1} parent=5 // pred_check
        _
      $region10: #{bert_forward.1} parent=5 // pred_check_branch
        %498 = sbr.rel (%p495) target = $region12
      $region11: #{bert_forward.1} parent=5 // pred_region
        %s499 = ssub.s32 %s29, 1
        // Predicated region
        $region13: #{bert_forward.1} parent=11 // pred_check
          %p500 = pneg %p102
        $region14: #{bert_forward.1} parent=11 // pred_check_branch
          %502 = sbr.rel (%p500) target = $region16
        $region15: #{bert_forward.1} parent=11 // pred_region
          _
        $region16: #{bert_forward.1} parent=11 // pred_fallthru
          _
        // Predicated region
        $region17: #{bert_forward.1} parent=11 // pred_check
          %p503 = pneg %p123
        $region18: #{bert_forward.1} parent=11 // pred_check_branch
          %505 = sbr.rel (%p503) target = $region20
        $region19: #{bert_forward.1} parent=11 // pred_region
          _
        $region20: #{bert_forward.1} parent=11 // pred_fallthru
          _
        // Predicated region
        $region21: #{bert_forward.1} parent=11 // pred_check
          %p506 = pneg %p144
        $region22: #{bert_forward.1} parent=11 // pred_check_branch
          %508 = sbr.rel (%p506) target = $region24
        $region23: #{bert_forward.1} parent=11 // pred_region
          _
        $region24: #{bert_forward.1} parent=11 // pred_fallthru
          _
        // Predicated region
        $region25: #{bert_forward.1} parent=11 // pred_check
          %p509 = pneg %p165
        $region26: #{bert_forward.1} parent=11 // pred_check_branch
          %511 = sbr.rel (%p509) target = $region28
        $region27: #{bert_forward.1} parent=11 // pred_region
          _
        $region28: #{bert_forward.1} parent=11 // pred_fallthru
          _
        // Predicated region
        $region29: #{bert_forward.1} parent=11 // pred_check
          %p512 = pneg %p186
        $region30: #{bert_forward.1} parent=11 // pred_check_branch
          %514 = sbr.rel (%p512) target = $region32
        $region31: #{bert_forward.1} parent=11 // pred_region
          _
        $region32: #{bert_forward.1} parent=11 // pred_fallthru
          _
        // Predicated region
        $region33: #{bert_forward.1} parent=11 // pred_check
          %p515 = pneg %p207
        $region34: #{bert_forward.1} parent=11 // pred_check_branch
          %517 = sbr.rel (%p515) target = $region36
        $region35: #{bert_forward.1} parent=11 // pred_region
          _
        $region36: #{bert_forward.1} parent=11 // pred_fallthru
          _
        // Predicated region
        $region37: #{bert_forward.1} parent=11 // pred_check
          %p518 = pneg %p228
        $region38: #{bert_forward.1} parent=11 // pred_check_branch
          %520 = sbr.rel (%p518) target = $region40
        $region39: #{bert_forward.1} parent=11 // pred_region
          _
        $region40: #{bert_forward.1} parent=11 // pred_fallthru
          _
        // Predicated region
        $region41: #{bert_forward.1} parent=11 // pred_check
          %p521 = pneg %p249
        $region42: #{bert_forward.1} parent=11 // pred_check_branch
          %523 = sbr.rel (%p521) target = $region44
        $region43: #{bert_forward.1} parent=11 // pred_region
          _
        $region44: #{bert_forward.1} parent=11 // pred_fallthru
          _
        // Predicated region
        $region45: #{bert_forward.1} parent=11 // pred_check
          %p524 = pneg %p270
        $region46: #{bert_forward.1} parent=11 // pred_check_branch
          %526 = sbr.rel (%p524) target = $region48
        $region47: #{bert_forward.1} parent=11 // pred_region
          _
        $region48: #{bert_forward.1} parent=11 // pred_fallthru
          _
        // Predicated region
        $region49: #{bert_forward.1} parent=11 // pred_check
          %p527 = pneg %p291
        $region50: #{bert_forward.1} parent=11 // pred_check_branch
          %529 = sbr.rel (%p527) target = $region52
        $region51: #{bert_forward.1} parent=11 // pred_region
          _
        $region52: #{bert_forward.1} parent=11 // pred_fallthru
          _
        // Predicated region
        $region53: #{bert_forward.1} parent=11 // pred_check
          %p530 = pneg %p312
        $region54: #{bert_forward.1} parent=11 // pred_check_branch
          %532 = sbr.rel (%p530) target = $region56
        $region55: #{bert_forward.1} parent=11 // pred_region
          _
        $region56: #{bert_forward.1} parent=11 // pred_fallthru
          _
        // Predicated region
        $region57: #{bert_forward.1} parent=11 // pred_check
          %p533 = pneg %p333
        $region58: #{bert_forward.1} parent=11 // pred_check_branch
          %535 = sbr.rel (%p533) target = $region60
        $region59: #{bert_forward.1} parent=11 // pred_region
          _
        $region60: #{bert_forward.1} parent=11 // pred_fallthru
          _
        // Predicated region
        $region61: #{bert_forward.1} parent=11 // pred_check
          %p536 = pneg %p354
        $region62: #{bert_forward.1} parent=11 // pred_check_branch
          %538 = sbr.rel (%p536) target = $region64
        $region63: #{bert_forward.1} parent=11 // pred_region
          _
        $region64: #{bert_forward.1} parent=11 // pred_fallthru
          _
        // Predicated region
        $region65: #{bert_forward.1} parent=11 // pred_check
          %p539 = pneg %p375
        $region66: #{bert_forward.1} parent=11 // pred_check_branch
          %541 = sbr.rel (%p539) target = $region68
        $region67: #{bert_forward.1} parent=11 // pred_region
          _
        $region68: #{bert_forward.1} parent=11 // pred_fallthru
          _
        // Predicated region
        $region69: #{bert_forward.1} parent=11 // pred_check
          %p542 = pneg %p396
        $region70: #{bert_forward.1} parent=11 // pred_check_branch
          %544 = sbr.rel (%p542) target = $region72
        $region71: #{bert_forward.1} parent=11 // pred_region
          _
        $region72: #{bert_forward.1} parent=11 // pred_fallthru
          _
        // Predicated region
        $region73: #{bert_forward.1} parent=11 // pred_check
          %p545 = pneg %p417
        $region74: #{bert_forward.1} parent=11 // pred_check_branch
          %547 = sbr.rel (%p545) target = $region76
        $region75: #{bert_forward.1} parent=11 // pred_region
          _
        $region76: #{bert_forward.1} parent=11 // pred_fallthru
          _
        // Predicated region
        $region77: #{bert_forward.1} parent=11 // pred_check
          %p548 = pneg %p438
        $region78: #{bert_forward.1} parent=11 // pred_check_branch
          %550 = sbr.rel (%p548) target = $region80
        $region79: #{bert_forward.1} parent=11 // pred_region
          _
        $region80: #{bert_forward.1} parent=11 // pred_fallthru
          _
        // Predicated region
        $region81: #{bert_forward.1} parent=11 // pred_check
          %p551 = pneg %p459
        $region82: #{bert_forward.1} parent=11 // pred_check_branch
          %553 = sbr.rel (%p551) target = $region84
        $region83: #{bert_forward.1} parent=11 // pred_region
          _
        $region84: #{bert_forward.1} parent=11 // pred_fallthru
          _
      $region12: #{bert_forward.1} parent=5 // pred_fallthru
        _
      %p554 = scmp.lt.s32.totalorder %s29, 2
      // Predicated region
      $region85: #{bert_forward.1} parent=5 // pred_check
        %p555 = pneg %p554
      $region86: #{bert_forward.1} parent=5 // pred_check_branch
        %557 = sbr.rel (%p555) target = $region88
      $region87: #{bert_forward.1} parent=5 // pred_region
        // Predicated region
        $region89: #{bert_forward.1} parent=87 // pred_check
          %p558 = pneg %p49
        $region90: #{bert_forward.1} parent=87 // pred_check_branch
          %560 = sbr.rel (%p558) target = $region92
        $region91: #{bert_forward.1} parent=87 // pred_region
          %p561 = scmp.lt.s32.totalorder %s29, 1
          %s562 = scalar_select %p561, %s29, 1
          %s563 = smul.addr %s562, 8
          %s564 = scalar_lea.vmem %s0, %s563
        $region92: #{bert_forward.1} parent=87 // pred_fallthru
          _
        // Predicated region
        $region93: #{bert_forward.1} parent=87 // pred_check
          %p565 = pneg %p75
        $region94: #{bert_forward.1} parent=87 // pred_check_branch
          %567 = sbr.rel (%p565) target = $region96
        $region95: #{bert_forward.1} parent=87 // pred_region
          %p568 = scmp.lt.s32.totalorder %s29, 1
          %s569 = scalar_select %p568, %s29, 1
          %s570 = scalar_lea.vmem %s1, %s569
        $region96: #{bert_forward.1} parent=87 // pred_fallthru
          _
      $region88: #{bert_forward.1} parent=5 // pred_fallthru
        _
      %p571 = scmp.le.s32.totalorder 1, %s29
      %p572 = scmp.lt.s32.totalorder %s29, 3
      %p573 = pnand %p571, %p572
      %p574 = pneg %p573
      // Predicated region
      $region97: #{bert_forward.1} parent=5 // pred_check
        _
      $region98: #{bert_forward.1} parent=5 // pred_check_branch
        %576 = sbr.rel (%p573) target = $region100
      $region99: #{bert_forward.1} parent=5 // pred_region
        %s577 = ssub.s32 %s29, 1
        %p578 = scmp.lt.s32.totalorder %s34, 1
        %s579 = scalar_select %p578, %s34, 1
        %s580 = smul.addr %s579, 8
        %s581 = scalar_lea.vmem %s0, %s580
        %p582 = pneg %p55
        %p583 = pneg %p52
        %p584 = scmp.lt.s32.totalorder %s34, 1
        %s585 = scalar_select %p584, %s34, 1
        %s586 = scalar_lea.vmem %s1, %s585
        %p587 = pneg %p81
        %p588 = pneg %p78
        %p589 = pneg %p102
        %p590 = pneg %p99
        %p591 = pneg %p123
        %p592 = pneg %p120
        %p593 = pneg %p144
        %p594 = pneg %p141
        %p595 = pneg %p165
        %p596 = pneg %p162
        %p597 = pneg %p186
        %p598 = pneg %p183
        %p599 = pneg %p207
        %p600 = pneg %p204
        %p601 = pneg %p228
        %p602 = pneg %p225
        %p603 = pneg %p249
        %p604 = pneg %p246
        %p605 = pneg %p270
        %p606 = pneg %p267
        %p607 = pneg %p291
        %p608 = pneg %p288
        %p609 = pneg %p312
        %p610 = pneg %p309
        %p611 = pneg %p333
        %p612 = pneg %p330
        %p613 = pneg %p354
        %p614 = pneg %p351
        %p615 = pneg %p375
        %p616 = pneg %p372
        %p617 = pneg %p396
        %p618 = pneg %p393
        %p619 = pneg %p417
        %p620 = pneg %p414
        %p621 = pneg %p438
        %p622 = pneg %p435
        %p623 = pneg %p459
        %p624 = pneg %p456
        %p625 = pneg %p485
        %p626 = pneg %p482
        %s627 = sand.u32 %s472, 1
        %s628 = scalar_lea.sflag [#allocation3], %s627
        %s629 = sand.u32 %s472, 1
        %s630 = smul.addr %s629, 8
        %s631 = scalar_lea.vmem [#allocation2], %s630
        %p632 = scmp.lt.s32.totalorder %s34, 1
        %s633 = scalar_select %p632, %s34, 1
        %s634 = smul.addr %s633, 8
        %s635 = scalar_lea.vmem %s0, %s634
        %p636 = scmp.lt.s32.totalorder %s34, 1
        %s637 = scalar_select %p636, %s34, 1
        %s638 = scalar_lea.vmem %s1, %s637
        %v639 = vld [vmem:[%s635] sm:$0xff]
        %v640 = vld [vmem:[%s2] sm:$0x1]
        %v641 = vld [vmem:[%s3] sm:$0x1]
        %vm642 = vcmask 261120
        %v643 = vsel %vm642, %v639, 0.0
        %644 = vadd.xlane.f32.xlu0 %v643
        %v645 = vpop.xlane.xlu0 %644
        %v646 = vrcp.pop 32.0
        %v647 = vmul.f32 %v645, %v646
        %v648 = vsub.f32 %v639, %v647
        %v649 = vmul.f32 %v648, %v648
        %v650 = vsel %vm642, %v649, 0.0
        %651 = vadd.xlane.f32.xlu0 %v650
        %v652 = vpop.xlane.xlu0 %651
        %v653 = vmul.f32 %v652, %v646
        %v654 = vadd.f32 %v653, 1e-12
        %v655 = vrsqrt.pop %v654
        %v656 = vmul.f32 %v648, %v655
        %v658 = vlaneseq
        %v659 = vshrl.u32 %v658, 7
        %v660 = vsub.s32 0, %v659
        %v661 = vrot.slane %v640, %v660
        %v663 = vmul.f32 %v656, %v661
        %v665 = vlaneseq
        %v666 = vshrl.u32 %v665, 7
        %v667 = vsub.s32 0, %v666
        %v668 = vrot.slane %v641, %v667
        %v670 = vadd.f32 %v663, %v668
        %v671 = vld [vmem:[%s638] sm:$0x1]
        %v672 = vld [vmem:[%s4] sm:$0xff]
        %v673 = vld [vmem:[%s4 + $0x8] sm:$0xff]
        %v674 = vld [vmem:[%s4 + $0x10] sm:$0xff]
        %v675 = vld [vmem:[%s4 + $0x18] sm:$0xff]
        %v676 = vld [vmem:[%s7] sm:$0x1]
        %v678 = vlaneseq
        %v679 = vshrl.u32 %v678, 7
        %v680 = vsub.s32 0, %v679
        %v681 = vrot.slane %v676, %v680
        %v684 = vsel %vm642, %v670, 0
        %686 = vmatprep.subr.mxu0 0.0
        %687 = vmatpush1.msra.mxu0 0.0
        %688 = vmatprep.subr.mxu0 0.0
        %689 = vmatpush1.msra.mxu0 0.0
        %690 = vmatprep.subr.mxu0 0.0
        %691 = vmatpush1.msra.mxu0 0.0
        %692 = vmatprep.subr.mxu0 0.0
        %693 = vmatpush1.msra.mxu0 0.0
        %694 = vmatprep.subr.mxu0 0.0
        %695 = vmatpush1.msra.mxu0 0.0
        %696 = vmatprep.subr.mxu0 0.0
        %697 = vmatpush1.msra.mxu0 0.0
        %698 = vmatprep.subr.mxu0 0.0
        %699 = vmatpush1.msra.mxu0 0.0
        %700 = vmatprep.subr.mxu0 0.0
        %701 = vmatpush1.msra.mxu0 0.0
        %702 = vmatprep.subr.mxu0 0.0
        %703 = vmatpush1.msra.mxu0 0.0
        %704 = vmatprep.subr.mxu0 0.0
        %705 = vmatpush1.msra.mxu0 0.0
        %706 = vmatprep.subr.mxu0 0.0
        %707 = vmatpush1.msra.mxu0 0.0
        %708 = vmatprep.subr.mxu0 0.0
        %709 = vmatpush1.msra.mxu0 0.0
        %710 = vmatprep.subr.mxu0 0.0
        %711 = vmatpush1.msra.mxu0 %v675
        %712 = vmatprep.subr.mxu0 0.0
        %713 = vmatpush1.msra.mxu0 %v674
        %714 = vmatprep.subr.mxu0 0.0
        %715 = vmatpush1.msra.mxu0 %v673
        %716 = vmatprep.subr.mxu0 0.0
        %717 = vmatpush1.msra.mxu0 %v672
        %718 = vmatprep.subr.mxu0 0.0
        %719 = vmatpush2.msra.mxu0 0.0
        %720 = vmatprep.subr.mxu0 0.0
        %721 = vmatpush2.msra.mxu0 0.0
        %722 = vmatprep.subr.mxu0 0.0
        %723 = vmatpush2.msra.mxu0 0.0
        %724 = vmatprep.subr.mxu0 0.0
        %725 = vmatpush2.msra.mxu0 0.0
        %726 = vmatprep.subr.mxu0 0.0
        %727 = vmatpush2.msra.mxu0 0.0
        %728 = vmatprep.subr.mxu0 0.0
        %729 = vmatpush2.msra.mxu0 0.0
        %730 = vmatprep.subr.mxu0 0.0
        %731 = vmatpush2.msra.mxu0 0.0
        %732 = vmatprep.subr.mxu0 0.0
        %733 = vmatpush2.msra.mxu0 0.0
        %734 = vmatprep.subr.mxu0 0.0
        %735 = vmatpush2.msra.mxu0 0.0
        %736 = vmatprep.subr.mxu0 0.0
        %737 = vmatpush2.msra.mxu0 0.0
        %738 = vmatprep.subr.mxu0 0.0
        %739 = vmatpush2.msra.mxu0 0.0
        %740 = vmatprep.subr.mxu0 0.0
        %741 = vmatpush2.msra.mxu0 0.0
        %742 = vmatprep.subr.mxu0 0.0
        %743 = vmatpush2.msra.mxu0 0.0
        %744 = vmatprep.subr.mxu0 0.0
        %745 = vmatpush2.msra.mxu0 0.0
        %746 = vmatprep.subr.mxu0 0.0
        %747 = vmatpush2.msra.mxu0 0.0
        %748 = vmatprep.subr.mxu0 0.0
        %749 = vmatpush2.msra.mxu0 0.0
        %750 = vmatprep.mubr.f32.mxu0 0.0
        %751 = vmatmul.mubr.f32.gmra.mxu0 %v684
        %v752 = vpop.f32.mrf.mxu0
        %v753 = vadd.f32 %v681, %v752
        %v754 = vpop.f32.mrf.mxu0
        %755 = vdwg.mxu0
        %v756 = vld [vmem:[%s5] sm:$0xff]
        %v757 = vld [vmem:[%s5 + $0x8] sm:$0xff]
        %v758 = vld [vmem:[%s5 + $0x10] sm:$0xff]
        %v759 = vld [vmem:[%s5 + $0x18] sm:$0xff]
        %v760 = vld [vmem:[%s8] sm:$0x1]
        %v762 = vlaneseq
        %v763 = vshrl.u32 %v762, 7
        %v764 = vsub.s32 0, %v763
        %v765 = vrot.slane %v760, %v764
        %767 = vmatprep.subr.mxu0 0.0
        %768 = vmatpush1.msra.mxu0 0.0
        %769 = vmatprep.subr.mxu0 0.0
        %770 = vmatpush1.msra.mxu0 0.0
        %771 = vmatprep.subr.mxu0 0.0
        %772 = vmatpush1.msra.mxu0 0.0
        %773 = vmatprep.subr.mxu0 0.0
        %774 = vmatpush1.msra.mxu0 0.0
        %775 = vmatprep.subr.mxu0 0.0
        %776 = vmatpush1.msra.mxu0 0.0
        %777 = vmatprep.subr.mxu0 0.0
        %778 = vmatpush1.msra.mxu0 0.0
        %779 = vmatprep.subr.mxu0 0.0
        %780 = vmatpush1.msra.mxu0 0.0
        %781 = vmatprep.subr.mxu0 0.0
        %782 = vmatpush1.msra.mxu0 0.0
        %783 = vmatprep.subr.mxu0 0.0
        %784 = vmatpush1.msra.mxu0 0.0
        %785 = vmatprep.subr.mxu0 0.0
        %786 = vmatpush1.msra.mxu0 0.0
        %787 = vmatprep.subr.mxu0 0.0
        %788 = vmatpush1.msra.mxu0 0.0
        %789 = vmatprep.subr.mxu0 0.0
        %790 = vmatpush1.msra.mxu0 0.0
        %791 = vmatprep.subr.mxu0 0.0
        %792 = vmatpush1.msra.mxu0 %v759
        %793 = vmatprep.subr.mxu0 0.0
        %794 = vmatpush1.msra.mxu0 %v758
        %795 = vmatprep.subr.mxu0 0.0
        %796 = vmatpush1.msra.mxu0 %v757
        %797 = vmatprep.subr.mxu0 0.0
        %798 = vmatpush1.msra.mxu0 %v756
        %799 = vmatprep.subr.mxu0 0.0
        %800 = vmatpush2.msra.mxu0 0.0
        %801 = vmatprep.subr.mxu0 0.0
        %802 = vmatpush2.msra.mxu0 0.0
        %803 = vmatprep.subr.mxu0 0.0
        %804 = vmatpush2.msra.mxu0 0.0
        %805 = vmatprep.subr.mxu0 0.0
        %806 = vmatpush2.msra.mxu0 0.0
        %807 = vmatprep.subr.mxu0 0.0
        %808 = vmatpush2.msra.mxu0 0.0
        %809 = vmatprep.subr.mxu0 0.0
        %810 = vmatpush2.msra.mxu0 0.0
        %811 = vmatprep.subr.mxu0 0.0
        %812 = vmatpush2.msra.mxu0 0.0
        %813 = vmatprep.subr.mxu0 0.0
        %814 = vmatpush2.msra.mxu0 0.0
        %815 = vmatprep.subr.mxu0 0.0
        %816 = vmatpush2.msra.mxu0 0.0
        %817 = vmatprep.subr.mxu0 0.0
        %818 = vmatpush2.msra.mxu0 0.0
        %819 = vmatprep.subr.mxu0 0.0
        %820 = vmatpush2.msra.mxu0 0.0
        %821 = vmatprep.subr.mxu0 0.0
        %822 = vmatpush2.msra.mxu0 0.0
        %823 = vmatprep.subr.mxu0 0.0
        %824 = vmatpush2.msra.mxu0 0.0
        %825 = vmatprep.subr.mxu0 0.0
        %826 = vmatpush2.msra.mxu0 0.0
        %827 = vmatprep.subr.mxu0 0.0
        %828 = vmatpush2.msra.mxu0 0.0
        %829 = vmatprep.subr.mxu0 0.0
        %830 = vmatpush2.msra.mxu0 0.0
        %831 = vmatprep.mubr.f32.mxu0 0.0
        %832 = vmatmul.mubr.f32.gmra.mxu0 %v684
        %v833 = vpop.f32.mrf.mxu0
        %v834 = vadd.f32 %v765, %v833
        %v835 = vpop.f32.mrf.mxu0
        %836 = vdwg.mxu0
        %v837 = vld [vmem:[%s6] sm:$0xff]
        %v838 = vld [vmem:[%s6 + $0x8] sm:$0xff]
        %v839 = vld [vmem:[%s6 + $0x10] sm:$0xff]
        %v840 = vld [vmem:[%s6 + $0x18] sm:$0xff]
        %v841 = vld [vmem:[%s9] sm:$0x1]
        %v843 = vlaneseq
        %v844 = vshrl.u32 %v843, 7
        %v845 = vsub.s32 0, %v844
        %v846 = vrot.slane %v841, %v845
        %848 = vmatprep.subr.mxu0 0.0
        %849 = vmatpush1.msra.mxu0 0.0
        %850 = vmatprep.subr.mxu0 0.0
        %851 = vmatpush1.msra.mxu0 0.0
        %852 = vmatprep.subr.mxu0 0.0
        %853 = vmatpush1.msra.mxu0 0.0
        %854 = vmatprep.subr.mxu0 0.0
        %855 = vmatpush1.msra.mxu0 0.0
        %856 = vmatprep.subr.mxu0 0.0
        %857 = vmatpush1.msra.mxu0 0.0
        %858 = vmatprep.subr.mxu0 0.0
        %859 = vmatpush1.msra.mxu0 0.0
        %860 = vmatprep.subr.mxu0 0.0
        %861 = vmatpush1.msra.mxu0 0.0
        %862 = vmatprep.subr.mxu0 0.0
        %863 = vmatpush1.msra.mxu0 0.0
        %864 = vmatprep.subr.mxu0 0.0
        %865 = vmatpush1.msra.mxu0 0.0
        %866 = vmatprep.subr.mxu0 0.0
        %867 = vmatpush1.msra.mxu0 0.0
        %868 = vmatprep.subr.mxu0 0.0
        %869 = vmatpush1.msra.mxu0 0.0
        %870 = vmatprep.subr.mxu0 0.0
        %871 = vmatpush1.msra.mxu0 0.0
        %872 = vmatprep.subr.mxu0 0.0
        %873 = vmatpush1.msra.mxu0 %v840
        %874 = vmatprep.subr.mxu0 0.0
        %875 = vmatpush1.msra.mxu0 %v839
        %876 = vmatprep.subr.mxu0 0.0
        %877 = vmatpush1.msra.mxu0 %v838
        %878 = vmatprep.subr.mxu0 0.0
        %879 = vmatpush1.msra.mxu0 %v837
        %880 = vmatprep.subr.mxu0 0.0
        %881 = vmatpush2.msra.mxu0 0.0
        %882 = vmatprep.subr.mxu0 0.0
        %883 = vmatpush2.msra.mxu0 0.0
        %884 = vmatprep.subr.mxu0 0.0
        %885 = vmatpush2.msra.mxu0 0.0
        %886 = vmatprep.subr.mxu0 0.0
        %887 = vmatpush2.msra.mxu0 0.0
        %888 = vmatprep.subr.mxu0 0.0
        %889 = vmatpush2.msra.mxu0 0.0
        %890 = vmatprep.subr.mxu0 0.0
        %891 = vmatpush2.msra.mxu0 0.0
        %892 = vmatprep.subr.mxu0 0.0
        %893 = vmatpush2.msra.mxu0 0.0
        %894 = vmatprep.subr.mxu0 0.0
        %895 = vmatpush2.msra.mxu0 0.0
        %896 = vmatprep.subr.mxu0 0.0
        %897 = vmatpush2.msra.mxu0 0.0
        %898 = vmatprep.subr.mxu0 0.0
        %899 = vmatpush2.msra.mxu0 0.0
        %900 = vmatprep.subr.mxu0 0.0
        %901 = vmatpush2.msra.mxu0 0.0
        %902 = vmatprep.subr.mxu0 0.0
        %903 = vmatpush2.msra.mxu0 0.0
        %904 = vmatprep.subr.mxu0 0.0
        %905 = vmatpush2.msra.mxu0 0.0
        %906 = vmatprep.subr.mxu0 0.0
        %907 = vmatpush2.msra.mxu0 0.0
        %908 = vmatprep.subr.mxu0 0.0
        %909 = vmatpush2.msra.mxu0 0.0
        %910 = vmatprep.subr.mxu0 0.0
        %911 = vmatpush2.msra.mxu0 0.0
        %912 = vmatprep.mubr.f32.mxu0 0.0
        %913 = vmatmul.mubr.f32.gmra.mxu0 %v684
        %v914 = vpop.f32.mrf.mxu0
        %v915 = vadd.f32 %v846, %v914
        %v916 = vpop.f32.mrf.mxu0
        %917 = vdwg.mxu0
        %vm918 = vcmask 64512
        %v920 = vsel %vm918, %v753, 0
        %v923 = vsel %vm918, %v834, 0
        %925 = vmatprep.subr.mxu0 0.0
        %926 = vmatpush1.xpose.msra.mxu0 0.0
        %927 = vmatprep.subr.mxu0 0.0
        %928 = vmatpush1.xpose.msra.mxu0 0.0
        %929 = vmatprep.subr.mxu0 0.0
        %930 = vmatpush1.xpose.msra.mxu0 0.0
        %931 = vmatprep.subr.mxu0 0.0
        %932 = vmatpush1.xpose.msra.mxu0 0.0
        %933 = vmatprep.subr.mxu0 0.0
        %934 = vmatpush1.xpose.msra.mxu0 0.0
        %935 = vmatprep.subr.mxu0 0.0
        %936 = vmatpush1.xpose.msra.mxu0 0.0
        %937 = vmatprep.subr.mxu0 0.0
        %938 = vmatpush1.xpose.msra.mxu0 0.0
        %939 = vmatprep.subr.mxu0 0.0
        %940 = vmatpush1.xpose.msra.mxu0 0.0
        %941 = vmatprep.subr.mxu0 0.0
        %942 = vmatpush1.xpose.msra.mxu0 0.0
        %943 = vmatprep.subr.mxu0 0.0
        %944 = vmatpush1.xpose.msra.mxu0 0.0
        %945 = vmatprep.subr.mxu0 0.0
        %946 = vmatpush1.xpose.msra.mxu0 0.0
        %947 = vmatprep.subr.mxu0 0.0
        %948 = vmatpush1.xpose.msra.mxu0 0.0
        %949 = vmatprep.subr.mxu0 0.0
        %950 = vmatpush1.xpose.msra.mxu0 0.0
        %951 = vmatprep.subr.mxu0 0.0
        %952 = vmatpush1.xpose.msra.mxu0 0.0
        %953 = vmatprep.subr.mxu0 0.0
        %954 = vmatpush1.xpose.msra.mxu0 0.0
        %955 = vmatprep.subr.mxu0 0.0
        %956 = vmatpush1.xpose.msra.mxu0 %v923
        %957 = vmatprep.subr.mxu0 0.0
        %958 = vmatpush2.xpose.msra.mxu0 0.0
        %959 = vmatprep.subr.mxu0 0.0
        %960 = vmatpush2.xpose.msra.mxu0 0.0
        %961 = vmatprep.subr.mxu0 0.0
        %962 = vmatpush2.xpose.msra.mxu0 0.0
        %963 = vmatprep.subr.mxu0 0.0
        %964 = vmatpush2.xpose.msra.mxu0 0.0
        %965 = vmatprep.subr.mxu0 0.0
        %966 = vmatpush2.xpose.msra.mxu0 0.0
        %967 = vmatprep.subr.mxu0 0.0
        %968 = vmatpush2.xpose.msra.mxu0 0.0
        %969 = vmatprep.subr.mxu0 0.0
        %970 = vmatpush2.xpose.msra.mxu0 0.0
        %971 = vmatprep.subr.mxu0 0.0
        %972 = vmatpush2.xpose.msra.mxu0 0.0
        %973 = vmatprep.subr.mxu0 0.0
        %974 = vmatpush2.xpose.msra.mxu0 0.0
        %975 = vmatprep.subr.mxu0 0.0
        %976 = vmatpush2.xpose.msra.mxu0 0.0
        %977 = vmatprep.subr.mxu0 0.0
        %978 = vmatpush2.xpose.msra.mxu0 0.0
        %979 = vmatprep.subr.mxu0 0.0
        %980 = vmatpush2.xpose.msra.mxu0 0.0
        %981 = vmatprep.subr.mxu0 0.0
        %982 = vmatpush2.xpose.msra.mxu0 0.0
        %983 = vmatprep.subr.mxu0 0.0
        %984 = vmatpush2.xpose.msra.mxu0 0.0
        %985 = vmatprep.subr.mxu0 0.0
        %986 = vmatpush2.xpose.msra.mxu0 0.0
        %987 = vmatprep.subr.mxu0 0.0
        %988 = vmatpush2.xpose.msra.mxu0 0.0
        %989 = vmatprep.mubr.f32.mxu0 0.0
        %990 = vmatmul.mubr.f32.gmra.mxu0 %v920
        %v991 = vpop.f32.mrf.mxu0
        %v992 = vadd.f32 0.0, %v991
        %v993 = vpop.f32.mrf.mxu0
        %994 = vdwg.mxu0
        %v995 = vmul.f32 %v992, 0.35355338
        %v997 = vlaneseq
        %v998 = vshrl.u32 %v997, 7
        %v999 = vsub.s32 0, %v998
        %v1000 = vrot.slane %v671, %v999
        %v1002 = vadd.f32 %v995, %v1000
        %v1003 = vsel %vm918, %v1002, -inf
        %1004 = vmax.xlane.f32.xlu0 %v1003
        %v1005 = vpop.xlane.xlu0 %1004
        %v1006 = vsub.f32 %v1002, %v1005
        %v1007 = vmul.f32 %v1006, 1.442695
        %v1008 = vpow.pop %v1007
        %v1009 = vsel %vm918, %v1008, 0.0
        %1010 = vadd.xlane.f32.xlu0 %v1009
        %v1011 = vpop.xlane.xlu0 %1010
        %v1012 = vrcp.pop %v1011
        %v1013 = vmul.f32 %v1008, %v1012
        %v1015 = vsel %vm918, %v1013, 0
        %1017 = vmatprep.subr.mxu0 0.0
        %1018 = vmatpush1.msra.mxu0 0.0
        %1019 = vmatprep.subr.mxu0 0.0
        %1020 = vmatpush1.msra.mxu0 0.0
        %1021 = vmatprep.subr.mxu0 0.0
        %1022 = vmatpush1.msra.mxu0 0.0
        %1023 = vmatprep.subr.mxu0 0.0
        %1024 = vmatpush1.msra.mxu0 0.0
        %1025 = vmatprep.subr.mxu0 0.0
        %1026 = vmatpush1.msra.mxu0 0.0
        %1027 = vmatprep.subr.mxu0 0.0
        %1028 = vmatpush1.msra.mxu0 0.0
        %1029 = vmatprep.subr.mxu0 0.0
        %1030 = vmatpush1.msra.mxu0 0.0
        %1031 = vmatprep.subr.mxu0 0.0
        %1032 = vmatpush1.msra.mxu0 0.0
        %1033 = vmatprep.subr.mxu0 0.0
        %1034 = vmatpush1.msra.mxu0 0.0
        %1035 = vmatprep.subr.mxu0 0.0
        %1036 = vmatpush1.msra.mxu0 0.0
        %1037 = vmatprep.subr.mxu0 0.0
        %1038 = vmatpush1.msra.mxu0 0.0
        %1039 = vmatprep.subr.mxu0 0.0
        %1040 = vmatpush1.msra.mxu0 0.0
        %1041 = vmatprep.subr.mxu0 0.0
        %1042 = vmatpush1.msra.mxu0 0.0
        %1043 = vmatprep.subr.mxu0 0.0
        %1044 = vmatpush1.msra.mxu0 0.0
        %1045 = vmatprep.subr.mxu0 0.0
        %1046 = vmatpush1.msra.mxu0 0.0
        %1047 = vmatprep.subr.mxu0 0.0
        %1048 = vmatpush1.msra.mxu0 %v915
        %1049 = vmatprep.subr.mxu0 0.0
        %1050 = vmatpush2.msra.mxu0 0.0
        %1051 = vmatprep.subr.mxu0 0.0
        %1052 = vmatpush2.msra.mxu0 0.0
        %1053 = vmatprep.subr.mxu0 0.0
        %1054 = vmatpush2.msra.mxu0 0.0
        %1055 = vmatprep.subr.mxu0 0.0
        %1056 = vmatpush2.msra.mxu0 0.0
        %1057 = vmatprep.subr.mxu0 0.0
        %1058 = vmatpush2.msra.mxu0 0.0
        %1059 = vmatprep.subr.mxu0 0.0
        %1060 = vmatpush2.msra.mxu0 0.0
        %1061 = vmatprep.subr.mxu0 0.0
        %1062 = vmatpush2.msra.mxu0 0.0
        %1063 = vmatprep.subr.mxu0 0.0
        %1064 = vmatpush2.msra.mxu0 0.0
        %1065 = vmatprep.subr.mxu0 0.0
        %1066 = vmatpush2.msra.mxu0 0.0
        %1067 = vmatprep.subr.mxu0 0.0
        %1068 = vmatpush2.msra.mxu0 0.0
        %1069 = vmatprep.subr.mxu0 0.0
        %1070 = vmatpush2.msra.mxu0 0.0
        %1071 = vmatprep.subr.mxu0 0.0
        %1072 = vmatpush2.msra.mxu0 0.0
        %1073 = vmatprep.subr.mxu0 0.0
        %1074 = vmatpush2.msra.mxu0 0.0
        %1075 = vmatprep.subr.mxu0 0.0
        %1076 = vmatpush2.msra.mxu0 0.0
        %1077 = vmatprep.subr.mxu0 0.0
        %1078 = vmatpush2.msra.mxu0 0.0
        %1079 = vmatprep.subr.mxu0 0.0
        %1080 = vmatpush2.msra.mxu0 0.0
        %1081 = vmatprep.mubr.f32.mxu0 0.0
        %1082 = vmatmul.mubr.f32.gmra.mxu0 %v1015
        %v1083 = vpop.f32.mrf.mxu0
        %v1084 = vadd.f32 0.0, %v1083
        %v1085 = vpop.f32.mrf.mxu0
        %1086 = vdwg.mxu0
        %v1087 = vld [vmem:[%s10] sm:$0xff]
        %s1088 = scalar_lea.vmem %s4, 32
        %v1089 = vld [vmem:[%s1088] sm:$0xff]
        %v1090 = vld [vmem:[%s1088 + $0x8] sm:$0xff]
        %v1091 = vld [vmem:[%s1088 + $0x10] sm:$0xff]
        %v1092 = vld [vmem:[%s1088 + $0x18] sm:$0xff]
        %s1093 = scalar_lea.vmem %s7, 1
        %v1094 = vld [vmem:[%s1093] sm:$0x1]
        %v1096 = vlaneseq
        %v1097 = vshrl.u32 %v1096, 7
        %v1098 = vsub.s32 0, %v1097
        %v1099 = vrot.slane %v1094, %v1098
        %1101 = vmatprep.subr.mxu0 0.0
        %1102 = vmatpush1.msra.mxu0 0.0
        %1103 = vmatprep.subr.mxu0 0.0
        %1104 = vmatpush1.msra.mxu0 0.0
        %1105 = vmatprep.subr.mxu0 0.0
        %1106 = vmatpush1.msra.mxu0 0.0
        %1107 = vmatprep.subr.mxu0 0.0
        %1108 = vmatpush1.msra.mxu0 0.0
        %1109 = vmatprep.subr.mxu0 0.0
        %1110 = vmatpush1.msra.mxu0 0.0
        %1111 = vmatprep.subr.mxu0 0.0
        %1112 = vmatpush1.msra.mxu0 0.0
        %1113 = vmatprep.subr.mxu0 0.0
        %1114 = vmatpush1.msra.mxu0 0.0
        %1115 = vmatprep.subr.mxu0 0.0
        %1116 = vmatpush1.msra.mxu0 0.0
        %1117 = vmatprep.subr.mxu0 0.0
        %1118 = vmatpush1.msra.mxu0 0.0
        %1119 = vmatprep.subr.mxu0 0.0
        %1120 = vmatpush1.msra.mxu0 0.0
        %1121 = vmatprep.subr.mxu0 0.0
        %1122 = vmatpush1.msra.mxu0 0.0
        %1123 = vmatprep.subr.mxu0 0.0
        %1124 = vmatpush1.msra.mxu0 0.0
        %1125 = vmatprep.subr.mxu0 0.0
        %1126 = vmatpush1.msra.mxu0 %v1092
        %1127 = vmatprep.subr.mxu0 0.0
        %1128 = vmatpush1.msra.mxu0 %v1091
        %1129 = vmatprep.subr.mxu0 0.0
        %1130 = vmatpush1.msra.mxu0 %v1090
        %1131 = vmatprep.subr.mxu0 0.0
        %1132 = vmatpush1.msra.mxu0 %v1089
        %1133 = vmatprep.subr.mxu0 0.0
        %1134 = vmatpush2.msra.mxu0 0.0
        %1135 = vmatprep.subr.mxu0 0.0
        %1136 = vmatpush2.msra.mxu0 0.0
        %1137 = vmatprep.subr.mxu0 0.0
        %1138 = vmatpush2.msra.mxu0 0.0
        %1139 = vmatprep.subr.mxu0 0.0
        %1140 = vmatpush2.msra.mxu0 0.0
        %1141 = vmatprep.subr.mxu0 0.0
        %1142 = vmatpush2.msra.mxu0 0.0
        %1143 = vmatprep.subr.mxu0 0.0
        %1144 = vmatpush2.msra.mxu0 0.0
        %1145 = vmatprep.subr.mxu0 0.0
        %1146 = vmatpush2.msra.mxu0 0.0
        %1147 = vmatprep.subr.mxu0 0.0
        %1148 = vmatpush2.msra.mxu0 0.0
        %1149 = vmatprep.subr.mxu0 0.0
        %1150 = vmatpush2.msra.mxu0 0.0
        %1151 = vmatprep.subr.mxu0 0.0
        %1152 = vmatpush2.msra.mxu0 0.0
        %1153 = vmatprep.subr.mxu0 0.0
        %1154 = vmatpush2.msra.mxu0 0.0
        %1155 = vmatprep.subr.mxu0 0.0
        %1156 = vmatpush2.msra.mxu0 0.0
        %1157 = vmatprep.subr.mxu0 0.0
        %1158 = vmatpush2.msra.mxu0 0.0
        %1159 = vmatprep.subr.mxu0 0.0
        %1160 = vmatpush2.msra.mxu0 0.0
        %1161 = vmatprep.subr.mxu0 0.0
        %1162 = vmatpush2.msra.mxu0 0.0
        %1163 = vmatprep.subr.mxu0 0.0
        %1164 = vmatpush2.msra.mxu0 0.0
        %1165 = vmatprep.mubr.f32.mxu0 0.0
        %1166 = vmatmul.mubr.f32.gmra.mxu0 %v684
        %v1167 = vpop.f32.mrf.mxu0
        %v1168 = vadd.f32 %v1099, %v1167
        %v1169 = vpop.f32.mrf.mxu0
        %1170 = vdwg.mxu0
        %s1171 = scalar_lea.vmem %s5, 32
        %v1172 = vld [vmem:[%s1171] sm:$0xff]
        %v1173 = vld [vmem:[%s1171 + $0x8] sm:$0xff]
        %v1174 = vld [vmem:[%s1171 + $0x10] sm:$0xff]
        %v1175 = vld [vmem:[%s1171 + $0x18] sm:$0xff]
        %s1176 = scalar_lea.vmem %s8, 1
        %v1177 = vld [vmem:[%s1176] sm:$0x1]
        %v1179 = vlaneseq
        %v1180 = vshrl.u32 %v1179, 7
        %v1181 = vsub.s32 0, %v1180
        %v1182 = vrot.slane %v1177, %v1181
        %1184 = vmatprep.subr.mxu0 0.0
        %1185 = vmatpush1.msra.mxu0 0.0
        %1186 = vmatprep.subr.mxu0 0.0
        %1187 = vmatpush1.msra.mxu0 0.0
        %1188 = vmatprep.subr.mxu0 0.0
        %1189 = vmatpush1.msra.mxu0 0.0
        %1190 = vmatprep.subr.mxu0 0.0
        %1191 = vmatpush1.msra.mxu0 0.0
        %1192 = vmatprep.subr.mxu0 0.0
        %1193 = vmatpush1.msra.mxu0 0.0
        %1194 = vmatprep.subr.mxu0 0.0
        %1195 = vmatpush1.msra.mxu0 0.0
        %1196 = vmatprep.subr.mxu0 0.0
        %1197 = vmatpush1.msra.mxu0 0.0
        %1198 = vmatprep.subr.mxu0 0.0
        %1199 = vmatpush1.msra.mxu0 0.0
        %1200 = vmatprep.subr.mxu0 0.0
        %1201 = vmatpush1.msra.mxu0 0.0
        %1202 = vmatprep.subr.mxu0 0.0
        %1203 = vmatpush1.msra.mxu0 0.0
        %1204 = vmatprep.subr.mxu0 0.0
        %1205 = vmatpush1.msra.mxu0 0.0
        %1206 = vmatprep.subr.mxu0 0.0
        %1207 = vmatpush1.msra.mxu0 0.0
        %1208 = vmatprep.subr.mxu0 0.0
        %1209 = vmatpush1.msra.mxu0 %v1175
        %1210 = vmatprep.subr.mxu0 0.0
        %1211 = vmatpush1.msra.mxu0 %v1174
        %1212 = vmatprep.subr.mxu0 0.0
        %1213 = vmatpush1.msra.mxu0 %v1173
        %1214 = vmatprep.subr.mxu0 0.0
        %1215 = vmatpush1.msra.mxu0 %v1172
        %1216 = vmatprep.subr.mxu0 0.0
        %1217 = vmatpush2.msra.mxu0 0.0
        %1218 = vmatprep.subr.mxu0 0.0
        %1219 = vmatpush2.msra.mxu0 0.0
        %1220 = vmatprep.subr.mxu0 0.0
        %1221 = vmatpush2.msra.mxu0 0.0
        %1222 = vmatprep.subr.mxu0 0.0
        %1223 = vmatpush2.msra.mxu0 0.0
        %1224 = vmatprep.subr.mxu0 0.0
        %1225 = vmatpush2.msra.mxu0 0.0
        %1226 = vmatprep.subr.mxu0 0.0
        %1227 = vmatpush2.msra.mxu0 0.0
        %1228 = vmatprep.subr.mxu0 0.0
        %1229 = vmatpush2.msra.mxu0 0.0
        %1230 = vmatprep.subr.mxu0 0.0
        %1231 = vmatpush2.msra.mxu0 0.0
        %1232 = vmatprep.subr.mxu0 0.0
        %1233 = vmatpush2.msra.mxu0 0.0
        %1234 = vmatprep.subr.mxu0 0.0
        %1235 = vmatpush2.msra.mxu0 0.0
        %1236 = vmatprep.subr.mxu0 0.0
        %1237 = vmatpush2.msra.mxu0 0.0
        %1238 = vmatprep.subr.mxu0 0.0
        %1239 = vmatpush2.msra.mxu0 0.0
        %1240 = vmatprep.subr.mxu0 0.0
        %1241 = vmatpush2.msra.mxu0 0.0
        %1242 = vmatprep.subr.mxu0 0.0
        %1243 = vmatpush2.msra.mxu0 0.0
        %1244 = vmatprep.subr.mxu0 0.0
        %1245 = vmatpush2.msra.mxu0 0.0
        %1246 = vmatprep.subr.mxu0 0.0
        %1247 = vmatpush2.msra.mxu0 0.0
        %1248 = vmatprep.mubr.f32.mxu0 0.0
        %1249 = vmatmul.mubr.f32.gmra.mxu0 %v684
        %v1250 = vpop.f32.mrf.mxu0
        %v1251 = vadd.f32 %v1182, %v1250
        %v1252 = vpop.f32.mrf.mxu0
        %1253 = vdwg.mxu0
        %s1254 = scalar_lea.vmem %s6, 32
        %v1255 = vld [vmem:[%s1254] sm:$0xff]
        %v1256 = vld [vmem:[%s1254 + $0x8] sm:$0xff]
        %v1257 = vld [vmem:[%s1254 + $0x10] sm:$0xff]
        %v1258 = vld [vmem:[%s1254 + $0x18] sm:$0xff]
        %s1259 = scalar_lea.vmem %s9, 1
        %v1260 = vld [vmem:[%s1259] sm:$0x1]
        %v1262 = vlaneseq
        %v1263 = vshrl.u32 %v1262, 7
        %v1264 = vsub.s32 0, %v1263
        %v1265 = vrot.slane %v1260, %v1264
        %1267 = vmatprep.subr.mxu0 0.0
        %1268 = vmatpush1.msra.mxu0 0.0
        %1269 = vmatprep.subr.mxu0 0.0
        %1270 = vmatpush1.msra.mxu0 0.0
        %1271 = vmatprep.subr.mxu0 0.0
        %1272 = vmatpush1.msra.mxu0 0.0
        %1273 = vmatprep.subr.mxu0 0.0
        %1274 = vmatpush1.msra.mxu0 0.0
        %1275 = vmatprep.subr.mxu0 0.0
        %1276 = vmatpush1.msra.mxu0 0.0
        %1277 = vmatprep.subr.mxu0 0.0
        %1278 = vmatpush1.msra.mxu0 0.0
        %1279 = vmatprep.subr.mxu0 0.0
        %1280 = vmatpush1.msra.mxu0 0.0
        %1281 = vmatprep.subr.mxu0 0.0
        %1282 = vmatpush1.msra.mxu0 0.0
        %1283 = vmatprep.subr.mxu0 0.0
        %1284 = vmatpush1.msra.mxu0 0.0
        %1285 = vmatprep.subr.mxu0 0.0
        %1286 = vmatpush1.msra.mxu0 0.0
        %1287 = vmatprep.subr.mxu0 0.0
        %1288 = vmatpush1.msra.mxu0 0.0
        %1289 = vmatprep.subr.mxu0 0.0
        %1290 = vmatpush1.msra.mxu0 0.0
        %1291 = vmatprep.subr.mxu0 0.0
        %1292 = vmatpush1.msra.mxu0 %v1258
        %1293 = vmatprep.subr.mxu0 0.0
        %1294 = vmatpush1.msra.mxu0 %v1257
        %1295 = vmatprep.subr.mxu0 0.0
        %1296 = vmatpush1.msra.mxu0 %v1256
        %1297 = vmatprep.subr.mxu0 0.0
        %1298 = vmatpush1.msra.mxu0 %v1255
        %1299 = vmatprep.subr.mxu0 0.0
        %1300 = vmatpush2.msra.mxu0 0.0
        %1301 = vmatprep.subr.mxu0 0.0
        %1302 = vmatpush2.msra.mxu0 0.0
        %1303 = vmatprep.subr.mxu0 0.0
        %1304 = vmatpush2.msra.mxu0 0.0
        %1305 = vmatprep.subr.mxu0 0.0
        %1306 = vmatpush2.msra.mxu0 0.0
        %1307 = vmatprep.subr.mxu0 0.0
        %1308 = vmatpush2.msra.mxu0 0.0
        %1309 = vmatprep.subr.mxu0 0.0
        %1310 = vmatpush2.msra.mxu0 0.0
        %1311 = vmatprep.subr.mxu0 0.0
        %1312 = vmatpush2.msra.mxu0 0.0
        %1313 = vmatprep.subr.mxu0 0.0
        %1314 = vmatpush2.msra.mxu0 0.0
        %1315 = vmatprep.subr.mxu0 0.0
        %1316 = vmatpush2.msra.mxu0 0.0
        %1317 = vmatprep.subr.mxu0 0.0
        %1318 = vmatpush2.msra.mxu0 0.0
        %1319 = vmatprep.subr.mxu0 0.0
        %1320 = vmatpush2.msra.mxu0 0.0
        %1321 = vmatprep.subr.mxu0 0.0
        %1322 = vmatpush2.msra.mxu0 0.0
        %1323 = vmatprep.subr.mxu0 0.0
        %1324 = vmatpush2.msra.mxu0 0.0
        %1325 = vmatprep.subr.mxu0 0.0
        %1326 = vmatpush2.msra.mxu0 0.0
        %1327 = vmatprep.subr.mxu0 0.0
        %1328 = vmatpush2.msra.mxu0 0.0
        %1329 = vmatprep.subr.mxu0 0.0
        %1330 = vmatpush2.msra.mxu0 0.0
        %1331 = vmatprep.mubr.f32.mxu0 0.0
        %1332 = vmatmul.mubr.f32.gmra.mxu0 %v684
        %v1333 = vpop.f32.mrf.mxu0
        %v1334 = vadd.f32 %v1265, %v1333
        %v1335 = vpop.f32.mrf.mxu0
        %1336 = vdwg.mxu0
        %v1338 = vsel %vm918, %v1168, 0
        %v1341 = vsel %vm918, %v1251, 0
        %1343 = vmatprep.subr.mxu0 0.0
        %1344 = vmatpush1.xpose.msra.mxu0 0.0
        %1345 = vmatprep.subr.mxu0 0.0
        %1346 = vmatpush1.xpose.msra.mxu0 0.0
        %1347 = vmatprep.subr.mxu0 0.0
        %1348 = vmatpush1.xpose.msra.mxu0 0.0
        %1349 = vmatprep.subr.mxu0 0.0
        %1350 = vmatpush1.xpose.msra.mxu0 0.0
        %1351 = vmatprep.subr.mxu0 0.0
        %1352 = vmatpush1.xpose.msra.mxu0 0.0
        %1353 = vmatprep.subr.mxu0 0.0
        %1354 = vmatpush1.xpose.msra.mxu0 0.0
        %1355 = vmatprep.subr.mxu0 0.0
        %1356 = vmatpush1.xpose.msra.mxu0 0.0
        %1357 = vmatprep.subr.mxu0 0.0
        %1358 = vmatpush1.xpose.msra.mxu0 0.0
        %1359 = vmatprep.subr.mxu0 0.0
        %1360 = vmatpush1.xpose.msra.mxu0 0.0
        %1361 = vmatprep.subr.mxu0 0.0
        %1362 = vmatpush1.xpose.msra.mxu0 0.0
        %1363 = vmatprep.subr.mxu0 0.0
        %1364 = vmatpush1.xpose.msra.mxu0 0.0
        %1365 = vmatprep.subr.mxu0 0.0
        %1366 = vmatpush1.xpose.msra.mxu0 0.0
        %1367 = vmatprep.subr.mxu0 0.0
        %1368 = vmatpush1.xpose.msra.mxu0 0.0
        %1369 = vmatprep.subr.mxu0 0.0
        %1370 = vmatpush1.xpose.msra.mxu0 0.0
        %1371 = vmatprep.subr.mxu0 0.0
        %1372 = vmatpush1.xpose.msra.mxu0 0.0
        %1373 = vmatprep.subr.mxu0 0.0
        %1374 = vmatpush1.xpose.msra.mxu0 %v1341
        %1375 = vmatprep.subr.mxu0 0.0
        %1376 = vmatpush2.xpose.msra.mxu0 0.0
        %1377 = vmatprep.subr.mxu0 0.0
        %1378 = vmatpush2.xpose.msra.mxu0 0.0
        %1379 = vmatprep.subr.mxu0 0.0
        %1380 = vmatpush2.xpose.msra.mxu0 0.0
        %1381 = vmatprep.subr.mxu0 0.0
        %1382 = vmatpush2.xpose.msra.mxu0 0.0
        %1383 = vmatprep.subr.mxu0 0.0
        %1384 = vmatpush2.xpose.msra.mxu0 0.0
        %1385 = vmatprep.subr.mxu0 0.0
        %1386 = vmatpush2.xpose.msra.mxu0 0.0
        %1387 = vmatprep.subr.mxu0 0.0
        %1388 = vmatpush2.xpose.msra.mxu0 0.0
        %1389 = vmatprep.subr.mxu0 0.0
        %1390 = vmatpush2.xpose.msra.mxu0 0.0
        %1391 = vmatprep.subr.mxu0 0.0
        %1392 = vmatpush2.xpose.msra.mxu0 0.0
        %1393 = vmatprep.subr.mxu0 0.0
        %1394 = vmatpush2.xpose.msra.mxu0 0.0
        %1395 = vmatprep.subr.mxu0 0.0
        %1396 = vmatpush2.xpose.msra.mxu0 0.0
        %1397 = vmatprep.subr.mxu0 0.0
        %1398 = vmatpush2.xpose.msra.mxu0 0.0
        %1399 = vmatprep.subr.mxu0 0.0
        %1400 = vmatpush2.xpose.msra.mxu0 0.0
        %1401 = vmatprep.subr.mxu0 0.0
        %1402 = vmatpush2.xpose.msra.mxu0 0.0
        %1403 = vmatprep.subr.mxu0 0.0
        %1404 = vmatpush2.xpose.msra.mxu0 0.0
        %1405 = vmatprep.subr.mxu0 0.0
        %1406 = vmatpush2.xpose.msra.mxu0 0.0
        %1407 = vmatprep.mubr.f32.mxu0 0.0
        %1408 = vmatmul.mubr.f32.gmra.mxu0 %v1338
        %v1409 = vpop.f32.mrf.mxu0
        %v1410 = vadd.f32 0.0, %v1409
        %v1411 = vpop.f32.mrf.mxu0
        %1412 = vdwg.mxu0
        %v1413 = vmul.f32 %v1410, 0.35355338
        %v1414 = vadd.f32 %v1413, %v1000
        %v1415 = vsel %vm918, %v1414, -inf
        %1416 = vmax.xlane.f32.xlu0 %v1415
        %v1417 = vpop.xlane.xlu0 %1416
        %v1418 = vsub.f32 %v1414, %v1417
        %v1419 = vmul.f32 %v1418, 1.442695
        %v1420 = vpow.pop %v1419
        %v1421 = vsel %vm918, %v1420, 0.0
        %1422 = vadd.xlane.f32.xlu0 %v1421
        %v1423 = vpop.xlane.xlu0 %1422
        %v1424 = vrcp.pop %v1423
        %v1425 = vmul.f32 %v1420, %v1424
        %v1427 = vsel %vm918, %v1425, 0
        %1429 = vmatprep.subr.mxu0 0.0
        %1430 = vmatpush1.msra.mxu0 0.0
        %1431 = vmatprep.subr.mxu0 0.0
        %1432 = vmatpush1.msra.mxu0 0.0
        %1433 = vmatprep.subr.mxu0 0.0
        %1434 = vmatpush1.msra.mxu0 0.0
        %1435 = vmatprep.subr.mxu0 0.0
        %1436 = vmatpush1.msra.mxu0 0.0
        %1437 = vmatprep.subr.mxu0 0.0
        %1438 = vmatpush1.msra.mxu0 0.0
        %1439 = vmatprep.subr.mxu0 0.0
        %1440 = vmatpush1.msra.mxu0 0.0
        %1441 = vmatprep.subr.mxu0 0.0
        %1442 = vmatpush1.msra.mxu0 0.0
        %1443 = vmatprep.subr.mxu0 0.0
        %1444 = vmatpush1.msra.mxu0 0.0
        %1445 = vmatprep.subr.mxu0 0.0
        %1446 = vmatpush1.msra.mxu0 0.0
        %1447 = vmatprep.subr.mxu0 0.0
        %1448 = vmatpush1.msra.mxu0 0.0
        %1449 = vmatprep.subr.mxu0 0.0
        %1450 = vmatpush1.msra.mxu0 0.0
        %1451 = vmatprep.subr.mxu0 0.0
        %1452 = vmatpush1.msra.mxu0 0.0
        %1453 = vmatprep.subr.mxu0 0.0
        %1454 = vmatpush1.msra.mxu0 0.0
        %1455 = vmatprep.subr.mxu0 0.0
        %1456 = vmatpush1.msra.mxu0 0.0
        %1457 = vmatprep.subr.mxu0 0.0
        %1458 = vmatpush1.msra.mxu0 0.0
        %1459 = vmatprep.subr.mxu0 0.0
        %1460 = vmatpush1.msra.mxu0 %v1334
        %1461 = vmatprep.subr.mxu0 0.0
        %1462 = vmatpush2.msra.mxu0 0.0
        %1463 = vmatprep.subr.mxu0 0.0
        %1464 = vmatpush2.msra.mxu0 0.0
        %1465 = vmatprep.subr.mxu0 0.0
        %1466 = vmatpush2.msra.mxu0 0.0
        %1467 = vmatprep.subr.mxu0 0.0
        %1468 = vmatpush2.msra.mxu0 0.0
        %1469 = vmatprep.subr.mxu0 0.0
        %1470 = vmatpush2.msra.mxu0 0.0
        %1471 = vmatprep.subr.mxu0 0.0
        %1472 = vmatpush2.msra.mxu0 0.0
        %1473 = vmatprep.subr.mxu0 0.0
        %1474 = vmatpush2.msra.mxu0 0.0
        %1475 = vmatprep.subr.mxu0 0.0
        %1476 = vmatpush2.msra.mxu0 0.0
        %1477 = vmatprep.subr.mxu0 0.0
        %1478 = vmatpush2.msra.mxu0 0.0
        %1479 = vmatprep.subr.mxu0 0.0
        %1480 = vmatpush2.msra.mxu0 0.0
        %1481 = vmatprep.subr.mxu0 0.0
        %1482 = vmatpush2.msra.mxu0 0.0
        %1483 = vmatprep.subr.mxu0 0.0
        %1484 = vmatpush2.msra.mxu0 0.0
        %1485 = vmatprep.subr.mxu0 0.0
        %1486 = vmatpush2.msra.mxu0 0.0
        %1487 = vmatprep.subr.mxu0 0.0
        %1488 = vmatpush2.msra.mxu0 0.0
        %1489 = vmatprep.subr.mxu0 0.0
        %1490 = vmatpush2.msra.mxu0 0.0
        %1491 = vmatprep.subr.mxu0 0.0
        %1492 = vmatpush2.msra.mxu0 0.0
        %1493 = vmatprep.mubr.f32.mxu0 0.0
        %1494 = vmatmul.mubr.f32.gmra.mxu0 %v1427
        %v1495 = vpop.f32.mrf.mxu0
        %v1496 = vadd.f32 0.0, %v1495
        %v1497 = vpop.f32.mrf.mxu0
        %1498 = vdwg.mxu0
        %s1499 = scalar_lea.vmem %s10, 8
        %v1500 = vld [vmem:[%s1499] sm:$0xff]
        %v1502 = vsel %vm918, %v1496, 0
        %1504 = vmatprep.subr.mxu0 0.0
        %1505 = vmatpush1.msra.mxu0 0.0
        %1506 = vmatprep.subr.mxu0 0.0
        %1507 = vmatpush1.msra.mxu0 0.0
        %1508 = vmatprep.subr.mxu0 0.0
        %1509 = vmatpush1.msra.mxu0 0.0
        %1510 = vmatprep.subr.mxu0 0.0
        %1511 = vmatpush1.msra.mxu0 0.0
        %1512 = vmatprep.subr.mxu0 0.0
        %1513 = vmatpush1.msra.mxu0 0.0
        %1514 = vmatprep.subr.mxu0 0.0
        %1515 = vmatpush1.msra.mxu0 0.0
        %1516 = vmatprep.subr.mxu0 0.0
        %1517 = vmatpush1.msra.mxu0 0.0
        %1518 = vmatprep.subr.mxu0 0.0
        %1519 = vmatpush1.msra.mxu0 0.0
        %1520 = vmatprep.subr.mxu0 0.0
        %1521 = vmatpush1.msra.mxu0 0.0
        %1522 = vmatprep.subr.mxu0 0.0
        %1523 = vmatpush1.msra.mxu0 0.0
        %1524 = vmatprep.subr.mxu0 0.0
        %1525 = vmatpush1.msra.mxu0 0.0
        %1526 = vmatprep.subr.mxu0 0.0
        %1527 = vmatpush1.msra.mxu0 0.0
        %1528 = vmatprep.subr.mxu0 0.0
        %1529 = vmatpush1.msra.mxu0 0.0
        %1530 = vmatprep.subr.mxu0 0.0
        %1531 = vmatpush1.msra.mxu0 0.0
        %1532 = vmatprep.subr.mxu0 0.0
        %1533 = vmatpush1.msra.mxu0 0.0
        %1534 = vmatprep.subr.mxu0 0.0
        %1535 = vmatpush1.msra.mxu0 %v1500
        %1536 = vmatprep.subr.mxu0 0.0
        %1537 = vmatpush2.msra.mxu0 0.0
        %1538 = vmatprep.subr.mxu0 0.0
        %1539 = vmatpush2.msra.mxu0 0.0
        %1540 = vmatprep.subr.mxu0 0.0
        %1541 = vmatpush2.msra.mxu0 0.0
        %1542 = vmatprep.subr.mxu0 0.0
        %1543 = vmatpush2.msra.mxu0 0.0
        %1544 = vmatprep.subr.mxu0 0.0
        %1545 = vmatpush2.msra.mxu0 0.0
        %1546 = vmatprep.subr.mxu0 0.0
        %1547 = vmatpush2.msra.mxu0 0.0
        %1548 = vmatprep.subr.mxu0 0.0
        %1549 = vmatpush2.msra.mxu0 0.0
        %1550 = vmatprep.subr.mxu0 0.0
        %1551 = vmatpush2.msra.mxu0 0.0
        %1552 = vmatprep.subr.mxu0 0.0
        %1553 = vmatpush2.msra.mxu0 0.0
        %1554 = vmatprep.subr.mxu0 0.0
        %1555 = vmatpush2.msra.mxu0 0.0
        %1556 = vmatprep.subr.mxu0 0.0
        %1557 = vmatpush2.msra.mxu0 0.0
        %1558 = vmatprep.subr.mxu0 0.0
        %1559 = vmatpush2.msra.mxu0 0.0
        %1560 = vmatprep.subr.mxu0 0.0
        %1561 = vmatpush2.msra.mxu0 0.0
        %1562 = vmatprep.subr.mxu0 0.0
        %1563 = vmatpush2.msra.mxu0 0.0
        %1564 = vmatprep.subr.mxu0 0.0
        %1565 = vmatpush2.msra.mxu0 0.0
        %1566 = vmatprep.subr.mxu0 0.0
        %1567 = vmatpush2.msra.mxu0 0.0
        %1568 = vmatprep.mubr.f32.mxu0 0.0
        %1569 = vmatmul.mubr.f32.gmra.mxu0 %v1502
        %v1570 = vpop.f32.mrf.mxu0
        %v1571 = vadd.f32 0.0, %v1570
        %v1572 = vpop.f32.mrf.mxu0
        %1573 = vdwg.mxu0
        %v1575 = vsel %vm918, %v1084, 0
        %1577 = vmatprep.subr.mxu0 0.0
        %1578 = vmatpush1.msra.mxu0 0.0
        %1579 = vmatprep.subr.mxu0 0.0
        %1580 = vmatpush1.msra.mxu0 0.0
        %1581 = vmatprep.subr.mxu0 0.0
        %1582 = vmatpush1.msra.mxu0 0.0
        %1583 = vmatprep.subr.mxu0 0.0
        %1584 = vmatpush1.msra.mxu0 0.0
        %1585 = vmatprep.subr.mxu0 0.0
        %1586 = vmatpush1.msra.mxu0 0.0
        %1587 = vmatprep.subr.mxu0 0.0
        %1588 = vmatpush1.msra.mxu0 0.0
        %1589 = vmatprep.subr.mxu0 0.0
        %1590 = vmatpush1.msra.mxu0 0.0
        %1591 = vmatprep.subr.mxu0 0.0
        %1592 = vmatpush1.msra.mxu0 0.0
        %1593 = vmatprep.subr.mxu0 0.0
        %1594 = vmatpush1.msra.mxu0 0.0
        %1595 = vmatprep.subr.mxu0 0.0
        %1596 = vmatpush1.msra.mxu0 0.0
        %1597 = vmatprep.subr.mxu0 0.0
        %1598 = vmatpush1.msra.mxu0 0.0
        %1599 = vmatprep.subr.mxu0 0.0
        %1600 = vmatpush1.msra.mxu0 0.0
        %1601 = vmatprep.subr.mxu0 0.0
        %1602 = vmatpush1.msra.mxu0 0.0
        %1603 = vmatprep.subr.mxu0 0.0
        %1604 = vmatpush1.msra.mxu0 0.0
        %1605 = vmatprep.subr.mxu0 0.0
        %1606 = vmatpush1.msra.mxu0 0.0
        %1607 = vmatprep.subr.mxu0 0.0
        %1608 = vmatpush1.msra.mxu0 %v1087
        %1609 = vmatprep.subr.mxu0 0.0
        %1610 = vmatpush2.msra.mxu0 0.0
        %1611 = vmatprep.subr.mxu0 0.0
        %1612 = vmatpush2.msra.mxu0 0.0
        %1613 = vmatprep.subr.mxu0 0.0
        %1614 = vmatpush2.msra.mxu0 0.0
        %1615 = vmatprep.subr.mxu0 0.0
        %1616 = vmatpush2.msra.mxu0 0.0
        %1617 = vmatprep.subr.mxu0 0.0
        %1618 = vmatpush2.msra.mxu0 0.0
        %1619 = vmatprep.subr.mxu0 0.0
        %1620 = vmatpush2.msra.mxu0 0.0
        %1621 = vmatprep.subr.mxu0 0.0
        %1622 = vmatpush2.msra.mxu0 0.0
        %1623 = vmatprep.subr.mxu0 0.0
        %1624 = vmatpush2.msra.mxu0 0.0
        %1625 = vmatprep.subr.mxu0 0.0
        %1626 = vmatpush2.msra.mxu0 0.0
        %1627 = vmatprep.subr.mxu0 0.0
        %1628 = vmatpush2.msra.mxu0 0.0
        %1629 = vmatprep.subr.mxu0 0.0
        %1630 = vmatpush2.msra.mxu0 0.0
        %1631 = vmatprep.subr.mxu0 0.0
        %1632 = vmatpush2.msra.mxu0 0.0
        %1633 = vmatprep.subr.mxu0 0.0
        %1634 = vmatpush2.msra.mxu0 0.0
        %1635 = vmatprep.subr.mxu0 0.0
        %1636 = vmatpush2.msra.mxu0 0.0
        %1637 = vmatprep.subr.mxu0 0.0
        %1638 = vmatpush2.msra.mxu0 0.0
        %1639 = vmatprep.subr.mxu0 0.0
        %1640 = vmatpush2.msra.mxu0 0.0
        %1641 = vmatprep.mubr.f32.mxu0 0.0
        %1642 = vmatmul.mubr.f32.gmra.mxu0 %v1575
        %v1643 = vpop.f32.mrf.mxu0
        %v1644 = vadd.f32 %v1571, %v1643
        %v1645 = vpop.f32.mrf.mxu0
        %1646 = vdwg.mxu0
        %s1647 = scalar_lea.vmem %s4, 64
        %v1648 = vld [vmem:[%s1647] sm:$0xff]
        %v1649 = vld [vmem:[%s1647 + $0x8] sm:$0xff]
        %v1650 = vld [vmem:[%s1647 + $0x10] sm:$0xff]
        %v1651 = vld [vmem:[%s1647 + $0x18] sm:$0xff]
        %s1652 = scalar_lea.vmem %s7, 2
        %v1653 = vld [vmem:[%s1652] sm:$0x1]
        %v1655 = vlaneseq
        %v1656 = vshrl.u32 %v1655, 7
        %v1657 = vsub.s32 0, %v1656
        %v1658 = vrot.slane %v1653, %v1657
        %1660 = vmatprep.subr.mxu0 0.0
        %1661 = vmatpush1.msra.mxu0 0.0
        %1662 = vmatprep.subr.mxu0 0.0
        %1663 = vmatpush1.msra.mxu0 0.0
        %1664 = vmatprep.subr.mxu0 0.0
        %1665 = vmatpush1.msra.mxu0 0.0
        %1666 = vmatprep.subr.mxu0 0.0
        %1667 = vmatpush1.msra.mxu0 0.0
        %1668 = vmatprep.subr.mxu0 0.0
        %1669 = vmatpush1.msra.mxu0 0.0
        %1670 = vmatprep.subr.mxu0 0.0
        %1671 = vmatpush1.msra.mxu0 0.0
        %1672 = vmatprep.subr.mxu0 0.0
        %1673 = vmatpush1.msra.mxu0 0.0
        %1674 = vmatprep.subr.mxu0 0.0
        %1675 = vmatpush1.msra.mxu0 0.0
        %1676 = vmatprep.subr.mxu0 0.0
        %1677 = vmatpush1.msra.mxu0 0.0
        %1678 = vmatprep.subr.mxu0 0.0
        %1679 = vmatpush1.msra.mxu0 0.0
        %1680 = vmatprep.subr.mxu0 0.0
        %1681 = vmatpush1.msra.mxu0 0.0
        %1682 = vmatprep.subr.mxu0 0.0
        %1683 = vmatpush1.msra.mxu0 0.0
        %1684 = vmatprep.subr.mxu0 0.0
        %1685 = vmatpush1.msra.mxu0 %v1651
        %1686 = vmatprep.subr.mxu0 0.0
        %1687 = vmatpush1.msra.mxu0 %v1650
        %1688 = vmatprep.subr.mxu0 0.0
        %1689 = vmatpush1.msra.mxu0 %v1649
        %1690 = vmatprep.subr.mxu0 0.0
        %1691 = vmatpush1.msra.mxu0 %v1648
        %1692 = vmatprep.subr.mxu0 0.0
        %1693 = vmatpush2.msra.mxu0 0.0
        %1694 = vmatprep.subr.mxu0 0.0
        %1695 = vmatpush2.msra.mxu0 0.0
        %1696 = vmatprep.subr.mxu0 0.0
        %1697 = vmatpush2.msra.mxu0 0.0
        %1698 = vmatprep.subr.mxu0 0.0
        %1699 = vmatpush2.msra.mxu0 0.0
        %1700 = vmatprep.subr.mxu0 0.0
        %1701 = vmatpush2.msra.mxu0 0.0
        %1702 = vmatprep.subr.mxu0 0.0
        %1703 = vmatpush2.msra.mxu0 0.0
        %1704 = vmatprep.subr.mxu0 0.0
        %1705 = vmatpush2.msra.mxu0 0.0
        %1706 = vmatprep.subr.mxu0 0.0
        %1707 = vmatpush2.msra.mxu0 0.0
        %1708 = vmatprep.subr.mxu0 0.0
        %1709 = vmatpush2.msra.mxu0 0.0
        %1710 = vmatprep.subr.mxu0 0.0
        %1711 = vmatpush2.msra.mxu0 0.0
        %1712 = vmatprep.subr.mxu0 0.0
        %1713 = vmatpush2.msra.mxu0 0.0
        %1714 = vmatprep.subr.mxu0 0.0
        %1715 = vmatpush2.msra.mxu0 0.0
        %1716 = vmatprep.subr.mxu0 0.0
        %1717 = vmatpush2.msra.mxu0 0.0
        %1718 = vmatprep.subr.mxu0 0.0
        %1719 = vmatpush2.msra.mxu0 0.0
        %1720 = vmatprep.subr.mxu0 0.0
        %1721 = vmatpush2.msra.mxu0 0.0
        %1722 = vmatprep.subr.mxu0 0.0
        %1723 = vmatpush2.msra.mxu0 0.0
        %1724 = vmatprep.mubr.f32.mxu0 0.0
        %1725 = vmatmul.mubr.f32.gmra.mxu0 %v684
        %v1726 = vpop.f32.mrf.mxu0
        %v1727 = vadd.f32 %v1658, %v1726
        %v1728 = vpop.f32.mrf.mxu0
        %1729 = vdwg.mxu0
        %s1730 = scalar_lea.vmem %s5, 64
        %v1731 = vld [vmem:[%s1730] sm:$0xff]
        %v1732 = vld [vmem:[%s1730 + $0x8] sm:$0xff]
        %v1733 = vld [vmem:[%s1730 + $0x10] sm:$0xff]
        %v1734 = vld [vmem:[%s1730 + $0x18] sm:$0xff]
        %s1735 = scalar_lea.vmem %s8, 2
        %v1736 = vld [vmem:[%s1735] sm:$0x1]
        %v1738 = vlaneseq
        %v1739 = vshrl.u32 %v1738, 7
        %v1740 = vsub.s32 0, %v1739
        %v1741 = vrot.slane %v1736, %v1740
        %1743 = vmatprep.subr.mxu0 0.0
        %1744 = vmatpush1.msra.mxu0 0.0
        %1745 = vmatprep.subr.mxu0 0.0
        %1746 = vmatpush1.msra.mxu0 0.0
        %1747 = vmatprep.subr.mxu0 0.0
        %1748 = vmatpush1.msra.mxu0 0.0
        %1749 = vmatprep.subr.mxu0 0.0
        %1750 = vmatpush1.msra.mxu0 0.0
        %1751 = vmatprep.subr.mxu0 0.0
        %1752 = vmatpush1.msra.mxu0 0.0
        %1753 = vmatprep.subr.mxu0 0.0
        %1754 = vmatpush1.msra.mxu0 0.0
        %1755 = vmatprep.subr.mxu0 0.0
        %1756 = vmatpush1.msra.mxu0 0.0
        %1757 = vmatprep.subr.mxu0 0.0
        %1758 = vmatpush1.msra.mxu0 0.0
        %1759 = vmatprep.subr.mxu0 0.0
        %1760 = vmatpush1.msra.mxu0 0.0
        %1761 = vmatprep.subr.mxu0 0.0
        %1762 = vmatpush1.msra.mxu0 0.0
        %1763 = vmatprep.subr.mxu0 0.0
        %1764 = vmatpush1.msra.mxu0 0.0
        %1765 = vmatprep.subr.mxu0 0.0
        %1766 = vmatpush1.msra.mxu0 0.0
        %1767 = vmatprep.subr.mxu0 0.0
        %1768 = vmatpush1.msra.mxu0 %v1734
        %1769 = vmatprep.subr.mxu0 0.0
        %1770 = vmatpush1.msra.mxu0 %v1733
        %1771 = vmatprep.subr.mxu0 0.0
        %1772 = vmatpush1.msra.mxu0 %v1732
        %1773 = vmatprep.subr.mxu0 0.0
        %1774 = vmatpush1.msra.mxu0 %v1731
        %1775 = vmatprep.subr.mxu0 0.0
        %1776 = vmatpush2.msra.mxu0 0.0
        %1777 = vmatprep.subr.mxu0 0.0
        %1778 = vmatpush2.msra.mxu0 0.0
        %1779 = vmatprep.subr.mxu0 0.0
        %1780 = vmatpush2.msra.mxu0 0.0
        %1781 = vmatprep.subr.mxu0 0.0
        %1782 = vmatpush2.msra.mxu0 0.0
        %1783 = vmatprep.subr.mxu0 0.0
        %1784 = vmatpush2.msra.mxu0 0.0
        %1785 = vmatprep.subr.mxu0 0.0
        %1786 = vmatpush2.msra.mxu0 0.0
        %1787 = vmatprep.subr.mxu0 0.0
        %1788 = vmatpush2.msra.mxu0 0.0
        %1789 = vmatprep.subr.mxu0 0.0
        %1790 = vmatpush2.msra.mxu0 0.0
        %1791 = vmatprep.subr.mxu0 0.0
        %1792 = vmatpush2.msra.mxu0 0.0
        %1793 = vmatprep.subr.mxu0 0.0
        %1794 = vmatpush2.msra.mxu0 0.0
        %1795 = vmatprep.subr.mxu0 0.0
        %1796 = vmatpush2.msra.mxu0 0.0
        %1797 = vmatprep.subr.mxu0 0.0
        %1798 = vmatpush2.msra.mxu0 0.0
        %1799 = vmatprep.subr.mxu0 0.0
        %1800 = vmatpush2.msra.mxu0 0.0
        %1801 = vmatprep.subr.mxu0 0.0
        %1802 = vmatpush2.msra.mxu0 0.0
        %1803 = vmatprep.subr.mxu0 0.0
        %1804 = vmatpush2.msra.mxu0 0.0
        %1805 = vmatprep.subr.mxu0 0.0
        %1806 = vmatpush2.msra.mxu0 0.0
        %1807 = vmatprep.mubr.f32.mxu0 0.0
        %1808 = vmatmul.mubr.f32.gmra.mxu0 %v684
        %v1809 = vpop.f32.mrf.mxu0
        %v1810 = vadd.f32 %v1741, %v1809
        %v1811 = vpop.f32.mrf.mxu0
        %1812 = vdwg.mxu0
        %s1813 = scalar_lea.vmem %s6, 64
        %v1814 = vld [vmem:[%s1813] sm:$0xff]
        %v1815 = vld [vmem:[%s1813 + $0x8] sm:$0xff]
        %v1816 = vld [vmem:[%s1813 + $0x10] sm:$0xff]
        %v1817 = vld [vmem:[%s1813 + $0x18] sm:$0xff]
        %s1818 = scalar_lea.vmem %s9, 2
        %v1819 = vld [vmem:[%s1818] sm:$0x1]
        %v1821 = vlaneseq
        %v1822 = vshrl.u32 %v1821, 7
        %v1823 = vsub.s32 0, %v1822
        %v1824 = vrot.slane %v1819, %v1823
        %1826 = vmatprep.subr.mxu0 0.0
        %1827 = vmatpush1.msra.mxu0 0.0
        %1828 = vmatprep.subr.mxu0 0.0
        %1829 = vmatpush1.msra.mxu0 0.0
        %1830 = vmatprep.subr.mxu0 0.0
        %1831 = vmatpush1.msra.mxu0 0.0
        %1832 = vmatprep.subr.mxu0 0.0
        %1833 = vmatpush1.msra.mxu0 0.0
        %1834 = vmatprep.subr.mxu0 0.0
        %1835 = vmatpush1.msra.mxu0 0.0
        %1836 = vmatprep.subr.mxu0 0.0
        %1837 = vmatpush1.msra.mxu0 0.0
        %1838 = vmatprep.subr.mxu0 0.0
        %1839 = vmatpush1.msra.mxu0 0.0
        %1840 = vmatprep.subr.mxu0 0.0
        %1841 = vmatpush1.msra.mxu0 0.0
        %1842 = vmatprep.subr.mxu0 0.0
        %1843 = vmatpush1.msra.mxu0 0.0
        %1844 = vmatprep.subr.mxu0 0.0
        %1845 = vmatpush1.msra.mxu0 0.0
        %1846 = vmatprep.subr.mxu0 0.0
        %1847 = vmatpush1.msra.mxu0 0.0
        %1848 = vmatprep.subr.mxu0 0.0
        %1849 = vmatpush1.msra.mxu0 0.0
        %1850 = vmatprep.subr.mxu0 0.0
        %1851 = vmatpush1.msra.mxu0 %v1817
        %1852 = vmatprep.subr.mxu0 0.0
        %1853 = vmatpush1.msra.mxu0 %v1816
        %1854 = vmatprep.subr.mxu0 0.0
        %1855 = vmatpush1.msra.mxu0 %v1815
        %1856 = vmatprep.subr.mxu0 0.0
        %1857 = vmatpush1.msra.mxu0 %v1814
        %1858 = vmatprep.subr.mxu0 0.0
        %1859 = vmatpush2.msra.mxu0 0.0
        %1860 = vmatprep.subr.mxu0 0.0
        %1861 = vmatpush2.msra.mxu0 0.0
        %1862 = vmatprep.subr.mxu0 0.0
        %1863 = vmatpush2.msra.mxu0 0.0
        %1864 = vmatprep.subr.mxu0 0.0
        %1865 = vmatpush2.msra.mxu0 0.0
        %1866 = vmatprep.subr.mxu0 0.0
        %1867 = vmatpush2.msra.mxu0 0.0
        %1868 = vmatprep.subr.mxu0 0.0
        %1869 = vmatpush2.msra.mxu0 0.0
        %1870 = vmatprep.subr.mxu0 0.0
        %1871 = vmatpush2.msra.mxu0 0.0
        %1872 = vmatprep.subr.mxu0 0.0
        %1873 = vmatpush2.msra.mxu0 0.0
        %1874 = vmatprep.subr.mxu0 0.0
        %1875 = vmatpush2.msra.mxu0 0.0
        %1876 = vmatprep.subr.mxu0 0.0
        %1877 = vmatpush2.msra.mxu0 0.0
        %1878 = vmatprep.subr.mxu0 0.0
        %1879 = vmatpush2.msra.mxu0 0.0
        %1880 = vmatprep.subr.mxu0 0.0
        %1881 = vmatpush2.msra.mxu0 0.0
        %1882 = vmatprep.subr.mxu0 0.0
        %1883 = vmatpush2.msra.mxu0 0.0
        %1884 = vmatprep.subr.mxu0 0.0
        %1885 = vmatpush2.msra.mxu0 0.0
        %1886 = vmatprep.subr.mxu0 0.0
        %1887 = vmatpush2.msra.mxu0 0.0
        %1888 = vmatprep.subr.mxu0 0.0
        %1889 = vmatpush2.msra.mxu0 0.0
        %1890 = vmatprep.mubr.f32.mxu0 0.0
        %1891 = vmatmul.mubr.f32.gmra.mxu0 %v684
        %v1892 = vpop.f32.mrf.mxu0
        %v1893 = vadd.f32 %v1824, %v1892
        %v1894 = vpop.f32.mrf.mxu0
        %1895 = vdwg.mxu0
        %v1897 = vsel %vm918, %v1727, 0
        %v1900 = vsel %vm918, %v1810, 0
        %1902 = vmatprep.subr.mxu0 0.0
        %1903 = vmatpush1.xpose.msra.mxu0 0.0
        %1904 = vmatprep.subr.mxu0 0.0
        %1905 = vmatpush1.xpose.msra.mxu0 0.0
        %1906 = vmatprep.subr.mxu0 0.0
        %1907 = vmatpush1.xpose.msra.mxu0 0.0
        %1908 = vmatprep.subr.mxu0 0.0
        %1909 = vmatpush1.xpose.msra.mxu0 0.0
        %1910 = vmatprep.subr.mxu0 0.0
        %1911 = vmatpush1.xpose.msra.mxu0 0.0
        %1912 = vmatprep.subr.mxu0 0.0
        %1913 = vmatpush1.xpose.msra.mxu0 0.0
        %1914 = vmatprep.subr.mxu0 0.0
        %1915 = vmatpush1.xpose.msra.mxu0 0.0
        %1916 = vmatprep.subr.mxu0 0.0
        %1917 = vmatpush1.xpose.msra.mxu0 0.0
        %1918 = vmatprep.subr.mxu0 0.0
        %1919 = vmatpush1.xpose.msra.mxu0 0.0
        %1920 = vmatprep.subr.mxu0 0.0
        %1921 = vmatpush1.xpose.msra.mxu0 0.0
        %1922 = vmatprep.subr.mxu0 0.0
        %1923 = vmatpush1.xpose.msra.mxu0 0.0
        %1924 = vmatprep.subr.mxu0 0.0
        %1925 = vmatpush1.xpose.msra.mxu0 0.0
        %1926 = vmatprep.subr.mxu0 0.0
        %1927 = vmatpush1.xpose.msra.mxu0 0.0
        %1928 = vmatprep.subr.mxu0 0.0
        %1929 = vmatpush1.xpose.msra.mxu0 0.0
        %1930 = vmatprep.subr.mxu0 0.0
        %1931 = vmatpush1.xpose.msra.mxu0 0.0
        %1932 = vmatprep.subr.mxu0 0.0
        %1933 = vmatpush1.xpose.msra.mxu0 %v1900
        %1934 = vmatprep.subr.mxu0 0.0
        %1935 = vmatpush2.xpose.msra.mxu0 0.0
        %1936 = vmatprep.subr.mxu0 0.0
        %1937 = vmatpush2.xpose.msra.mxu0 0.0
        %1938 = vmatprep.subr.mxu0 0.0
        %1939 = vmatpush2.xpose.msra.mxu0 0.0
        %1940 = vmatprep.subr.mxu0 0.0
        %1941 = vmatpush2.xpose.msra.mxu0 0.0
        %1942 = vmatprep.subr.mxu0 0.0
        %1943 = vmatpush2.xpose.msra.mxu0 0.0
        %1944 = vmatprep.subr.mxu0 0.0
        %1945 = vmatpush2.xpose.msra.mxu0 0.0
        %1946 = vmatprep.subr.mxu0 0.0
        %1947 = vmatpush2.xpose.msra.mxu0 0.0
        %1948 = vmatprep.subr.mxu0 0.0
        %1949 = vmatpush2.xpose.msra.mxu0 0.0
        %1950 = vmatprep.subr.mxu0 0.0
        %1951 = vmatpush2.xpose.msra.mxu0 0.0
        %1952 = vmatprep.subr.mxu0 0.0
        %1953 = vmatpush2.xpose.msra.mxu0 0.0
        %1954 = vmatprep.subr.mxu0 0.0
        %1955 = vmatpush2.xpose.msra.mxu0 0.0
        %1956 = vmatprep.subr.mxu0 0.0
        %1957 = vmatpush2.xpose.msra.mxu0 0.0
        %1958 = vmatprep.subr.mxu0 0.0
        %1959 = vmatpush2.xpose.msra.mxu0 0.0
        %1960 = vmatprep.subr.mxu0 0.0
        %1961 = vmatpush2.xpose.msra.mxu0 0.0
        %1962 = vmatprep.subr.mxu0 0.0
        %1963 = vmatpush2.xpose.msra.mxu0 0.0
        %1964 = vmatprep.subr.mxu0 0.0
        %1965 = vmatpush2.xpose.msra.mxu0 0.0
        %1966 = vmatprep.mubr.f32.mxu0 0.0
        %1967 = vmatmul.mubr.f32.gmra.mxu0 %v1897
        %v1968 = vpop.f32.mrf.mxu0
        %v1969 = vadd.f32 0.0, %v1968
        %v1970 = vpop.f32.mrf.mxu0
        %1971 = vdwg.mxu0
        %v1972 = vmul.f32 %v1969, 0.35355338
        %v1973 = vadd.f32 %v1972, %v1000
        %v1974 = vsel %vm918, %v1973, -inf
        %1975 = vmax.xlane.f32.xlu0 %v1974
        %v1976 = vpop.xlane.xlu0 %1975
        %v1977 = vsub.f32 %v1973, %v1976
        %v1978 = vmul.f32 %v1977, 1.442695
        %v1979 = vpow.pop %v1978
        %v1980 = vsel %vm918, %v1979, 0.0
        %1981 = vadd.xlane.f32.xlu0 %v1980
        %v1982 = vpop.xlane.xlu0 %1981
        %v1983 = vrcp.pop %v1982
        %v1984 = vmul.f32 %v1979, %v1983
        %v1986 = vsel %vm918, %v1984, 0
        %1988 = vmatprep.subr.mxu0 0.0
        %1989 = vmatpush1.msra.mxu0 0.0
        %1990 = vmatprep.subr.mxu0 0.0
        %1991 = vmatpush1.msra.mxu0 0.0
        %1992 = vmatprep.subr.mxu0 0.0
        %1993 = vmatpush1.msra.mxu0 0.0
        %1994 = vmatprep.subr.mxu0 0.0
        %1995 = vmatpush1.msra.mxu0 0.0
        %1996 = vmatprep.subr.mxu0 0.0
        %1997 = vmatpush1.msra.mxu0 0.0
        %1998 = vmatprep.subr.mxu0 0.0
        %1999 = vmatpush1.msra.mxu0 0.0
        %2000 = vmatprep.subr.mxu0 0.0
        %2001 = vmatpush1.msra.mxu0 0.0
        %2002 = vmatprep.subr.mxu0 0.0
        %2003 = vmatpush1.msra.mxu0 0.0
        %2004 = vmatprep.subr.mxu0 0.0
        %2005 = vmatpush1.msra.mxu0 0.0
        %2006 = vmatprep.subr.mxu0 0.0
        %2007 = vmatpush1.msra.mxu0 0.0
        %2008 = vmatprep.subr.mxu0 0.0
        %2009 = vmatpush1.msra.mxu0 0.0
        %2010 = vmatprep.subr.mxu0 0.0
        %2011 = vmatpush1.msra.mxu0 0.0
        %2012 = vmatprep.subr.mxu0 0.0
        %2013 = vmatpush1.msra.mxu0 0.0
        %2014 = vmatprep.subr.mxu0 0.0
        %2015 = vmatpush1.msra.mxu0 0.0
        %2016 = vmatprep.subr.mxu0 0.0
        %2017 = vmatpush1.msra.mxu0 0.0
        %2018 = vmatprep.subr.mxu0 0.0
        %2019 = vmatpush1.msra.mxu0 %v1893
        %2020 = vmatprep.subr.mxu0 0.0
        %2021 = vmatpush2.msra.mxu0 0.0
        %2022 = vmatprep.subr.mxu0 0.0
        %2023 = vmatpush2.msra.mxu0 0.0
        %2024 = vmatprep.subr.mxu0 0.0
        %2025 = vmatpush2.msra.mxu0 0.0
        %2026 = vmatprep.subr.mxu0 0.0
        %2027 = vmatpush2.msra.mxu0 0.0
        %2028 = vmatprep.subr.mxu0 0.0
        %2029 = vmatpush2.msra.mxu0 0.0
        %2030 = vmatprep.subr.mxu0 0.0
        %2031 = vmatpush2.msra.mxu0 0.0
        %2032 = vmatprep.subr.mxu0 0.0
        %2033 = vmatpush2.msra.mxu0 0.0
        %2034 = vmatprep.subr.mxu0 0.0
        %2035 = vmatpush2.msra.mxu0 0.0
        %2036 = vmatprep.subr.mxu0 0.0
        %2037 = vmatpush2.msra.mxu0 0.0
        %2038 = vmatprep.subr.mxu0 0.0
        %2039 = vmatpush2.msra.mxu0 0.0
        %2040 = vmatprep.subr.mxu0 0.0
        %2041 = vmatpush2.msra.mxu0 0.0
        %2042 = vmatprep.subr.mxu0 0.0
        %2043 = vmatpush2.msra.mxu0 0.0
        %2044 = vmatprep.subr.mxu0 0.0
        %2045 = vmatpush2.msra.mxu0 0.0
        %2046 = vmatprep.subr.mxu0 0.0
        %2047 = vmatpush2.msra.mxu0 0.0
        %2048 = vmatprep.subr.mxu0 0.0
        %2049 = vmatpush2.msra.mxu0 0.0
        %2050 = vmatprep.subr.mxu0 0.0
        %2051 = vmatpush2.msra.mxu0 0.0
        %2052 = vmatprep.mubr.f32.mxu0 0.0
        %2053 = vmatmul.mubr.f32.gmra.mxu0 %v1986
        %v2054 = vpop.f32.mrf.mxu0
        %v2055 = vadd.f32 0.0, %v2054
        %v2056 = vpop.f32.mrf.mxu0
        %2057 = vdwg.mxu0
        %s2058 = scalar_lea.vmem %s10, 16
        %v2059 = vld [vmem:[%s2058] sm:$0xff]
        %v2061 = vsel %vm918, %v2055, 0
        %2063 = vmatprep.subr.mxu0 0.0
        %2064 = vmatpush1.msra.mxu0 0.0
        %2065 = vmatprep.subr.mxu0 0.0
        %2066 = vmatpush1.msra.mxu0 0.0
        %2067 = vmatprep.subr.mxu0 0.0
        %2068 = vmatpush1.msra.mxu0 0.0
        %2069 = vmatprep.subr.mxu0 0.0
        %2070 = vmatpush1.msra.mxu0 0.0
        %2071 = vmatprep.subr.mxu0 0.0
        %2072 = vmatpush1.msra.mxu0 0.0
        %2073 = vmatprep.subr.mxu0 0.0
        %2074 = vmatpush1.msra.mxu0 0.0
        %2075 = vmatprep.subr.mxu0 0.0
        %2076 = vmatpush1.msra.mxu0 0.0
        %2077 = vmatprep.subr.mxu0 0.0
        %2078 = vmatpush1.msra.mxu0 0.0
        %2079 = vmatprep.subr.mxu0 0.0
        %2080 = vmatpush1.msra.mxu0 0.0
        %2081 = vmatprep.subr.mxu0 0.0
        %2082 = vmatpush1.msra.mxu0 0.0
        %2083 = vmatprep.subr.mxu0 0.0
        %2084 = vmatpush1.msra.mxu0 0.0
        %2085 = vmatprep.subr.mxu0 0.0
        %2086 = vmatpush1.msra.mxu0 0.0
        %2087 = vmatprep.subr.mxu0 0.0
        %2088 = vmatpush1.msra.mxu0 0.0
        %2089 = vmatprep.subr.mxu0 0.0
        %2090 = vmatpush1.msra.mxu0 0.0
        %2091 = vmatprep.subr.mxu0 0.0
        %2092 = vmatpush1.msra.mxu0 0.0
        %2093 = vmatprep.subr.mxu0 0.0
        %2094 = vmatpush1.msra.mxu0 %v2059
        %2095 = vmatprep.subr.mxu0 0.0
        %2096 = vmatpush2.msra.mxu0 0.0
        %2097 = vmatprep.subr.mxu0 0.0
        %2098 = vmatpush2.msra.mxu0 0.0
        %2099 = vmatprep.subr.mxu0 0.0
        %2100 = vmatpush2.msra.mxu0 0.0
        %2101 = vmatprep.subr.mxu0 0.0
        %2102 = vmatpush2.msra.mxu0 0.0
        %2103 = vmatprep.subr.mxu0 0.0
        %2104 = vmatpush2.msra.mxu0 0.0
        %2105 = vmatprep.subr.mxu0 0.0
        %2106 = vmatpush2.msra.mxu0 0.0
        %2107 = vmatprep.subr.mxu0 0.0
        %2108 = vmatpush2.msra.mxu0 0.0
        %2109 = vmatprep.subr.mxu0 0.0
        %2110 = vmatpush2.msra.mxu0 0.0
        %2111 = vmatprep.subr.mxu0 0.0
        %2112 = vmatpush2.msra.mxu0 0.0
        %2113 = vmatprep.subr.mxu0 0.0
        %2114 = vmatpush2.msra.mxu0 0.0
        %2115 = vmatprep.subr.mxu0 0.0
        %2116 = vmatpush2.msra.mxu0 0.0
        %2117 = vmatprep.subr.mxu0 0.0
        %2118 = vmatpush2.msra.mxu0 0.0
        %2119 = vmatprep.subr.mxu0 0.0
        %2120 = vmatpush2.msra.mxu0 0.0
        %2121 = vmatprep.subr.mxu0 0.0
        %2122 = vmatpush2.msra.mxu0 0.0
        %2123 = vmatprep.subr.mxu0 0.0
        %2124 = vmatpush2.msra.mxu0 0.0
        %2125 = vmatprep.subr.mxu0 0.0
        %2126 = vmatpush2.msra.mxu0 0.0
        %2127 = vmatprep.mubr.f32.mxu0 0.0
        %2128 = vmatmul.mubr.f32.gmra.mxu0 %v2061
        %v2129 = vpop.f32.mrf.mxu0
        %v2130 = vadd.f32 0.0, %v2129
        %v2131 = vpop.f32.mrf.mxu0
        %2132 = vdwg.mxu0
        %v2133 = vadd.f32 %v1644, %v2130
        %s2134 = scalar_lea.vmem %s4, 96
        %v2135 = vld [vmem:[%s2134] sm:$0xff]
        %v2136 = vld [vmem:[%s2134 + $0x8] sm:$0xff]
        %v2137 = vld [vmem:[%s2134 + $0x10] sm:$0xff]
        %v2138 = vld [vmem:[%s2134 + $0x18] sm:$0xff]
        %s2139 = scalar_lea.vmem %s7, 3
        %v2140 = vld [vmem:[%s2139] sm:$0x1]
        %v2142 = vlaneseq
        %v2143 = vshrl.u32 %v2142, 7
        %v2144 = vsub.s32 0, %v2143
        %v2145 = vrot.slane %v2140, %v2144
        %2147 = vmatprep.subr.mxu0 0.0
        %2148 = vmatpush1.msra.mxu0 0.0
        %2149 = vmatprep.subr.mxu0 0.0
        %2150 = vmatpush1.msra.mxu0 0.0
        %2151 = vmatprep.subr.mxu0 0.0
        %2152 = vmatpush1.msra.mxu0 0.0
        %2153 = vmatprep.subr.mxu0 0.0
        %2154 = vmatpush1.msra.mxu0 0.0
        %2155 = vmatprep.subr.mxu0 0.0
        %2156 = vmatpush1.msra.mxu0 0.0
        %2157 = vmatprep.subr.mxu0 0.0
        %2158 = vmatpush1.msra.mxu0 0.0
        %2159 = vmatprep.subr.mxu0 0.0
        %2160 = vmatpush1.msra.mxu0 0.0
        %2161 = vmatprep.subr.mxu0 0.0
        %2162 = vmatpush1.msra.mxu0 0.0
        %2163 = vmatprep.subr.mxu0 0.0
        %2164 = vmatpush1.msra.mxu0 0.0
        %2165 = vmatprep.subr.mxu0 0.0
        %2166 = vmatpush1.msra.mxu0 0.0
        %2167 = vmatprep.subr.mxu0 0.0
        %2168 = vmatpush1.msra.mxu0 0.0
        %2169 = vmatprep.subr.mxu0 0.0
        %2170 = vmatpush1.msra.mxu0 0.0
        %2171 = vmatprep.subr.mxu0 0.0
        %2172 = vmatpush1.msra.mxu0 %v2138
        %2173 = vmatprep.subr.mxu0 0.0
        %2174 = vmatpush1.msra.mxu0 %v2137
        %2175 = vmatprep.subr.mxu0 0.0
        %2176 = vmatpush1.msra.mxu0 %v2136
        %2177 = vmatprep.subr.mxu0 0.0
        %2178 = vmatpush1.msra.mxu0 %v2135
        %2179 = vmatprep.subr.mxu0 0.0
        %2180 = vmatpush2.msra.mxu0 0.0
        %2181 = vmatprep.subr.mxu0 0.0
        %2182 = vmatpush2.msra.mxu0 0.0
        %2183 = vmatprep.subr.mxu0 0.0
        %2184 = vmatpush2.msra.mxu0 0.0
        %2185 = vmatprep.subr.mxu0 0.0
        %2186 = vmatpush2.msra.mxu0 0.0
        %2187 = vmatprep.subr.mxu0 0.0
        %2188 = vmatpush2.msra.mxu0 0.0
        %2189 = vmatprep.subr.mxu0 0.0
        %2190 = vmatpush2.msra.mxu0 0.0
        %2191 = vmatprep.subr.mxu0 0.0
        %2192 = vmatpush2.msra.mxu0 0.0
        %2193 = vmatprep.subr.mxu0 0.0
        %2194 = vmatpush2.msra.mxu0 0.0
        %2195 = vmatprep.subr.mxu0 0.0
        %2196 = vmatpush2.msra.mxu0 0.0
        %2197 = vmatprep.subr.mxu0 0.0
        %2198 = vmatpush2.msra.mxu0 0.0
        %2199 = vmatprep.subr.mxu0 0.0
        %2200 = vmatpush2.msra.mxu0 0.0
        %2201 = vmatprep.subr.mxu0 0.0
        %2202 = vmatpush2.msra.mxu0 0.0
        %2203 = vmatprep.subr.mxu0 0.0
        %2204 = vmatpush2.msra.mxu0 0.0
        %2205 = vmatprep.subr.mxu0 0.0
        %2206 = vmatpush2.msra.mxu0 0.0
        %2207 = vmatprep.subr.mxu0 0.0
        %2208 = vmatpush2.msra.mxu0 0.0
        %2209 = vmatprep.subr.mxu0 0.0
        %2210 = vmatpush2.msra.mxu0 0.0
        %2211 = vmatprep.mubr.f32.mxu0 0.0
        %2212 = vmatmul.mubr.f32.gmra.mxu0 %v684
        %v2213 = vpop.f32.mrf.mxu0
        %v2214 = vadd.f32 %v2145, %v2213
        %v2215 = vpop.f32.mrf.mxu0
        %2216 = vdwg.mxu0
        %s2217 = scalar_lea.vmem %s5, 96
        %v2218 = vld [vmem:[%s2217] sm:$0xff]
        %v2219 = vld [vmem:[%s2217 + $0x8] sm:$0xff]
        %v2220 = vld [vmem:[%s2217 + $0x10] sm:$0xff]
        %v2221 = vld [vmem:[%s2217 + $0x18] sm:$0xff]
        %s2222 = scalar_lea.vmem %s8, 3
        %v2223 = vld [vmem:[%s2222] sm:$0x1]
        %v2225 = vlaneseq
        %v2226 = vshrl.u32 %v2225, 7
        %v2227 = vsub.s32 0, %v2226
        %v2228 = vrot.slane %v2223, %v2227
        %2230 = vmatprep.subr.mxu0 0.0
        %2231 = vmatpush1.msra.mxu0 0.0
        %2232 = vmatprep.subr.mxu0 0.0
        %2233 = vmatpush1.msra.mxu0 0.0
        %2234 = vmatprep.subr.mxu0 0.0
        %2235 = vmatpush1.msra.mxu0 0.0
        %2236 = vmatprep.subr.mxu0 0.0
        %2237 = vmatpush1.msra.mxu0 0.0
        %2238 = vmatprep.subr.mxu0 0.0
        %2239 = vmatpush1.msra.mxu0 0.0
        %2240 = vmatprep.subr.mxu0 0.0
        %2241 = vmatpush1.msra.mxu0 0.0
        %2242 = vmatprep.subr.mxu0 0.0
        %2243 = vmatpush1.msra.mxu0 0.0
        %2244 = vmatprep.subr.mxu0 0.0
        %2245 = vmatpush1.msra.mxu0 0.0
        %2246 = vmatprep.subr.mxu0 0.0
        %2247 = vmatpush1.msra.mxu0 0.0
        %2248 = vmatprep.subr.mxu0 0.0
        %2249 = vmatpush1.msra.mxu0 0.0
        %2250 = vmatprep.subr.mxu0 0.0
        %2251 = vmatpush1.msra.mxu0 0.0
        %2252 = vmatprep.subr.mxu0 0.0
        %2253 = vmatpush1.msra.mxu0 0.0
        %2254 = vmatprep.subr.mxu0 0.0
        %2255 = vmatpush1.msra.mxu0 %v2221
        %2256 = vmatprep.subr.mxu0 0.0
        %2257 = vmatpush1.msra.mxu0 %v2220
        %2258 = vmatprep.subr.mxu0 0.0
        %2259 = vmatpush1.msra.mxu0 %v2219
        %2260 = vmatprep.subr.mxu0 0.0
        %2261 = vmatpush1.msra.mxu0 %v2218
        %2262 = vmatprep.subr.mxu0 0.0
        %2263 = vmatpush2.msra.mxu0 0.0
        %2264 = vmatprep.subr.mxu0 0.0
        %2265 = vmatpush2.msra.mxu0 0.0
        %2266 = vmatprep.subr.mxu0 0.0
        %2267 = vmatpush2.msra.mxu0 0.0
        %2268 = vmatprep.subr.mxu0 0.0
        %2269 = vmatpush2.msra.mxu0 0.0
        %2270 = vmatprep.subr.mxu0 0.0
        %2271 = vmatpush2.msra.mxu0 0.0
        %2272 = vmatprep.subr.mxu0 0.0
        %2273 = vmatpush2.msra.mxu0 0.0
        %2274 = vmatprep.subr.mxu0 0.0
        %2275 = vmatpush2.msra.mxu0 0.0
        %2276 = vmatprep.subr.mxu0 0.0
        %2277 = vmatpush2.msra.mxu0 0.0
        %2278 = vmatprep.subr.mxu0 0.0
        %2279 = vmatpush2.msra.mxu0 0.0
        %2280 = vmatprep.subr.mxu0 0.0
        %2281 = vmatpush2.msra.mxu0 0.0
        %2282 = vmatprep.subr.mxu0 0.0
        %2283 = vmatpush2.msra.mxu0 0.0
        %2284 = vmatprep.subr.mxu0 0.0
        %2285 = vmatpush2.msra.mxu0 0.0
        %2286 = vmatprep.subr.mxu0 0.0
        %2287 = vmatpush2.msra.mxu0 0.0
        %2288 = vmatprep.subr.mxu0 0.0
        %2289 = vmatpush2.msra.mxu0 0.0
        %2290 = vmatprep.subr.mxu0 0.0
        %2291 = vmatpush2.msra.mxu0 0.0
        %2292 = vmatprep.subr.mxu0 0.0
        %2293 = vmatpush2.msra.mxu0 0.0
        %2294 = vmatprep.mubr.f32.mxu0 0.0
        %2295 = vmatmul.mubr.f32.gmra.mxu0 %v684
        %v2296 = vpop.f32.mrf.mxu0
        %v2297 = vadd.f32 %v2228, %v2296
        %v2298 = vpop.f32.mrf.mxu0
        %2299 = vdwg.mxu0
        %s2300 = scalar_lea.vmem %s6, 96
        %v2301 = vld [vmem:[%s2300] sm:$0xff]
        %v2302 = vld [vmem:[%s2300 + $0x8] sm:$0xff]
        %v2303 = vld [vmem:[%s2300 + $0x10] sm:$0xff]
        %v2304 = vld [vmem:[%s2300 + $0x18] sm:$0xff]
        %s2305 = scalar_lea.vmem %s9, 3
        %v2306 = vld [vmem:[%s2305] sm:$0x1]
        %v2308 = vlaneseq
        %v2309 = vshrl.u32 %v2308, 7
        %v2310 = vsub.s32 0, %v2309
        %v2311 = vrot.slane %v2306, %v2310
        %2313 = vmatprep.subr.mxu0 0.0
        %2314 = vmatpush1.msra.mxu0 0.0
        %2315 = vmatprep.subr.mxu0 0.0
        %2316 = vmatpush1.msra.mxu0 0.0
        %2317 = vmatprep.subr.mxu0 0.0
        %2318 = vmatpush1.msra.mxu0 0.0
        %2319 = vmatprep.subr.mxu0 0.0
        %2320 = vmatpush1.msra.mxu0 0.0
        %2321 = vmatprep.subr.mxu0 0.0
        %2322 = vmatpush1.msra.mxu0 0.0
        %2323 = vmatprep.subr.mxu0 0.0
        %2324 = vmatpush1.msra.mxu0 0.0
        %2325 = vmatprep.subr.mxu0 0.0
        %2326 = vmatpush1.msra.mxu0 0.0
        %2327 = vmatprep.subr.mxu0 0.0
        %2328 = vmatpush1.msra.mxu0 0.0
        %2329 = vmatprep.subr.mxu0 0.0
        %2330 = vmatpush1.msra.mxu0 0.0
        %2331 = vmatprep.subr.mxu0 0.0
        %2332 = vmatpush1.msra.mxu0 0.0
        %2333 = vmatprep.subr.mxu0 0.0
        %2334 = vmatpush1.msra.mxu0 0.0
        %2335 = vmatprep.subr.mxu0 0.0
        %2336 = vmatpush1.msra.mxu0 0.0
        %2337 = vmatprep.subr.mxu0 0.0
        %2338 = vmatpush1.msra.mxu0 %v2304
        %2339 = vmatprep.subr.mxu0 0.0
        %2340 = vmatpush1.msra.mxu0 %v2303
        %2341 = vmatprep.subr.mxu0 0.0
        %2342 = vmatpush1.msra.mxu0 %v2302
        %2343 = vmatprep.subr.mxu0 0.0
        %2344 = vmatpush1.msra.mxu0 %v2301
        %2345 = vmatprep.subr.mxu0 0.0
        %2346 = vmatpush2.msra.mxu0 0.0
        %2347 = vmatprep.subr.mxu0 0.0
        %2348 = vmatpush2.msra.mxu0 0.0
        %2349 = vmatprep.subr.mxu0 0.0
        %2350 = vmatpush2.msra.mxu0 0.0
        %2351 = vmatprep.subr.mxu0 0.0
        %2352 = vmatpush2.msra.mxu0 0.0
        %2353 = vmatprep.subr.mxu0 0.0
        %2354 = vmatpush2.msra.mxu0 0.0
        %2355 = vmatprep.subr.mxu0 0.0
        %2356 = vmatpush2.msra.mxu0 0.0
        %2357 = vmatprep.subr.mxu0 0.0
        %2358 = vmatpush2.msra.mxu0 0.0
        %2359 = vmatprep.subr.mxu0 0.0
        %2360 = vmatpush2.msra.mxu0 0.0
        %2361 = vmatprep.subr.mxu0 0.0
        %2362 = vmatpush2.msra.mxu0 0.0
        %2363 = vmatprep.subr.mxu0 0.0
        %2364 = vmatpush2.msra.mxu0 0.0
        %2365 = vmatprep.subr.mxu0 0.0
        %2366 = vmatpush2.msra.mxu0 0.0
        %2367 = vmatprep.subr.mxu0 0.0
        %2368 = vmatpush2.msra.mxu0 0.0
        %2369 = vmatprep.subr.mxu0 0.0
        %2370 = vmatpush2.msra.mxu0 0.0
        %2371 = vmatprep.subr.mxu0 0.0
        %2372 = vmatpush2.msra.mxu0 0.0
        %2373 = vmatprep.subr.mxu0 0.0
        %2374 = vmatpush2.msra.mxu0 0.0
        %2375 = vmatprep.subr.mxu0 0.0
        %2376 = vmatpush2.msra.mxu0 0.0
        %2377 = vmatprep.mubr.f32.mxu0 0.0
        %2378 = vmatmul.mubr.f32.gmra.mxu0 %v684
        %v2379 = vpop.f32.mrf.mxu0
        %v2380 = vadd.f32 %v2311, %v2379
        %v2381 = vpop.f32.mrf.mxu0
        %2382 = vdwg.mxu0
        %v2384 = vsel %vm918, %v2214, 0
        %v2387 = vsel %vm918, %v2297, 0
        %2389 = vmatprep.subr.mxu0 0.0
        %2390 = vmatpush1.xpose.msra.mxu0 0.0
        %2391 = vmatprep.subr.mxu0 0.0
        %2392 = vmatpush1.xpose.msra.mxu0 0.0
        %2393 = vmatprep.subr.mxu0 0.0
        %2394 = vmatpush1.xpose.msra.mxu0 0.0
        %2395 = vmatprep.subr.mxu0 0.0
        %2396 = vmatpush1.xpose.msra.mxu0 0.0
        %2397 = vmatprep.subr.mxu0 0.0
        %2398 = vmatpush1.xpose.msra.mxu0 0.0
        %2399 = vmatprep.subr.mxu0 0.0
        %2400 = vmatpush1.xpose.msra.mxu0 0.0
        %2401 = vmatprep.subr.mxu0 0.0
        %2402 = vmatpush1.xpose.msra.mxu0 0.0
        %2403 = vmatprep.subr.mxu0 0.0
        %2404 = vmatpush1.xpose.msra.mxu0 0.0
        %2405 = vmatprep.subr.mxu0 0.0
        %2406 = vmatpush1.xpose.msra.mxu0 0.0
        %2407 = vmatprep.subr.mxu0 0.0
        %2408 = vmatpush1.xpose.msra.mxu0 0.0
        %2409 = vmatprep.subr.mxu0 0.0
        %2410 = vmatpush1.xpose.msra.mxu0 0.0
        %2411 = vmatprep.subr.mxu0 0.0
        %2412 = vmatpush1.xpose.msra.mxu0 0.0
        %2413 = vmatprep.subr.mxu0 0.0
        %2414 = vmatpush1.xpose.msra.mxu0 0.0
        %2415 = vmatprep.subr.mxu0 0.0
        %2416 = vmatpush1.xpose.msra.mxu0 0.0
        %2417 = vmatprep.subr.mxu0 0.0
        %2418 = vmatpush1.xpose.msra.mxu0 0.0
        %2419 = vmatprep.subr.mxu0 0.0
        %2420 = vmatpush1.xpose.msra.mxu0 %v2387
        %2421 = vmatprep.subr.mxu0 0.0
        %2422 = vmatpush2.xpose.msra.mxu0 0.0
        %2423 = vmatprep.subr.mxu0 0.0
        %2424 = vmatpush2.xpose.msra.mxu0 0.0
        %2425 = vmatprep.subr.mxu0 0.0
        %2426 = vmatpush2.xpose.msra.mxu0 0.0
        %2427 = vmatprep.subr.mxu0 0.0
        %2428 = vmatpush2.xpose.msra.mxu0 0.0
        %2429 = vmatprep.subr.mxu0 0.0
        %2430 = vmatpush2.xpose.msra.mxu0 0.0
        %2431 = vmatprep.subr.mxu0 0.0
        %2432 = vmatpush2.xpose.msra.mxu0 0.0
        %2433 = vmatprep.subr.mxu0 0.0
        %2434 = vmatpush2.xpose.msra.mxu0 0.0
        %2435 = vmatprep.subr.mxu0 0.0
        %2436 = vmatpush2.xpose.msra.mxu0 0.0
        %2437 = vmatprep.subr.mxu0 0.0
        %2438 = vmatpush2.xpose.msra.mxu0 0.0
        %2439 = vmatprep.subr.mxu0 0.0
        %2440 = vmatpush2.xpose.msra.mxu0 0.0
        %2441 = vmatprep.subr.mxu0 0.0
        %2442 = vmatpush2.xpose.msra.mxu0 0.0
        %2443 = vmatprep.subr.mxu0 0.0
        %2444 = vmatpush2.xpose.msra.mxu0 0.0
        %2445 = vmatprep.subr.mxu0 0.0
        %2446 = vmatpush2.xpose.msra.mxu0 0.0
        %2447 = vmatprep.subr.mxu0 0.0
        %2448 = vmatpush2.xpose.msra.mxu0 0.0
        %2449 = vmatprep.subr.mxu0 0.0
        %2450 = vmatpush2.xpose.msra.mxu0 0.0
        %2451 = vmatprep.subr.mxu0 0.0
        %2452 = vmatpush2.xpose.msra.mxu0 0.0
        %2453 = vmatprep.mubr.f32.mxu0 0.0
        %2454 = vmatmul.mubr.f32.gmra.mxu0 %v2384
        %v2455 = vpop.f32.mrf.mxu0
        %v2456 = vadd.f32 0.0, %v2455
        %v2457 = vpop.f32.mrf.mxu0
        %2458 = vdwg.mxu0
        %v2459 = vmul.f32 %v2456, 0.35355338
        %v2460 = vadd.f32 %v2459, %v1000
        %v2461 = vsel %vm918, %v2460, -inf
        %2462 = vmax.xlane.f32.xlu0 %v2461
        %v2463 = vpop.xlane.xlu0 %2462
        %v2464 = vsub.f32 %v2460, %v2463
        %v2465 = vmul.f32 %v2464, 1.442695
        %v2466 = vpow.pop %v2465
        %v2467 = vsel %vm918, %v2466, 0.0
        %2468 = vadd.xlane.f32.xlu0 %v2467
        %v2469 = vpop.xlane.xlu0 %2468
        %v2470 = vrcp.pop %v2469
        %v2471 = vmul.f32 %v2466, %v2470
        %v2473 = vsel %vm918, %v2471, 0
        %2475 = vmatprep.subr.mxu0 0.0
        %2476 = vmatpush1.msra.mxu0 0.0
        %2477 = vmatprep.subr.mxu0 0.0
        %2478 = vmatpush1.msra.mxu0 0.0
        %2479 = vmatprep.subr.mxu0 0.0
        %2480 = vmatpush1.msra.mxu0 0.0
        %2481 = vmatprep.subr.mxu0 0.0
        %2482 = vmatpush1.msra.mxu0 0.0
        %2483 = vmatprep.subr.mxu0 0.0
        %2484 = vmatpush1.msra.mxu0 0.0
        %2485 = vmatprep.subr.mxu0 0.0
        %2486 = vmatpush1.msra.mxu0 0.0
        %2487 = vmatprep.subr.mxu0 0.0
        %2488 = vmatpush1.msra.mxu0 0.0
        %2489 = vmatprep.subr.mxu0 0.0
        %2490 = vmatpush1.msra.mxu0 0.0
        %2491 = vmatprep.subr.mxu0 0.0
        %2492 = vmatpush1.msra.mxu0 0.0
        %2493 = vmatprep.subr.mxu0 0.0
        %2494 = vmatpush1.msra.mxu0 0.0
        %2495 = vmatprep.subr.mxu0 0.0
        %2496 = vmatpush1.msra.mxu0 0.0
        %2497 = vmatprep.subr.mxu0 0.0
        %2498 = vmatpush1.msra.mxu0 0.0
        %2499 = vmatprep.subr.mxu0 0.0
        %2500 = vmatpush1.msra.mxu0 0.0
        %2501 = vmatprep.subr.mxu0 0.0
        %2502 = vmatpush1.msra.mxu0 0.0
        %2503 = vmatprep.subr.mxu0 0.0
        %2504 = vmatpush1.msra.mxu0 0.0
        %2505 = vmatprep.subr.mxu0 0.0
        %2506 = vmatpush1.msra.mxu0 %v2380
        %2507 = vmatprep.subr.mxu0 0.0
        %2508 = vmatpush2.msra.mxu0 0.0
        %2509 = vmatprep.subr.mxu0 0.0
        %2510 = vmatpush2.msra.mxu0 0.0
        %2511 = vmatprep.subr.mxu0 0.0
        %2512 = vmatpush2.msra.mxu0 0.0
        %2513 = vmatprep.subr.mxu0 0.0
        %2514 = vmatpush2.msra.mxu0 0.0
        %2515 = vmatprep.subr.mxu0 0.0
        %2516 = vmatpush2.msra.mxu0 0.0
        %2517 = vmatprep.subr.mxu0 0.0
        %2518 = vmatpush2.msra.mxu0 0.0
        %2519 = vmatprep.subr.mxu0 0.0
        %2520 = vmatpush2.msra.mxu0 0.0
        %2521 = vmatprep.subr.mxu0 0.0
        %2522 = vmatpush2.msra.mxu0 0.0
        %2523 = vmatprep.subr.mxu0 0.0
        %2524 = vmatpush2.msra.mxu0 0.0
        %2525 = vmatprep.subr.mxu0 0.0
        %2526 = vmatpush2.msra.mxu0 0.0
        %2527 = vmatprep.subr.mxu0 0.0
        %2528 = vmatpush2.msra.mxu0 0.0
        %2529 = vmatprep.subr.mxu0 0.0
        %2530 = vmatpush2.msra.mxu0 0.0
        %2531 = vmatprep.subr.mxu0 0.0
        %2532 = vmatpush2.msra.mxu0 0.0
        %2533 = vmatprep.subr.mxu0 0.0
        %2534 = vmatpush2.msra.mxu0 0.0
        %2535 = vmatprep.subr.mxu0 0.0
        %2536 = vmatpush2.msra.mxu0 0.0
        %2537 = vmatprep.subr.mxu0 0.0
        %2538 = vmatpush2.msra.mxu0 0.0
        %2539 = vmatprep.mubr.f32.mxu0 0.0
        %2540 = vmatmul.mubr.f32.gmra.mxu0 %v2473
        %v2541 = vpop.f32.mrf.mxu0
        %v2542 = vadd.f32 0.0, %v2541
        %v2543 = vpop.f32.mrf.mxu0
        %2544 = vdwg.mxu0
        %s2545 = scalar_lea.vmem %s10, 24
        %v2546 = vld [vmem:[%s2545] sm:$0xff]
        %v2548 = vsel %vm918, %v2542, 0
        %2550 = vmatprep.subr.mxu0 0.0
        %2551 = vmatpush1.msra.mxu0 0.0
        %2552 = vmatprep.subr.mxu0 0.0
        %2553 = vmatpush1.msra.mxu0 0.0
        %2554 = vmatprep.subr.mxu0 0.0
        %2555 = vmatpush1.msra.mxu0 0.0
        %2556 = vmatprep.subr.mxu0 0.0
        %2557 = vmatpush1.msra.mxu0 0.0
        %2558 = vmatprep.subr.mxu0 0.0
        %2559 = vmatpush1.msra.mxu0 0.0
        %2560 = vmatprep.subr.mxu0 0.0
        %2561 = vmatpush1.msra.mxu0 0.0
        %2562 = vmatprep.subr.mxu0 0.0
        %2563 = vmatpush1.msra.mxu0 0.0
        %2564 = vmatprep.subr.mxu0 0.0
        %2565 = vmatpush1.msra.mxu0 0.0
        %2566 = vmatprep.subr.mxu0 0.0
        %2567 = vmatpush1.msra.mxu0 0.0
        %2568 = vmatprep.subr.mxu0 0.0
        %2569 = vmatpush1.msra.mxu0 0.0
        %2570 = vmatprep.subr.mxu0 0.0
        %2571 = vmatpush1.msra.mxu0 0.0
        %2572 = vmatprep.subr.mxu0 0.0
        %2573 = vmatpush1.msra.mxu0 0.0
        %2574 = vmatprep.subr.mxu0 0.0
        %2575 = vmatpush1.msra.mxu0 0.0
        %2576 = vmatprep.subr.mxu0 0.0
        %2577 = vmatpush1.msra.mxu0 0.0
        %2578 = vmatprep.subr.mxu0 0.0
        %2579 = vmatpush1.msra.mxu0 0.0
        %2580 = vmatprep.subr.mxu0 0.0
        %2581 = vmatpush1.msra.mxu0 %v2546
        %2582 = vmatprep.subr.mxu0 0.0
        %2583 = vmatpush2.msra.mxu0 0.0
        %2584 = vmatprep.subr.mxu0 0.0
        %2585 = vmatpush2.msra.mxu0 0.0
        %2586 = vmatprep.subr.mxu0 0.0
        %2587 = vmatpush2.msra.mxu0 0.0
        %2588 = vmatprep.subr.mxu0 0.0
        %2589 = vmatpush2.msra.mxu0 0.0
        %2590 = vmatprep.subr.mxu0 0.0
        %2591 = vmatpush2.msra.mxu0 0.0
        %2592 = vmatprep.subr.mxu0 0.0
        %2593 = vmatpush2.msra.mxu0 0.0
        %2594 = vmatprep.subr.mxu0 0.0
        %2595 = vmatpush2.msra.mxu0 0.0
        %2596 = vmatprep.subr.mxu0 0.0
        %2597 = vmatpush2.msra.mxu0 0.0
        %2598 = vmatprep.subr.mxu0 0.0
        %2599 = vmatpush2.msra.mxu0 0.0
        %2600 = vmatprep.subr.mxu0 0.0
        %2601 = vmatpush2.msra.mxu0 0.0
        %2602 = vmatprep.subr.mxu0 0.0
        %2603 = vmatpush2.msra.mxu0 0.0
        %2604 = vmatprep.subr.mxu0 0.0
        %2605 = vmatpush2.msra.mxu0 0.0
        %2606 = vmatprep.subr.mxu0 0.0
        %2607 = vmatpush2.msra.mxu0 0.0
        %2608 = vmatprep.subr.mxu0 0.0
        %2609 = vmatpush2.msra.mxu0 0.0
        %2610 = vmatprep.subr.mxu0 0.0
        %2611 = vmatpush2.msra.mxu0 0.0
        %2612 = vmatprep.subr.mxu0 0.0
        %2613 = vmatpush2.msra.mxu0 0.0
        %2614 = vmatprep.mubr.f32.mxu0 0.0
        %2615 = vmatmul.mubr.f32.gmra.mxu0 %v2548
        %v2616 = vpop.f32.mrf.mxu0
        %v2617 = vadd.f32 0.0, %v2616
        %v2618 = vpop.f32.mrf.mxu0
        %2619 = vdwg.mxu0
        %v2620 = vadd.f32 %v2133, %v2617
        %v2621 = vld [vmem:[%s11] sm:$0x1]
        %v2623 = vlaneseq
        %v2624 = vshrl.u32 %v2623, 7
        %v2625 = vsub.s32 0, %v2624
        %v2626 = vrot.slane %v2621, %v2625
        %v2628 = vadd.f32 %v2620, %v2626
        %v2629 = vadd.f32 %v2628, %v670
        %v2630 = vld [vmem:[%s12] sm:$0x1]
        %v2631 = vld [vmem:[%s13] sm:$0x1]
        %v2632 = vsel %vm642, %v2629, 0.0
        %2633 = vadd.xlane.f32.xlu0 %v2632
        %v2634 = vpop.xlane.xlu0 %2633
        %v2635 = vmul.f32 %v2634, %v646
        %v2636 = vsub.f32 %v2629, %v2635
        %v2637 = vmul.f32 %v2636, %v2636
        %v2638 = vsel %vm642, %v2637, 0.0
        %2639 = vadd.xlane.f32.xlu0 %v2638
        %v2640 = vpop.xlane.xlu0 %2639
        %v2641 = vmul.f32 %v2640, %v646
        %v2642 = vadd.f32 %v2641, 1e-12
        %v2643 = vrsqrt.pop %v2642
        %v2644 = vmul.f32 %v2636, %v2643
        %v2646 = vlaneseq
        %v2647 = vshrl.u32 %v2646, 7
        %v2648 = vsub.s32 0, %v2647
        %v2649 = vrot.slane %v2630, %v2648
        %v2651 = vmul.f32 %v2644, %v2649
        %v2653 = vlaneseq
        %v2654 = vshrl.u32 %v2653, 7
        %v2655 = vsub.s32 0, %v2654
        %v2656 = vrot.slane %v2631, %v2655
        %v2658 = vadd.f32 %v2651, %v2656
        %v2659 = vld [vmem:[%s14] sm:$0xff]
        %v2660 = vld [vmem:[%s14 + $0x8] sm:$0xff]
        %v2661 = vld [vmem:[%s14 + $0x10] sm:$0xff]
        %v2662 = vld [vmem:[%s14 + $0x18] sm:$0xff]
        %v2663 = vld [vmem:[%s15] sm:$0x1]
        %v2665 = vlaneseq
        %v2666 = vshrl.u32 %v2665, 7
        %v2667 = vsub.s32 0, %v2666
        %v2668 = vrot.slane %v2663, %v2667
        %v2671 = vsel %vm642, %v2658, 0
        %2673 = vmatprep.subr.mxu0 0.0
        %2674 = vmatpush1.msra.mxu0 0.0
        %2675 = vmatprep.subr.mxu0 0.0
        %2676 = vmatpush1.msra.mxu0 0.0
        %2677 = vmatprep.subr.mxu0 0.0
        %2678 = vmatpush1.msra.mxu0 0.0
        %2679 = vmatprep.subr.mxu0 0.0
        %2680 = vmatpush1.msra.mxu0 0.0
        %2681 = vmatprep.subr.mxu0 0.0
        %2682 = vmatpush1.msra.mxu0 0.0
        %2683 = vmatprep.subr.mxu0 0.0
        %2684 = vmatpush1.msra.mxu0 0.0
        %2685 = vmatprep.subr.mxu0 0.0
        %2686 = vmatpush1.msra.mxu0 0.0
        %2687 = vmatprep.subr.mxu0 0.0
        %2688 = vmatpush1.msra.mxu0 0.0
        %2689 = vmatprep.subr.mxu0 0.0
        %2690 = vmatpush1.msra.mxu0 0.0
        %2691 = vmatprep.subr.mxu0 0.0
        %2692 = vmatpush1.msra.mxu0 0.0
        %2693 = vmatprep.subr.mxu0 0.0
        %2694 = vmatpush1.msra.mxu0 0.0
        %2695 = vmatprep.subr.mxu0 0.0
        %2696 = vmatpush1.msra.mxu0 0.0
        %2697 = vmatprep.subr.mxu0 0.0
        %2698 = vmatpush1.msra.mxu0 %v2662
        %2699 = vmatprep.subr.mxu0 0.0
        %2700 = vmatpush1.msra.mxu0 %v2661
        %2701 = vmatprep.subr.mxu0 0.0
        %2702 = vmatpush1.msra.mxu0 %v2660
        %2703 = vmatprep.subr.mxu0 0.0
        %2704 = vmatpush1.msra.mxu0 %v2659
        %2705 = vmatprep.subr.mxu0 0.0
        %2706 = vmatpush2.msra.mxu0 0.0
        %2707 = vmatprep.subr.mxu0 0.0
        %2708 = vmatpush2.msra.mxu0 0.0
        %2709 = vmatprep.subr.mxu0 0.0
        %2710 = vmatpush2.msra.mxu0 0.0
        %2711 = vmatprep.subr.mxu0 0.0
        %2712 = vmatpush2.msra.mxu0 0.0
        %2713 = vmatprep.subr.mxu0 0.0
        %2714 = vmatpush2.msra.mxu0 0.0
        %2715 = vmatprep.subr.mxu0 0.0
        %2716 = vmatpush2.msra.mxu0 0.0
        %2717 = vmatprep.subr.mxu0 0.0
        %2718 = vmatpush2.msra.mxu0 0.0
        %2719 = vmatprep.subr.mxu0 0.0
        %2720 = vmatpush2.msra.mxu0 0.0
        %2721 = vmatprep.subr.mxu0 0.0
        %2722 = vmatpush2.msra.mxu0 0.0
        %2723 = vmatprep.subr.mxu0 0.0
        %2724 = vmatpush2.msra.mxu0 0.0
        %2725 = vmatprep.subr.mxu0 0.0
        %2726 = vmatpush2.msra.mxu0 0.0
        %2727 = vmatprep.subr.mxu0 0.0
        %2728 = vmatpush2.msra.mxu0 0.0
        %2729 = vmatprep.subr.mxu0 0.0
        %2730 = vmatpush2.msra.mxu0 0.0
        %2731 = vmatprep.subr.mxu0 0.0
        %2732 = vmatpush2.msra.mxu0 0.0
        %2733 = vmatprep.subr.mxu0 0.0
        %2734 = vmatpush2.msra.mxu0 0.0
        %2735 = vmatprep.subr.mxu0 0.0
        %2736 = vmatpush2.msra.mxu0 0.0
        %2737 = vmatprep.mubr.f32.mxu0 0.0
        %2738 = vmatmul.mubr.f32.gmra.mxu0 %v2671
        %v2739 = vpop.f32.mrf.mxu0
        %v2740 = vadd.f32 %v2668, %v2739
        %v2741 = vpop.f32.mrf.mxu0
        %2742 = vdwg.mxu0
        %v2743 = vmul.f32 %v2740, 0.5
        %v2744 = vmul.f32 %v2740, 0.70710677
        %v2745 = verf.f32.pop %v2744
        %v2746 = vadd.f32 %v2745, 1.0
        %v2747 = vmul.f32 %v2743, %v2746
        %v2748 = vld [vmem:[%s16] sm:$0xff]
        %v2749 = vld [vmem:[%s16 + $0x8] sm:$0xff]
        %v2750 = vld [vmem:[%s16 + $0x10] sm:$0xff]
        %v2751 = vld [vmem:[%s16 + $0x18] sm:$0xff]
        %v2752 = vld [vmem:[%s16 + $0x20] sm:$0xff]
        %v2753 = vld [vmem:[%s16 + $0x28] sm:$0xff]
        %v2754 = vld [vmem:[%s16 + $0x30] sm:$0xff]
        %v2755 = vld [vmem:[%s16 + $0x38] sm:$0xff]
        %v2756 = vld [vmem:[%s17] sm:$0x1]
        %v2758 = vlaneseq
        %v2759 = vshrl.u32 %v2758, 7
        %v2760 = vsub.s32 0, %v2759
        %v2761 = vrot.slane %v2756, %v2760
        %vm2763 = vcmask 523264
        %v2765 = vsel %vm2763, %v2747, 0
        %2767 = vmatprep.subr.mxu0 0.0
        %2768 = vmatpush1.msra.mxu0 0.0
        %2769 = vmatprep.subr.mxu0 0.0
        %2770 = vmatpush1.msra.mxu0 0.0
        %2771 = vmatprep.subr.mxu0 0.0
        %2772 = vmatpush1.msra.mxu0 0.0
        %2773 = vmatprep.subr.mxu0 0.0
        %2774 = vmatpush1.msra.mxu0 0.0
        %2775 = vmatprep.subr.mxu0 0.0
        %2776 = vmatpush1.msra.mxu0 0.0
        %2777 = vmatprep.subr.mxu0 0.0
        %2778 = vmatpush1.msra.mxu0 0.0
        %2779 = vmatprep.subr.mxu0 0.0
        %2780 = vmatpush1.msra.mxu0 0.0
        %2781 = vmatprep.subr.mxu0 0.0
        %2782 = vmatpush1.msra.mxu0 0.0
        %2783 = vmatprep.subr.mxu0 0.0
        %2784 = vmatpush1.msra.mxu0 %v2755
        %2785 = vmatprep.subr.mxu0 0.0
        %2786 = vmatpush1.msra.mxu0 %v2754
        %2787 = vmatprep.subr.mxu0 0.0
        %2788 = vmatpush1.msra.mxu0 %v2753
        %2789 = vmatprep.subr.mxu0 0.0
        %2790 = vmatpush1.msra.mxu0 %v2752
        %2791 = vmatprep.subr.mxu0 0.0
        %2792 = vmatpush1.msra.mxu0 %v2751
        %2793 = vmatprep.subr.mxu0 0.0
        %2794 = vmatpush1.msra.mxu0 %v2750
        %2795 = vmatprep.subr.mxu0 0.0
        %2796 = vmatpush1.msra.mxu0 %v2749
        %2797 = vmatprep.subr.mxu0 0.0
        %2798 = vmatpush1.msra.mxu0 %v2748
        %2799 = vmatprep.subr.mxu0 0.0
        %2800 = vmatpush2.msra.mxu0 0.0
        %2801 = vmatprep.subr.mxu0 0.0
        %2802 = vmatpush2.msra.mxu0 0.0
        %2803 = vmatprep.subr.mxu0 0.0
        %2804 = vmatpush2.msra.mxu0 0.0
        %2805 = vmatprep.subr.mxu0 0.0
        %2806 = vmatpush2.msra.mxu0 0.0
        %2807 = vmatprep.subr.mxu0 0.0
        %2808 = vmatpush2.msra.mxu0 0.0
        %2809 = vmatprep.subr.mxu0 0.0
        %2810 = vmatpush2.msra.mxu0 0.0
        %2811 = vmatprep.subr.mxu0 0.0
        %2812 = vmatpush2.msra.mxu0 0.0
        %2813 = vmatprep.subr.mxu0 0.0
        %2814 = vmatpush2.msra.mxu0 0.0
        %2815 = vmatprep.subr.mxu0 0.0
        %2816 = vmatpush2.msra.mxu0 0.0
        %2817 = vmatprep.subr.mxu0 0.0
        %2818 = vmatpush2.msra.mxu0 0.0
        %2819 = vmatprep.subr.mxu0 0.0
        %2820 = vmatpush2.msra.mxu0 0.0
        %2821 = vmatprep.subr.mxu0 0.0
        %2822 = vmatpush2.msra.mxu0 0.0
        %2823 = vmatprep.subr.mxu0 0.0
        %2824 = vmatpush2.msra.mxu0 0.0
        %2825 = vmatprep.subr.mxu0 0.0
        %2826 = vmatpush2.msra.mxu0 0.0
        %2827 = vmatprep.subr.mxu0 0.0
        %2828 = vmatpush2.msra.mxu0 0.0
        %2829 = vmatprep.subr.mxu0 0.0
        %2830 = vmatpush2.msra.mxu0 0.0
        %2831 = vmatprep.mubr.f32.mxu0 0.0
        %2832 = vmatmul.mubr.f32.gmra.mxu0 %v2765
        %v2833 = vpop.f32.mrf.mxu0
        %v2834 = vadd.f32 %v2761, %v2833
        %v2835 = vpop.f32.mrf.mxu0
        %2836 = vdwg.mxu0
        %v2837 = vadd.f32 %v2834, %v2658
        %v2838 = vld [vmem:[%s18] sm:$0x1]
        %v2839 = vld [vmem:[%s19] sm:$0x1]
        %v2840 = vsel %vm642, %v2837, 0.0
        %2841 = vadd.xlane.f32.xlu0 %v2840
        %v2842 = vpop.xlane.xlu0 %2841
        %v2843 = vmul.f32 %v2842, %v646
        %v2844 = vsub.f32 %v2837, %v2843
        %v2845 = vmul.f32 %v2844, %v2844
        %v2846 = vsel %vm642, %v2845, 0.0
        %2847 = vadd.xlane.f32.xlu0 %v2846
        %v2848 = vpop.xlane.xlu0 %2847
        %v2849 = vmul.f32 %v2848, %v646
        %v2850 = vadd.f32 %v2849, 1e-12
        %v2851 = vrsqrt.pop %v2850
        %v2852 = vmul.f32 %v2844, %v2851
        %v2854 = vlaneseq
        %v2855 = vshrl.u32 %v2854, 7
        %v2856 = vsub.s32 0, %v2855
        %v2857 = vrot.slane %v2838, %v2856
        %v2859 = vmul.f32 %v2852, %v2857
        %v2861 = vlaneseq
        %v2862 = vshrl.u32 %v2861, 7
        %v2863 = vsub.s32 0, %v2862
        %v2864 = vrot.slane %v2839, %v2863
        %v2866 = vadd.f32 %v2859, %v2864
        %s2867 = scalar_lea.vmem %s4, 128
        %v2868 = vld [vmem:[%s2867] sm:$0xff]
        %v2869 = vld [vmem:[%s2867 + $0x8] sm:$0xff]
        %v2870 = vld [vmem:[%s2867 + $0x10] sm:$0xff]
        %v2871 = vld [vmem:[%s2867 + $0x18] sm:$0xff]
        %s2872 = scalar_lea.vmem %s7, 4
        %v2873 = vld [vmem:[%s2872] sm:$0x1]
        %v2875 = vlaneseq
        %v2876 = vshrl.u32 %v2875, 7
        %v2877 = vsub.s32 0, %v2876
        %v2878 = vrot.slane %v2873, %v2877
        %v2881 = vsel %vm642, %v2866, 0
        %2883 = vmatprep.subr.mxu0 0.0
        %2884 = vmatpush1.msra.mxu0 0.0
        %2885 = vmatprep.subr.mxu0 0.0
        %2886 = vmatpush1.msra.mxu0 0.0
        %2887 = vmatprep.subr.mxu0 0.0
        %2888 = vmatpush1.msra.mxu0 0.0
        %2889 = vmatprep.subr.mxu0 0.0
        %2890 = vmatpush1.msra.mxu0 0.0
        %2891 = vmatprep.subr.mxu0 0.0
        %2892 = vmatpush1.msra.mxu0 0.0
        %2893 = vmatprep.subr.mxu0 0.0
        %2894 = vmatpush1.msra.mxu0 0.0
        %2895 = vmatprep.subr.mxu0 0.0
        %2896 = vmatpush1.msra.mxu0 0.0
        %2897 = vmatprep.subr.mxu0 0.0
        %2898 = vmatpush1.msra.mxu0 0.0
        %2899 = vmatprep.subr.mxu0 0.0
        %2900 = vmatpush1.msra.mxu0 0.0
        %2901 = vmatprep.subr.mxu0 0.0
        %2902 = vmatpush1.msra.mxu0 0.0
        %2903 = vmatprep.subr.mxu0 0.0
        %2904 = vmatpush1.msra.mxu0 0.0
        %2905 = vmatprep.subr.mxu0 0.0
        %2906 = vmatpush1.msra.mxu0 0.0
        %2907 = vmatprep.subr.mxu0 0.0
        %2908 = vmatpush1.msra.mxu0 %v2871
        %2909 = vmatprep.subr.mxu0 0.0
        %2910 = vmatpush1.msra.mxu0 %v2870
        %2911 = vmatprep.subr.mxu0 0.0
        %2912 = vmatpush1.msra.mxu0 %v2869
        %2913 = vmatprep.subr.mxu0 0.0
        %2914 = vmatpush1.msra.mxu0 %v2868
        %2915 = vmatprep.subr.mxu0 0.0
        %2916 = vmatpush2.msra.mxu0 0.0
        %2917 = vmatprep.subr.mxu0 0.0
        %2918 = vmatpush2.msra.mxu0 0.0
        %2919 = vmatprep.subr.mxu0 0.0
        %2920 = vmatpush2.msra.mxu0 0.0
        %2921 = vmatprep.subr.mxu0 0.0
        %2922 = vmatpush2.msra.mxu0 0.0
        %2923 = vmatprep.subr.mxu0 0.0
        %2924 = vmatpush2.msra.mxu0 0.0
        %2925 = vmatprep.subr.mxu0 0.0
        %2926 = vmatpush2.msra.mxu0 0.0
        %2927 = vmatprep.subr.mxu0 0.0
        %2928 = vmatpush2.msra.mxu0 0.0
        %2929 = vmatprep.subr.mxu0 0.0
        %2930 = vmatpush2.msra.mxu0 0.0
        %2931 = vmatprep.subr.mxu0 0.0
        %2932 = vmatpush2.msra.mxu0 0.0
        %2933 = vmatprep.subr.mxu0 0.0
        %2934 = vmatpush2.msra.mxu0 0.0
        %2935 = vmatprep.subr.mxu0 0.0
        %2936 = vmatpush2.msra.mxu0 0.0
        %2937 = vmatprep.subr.mxu0 0.0
        %2938 = vmatpush2.msra.mxu0 0.0
        %2939 = vmatprep.subr.mxu0 0.0
        %2940 = vmatpush2.msra.mxu0 0.0
        %2941 = vmatprep.subr.mxu0 0.0
        %2942 = vmatpush2.msra.mxu0 0.0
        %2943 = vmatprep.subr.mxu0 0.0
        %2944 = vmatpush2.msra.mxu0 0.0
        %2945 = vmatprep.subr.mxu0 0.0
        %2946 = vmatpush2.msra.mxu0 0.0
        %2947 = vmatprep.mubr.f32.mxu0 0.0
        %2948 = vmatmul.mubr.f32.gmra.mxu0 %v2881
        %v2949 = vpop.f32.mrf.mxu0
        %v2950 = vadd.f32 %v2878, %v2949
        %v2951 = vpop.f32.mrf.mxu0
        %2952 = vdwg.mxu0
        %s2953 = scalar_lea.vmem %s5, 128
        %v2954 = vld [vmem:[%s2953] sm:$0xff]
        %v2955 = vld [vmem:[%s2953 + $0x8] sm:$0xff]
        %v2956 = vld [vmem:[%s2953 + $0x10] sm:$0xff]
        %v2957 = vld [vmem:[%s2953 + $0x18] sm:$0xff]
        %s2958 = scalar_lea.vmem %s8, 4
        %v2959 = vld [vmem:[%s2958] sm:$0x1]
        %v2961 = vlaneseq
        %v2962 = vshrl.u32 %v2961, 7
        %v2963 = vsub.s32 0, %v2962
        %v2964 = vrot.slane %v2959, %v2963
        %2966 = vmatprep.subr.mxu0 0.0
        %2967 = vmatpush1.msra.mxu0 0.0
        %2968 = vmatprep.subr.mxu0 0.0
        %2969 = vmatpush1.msra.mxu0 0.0
        %2970 = vmatprep.subr.mxu0 0.0
        %2971 = vmatpush1.msra.mxu0 0.0
        %2972 = vmatprep.subr.mxu0 0.0
        %2973 = vmatpush1.msra.mxu0 0.0
        %2974 = vmatprep.subr.mxu0 0.0
        %2975 = vmatpush1.msra.mxu0 0.0
        %2976 = vmatprep.subr.mxu0 0.0
        %2977 = vmatpush1.msra.mxu0 0.0
        %2978 = vmatprep.subr.mxu0 0.0
        %2979 = vmatpush1.msra.mxu0 0.0
        %2980 = vmatprep.subr.mxu0 0.0
        %2981 = vmatpush1.msra.mxu0 0.0
        %2982 = vmatprep.subr.mxu0 0.0
        %2983 = vmatpush1.msra.mxu0 0.0
        %2984 = vmatprep.subr.mxu0 0.0
        %2985 = vmatpush1.msra.mxu0 0.0
        %2986 = vmatprep.subr.mxu0 0.0
        %2987 = vmatpush1.msra.mxu0 0.0
        %2988 = vmatprep.subr.mxu0 0.0
        %2989 = vmatpush1.msra.mxu0 0.0
        %2990 = vmatprep.subr.mxu0 0.0
        %2991 = vmatpush1.msra.mxu0 %v2957
        %2992 = vmatprep.subr.mxu0 0.0
        %2993 = vmatpush1.msra.mxu0 %v2956
        %2994 = vmatprep.subr.mxu0 0.0
        %2995 = vmatpush1.msra.mxu0 %v2955
        %2996 = vmatprep.subr.mxu0 0.0
        %2997 = vmatpush1.msra.mxu0 %v2954
        %2998 = vmatprep.subr.mxu0 0.0
        %2999 = vmatpush2.msra.mxu0 0.0
        %3000 = vmatprep.subr.mxu0 0.0
        %3001 = vmatpush2.msra.mxu0 0.0
        %3002 = vmatprep.subr.mxu0 0.0
        %3003 = vmatpush2.msra.mxu0 0.0
        %3004 = vmatprep.subr.mxu0 0.0
        %3005 = vmatpush2.msra.mxu0 0.0
        %3006 = vmatprep.subr.mxu0 0.0
        %3007 = vmatpush2.msra.mxu0 0.0
        %3008 = vmatprep.subr.mxu0 0.0
        %3009 = vmatpush2.msra.mxu0 0.0
        %3010 = vmatprep.subr.mxu0 0.0
        %3011 = vmatpush2.msra.mxu0 0.0
        %3012 = vmatprep.subr.mxu0 0.0
        %3013 = vmatpush2.msra.mxu0 0.0
        %3014 = vmatprep.subr.mxu0 0.0
        %3015 = vmatpush2.msra.mxu0 0.0
        %3016 = vmatprep.subr.mxu0 0.0
        %3017 = vmatpush2.msra.mxu0 0.0
        %3018 = vmatprep.subr.mxu0 0.0
        %3019 = vmatpush2.msra.mxu0 0.0
        %3020 = vmatprep.subr.mxu0 0.0
        %3021 = vmatpush2.msra.mxu0 0.0
        %3022 = vmatprep.subr.mxu0 0.0
        %3023 = vmatpush2.msra.mxu0 0.0
        %3024 = vmatprep.subr.mxu0 0.0
        %3025 = vmatpush2.msra.mxu0 0.0
        %3026 = vmatprep.subr.mxu0 0.0
        %3027 = vmatpush2.msra.mxu0 0.0
        %3028 = vmatprep.subr.mxu0 0.0
        %3029 = vmatpush2.msra.mxu0 0.0
        %3030 = vmatprep.mubr.f32.mxu0 0.0
        %3031 = vmatmul.mubr.f32.gmra.mxu0 %v2881
        %v3032 = vpop.f32.mrf.mxu0
        %v3033 = vadd.f32 %v2964, %v3032
        %v3034 = vpop.f32.mrf.mxu0
        %3035 = vdwg.mxu0
        %s3036 = scalar_lea.vmem %s6, 128
        %v3037 = vld [vmem:[%s3036] sm:$0xff]
        %v3038 = vld [vmem:[%s3036 + $0x8] sm:$0xff]
        %v3039 = vld [vmem:[%s3036 + $0x10] sm:$0xff]
        %v3040 = vld [vmem:[%s3036 + $0x18] sm:$0xff]
        %s3041 = scalar_lea.vmem %s9, 4
        %v3042 = vld [vmem:[%s3041] sm:$0x1]
        %v3044 = vlaneseq
        %v3045 = vshrl.u32 %v3044, 7
        %v3046 = vsub.s32 0, %v3045
        %v3047 = vrot.slane %v3042, %v3046
        %3049 = vmatprep.subr.mxu0 0.0
        %3050 = vmatpush1.msra.mxu0 0.0
        %3051 = vmatprep.subr.mxu0 0.0
        %3052 = vmatpush1.msra.mxu0 0.0
        %3053 = vmatprep.subr.mxu0 0.0
        %3054 = vmatpush1.msra.mxu0 0.0
        %3055 = vmatprep.subr.mxu0 0.0
        %3056 = vmatpush1.msra.mxu0 0.0
        %3057 = vmatprep.subr.mxu0 0.0
        %3058 = vmatpush1.msra.mxu0 0.0
        %3059 = vmatprep.subr.mxu0 0.0
        %3060 = vmatpush1.msra.mxu0 0.0
        %3061 = vmatprep.subr.mxu0 0.0
        %3062 = vmatpush1.msra.mxu0 0.0
        %3063 = vmatprep.subr.mxu0 0.0
        %3064 = vmatpush1.msra.mxu0 0.0
        %3065 = vmatprep.subr.mxu0 0.0
        %3066 = vmatpush1.msra.mxu0 0.0
        %3067 = vmatprep.subr.mxu0 0.0
        %3068 = vmatpush1.msra.mxu0 0.0
        %3069 = vmatprep.subr.mxu0 0.0
        %3070 = vmatpush1.msra.mxu0 0.0
        %3071 = vmatprep.subr.mxu0 0.0
        %3072 = vmatpush1.msra.mxu0 0.0
        %3073 = vmatprep.subr.mxu0 0.0
        %3074 = vmatpush1.msra.mxu0 %v3040
        %3075 = vmatprep.subr.mxu0 0.0
        %3076 = vmatpush1.msra.mxu0 %v3039
        %3077 = vmatprep.subr.mxu0 0.0
        %3078 = vmatpush1.msra.mxu0 %v3038
        %3079 = vmatprep.subr.mxu0 0.0
        %3080 = vmatpush1.msra.mxu0 %v3037
        %3081 = vmatprep.subr.mxu0 0.0
        %3082 = vmatpush2.msra.mxu0 0.0
        %3083 = vmatprep.subr.mxu0 0.0
        %3084 = vmatpush2.msra.mxu0 0.0
        %3085 = vmatprep.subr.mxu0 0.0
        %3086 = vmatpush2.msra.mxu0 0.0
        %3087 = vmatprep.subr.mxu0 0.0
        %3088 = vmatpush2.msra.mxu0 0.0
        %3089 = vmatprep.subr.mxu0 0.0
        %3090 = vmatpush2.msra.mxu0 0.0
        %3091 = vmatprep.subr.mxu0 0.0
        %3092 = vmatpush2.msra.mxu0 0.0
        %3093 = vmatprep.subr.mxu0 0.0
        %3094 = vmatpush2.msra.mxu0 0.0
        %3095 = vmatprep.subr.mxu0 0.0
        %3096 = vmatpush2.msra.mxu0 0.0
        %3097 = vmatprep.subr.mxu0 0.0
        %3098 = vmatpush2.msra.mxu0 0.0
        %3099 = vmatprep.subr.mxu0 0.0
        %3100 = vmatpush2.msra.mxu0 0.0
        %3101 = vmatprep.subr.mxu0 0.0
        %3102 = vmatpush2.msra.mxu0 0.0
        %3103 = vmatprep.subr.mxu0 0.0
        %3104 = vmatpush2.msra.mxu0 0.0
        %3105 = vmatprep.subr.mxu0 0.0
        %3106 = vmatpush2.msra.mxu0 0.0
        %3107 = vmatprep.subr.mxu0 0.0
        %3108 = vmatpush2.msra.mxu0 0.0
        %3109 = vmatprep.subr.mxu0 0.0
        %3110 = vmatpush2.msra.mxu0 0.0
        %3111 = vmatprep.subr.mxu0 0.0
        %3112 = vmatpush2.msra.mxu0 0.0
        %3113 = vmatprep.mubr.f32.mxu0 0.0
        %3114 = vmatmul.mubr.f32.gmra.mxu0 %v2881
        %v3115 = vpop.f32.mrf.mxu0
        %v3116 = vadd.f32 %v3047, %v3115
        %v3117 = vpop.f32.mrf.mxu0
        %3118 = vdwg.mxu0
        %v3120 = vsel %vm918, %v2950, 0
        %v3123 = vsel %vm918, %v3033, 0
        %3125 = vmatprep.subr.mxu0 0.0
        %3126 = vmatpush1.xpose.msra.mxu0 0.0
        %3127 = vmatprep.subr.mxu0 0.0
        %3128 = vmatpush1.xpose.msra.mxu0 0.0
        %3129 = vmatprep.subr.mxu0 0.0
        %3130 = vmatpush1.xpose.msra.mxu0 0.0
        %3131 = vmatprep.subr.mxu0 0.0
        %3132 = vmatpush1.xpose.msra.mxu0 0.0
        %3133 = vmatprep.subr.mxu0 0.0
        %3134 = vmatpush1.xpose.msra.mxu0 0.0
        %3135 = vmatprep.subr.mxu0 0.0
        %3136 = vmatpush1.xpose.msra.mxu0 0.0
        %3137 = vmatprep.subr.mxu0 0.0
        %3138 = vmatpush1.xpose.msra.mxu0 0.0
        %3139 = vmatprep.subr.mxu0 0.0
        %3140 = vmatpush1.xpose.msra.mxu0 0.0
        %3141 = vmatprep.subr.mxu0 0.0
        %3142 = vmatpush1.xpose.msra.mxu0 0.0
        %3143 = vmatprep.subr.mxu0 0.0
        %3144 = vmatpush1.xpose.msra.mxu0 0.0
        %3145 = vmatprep.subr.mxu0 0.0
        %3146 = vmatpush1.xpose.msra.mxu0 0.0
        %3147 = vmatprep.subr.mxu0 0.0
        %3148 = vmatpush1.xpose.msra.mxu0 0.0
        %3149 = vmatprep.subr.mxu0 0.0
        %3150 = vmatpush1.xpose.msra.mxu0 0.0
        %3151 = vmatprep.subr.mxu0 0.0
        %3152 = vmatpush1.xpose.msra.mxu0 0.0
        %3153 = vmatprep.subr.mxu0 0.0
        %3154 = vmatpush1.xpose.msra.mxu0 0.0
        %3155 = vmatprep.subr.mxu0 0.0
        %3156 = vmatpush1.xpose.msra.mxu0 %v3123
        %3157 = vmatprep.subr.mxu0 0.0
        %3158 = vmatpush2.xpose.msra.mxu0 0.0
        %3159 = vmatprep.subr.mxu0 0.0
        %3160 = vmatpush2.xpose.msra.mxu0 0.0
        %3161 = vmatprep.subr.mxu0 0.0
        %3162 = vmatpush2.xpose.msra.mxu0 0.0
        %3163 = vmatprep.subr.mxu0 0.0
        %3164 = vmatpush2.xpose.msra.mxu0 0.0
        %3165 = vmatprep.subr.mxu0 0.0
        %3166 = vmatpush2.xpose.msra.mxu0 0.0
        %3167 = vmatprep.subr.mxu0 0.0
        %3168 = vmatpush2.xpose.msra.mxu0 0.0
        %3169 = vmatprep.subr.mxu0 0.0
        %3170 = vmatpush2.xpose.msra.mxu0 0.0
        %3171 = vmatprep.subr.mxu0 0.0
        %3172 = vmatpush2.xpose.msra.mxu0 0.0
        %3173 = vmatprep.subr.mxu0 0.0
        %3174 = vmatpush2.xpose.msra.mxu0 0.0
        %3175 = vmatprep.subr.mxu0 0.0
        %3176 = vmatpush2.xpose.msra.mxu0 0.0
        %3177 = vmatprep.subr.mxu0 0.0
        %3178 = vmatpush2.xpose.msra.mxu0 0.0
        %3179 = vmatprep.subr.mxu0 0.0
        %3180 = vmatpush2.xpose.msra.mxu0 0.0
        %3181 = vmatprep.subr.mxu0 0.0
        %3182 = vmatpush2.xpose.msra.mxu0 0.0
        %3183 = vmatprep.subr.mxu0 0.0
        %3184 = vmatpush2.xpose.msra.mxu0 0.0
        %3185 = vmatprep.subr.mxu0 0.0
        %3186 = vmatpush2.xpose.msra.mxu0 0.0
        %3187 = vmatprep.subr.mxu0 0.0
        %3188 = vmatpush2.xpose.msra.mxu0 0.0
        %3189 = vmatprep.mubr.f32.mxu0 0.0
        %3190 = vmatmul.mubr.f32.gmra.mxu0 %v3120
        %v3191 = vpop.f32.mrf.mxu0
        %v3192 = vadd.f32 0.0, %v3191
        %v3193 = vpop.f32.mrf.mxu0
        %3194 = vdwg.mxu0
        %v3195 = vmul.f32 %v3192, 0.35355338
        %v3196 = vadd.f32 %v3195, %v1000
        %v3197 = vsel %vm918, %v3196, -inf
        %3198 = vmax.xlane.f32.xlu0 %v3197
        %v3199 = vpop.xlane.xlu0 %3198
        %v3200 = vsub.f32 %v3196, %v3199
        %v3201 = vmul.f32 %v3200, 1.442695
        %v3202 = vpow.pop %v3201
        %v3203 = vsel %vm918, %v3202, 0.0
        %3204 = vadd.xlane.f32.xlu0 %v3203
        %v3205 = vpop.xlane.xlu0 %3204
        %v3206 = vrcp.pop %v3205
        %v3207 = vmul.f32 %v3202, %v3206
        %v3209 = vsel %vm918, %v3207, 0
        %3211 = vmatprep.subr.mxu0 0.0
        %3212 = vmatpush1.msra.mxu0 0.0
        %3213 = vmatprep.subr.mxu0 0.0
        %3214 = vmatpush1.msra.mxu0 0.0
        %3215 = vmatprep.subr.mxu0 0.0
        %3216 = vmatpush1.msra.mxu0 0.0
        %3217 = vmatprep.subr.mxu0 0.0
        %3218 = vmatpush1.msra.mxu0 0.0
        %3219 = vmatprep.subr.mxu0 0.0
        %3220 = vmatpush1.msra.mxu0 0.0
        %3221 = vmatprep.subr.mxu0 0.0
        %3222 = vmatpush1.msra.mxu0 0.0
        %3223 = vmatprep.subr.mxu0 0.0
        %3224 = vmatpush1.msra.mxu0 0.0
        %3225 = vmatprep.subr.mxu0 0.0
        %3226 = vmatpush1.msra.mxu0 0.0
        %3227 = vmatprep.subr.mxu0 0.0
        %3228 = vmatpush1.msra.mxu0 0.0
        %3229 = vmatprep.subr.mxu0 0.0
        %3230 = vmatpush1.msra.mxu0 0.0
        %3231 = vmatprep.subr.mxu0 0.0
        %3232 = vmatpush1.msra.mxu0 0.0
        %3233 = vmatprep.subr.mxu0 0.0
        %3234 = vmatpush1.msra.mxu0 0.0
        %3235 = vmatprep.subr.mxu0 0.0
        %3236 = vmatpush1.msra.mxu0 0.0
        %3237 = vmatprep.subr.mxu0 0.0
        %3238 = vmatpush1.msra.mxu0 0.0
        %3239 = vmatprep.subr.mxu0 0.0
        %3240 = vmatpush1.msra.mxu0 0.0
        %3241 = vmatprep.subr.mxu0 0.0
        %3242 = vmatpush1.msra.mxu0 %v3116
        %3243 = vmatprep.subr.mxu0 0.0
        %3244 = vmatpush2.msra.mxu0 0.0
        %3245 = vmatprep.subr.mxu0 0.0
        %3246 = vmatpush2.msra.mxu0 0.0
        %3247 = vmatprep.subr.mxu0 0.0
        %3248 = vmatpush2.msra.mxu0 0.0
        %3249 = vmatprep.subr.mxu0 0.0
        %3250 = vmatpush2.msra.mxu0 0.0
        %3251 = vmatprep.subr.mxu0 0.0
        %3252 = vmatpush2.msra.mxu0 0.0
        %3253 = vmatprep.subr.mxu0 0.0
        %3254 = vmatpush2.msra.mxu0 0.0
        %3255 = vmatprep.subr.mxu0 0.0
        %3256 = vmatpush2.msra.mxu0 0.0
        %3257 = vmatprep.subr.mxu0 0.0
        %3258 = vmatpush2.msra.mxu0 0.0
        %3259 = vmatprep.subr.mxu0 0.0
        %3260 = vmatpush2.msra.mxu0 0.0
        %3261 = vmatprep.subr.mxu0 0.0
        %3262 = vmatpush2.msra.mxu0 0.0
        %3263 = vmatprep.subr.mxu0 0.0
        %3264 = vmatpush2.msra.mxu0 0.0
        %3265 = vmatprep.subr.mxu0 0.0
        %3266 = vmatpush2.msra.mxu0 0.0
        %3267 = vmatprep.subr.mxu0 0.0
        %3268 = vmatpush2.msra.mxu0 0.0
        %3269 = vmatprep.subr.mxu0 0.0
        %3270 = vmatpush2.msra.mxu0 0.0
        %3271 = vmatprep.subr.mxu0 0.0
        %3272 = vmatpush2.msra.mxu0 0.0
        %3273 = vmatprep.subr.mxu0 0.0
        %3274 = vmatpush2.msra.mxu0 0.0
        %3275 = vmatprep.mubr.f32.mxu0 0.0
        %3276 = vmatmul.mubr.f32.gmra.mxu0 %v3209
        %v3277 = vpop.f32.mrf.mxu0
        %v3278 = vadd.f32 0.0, %v3277
        %v3279 = vpop.f32.mrf.mxu0
        %3280 = vdwg.mxu0
        %s3281 = scalar_lea.vmem %s10, 32
        %v3282 = vld [vmem:[%s3281] sm:$0xff]
        %s3283 = scalar_lea.vmem %s4, 160
        %v3284 = vld [vmem:[%s3283] sm:$0xff]
        %v3285 = vld [vmem:[%s3283 + $0x8] sm:$0xff]
        %v3286 = vld [vmem:[%s3283 + $0x10] sm:$0xff]
        %v3287 = vld [vmem:[%s3283 + $0x18] sm:$0xff]
        %s3288 = scalar_lea.vmem %s7, 5
        %v3289 = vld [vmem:[%s3288] sm:$0x1]
        %v3291 = vlaneseq
        %v3292 = vshrl.u32 %v3291, 7
        %v3293 = vsub.s32 0, %v3292
        %v3294 = vrot.slane %v3289, %v3293
        %3296 = vmatprep.subr.mxu0 0.0
        %3297 = vmatpush1.msra.mxu0 0.0
        %3298 = vmatprep.subr.mxu0 0.0
        %3299 = vmatpush1.msra.mxu0 0.0
        %3300 = vmatprep.subr.mxu0 0.0
        %3301 = vmatpush1.msra.mxu0 0.0
        %3302 = vmatprep.subr.mxu0 0.0
        %3303 = vmatpush1.msra.mxu0 0.0
        %3304 = vmatprep.subr.mxu0 0.0
        %3305 = vmatpush1.msra.mxu0 0.0
        %3306 = vmatprep.subr.mxu0 0.0
        %3307 = vmatpush1.msra.mxu0 0.0
        %3308 = vmatprep.subr.mxu0 0.0
        %3309 = vmatpush1.msra.mxu0 0.0
        %3310 = vmatprep.subr.mxu0 0.0
        %3311 = vmatpush1.msra.mxu0 0.0
        %3312 = vmatprep.subr.mxu0 0.0
        %3313 = vmatpush1.msra.mxu0 0.0
        %3314 = vmatprep.subr.mxu0 0.0
        %3315 = vmatpush1.msra.mxu0 0.0
        %3316 = vmatprep.subr.mxu0 0.0
        %3317 = vmatpush1.msra.mxu0 0.0
        %3318 = vmatprep.subr.mxu0 0.0
        %3319 = vmatpush1.msra.mxu0 0.0
        %3320 = vmatprep.subr.mxu0 0.0
        %3321 = vmatpush1.msra.mxu0 %v3287
        %3322 = vmatprep.subr.mxu0 0.0
        %3323 = vmatpush1.msra.mxu0 %v3286
        %3324 = vmatprep.subr.mxu0 0.0
        %3325 = vmatpush1.msra.mxu0 %v3285
        %3326 = vmatprep.subr.mxu0 0.0
        %3327 = vmatpush1.msra.mxu0 %v3284
        %3328 = vmatprep.subr.mxu0 0.0
        %3329 = vmatpush2.msra.mxu0 0.0
        %3330 = vmatprep.subr.mxu0 0.0
        %3331 = vmatpush2.msra.mxu0 0.0
        %3332 = vmatprep.subr.mxu0 0.0
        %3333 = vmatpush2.msra.mxu0 0.0
        %3334 = vmatprep.subr.mxu0 0.0
        %3335 = vmatpush2.msra.mxu0 0.0
        %3336 = vmatprep.subr.mxu0 0.0
        %3337 = vmatpush2.msra.mxu0 0.0
        %3338 = vmatprep.subr.mxu0 0.0
        %3339 = vmatpush2.msra.mxu0 0.0
        %3340 = vmatprep.subr.mxu0 0.0
        %3341 = vmatpush2.msra.mxu0 0.0
        %3342 = vmatprep.subr.mxu0 0.0
        %3343 = vmatpush2.msra.mxu0 0.0
        %3344 = vmatprep.subr.mxu0 0.0
        %3345 = vmatpush2.msra.mxu0 0.0
        %3346 = vmatprep.subr.mxu0 0.0
        %3347 = vmatpush2.msra.mxu0 0.0
        %3348 = vmatprep.subr.mxu0 0.0
        %3349 = vmatpush2.msra.mxu0 0.0
        %3350 = vmatprep.subr.mxu0 0.0
        %3351 = vmatpush2.msra.mxu0 0.0
        %3352 = vmatprep.subr.mxu0 0.0
        %3353 = vmatpush2.msra.mxu0 0.0
        %3354 = vmatprep.subr.mxu0 0.0
        %3355 = vmatpush2.msra.mxu0 0.0
        %3356 = vmatprep.subr.mxu0 0.0
        %3357 = vmatpush2.msra.mxu0 0.0
        %3358 = vmatprep.subr.mxu0 0.0
        %3359 = vmatpush2.msra.mxu0 0.0
        %3360 = vmatprep.mubr.f32.mxu0 0.0
        %3361 = vmatmul.mubr.f32.gmra.mxu0 %v2881
        %v3362 = vpop.f32.mrf.mxu0
        %v3363 = vadd.f32 %v3294, %v3362
        %v3364 = vpop.f32.mrf.mxu0
        %3365 = vdwg.mxu0
        %s3366 = scalar_lea.vmem %s5, 160
        %v3367 = vld [vmem:[%s3366] sm:$0xff]
        %v3368 = vld [vmem:[%s3366 + $0x8] sm:$0xff]
        %v3369 = vld [vmem:[%s3366 + $0x10] sm:$0xff]
        %v3370 = vld [vmem:[%s3366 + $0x18] sm:$0xff]
        %s3371 = scalar_lea.vmem %s8, 5
        %v3372 = vld [vmem:[%s3371] sm:$0x1]
        %v3374 = vlaneseq
        %v3375 = vshrl.u32 %v3374, 7
        %v3376 = vsub.s32 0, %v3375
        %v3377 = vrot.slane %v3372, %v3376
        %3379 = vmatprep.subr.mxu0 0.0
        %3380 = vmatpush1.msra.mxu0 0.0
        %3381 = vmatprep.subr.mxu0 0.0
        %3382 = vmatpush1.msra.mxu0 0.0
        %3383 = vmatprep.subr.mxu0 0.0
        %3384 = vmatpush1.msra.mxu0 0.0
        %3385 = vmatprep.subr.mxu0 0.0
        %3386 = vmatpush1.msra.mxu0 0.0
        %3387 = vmatprep.subr.mxu0 0.0
        %3388 = vmatpush1.msra.mxu0 0.0
        %3389 = vmatprep.subr.mxu0 0.0
        %3390 = vmatpush1.msra.mxu0 0.0
        %3391 = vmatprep.subr.mxu0 0.0
        %3392 = vmatpush1.msra.mxu0 0.0
        %3393 = vmatprep.subr.mxu0 0.0
        %3394 = vmatpush1.msra.mxu0 0.0
        %3395 = vmatprep.subr.mxu0 0.0
        %3396 = vmatpush1.msra.mxu0 0.0
        %3397 = vmatprep.subr.mxu0 0.0
        %3398 = vmatpush1.msra.mxu0 0.0
        %3399 = vmatprep.subr.mxu0 0.0
        %3400 = vmatpush1.msra.mxu0 0.0
        %3401 = vmatprep.subr.mxu0 0.0
        %3402 = vmatpush1.msra.mxu0 0.0
        %3403 = vmatprep.subr.mxu0 0.0
        %3404 = vmatpush1.msra.mxu0 %v3370
        %3405 = vmatprep.subr.mxu0 0.0
        %3406 = vmatpush1.msra.mxu0 %v3369
        %3407 = vmatprep.subr.mxu0 0.0
        %3408 = vmatpush1.msra.mxu0 %v3368
        %3409 = vmatprep.subr.mxu0 0.0
        %3410 = vmatpush1.msra.mxu0 %v3367
        %3411 = vmatprep.subr.mxu0 0.0
        %3412 = vmatpush2.msra.mxu0 0.0
        %3413 = vmatprep.subr.mxu0 0.0
        %3414 = vmatpush2.msra.mxu0 0.0
        %3415 = vmatprep.subr.mxu0 0.0
        %3416 = vmatpush2.msra.mxu0 0.0
        %3417 = vmatprep.subr.mxu0 0.0
        %3418 = vmatpush2.msra.mxu0 0.0
        %3419 = vmatprep.subr.mxu0 0.0
        %3420 = vmatpush2.msra.mxu0 0.0
        %3421 = vmatprep.subr.mxu0 0.0
        %3422 = vmatpush2.msra.mxu0 0.0
        %3423 = vmatprep.subr.mxu0 0.0
        %3424 = vmatpush2.msra.mxu0 0.0
        %3425 = vmatprep.subr.mxu0 0.0
        %3426 = vmatpush2.msra.mxu0 0.0
        %3427 = vmatprep.subr.mxu0 0.0
        %3428 = vmatpush2.msra.mxu0 0.0
        %3429 = vmatprep.subr.mxu0 0.0
        %3430 = vmatpush2.msra.mxu0 0.0
        %3431 = vmatprep.subr.mxu0 0.0
        %3432 = vmatpush2.msra.mxu0 0.0
        %3433 = vmatprep.subr.mxu0 0.0
        %3434 = vmatpush2.msra.mxu0 0.0
        %3435 = vmatprep.subr.mxu0 0.0
        %3436 = vmatpush2.msra.mxu0 0.0
        %3437 = vmatprep.subr.mxu0 0.0
        %3438 = vmatpush2.msra.mxu0 0.0
        %3439 = vmatprep.subr.mxu0 0.0
        %3440 = vmatpush2.msra.mxu0 0.0
        %3441 = vmatprep.subr.mxu0 0.0
        %3442 = vmatpush2.msra.mxu0 0.0
        %3443 = vmatprep.mubr.f32.mxu0 0.0
        %3444 = vmatmul.mubr.f32.gmra.mxu0 %v2881
        %v3445 = vpop.f32.mrf.mxu0
        %v3446 = vadd.f32 %v3377, %v3445
        %v3447 = vpop.f32.mrf.mxu0
        %3448 = vdwg.mxu0
        %s3449 = scalar_lea.vmem %s6, 160
        %v3450 = vld [vmem:[%s3449] sm:$0xff]
        %v3451 = vld [vmem:[%s3449 + $0x8] sm:$0xff]
        %v3452 = vld [vmem:[%s3449 + $0x10] sm:$0xff]
        %v3453 = vld [vmem:[%s3449 + $0x18] sm:$0xff]
        %s3454 = scalar_lea.vmem %s9, 5
        %v3455 = vld [vmem:[%s3454] sm:$0x1]
        %v3457 = vlaneseq
        %v3458 = vshrl.u32 %v3457, 7
        %v3459 = vsub.s32 0, %v3458
        %v3460 = vrot.slane %v3455, %v3459
        %3462 = vmatprep.subr.mxu0 0.0
        %3463 = vmatpush1.msra.mxu0 0.0
        %3464 = vmatprep.subr.mxu0 0.0
        %3465 = vmatpush1.msra.mxu0 0.0
        %3466 = vmatprep.subr.mxu0 0.0
        %3467 = vmatpush1.msra.mxu0 0.0
        %3468 = vmatprep.subr.mxu0 0.0
        %3469 = vmatpush1.msra.mxu0 0.0
        %3470 = vmatprep.subr.mxu0 0.0
        %3471 = vmatpush1.msra.mxu0 0.0
        %3472 = vmatprep.subr.mxu0 0.0
        %3473 = vmatpush1.msra.mxu0 0.0
        %3474 = vmatprep.subr.mxu0 0.0
        %3475 = vmatpush1.msra.mxu0 0.0
        %3476 = vmatprep.subr.mxu0 0.0
        %3477 = vmatpush1.msra.mxu0 0.0
        %3478 = vmatprep.subr.mxu0 0.0
        %3479 = vmatpush1.msra.mxu0 0.0
        %3480 = vmatprep.subr.mxu0 0.0
        %3481 = vmatpush1.msra.mxu0 0.0
        %3482 = vmatprep.subr.mxu0 0.0
        %3483 = vmatpush1.msra.mxu0 0.0
        %3484 = vmatprep.subr.mxu0 0.0
        %3485 = vmatpush1.msra.mxu0 0.0
        %3486 = vmatprep.subr.mxu0 0.0
        %3487 = vmatpush1.msra.mxu0 %v3453
        %3488 = vmatprep.subr.mxu0 0.0
        %3489 = vmatpush1.msra.mxu0 %v3452
        %3490 = vmatprep.subr.mxu0 0.0
        %3491 = vmatpush1.msra.mxu0 %v3451
        %3492 = vmatprep.subr.mxu0 0.0
        %3493 = vmatpush1.msra.mxu0 %v3450
        %3494 = vmatprep.subr.mxu0 0.0
        %3495 = vmatpush2.msra.mxu0 0.0
        %3496 = vmatprep.subr.mxu0 0.0
        %3497 = vmatpush2.msra.mxu0 0.0
        %3498 = vmatprep.subr.mxu0 0.0
        %3499 = vmatpush2.msra.mxu0 0.0
        %3500 = vmatprep.subr.mxu0 0.0
        %3501 = vmatpush2.msra.mxu0 0.0
        %3502 = vmatprep.subr.mxu0 0.0
        %3503 = vmatpush2.msra.mxu0 0.0
        %3504 = vmatprep.subr.mxu0 0.0
        %3505 = vmatpush2.msra.mxu0 0.0
        %3506 = vmatprep.subr.mxu0 0.0
        %3507 = vmatpush2.msra.mxu0 0.0
        %3508 = vmatprep.subr.mxu0 0.0
        %3509 = vmatpush2.msra.mxu0 0.0
        %3510 = vmatprep.subr.mxu0 0.0
        %3511 = vmatpush2.msra.mxu0 0.0
        %3512 = vmatprep.subr.mxu0 0.0
        %3513 = vmatpush2.msra.mxu0 0.0
        %3514 = vmatprep.subr.mxu0 0.0
        %3515 = vmatpush2.msra.mxu0 0.0
        %3516 = vmatprep.subr.mxu0 0.0
        %3517 = vmatpush2.msra.mxu0 0.0
        %3518 = vmatprep.subr.mxu0 0.0
        %3519 = vmatpush2.msra.mxu0 0.0
        %3520 = vmatprep.subr.mxu0 0.0
        %3521 = vmatpush2.msra.mxu0 0.0
        %3522 = vmatprep.subr.mxu0 0.0
        %3523 = vmatpush2.msra.mxu0 0.0
        %3524 = vmatprep.subr.mxu0 0.0
        %3525 = vmatpush2.msra.mxu0 0.0
        %3526 = vmatprep.mubr.f32.mxu0 0.0
        %3527 = vmatmul.mubr.f32.gmra.mxu0 %v2881
        %v3528 = vpop.f32.mrf.mxu0
        %v3529 = vadd.f32 %v3460, %v3528
        %v3530 = vpop.f32.mrf.mxu0
        %3531 = vdwg.mxu0
        %v3533 = vsel %vm918, %v3363, 0
        %v3536 = vsel %vm918, %v3446, 0
        %3538 = vmatprep.subr.mxu0 0.0
        %3539 = vmatpush1.xpose.msra.mxu0 0.0
        %3540 = vmatprep.subr.mxu0 0.0
        %3541 = vmatpush1.xpose.msra.mxu0 0.0
        %3542 = vmatprep.subr.mxu0 0.0
        %3543 = vmatpush1.xpose.msra.mxu0 0.0
        %3544 = vmatprep.subr.mxu0 0.0
        %3545 = vmatpush1.xpose.msra.mxu0 0.0
        %3546 = vmatprep.subr.mxu0 0.0
        %3547 = vmatpush1.xpose.msra.mxu0 0.0
        %3548 = vmatprep.subr.mxu0 0.0
        %3549 = vmatpush1.xpose.msra.mxu0 0.0
        %3550 = vmatprep.subr.mxu0 0.0
        %3551 = vmatpush1.xpose.msra.mxu0 0.0
        %3552 = vmatprep.subr.mxu0 0.0
        %3553 = vmatpush1.xpose.msra.mxu0 0.0
        %3554 = vmatprep.subr.mxu0 0.0
        %3555 = vmatpush1.xpose.msra.mxu0 0.0
        %3556 = vmatprep.subr.mxu0 0.0
        %3557 = vmatpush1.xpose.msra.mxu0 0.0
        %3558 = vmatprep.subr.mxu0 0.0
        %3559 = vmatpush1.xpose.msra.mxu0 0.0
        %3560 = vmatprep.subr.mxu0 0.0
        %3561 = vmatpush1.xpose.msra.mxu0 0.0
        %3562 = vmatprep.subr.mxu0 0.0
        %3563 = vmatpush1.xpose.msra.mxu0 0.0
        %3564 = vmatprep.subr.mxu0 0.0
        %3565 = vmatpush1.xpose.msra.mxu0 0.0
        %3566 = vmatprep.subr.mxu0 0.0
        %3567 = vmatpush1.xpose.msra.mxu0 0.0
        %3568 = vmatprep.subr.mxu0 0.0
        %3569 = vmatpush1.xpose.msra.mxu0 %v3536
        %3570 = vmatprep.subr.mxu0 0.0
        %3571 = vmatpush2.xpose.msra.mxu0 0.0
        %3572 = vmatprep.subr.mxu0 0.0
        %3573 = vmatpush2.xpose.msra.mxu0 0.0
        %3574 = vmatprep.subr.mxu0 0.0
        %3575 = vmatpush2.xpose.msra.mxu0 0.0
        %3576 = vmatprep.subr.mxu0 0.0
        %3577 = vmatpush2.xpose.msra.mxu0 0.0
        %3578 = vmatprep.subr.mxu0 0.0
        %3579 = vmatpush2.xpose.msra.mxu0 0.0
        %3580 = vmatprep.subr.mxu0 0.0
        %3581 = vmatpush2.xpose.msra.mxu0 0.0
        %3582 = vmatprep.subr.mxu0 0.0
        %3583 = vmatpush2.xpose.msra.mxu0 0.0
        %3584 = vmatprep.subr.mxu0 0.0
        %3585 = vmatpush2.xpose.msra.mxu0 0.0
        %3586 = vmatprep.subr.mxu0 0.0
        %3587 = vmatpush2.xpose.msra.mxu0 0.0
        %3588 = vmatprep.subr.mxu0 0.0
        %3589 = vmatpush2.xpose.msra.mxu0 0.0
        %3590 = vmatprep.subr.mxu0 0.0
        %3591 = vmatpush2.xpose.msra.mxu0 0.0
        %3592 = vmatprep.subr.mxu0 0.0
        %3593 = vmatpush2.xpose.msra.mxu0 0.0
        %3594 = vmatprep.subr.mxu0 0.0
        %3595 = vmatpush2.xpose.msra.mxu0 0.0
        %3596 = vmatprep.subr.mxu0 0.0
        %3597 = vmatpush2.xpose.msra.mxu0 0.0
        %3598 = vmatprep.subr.mxu0 0.0
        %3599 = vmatpush2.xpose.msra.mxu0 0.0
        %3600 = vmatprep.subr.mxu0 0.0
        %3601 = vmatpush2.xpose.msra.mxu0 0.0
        %3602 = vmatprep.mubr.f32.mxu0 0.0
        %3603 = vmatmul.mubr.f32.gmra.mxu0 %v3533
        %v3604 = vpop.f32.mrf.mxu0
        %v3605 = vadd.f32 0.0, %v3604
        %v3606 = vpop.f32.mrf.mxu0
        %3607 = vdwg.mxu0
        %v3608 = vmul.f32 %v3605, 0.35355338
        %v3609 = vadd.f32 %v3608, %v1000
        %v3610 = vsel %vm918, %v3609, -inf
        %3611 = vmax.xlane.f32.xlu0 %v3610
        %v3612 = vpop.xlane.xlu0 %3611
        %v3613 = vsub.f32 %v3609, %v3612
        %v3614 = vmul.f32 %v3613, 1.442695
        %v3615 = vpow.pop %v3614
        %v3616 = vsel %vm918, %v3615, 0.0
        %3617 = vadd.xlane.f32.xlu0 %v3616
        %v3618 = vpop.xlane.xlu0 %3617
        %v3619 = vrcp.pop %v3618
        %v3620 = vmul.f32 %v3615, %v3619
        %v3622 = vsel %vm918, %v3620, 0
        %3624 = vmatprep.subr.mxu0 0.0
        %3625 = vmatpush1.msra.mxu0 0.0
        %3626 = vmatprep.subr.mxu0 0.0
        %3627 = vmatpush1.msra.mxu0 0.0
        %3628 = vmatprep.subr.mxu0 0.0
        %3629 = vmatpush1.msra.mxu0 0.0
        %3630 = vmatprep.subr.mxu0 0.0
        %3631 = vmatpush1.msra.mxu0 0.0
        %3632 = vmatprep.subr.mxu0 0.0
        %3633 = vmatpush1.msra.mxu0 0.0
        %3634 = vmatprep.subr.mxu0 0.0
        %3635 = vmatpush1.msra.mxu0 0.0
        %3636 = vmatprep.subr.mxu0 0.0
        %3637 = vmatpush1.msra.mxu0 0.0
        %3638 = vmatprep.subr.mxu0 0.0
        %3639 = vmatpush1.msra.mxu0 0.0
        %3640 = vmatprep.subr.mxu0 0.0
        %3641 = vmatpush1.msra.mxu0 0.0
        %3642 = vmatprep.subr.mxu0 0.0
        %3643 = vmatpush1.msra.mxu0 0.0
        %3644 = vmatprep.subr.mxu0 0.0
        %3645 = vmatpush1.msra.mxu0 0.0
        %3646 = vmatprep.subr.mxu0 0.0
        %3647 = vmatpush1.msra.mxu0 0.0
        %3648 = vmatprep.subr.mxu0 0.0
        %3649 = vmatpush1.msra.mxu0 0.0
        %3650 = vmatprep.subr.mxu0 0.0
        %3651 = vmatpush1.msra.mxu0 0.0
        %3652 = vmatprep.subr.mxu0 0.0
        %3653 = vmatpush1.msra.mxu0 0.0
        %3654 = vmatprep.subr.mxu0 0.0
        %3655 = vmatpush1.msra.mxu0 %v3529
        %3656 = vmatprep.subr.mxu0 0.0
        %3657 = vmatpush2.msra.mxu0 0.0
        %3658 = vmatprep.subr.mxu0 0.0
        %3659 = vmatpush2.msra.mxu0 0.0
        %3660 = vmatprep.subr.mxu0 0.0
        %3661 = vmatpush2.msra.mxu0 0.0
        %3662 = vmatprep.subr.mxu0 0.0
        %3663 = vmatpush2.msra.mxu0 0.0
        %3664 = vmatprep.subr.mxu0 0.0
        %3665 = vmatpush2.msra.mxu0 0.0
        %3666 = vmatprep.subr.mxu0 0.0
        %3667 = vmatpush2.msra.mxu0 0.0
        %3668 = vmatprep.subr.mxu0 0.0
        %3669 = vmatpush2.msra.mxu0 0.0
        %3670 = vmatprep.subr.mxu0 0.0
        %3671 = vmatpush2.msra.mxu0 0.0
        %3672 = vmatprep.subr.mxu0 0.0
        %3673 = vmatpush2.msra.mxu0 0.0
        %3674 = vmatprep.subr.mxu0 0.0
        %3675 = vmatpush2.msra.mxu0 0.0
        %3676 = vmatprep.subr.mxu0 0.0
        %3677 = vmatpush2.msra.mxu0 0.0
        %3678 = vmatprep.subr.mxu0 0.0
        %3679 = vmatpush2.msra.mxu0 0.0
        %3680 = vmatprep.subr.mxu0 0.0
        %3681 = vmatpush2.msra.mxu0 0.0
        %3682 = vmatprep.subr.mxu0 0.0
        %3683 = vmatpush2.msra.mxu0 0.0
        %3684 = vmatprep.subr.mxu0 0.0
        %3685 = vmatpush2.msra.mxu0 0.0
        %3686 = vmatprep.subr.mxu0 0.0
        %3687 = vmatpush2.msra.mxu0 0.0
        %3688 = vmatprep.mubr.f32.mxu0 0.0
        %3689 = vmatmul.mubr.f32.gmra.mxu0 %v3622
        %v3690 = vpop.f32.mrf.mxu0
        %v3691 = vadd.f32 0.0, %v3690
        %v3692 = vpop.f32.mrf.mxu0
        %3693 = vdwg.mxu0
        %s3694 = scalar_lea.vmem %s10, 40
        %v3695 = vld [vmem:[%s3694] sm:$0xff]
        %v3697 = vsel %vm918, %v3691, 0
        %3699 = vmatprep.subr.mxu0 0.0
        %3700 = vmatpush1.msra.mxu0 0.0
        %3701 = vmatprep.subr.mxu0 0.0
        %3702 = vmatpush1.msra.mxu0 0.0
        %3703 = vmatprep.subr.mxu0 0.0
        %3704 = vmatpush1.msra.mxu0 0.0
        %3705 = vmatprep.subr.mxu0 0.0
        %3706 = vmatpush1.msra.mxu0 0.0
        %3707 = vmatprep.subr.mxu0 0.0
        %3708 = vmatpush1.msra.mxu0 0.0
        %3709 = vmatprep.subr.mxu0 0.0
        %3710 = vmatpush1.msra.mxu0 0.0
        %3711 = vmatprep.subr.mxu0 0.0
        %3712 = vmatpush1.msra.mxu0 0.0
        %3713 = vmatprep.subr.mxu0 0.0
        %3714 = vmatpush1.msra.mxu0 0.0
        %3715 = vmatprep.subr.mxu0 0.0
        %3716 = vmatpush1.msra.mxu0 0.0
        %3717 = vmatprep.subr.mxu0 0.0
        %3718 = vmatpush1.msra.mxu0 0.0
        %3719 = vmatprep.subr.mxu0 0.0
        %3720 = vmatpush1.msra.mxu0 0.0
        %3721 = vmatprep.subr.mxu0 0.0
        %3722 = vmatpush1.msra.mxu0 0.0
        %3723 = vmatprep.subr.mxu0 0.0
        %3724 = vmatpush1.msra.mxu0 0.0
        %3725 = vmatprep.subr.mxu0 0.0
        %3726 = vmatpush1.msra.mxu0 0.0
        %3727 = vmatprep.subr.mxu0 0.0
        %3728 = vmatpush1.msra.mxu0 0.0
        %3729 = vmatprep.subr.mxu0 0.0
        %3730 = vmatpush1.msra.mxu0 %v3695
        %3731 = vmatprep.subr.mxu0 0.0
        %3732 = vmatpush2.msra.mxu0 0.0
        %3733 = vmatprep.subr.mxu0 0.0
        %3734 = vmatpush2.msra.mxu0 0.0
        %3735 = vmatprep.subr.mxu0 0.0
        %3736 = vmatpush2.msra.mxu0 0.0
        %3737 = vmatprep.subr.mxu0 0.0
        %3738 = vmatpush2.msra.mxu0 0.0
        %3739 = vmatprep.subr.mxu0 0.0
        %3740 = vmatpush2.msra.mxu0 0.0
        %3741 = vmatprep.subr.mxu0 0.0
        %3742 = vmatpush2.msra.mxu0 0.0
        %3743 = vmatprep.subr.mxu0 0.0
        %3744 = vmatpush2.msra.mxu0 0.0
        %3745 = vmatprep.subr.mxu0 0.0
        %3746 = vmatpush2.msra.mxu0 0.0
        %3747 = vmatprep.subr.mxu0 0.0
        %3748 = vmatpush2.msra.mxu0 0.0
        %3749 = vmatprep.subr.mxu0 0.0
        %3750 = vmatpush2.msra.mxu0 0.0
        %3751 = vmatprep.subr.mxu0 0.0
        %3752 = vmatpush2.msra.mxu0 0.0
        %3753 = vmatprep.subr.mxu0 0.0
        %3754 = vmatpush2.msra.mxu0 0.0
        %3755 = vmatprep.subr.mxu0 0.0
        %3756 = vmatpush2.msra.mxu0 0.0
        %3757 = vmatprep.subr.mxu0 0.0
        %3758 = vmatpush2.msra.mxu0 0.0
        %3759 = vmatprep.subr.mxu0 0.0
        %3760 = vmatpush2.msra.mxu0 0.0
        %3761 = vmatprep.subr.mxu0 0.0
        %3762 = vmatpush2.msra.mxu0 0.0
        %3763 = vmatprep.mubr.f32.mxu0 0.0
        %3764 = vmatmul.mubr.f32.gmra.mxu0 %v3697
        %v3765 = vpop.f32.mrf.mxu0
        %v3766 = vadd.f32 0.0, %v3765
        %v3767 = vpop.f32.mrf.mxu0
        %3768 = vdwg.mxu0
        %v3770 = vsel %vm918, %v3278, 0
        %3772 = vmatprep.subr.mxu0 0.0
        %3773 = vmatpush1.msra.mxu0 0.0
        %3774 = vmatprep.subr.mxu0 0.0
        %3775 = vmatpush1.msra.mxu0 0.0
        %3776 = vmatprep.subr.mxu0 0.0
        %3777 = vmatpush1.msra.mxu0 0.0
        %3778 = vmatprep.subr.mxu0 0.0
        %3779 = vmatpush1.msra.mxu0 0.0
        %3780 = vmatprep.subr.mxu0 0.0
        %3781 = vmatpush1.msra.mxu0 0.0
        %3782 = vmatprep.subr.mxu0 0.0
        %3783 = vmatpush1.msra.mxu0 0.0
        %3784 = vmatprep.subr.mxu0 0.0
        %3785 = vmatpush1.msra.mxu0 0.0
        %3786 = vmatprep.subr.mxu0 0.0
        %3787 = vmatpush1.msra.mxu0 0.0
        %3788 = vmatprep.subr.mxu0 0.0
        %3789 = vmatpush1.msra.mxu0 0.0
        %3790 = vmatprep.subr.mxu0 0.0
        %3791 = vmatpush1.msra.mxu0 0.0
        %3792 = vmatprep.subr.mxu0 0.0
        %3793 = vmatpush1.msra.mxu0 0.0
        %3794 = vmatprep.subr.mxu0 0.0
        %3795 = vmatpush1.msra.mxu0 0.0
        %3796 = vmatprep.subr.mxu0 0.0
        %3797 = vmatpush1.msra.mxu0 0.0
        %3798 = vmatprep.subr.mxu0 0.0
        %3799 = vmatpush1.msra.mxu0 0.0
        %3800 = vmatprep.subr.mxu0 0.0
        %3801 = vmatpush1.msra.mxu0 0.0
        %3802 = vmatprep.subr.mxu0 0.0
        %3803 = vmatpush1.msra.mxu0 %v3282
        %3804 = vmatprep.subr.mxu0 0.0
        %3805 = vmatpush2.msra.mxu0 0.0
        %3806 = vmatprep.subr.mxu0 0.0
        %3807 = vmatpush2.msra.mxu0 0.0
        %3808 = vmatprep.subr.mxu0 0.0
        %3809 = vmatpush2.msra.mxu0 0.0
        %3810 = vmatprep.subr.mxu0 0.0
        %3811 = vmatpush2.msra.mxu0 0.0
        %3812 = vmatprep.subr.mxu0 0.0
        %3813 = vmatpush2.msra.mxu0 0.0
        %3814 = vmatprep.subr.mxu0 0.0
        %3815 = vmatpush2.msra.mxu0 0.0
        %3816 = vmatprep.subr.mxu0 0.0
        %3817 = vmatpush2.msra.mxu0 0.0
        %3818 = vmatprep.subr.mxu0 0.0
        %3819 = vmatpush2.msra.mxu0 0.0
        %3820 = vmatprep.subr.mxu0 0.0
        %3821 = vmatpush2.msra.mxu0 0.0
        %3822 = vmatprep.subr.mxu0 0.0
        %3823 = vmatpush2.msra.mxu0 0.0
        %3824 = vmatprep.subr.mxu0 0.0
        %3825 = vmatpush2.msra.mxu0 0.0
        %3826 = vmatprep.subr.mxu0 0.0
        %3827 = vmatpush2.msra.mxu0 0.0
        %3828 = vmatprep.subr.mxu0 0.0
        %3829 = vmatpush2.msra.mxu0 0.0
        %3830 = vmatprep.subr.mxu0 0.0
        %3831 = vmatpush2.msra.mxu0 0.0
        %3832 = vmatprep.subr.mxu0 0.0
        %3833 = vmatpush2.msra.mxu0 0.0
        %3834 = vmatprep.subr.mxu0 0.0
        %3835 = vmatpush2.msra.mxu0 0.0
        %3836 = vmatprep.mubr.f32.mxu0 0.0
        %3837 = vmatmul.mubr.f32.gmra.mxu0 %v3770
        %v3838 = vpop.f32.mrf.mxu0
        %v3839 = vadd.f32 %v3766, %v3838
        %v3840 = vpop.f32.mrf.mxu0
        %3841 = vdwg.mxu0
        %s3842 = scalar_lea.vmem %s4, 192
        %v3843 = vld [vmem:[%s3842] sm:$0xff]
        %v3844 = vld [vmem:[%s3842 + $0x8] sm:$0xff]
        %v3845 = vld [vmem:[%s3842 + $0x10] sm:$0xff]
        %v3846 = vld [vmem:[%s3842 + $0x18] sm:$0xff]
        %s3847 = scalar_lea.vmem %s7, 6
        %v3848 = vld [vmem:[%s3847] sm:$0x1]
        %v3850 = vlaneseq
        %v3851 = vshrl.u32 %v3850, 7
        %v3852 = vsub.s32 0, %v3851
        %v3853 = vrot.slane %v3848, %v3852
        %3855 = vmatprep.subr.mxu0 0.0
        %3856 = vmatpush1.msra.mxu0 0.0
        %3857 = vmatprep.subr.mxu0 0.0
        %3858 = vmatpush1.msra.mxu0 0.0
        %3859 = vmatprep.subr.mxu0 0.0
        %3860 = vmatpush1.msra.mxu0 0.0
        %3861 = vmatprep.subr.mxu0 0.0
        %3862 = vmatpush1.msra.mxu0 0.0
        %3863 = vmatprep.subr.mxu0 0.0
        %3864 = vmatpush1.msra.mxu0 0.0
        %3865 = vmatprep.subr.mxu0 0.0
        %3866 = vmatpush1.msra.mxu0 0.0
        %3867 = vmatprep.subr.mxu0 0.0
        %3868 = vmatpush1.msra.mxu0 0.0
        %3869 = vmatprep.subr.mxu0 0.0
        %3870 = vmatpush1.msra.mxu0 0.0
        %3871 = vmatprep.subr.mxu0 0.0
        %3872 = vmatpush1.msra.mxu0 0.0
        %3873 = vmatprep.subr.mxu0 0.0
        %3874 = vmatpush1.msra.mxu0 0.0
        %3875 = vmatprep.subr.mxu0 0.0
        %3876 = vmatpush1.msra.mxu0 0.0
        %3877 = vmatprep.subr.mxu0 0.0
        %3878 = vmatpush1.msra.mxu0 0.0
        %3879 = vmatprep.subr.mxu0 0.0
        %3880 = vmatpush1.msra.mxu0 %v3846
        %3881 = vmatprep.subr.mxu0 0.0
        %3882 = vmatpush1.msra.mxu0 %v3845
        %3883 = vmatprep.subr.mxu0 0.0
        %3884 = vmatpush1.msra.mxu0 %v3844
        %3885 = vmatprep.subr.mxu0 0.0
        %3886 = vmatpush1.msra.mxu0 %v3843
        %3887 = vmatprep.subr.mxu0 0.0
        %3888 = vmatpush2.msra.mxu0 0.0
        %3889 = vmatprep.subr.mxu0 0.0
        %3890 = vmatpush2.msra.mxu0 0.0
        %3891 = vmatprep.subr.mxu0 0.0
        %3892 = vmatpush2.msra.mxu0 0.0
        %3893 = vmatprep.subr.mxu0 0.0
        %3894 = vmatpush2.msra.mxu0 0.0
        %3895 = vmatprep.subr.mxu0 0.0
        %3896 = vmatpush2.msra.mxu0 0.0
        %3897 = vmatprep.subr.mxu0 0.0
        %3898 = vmatpush2.msra.mxu0 0.0
        %3899 = vmatprep.subr.mxu0 0.0
        %3900 = vmatpush2.msra.mxu0 0.0
        %3901 = vmatprep.subr.mxu0 0.0
        %3902 = vmatpush2.msra.mxu0 0.0
        %3903 = vmatprep.subr.mxu0 0.0
        %3904 = vmatpush2.msra.mxu0 0.0
        %3905 = vmatprep.subr.mxu0 0.0
        %3906 = vmatpush2.msra.mxu0 0.0
        %3907 = vmatprep.subr.mxu0 0.0
        %3908 = vmatpush2.msra.mxu0 0.0
        %3909 = vmatprep.subr.mxu0 0.0
        %3910 = vmatpush2.msra.mxu0 0.0
        %3911 = vmatprep.subr.mxu0 0.0
        %3912 = vmatpush2.msra.mxu0 0.0
        %3913 = vmatprep.subr.mxu0 0.0
        %3914 = vmatpush2.msra.mxu0 0.0
        %3915 = vmatprep.subr.mxu0 0.0
        %3916 = vmatpush2.msra.mxu0 0.0
        %3917 = vmatprep.subr.mxu0 0.0
        %3918 = vmatpush2.msra.mxu0 0.0
        %3919 = vmatprep.mubr.f32.mxu0 0.0
        %3920 = vmatmul.mubr.f32.gmra.mxu0 %v2881
        %v3921 = vpop.f32.mrf.mxu0
        %v3922 = vadd.f32 %v3853, %v3921
        %v3923 = vpop.f32.mrf.mxu0
        %3924 = vdwg.mxu0
        %s3925 = scalar_lea.vmem %s5, 192
        %v3926 = vld [vmem:[%s3925] sm:$0xff]
        %v3927 = vld [vmem:[%s3925 + $0x8] sm:$0xff]
        %v3928 = vld [vmem:[%s3925 + $0x10] sm:$0xff]
        %v3929 = vld [vmem:[%s3925 + $0x18] sm:$0xff]
        %s3930 = scalar_lea.vmem %s8, 6
        %v3931 = vld [vmem:[%s3930] sm:$0x1]
        %v3933 = vlaneseq
        %v3934 = vshrl.u32 %v3933, 7
        %v3935 = vsub.s32 0, %v3934
        %v3936 = vrot.slane %v3931, %v3935
        %3938 = vmatprep.subr.mxu0 0.0
        %3939 = vmatpush1.msra.mxu0 0.0
        %3940 = vmatprep.subr.mxu0 0.0
        %3941 = vmatpush1.msra.mxu0 0.0
        %3942 = vmatprep.subr.mxu0 0.0
        %3943 = vmatpush1.msra.mxu0 0.0
        %3944 = vmatprep.subr.mxu0 0.0
        %3945 = vmatpush1.msra.mxu0 0.0
        %3946 = vmatprep.subr.mxu0 0.0
        %3947 = vmatpush1.msra.mxu0 0.0
        %3948 = vmatprep.subr.mxu0 0.0
        %3949 = vmatpush1.msra.mxu0 0.0
        %3950 = vmatprep.subr.mxu0 0.0
        %3951 = vmatpush1.msra.mxu0 0.0
        %3952 = vmatprep.subr.mxu0 0.0
        %3953 = vmatpush1.msra.mxu0 0.0
        %3954 = vmatprep.subr.mxu0 0.0
        %3955 = vmatpush1.msra.mxu0 0.0
        %3956 = vmatprep.subr.mxu0 0.0
        %3957 = vmatpush1.msra.mxu0 0.0
        %3958 = vmatprep.subr.mxu0 0.0
        %3959 = vmatpush1.msra.mxu0 0.0
        %3960 = vmatprep.subr.mxu0 0.0
        %3961 = vmatpush1.msra.mxu0 0.0
        %3962 = vmatprep.subr.mxu0 0.0
        %3963 = vmatpush1.msra.mxu0 %v3929
        %3964 = vmatprep.subr.mxu0 0.0
        %3965 = vmatpush1.msra.mxu0 %v3928
        %3966 = vmatprep.subr.mxu0 0.0
        %3967 = vmatpush1.msra.mxu0 %v3927
        %3968 = vmatprep.subr.mxu0 0.0
        %3969 = vmatpush1.msra.mxu0 %v3926
        %3970 = vmatprep.subr.mxu0 0.0
        %3971 = vmatpush2.msra.mxu0 0.0
        %3972 = vmatprep.subr.mxu0 0.0
        %3973 = vmatpush2.msra.mxu0 0.0
        %3974 = vmatprep.subr.mxu0 0.0
        %3975 = vmatpush2.msra.mxu0 0.0
        %3976 = vmatprep.subr.mxu0 0.0
        %3977 = vmatpush2.msra.mxu0 0.0
        %3978 = vmatprep.subr.mxu0 0.0
        %3979 = vmatpush2.msra.mxu0 0.0
        %3980 = vmatprep.subr.mxu0 0.0
        %3981 = vmatpush2.msra.mxu0 0.0
        %3982 = vmatprep.subr.mxu0 0.0
        %3983 = vmatpush2.msra.mxu0 0.0
        %3984 = vmatprep.subr.mxu0 0.0
        %3985 = vmatpush2.msra.mxu0 0.0
        %3986 = vmatprep.subr.mxu0 0.0
        %3987 = vmatpush2.msra.mxu0 0.0
        %3988 = vmatprep.subr.mxu0 0.0
        %3989 = vmatpush2.msra.mxu0 0.0
        %3990 = vmatprep.subr.mxu0 0.0
        %3991 = vmatpush2.msra.mxu0 0.0
        %3992 = vmatprep.subr.mxu0 0.0
        %3993 = vmatpush2.msra.mxu0 0.0
        %3994 = vmatprep.subr.mxu0 0.0
        %3995 = vmatpush2.msra.mxu0 0.0
        %3996 = vmatprep.subr.mxu0 0.0
        %3997 = vmatpush2.msra.mxu0 0.0
        %3998 = vmatprep.subr.mxu0 0.0
        %3999 = vmatpush2.msra.mxu0 0.0
        %4000 = vmatprep.subr.mxu0 0.0
        %4001 = vmatpush2.msra.mxu0 0.0
        %4002 = vmatprep.mubr.f32.mxu0 0.0
        %4003 = vmatmul.mubr.f32.gmra.mxu0 %v2881
        %v4004 = vpop.f32.mrf.mxu0
        %v4005 = vadd.f32 %v3936, %v4004
        %v4006 = vpop.f32.mrf.mxu0
        %4007 = vdwg.mxu0
        %s4008 = scalar_lea.vmem %s6, 192
        %v4009 = vld [vmem:[%s4008] sm:$0xff]
        %v4010 = vld [vmem:[%s4008 + $0x8] sm:$0xff]
        %v4011 = vld [vmem:[%s4008 + $0x10] sm:$0xff]
        %v4012 = vld [vmem:[%s4008 + $0x18] sm:$0xff]
        %s4013 = scalar_lea.vmem %s9, 6
        %v4014 = vld [vmem:[%s4013] sm:$0x1]
        %v4016 = vlaneseq
        %v4017 = vshrl.u32 %v4016, 7
        %v4018 = vsub.s32 0, %v4017
        %v4019 = vrot.slane %v4014, %v4018
        %4021 = vmatprep.subr.mxu0 0.0
        %4022 = vmatpush1.msra.mxu0 0.0
        %4023 = vmatprep.subr.mxu0 0.0
        %4024 = vmatpush1.msra.mxu0 0.0
        %4025 = vmatprep.subr.mxu0 0.0
        %4026 = vmatpush1.msra.mxu0 0.0
        %4027 = vmatprep.subr.mxu0 0.0
        %4028 = vmatpush1.msra.mxu0 0.0
        %4029 = vmatprep.subr.mxu0 0.0
        %4030 = vmatpush1.msra.mxu0 0.0
        %4031 = vmatprep.subr.mxu0 0.0
        %4032 = vmatpush1.msra.mxu0 0.0
        %4033 = vmatprep.subr.mxu0 0.0
        %4034 = vmatpush1.msra.mxu0 0.0
        %4035 = vmatprep.subr.mxu0 0.0
        %4036 = vmatpush1.msra.mxu0 0.0
        %4037 = vmatprep.subr.mxu0 0.0
        %4038 = vmatpush1.msra.mxu0 0.0
        %4039 = vmatprep.subr.mxu0 0.0
        %4040 = vmatpush1.msra.mxu0 0.0
        %4041 = vmatprep.subr.mxu0 0.0
        %4042 = vmatpush1.msra.mxu0 0.0
        %4043 = vmatprep.subr.mxu0 0.0
        %4044 = vmatpush1.msra.mxu0 0.0
        %4045 = vmatprep.subr.mxu0 0.0
        %4046 = vmatpush1.msra.mxu0 %v4012
        %4047 = vmatprep.subr.mxu0 0.0
        %4048 = vmatpush1.msra.mxu0 %v4011
        %4049 = vmatprep.subr.mxu0 0.0
        %4050 = vmatpush1.msra.mxu0 %v4010
        %4051 = vmatprep.subr.mxu0 0.0
        %4052 = vmatpush1.msra.mxu0 %v4009
        %4053 = vmatprep.subr.mxu0 0.0
        %4054 = vmatpush2.msra.mxu0 0.0
        %4055 = vmatprep.subr.mxu0 0.0
        %4056 = vmatpush2.msra.mxu0 0.0
        %4057 = vmatprep.subr.mxu0 0.0
        %4058 = vmatpush2.msra.mxu0 0.0
        %4059 = vmatprep.subr.mxu0 0.0
        %4060 = vmatpush2.msra.mxu0 0.0
        %4061 = vmatprep.subr.mxu0 0.0
        %4062 = vmatpush2.msra.mxu0 0.0
        %4063 = vmatprep.subr.mxu0 0.0
        %4064 = vmatpush2.msra.mxu0 0.0
        %4065 = vmatprep.subr.mxu0 0.0
        %4066 = vmatpush2.msra.mxu0 0.0
        %4067 = vmatprep.subr.mxu0 0.0
        %4068 = vmatpush2.msra.mxu0 0.0
        %4069 = vmatprep.subr.mxu0 0.0
        %4070 = vmatpush2.msra.mxu0 0.0
        %4071 = vmatprep.subr.mxu0 0.0
        %4072 = vmatpush2.msra.mxu0 0.0
        %4073 = vmatprep.subr.mxu0 0.0
        %4074 = vmatpush2.msra.mxu0 0.0
        %4075 = vmatprep.subr.mxu0 0.0
        %4076 = vmatpush2.msra.mxu0 0.0
        %4077 = vmatprep.subr.mxu0 0.0
        %4078 = vmatpush2.msra.mxu0 0.0
        %4079 = vmatprep.subr.mxu0 0.0
        %4080 = vmatpush2.msra.mxu0 0.0
        %4081 = vmatprep.subr.mxu0 0.0
        %4082 = vmatpush2.msra.mxu0 0.0
        %4083 = vmatprep.subr.mxu0 0.0
        %4084 = vmatpush2.msra.mxu0 0.0
        %4085 = vmatprep.mubr.f32.mxu0 0.0
        %4086 = vmatmul.mubr.f32.gmra.mxu0 %v2881
        %v4087 = vpop.f32.mrf.mxu0
        %v4088 = vadd.f32 %v4019, %v4087
        %v4089 = vpop.f32.mrf.mxu0
        %4090 = vdwg.mxu0
        %v4092 = vsel %vm918, %v3922, 0
        %v4095 = vsel %vm918, %v4005, 0
        %4097 = vmatprep.subr.mxu0 0.0
        %4098 = vmatpush1.xpose.msra.mxu0 0.0
        %4099 = vmatprep.subr.mxu0 0.0
        %4100 = vmatpush1.xpose.msra.mxu0 0.0
        %4101 = vmatprep.subr.mxu0 0.0
        %4102 = vmatpush1.xpose.msra.mxu0 0.0
        %4103 = vmatprep.subr.mxu0 0.0
        %4104 = vmatpush1.xpose.msra.mxu0 0.0
        %4105 = vmatprep.subr.mxu0 0.0
        %4106 = vmatpush1.xpose.msra.mxu0 0.0
        %4107 = vmatprep.subr.mxu0 0.0
        %4108 = vmatpush1.xpose.msra.mxu0 0.0
        %4109 = vmatprep.subr.mxu0 0.0
        %4110 = vmatpush1.xpose.msra.mxu0 0.0
        %4111 = vmatprep.subr.mxu0 0.0
        %4112 = vmatpush1.xpose.msra.mxu0 0.0
        %4113 = vmatprep.subr.mxu0 0.0
        %4114 = vmatpush1.xpose.msra.mxu0 0.0
        %4115 = vmatprep.subr.mxu0 0.0
        %4116 = vmatpush1.xpose.msra.mxu0 0.0
        %4117 = vmatprep.subr.mxu0 0.0
        %4118 = vmatpush1.xpose.msra.mxu0 0.0
        %4119 = vmatprep.subr.mxu0 0.0
        %4120 = vmatpush1.xpose.msra.mxu0 0.0
        %4121 = vmatprep.subr.mxu0 0.0
        %4122 = vmatpush1.xpose.msra.mxu0 0.0
        %4123 = vmatprep.subr.mxu0 0.0
        %4124 = vmatpush1.xpose.msra.mxu0 0.0
        %4125 = vmatprep.subr.mxu0 0.0
        %4126 = vmatpush1.xpose.msra.mxu0 0.0
        %4127 = vmatprep.subr.mxu0 0.0
        %4128 = vmatpush1.xpose.msra.mxu0 %v4095
        %4129 = vmatprep.subr.mxu0 0.0
        %4130 = vmatpush2.xpose.msra.mxu0 0.0
        %4131 = vmatprep.subr.mxu0 0.0
        %4132 = vmatpush2.xpose.msra.mxu0 0.0
        %4133 = vmatprep.subr.mxu0 0.0
        %4134 = vmatpush2.xpose.msra.mxu0 0.0
        %4135 = vmatprep.subr.mxu0 0.0
        %4136 = vmatpush2.xpose.msra.mxu0 0.0
        %4137 = vmatprep.subr.mxu0 0.0
        %4138 = vmatpush2.xpose.msra.mxu0 0.0
        %4139 = vmatprep.subr.mxu0 0.0
        %4140 = vmatpush2.xpose.msra.mxu0 0.0
        %4141 = vmatprep.subr.mxu0 0.0
        %4142 = vmatpush2.xpose.msra.mxu0 0.0
        %4143 = vmatprep.subr.mxu0 0.0
        %4144 = vmatpush2.xpose.msra.mxu0 0.0
        %4145 = vmatprep.subr.mxu0 0.0
        %4146 = vmatpush2.xpose.msra.mxu0 0.0
        %4147 = vmatprep.subr.mxu0 0.0
        %4148 = vmatpush2.xpose.msra.mxu0 0.0
        %4149 = vmatprep.subr.mxu0 0.0
        %4150 = vmatpush2.xpose.msra.mxu0 0.0
        %4151 = vmatprep.subr.mxu0 0.0
        %4152 = vmatpush2.xpose.msra.mxu0 0.0
        %4153 = vmatprep.subr.mxu0 0.0
        %4154 = vmatpush2.xpose.msra.mxu0 0.0
        %4155 = vmatprep.subr.mxu0 0.0
        %4156 = vmatpush2.xpose.msra.mxu0 0.0
        %4157 = vmatprep.subr.mxu0 0.0
        %4158 = vmatpush2.xpose.msra.mxu0 0.0
        %4159 = vmatprep.subr.mxu0 0.0
        %4160 = vmatpush2.xpose.msra.mxu0 0.0
        %4161 = vmatprep.mubr.f32.mxu0 0.0
        %4162 = vmatmul.mubr.f32.gmra.mxu0 %v4092
        %v4163 = vpop.f32.mrf.mxu0
        %v4164 = vadd.f32 0.0, %v4163
        %v4165 = vpop.f32.mrf.mxu0
        %4166 = vdwg.mxu0
        %v4167 = vmul.f32 %v4164, 0.35355338
        %v4168 = vadd.f32 %v4167, %v1000
        %v4169 = vsel %vm918, %v4168, -inf
        %4170 = vmax.xlane.f32.xlu0 %v4169
        %v4171 = vpop.xlane.xlu0 %4170
        %v4172 = vsub.f32 %v4168, %v4171
        %v4173 = vmul.f32 %v4172, 1.442695
        %v4174 = vpow.pop %v4173
        %v4175 = vsel %vm918, %v4174, 0.0
        %4176 = vadd.xlane.f32.xlu0 %v4175
        %v4177 = vpop.xlane.xlu0 %4176
        %v4178 = vrcp.pop %v4177
        %v4179 = vmul.f32 %v4174, %v4178
        %v4181 = vsel %vm918, %v4179, 0
        %4183 = vmatprep.subr.mxu0 0.0
        %4184 = vmatpush1.msra.mxu0 0.0
        %4185 = vmatprep.subr.mxu0 0.0
        %4186 = vmatpush1.msra.mxu0 0.0
        %4187 = vmatprep.subr.mxu0 0.0
        %4188 = vmatpush1.msra.mxu0 0.0
        %4189 = vmatprep.subr.mxu0 0.0
        %4190 = vmatpush1.msra.mxu0 0.0
        %4191 = vmatprep.subr.mxu0 0.0
        %4192 = vmatpush1.msra.mxu0 0.0
        %4193 = vmatprep.subr.mxu0 0.0
        %4194 = vmatpush1.msra.mxu0 0.0
        %4195 = vmatprep.subr.mxu0 0.0
        %4196 = vmatpush1.msra.mxu0 0.0
        %4197 = vmatprep.subr.mxu0 0.0
        %4198 = vmatpush1.msra.mxu0 0.0
        %4199 = vmatprep.subr.mxu0 0.0
        %4200 = vmatpush1.msra.mxu0 0.0
        %4201 = vmatprep.subr.mxu0 0.0
        %4202 = vmatpush1.msra.mxu0 0.0
        %4203 = vmatprep.subr.mxu0 0.0
        %4204 = vmatpush1.msra.mxu0 0.0
        %4205 = vmatprep.subr.mxu0 0.0
        %4206 = vmatpush1.msra.mxu0 0.0
        %4207 = vmatprep.subr.mxu0 0.0
        %4208 = vmatpush1.msra.mxu0 0.0
        %4209 = vmatprep.subr.mxu0 0.0
        %4210 = vmatpush1.msra.mxu0 0.0
        %4211 = vmatprep.subr.mxu0 0.0
        %4212 = vmatpush1.msra.mxu0 0.0
        %4213 = vmatprep.subr.mxu0 0.0
        %4214 = vmatpush1.msra.mxu0 %v4088
        %4215 = vmatprep.subr.mxu0 0.0
        %4216 = vmatpush2.msra.mxu0 0.0
        %4217 = vmatprep.subr.mxu0 0.0
        %4218 = vmatpush2.msra.mxu0 0.0
        %4219 = vmatprep.subr.mxu0 0.0
        %4220 = vmatpush2.msra.mxu0 0.0
        %4221 = vmatprep.subr.mxu0 0.0
        %4222 = vmatpush2.msra.mxu0 0.0
        %4223 = vmatprep.subr.mxu0 0.0
        %4224 = vmatpush2.msra.mxu0 0.0
        %4225 = vmatprep.subr.mxu0 0.0
        %4226 = vmatpush2.msra.mxu0 0.0
        %4227 = vmatprep.subr.mxu0 0.0
        %4228 = vmatpush2.msra.mxu0 0.0
        %4229 = vmatprep.subr.mxu0 0.0
        %4230 = vmatpush2.msra.mxu0 0.0
        %4231 = vmatprep.subr.mxu0 0.0
        %4232 = vmatpush2.msra.mxu0 0.0
        %4233 = vmatprep.subr.mxu0 0.0
        %4234 = vmatpush2.msra.mxu0 0.0
        %4235 = vmatprep.subr.mxu0 0.0
        %4236 = vmatpush2.msra.mxu0 0.0
        %4237 = vmatprep.subr.mxu0 0.0
        %4238 = vmatpush2.msra.mxu0 0.0
        %4239 = vmatprep.subr.mxu0 0.0
        %4240 = vmatpush2.msra.mxu0 0.0
        %4241 = vmatprep.subr.mxu0 0.0
        %4242 = vmatpush2.msra.mxu0 0.0
        %4243 = vmatprep.subr.mxu0 0.0
        %4244 = vmatpush2.msra.mxu0 0.0
        %4245 = vmatprep.subr.mxu0 0.0
        %4246 = vmatpush2.msra.mxu0 0.0
        %4247 = vmatprep.mubr.f32.mxu0 0.0
        %4248 = vmatmul.mubr.f32.gmra.mxu0 %v4181
        %v4249 = vpop.f32.mrf.mxu0
        %v4250 = vadd.f32 0.0, %v4249
        %v4251 = vpop.f32.mrf.mxu0
        %4252 = vdwg.mxu0
        %s4253 = scalar_lea.vmem %s10, 48
        %v4254 = vld [vmem:[%s4253] sm:$0xff]
        %v4256 = vsel %vm918, %v4250, 0
        %4258 = vmatprep.subr.mxu0 0.0
        %4259 = vmatpush1.msra.mxu0 0.0
        %4260 = vmatprep.subr.mxu0 0.0
        %4261 = vmatpush1.msra.mxu0 0.0
        %4262 = vmatprep.subr.mxu0 0.0
        %4263 = vmatpush1.msra.mxu0 0.0
        %4264 = vmatprep.subr.mxu0 0.0
        %4265 = vmatpush1.msra.mxu0 0.0
        %4266 = vmatprep.subr.mxu0 0.0
        %4267 = vmatpush1.msra.mxu0 0.0
        %4268 = vmatprep.subr.mxu0 0.0
        %4269 = vmatpush1.msra.mxu0 0.0
        %4270 = vmatprep.subr.mxu0 0.0
        %4271 = vmatpush1.msra.mxu0 0.0
        %4272 = vmatprep.subr.mxu0 0.0
        %4273 = vmatpush1.msra.mxu0 0.0
        %4274 = vmatprep.subr.mxu0 0.0
        %4275 = vmatpush1.msra.mxu0 0.0
        %4276 = vmatprep.subr.mxu0 0.0
        %4277 = vmatpush1.msra.mxu0 0.0
        %4278 = vmatprep.subr.mxu0 0.0
        %4279 = vmatpush1.msra.mxu0 0.0
        %4280 = vmatprep.subr.mxu0 0.0
        %4281 = vmatpush1.msra.mxu0 0.0
        %4282 = vmatprep.subr.mxu0 0.0
        %4283 = vmatpush1.msra.mxu0 0.0
        %4284 = vmatprep.subr.mxu0 0.0
        %4285 = vmatpush1.msra.mxu0 0.0
        %4286 = vmatprep.subr.mxu0 0.0
        %4287 = vmatpush1.msra.mxu0 0.0
        %4288 = vmatprep.subr.mxu0 0.0
        %4289 = vmatpush1.msra.mxu0 %v4254
        %4290 = vmatprep.subr.mxu0 0.0
        %4291 = vmatpush2.msra.mxu0 0.0
        %4292 = vmatprep.subr.mxu0 0.0
        %4293 = vmatpush2.msra.mxu0 0.0
        %4294 = vmatprep.subr.mxu0 0.0
        %4295 = vmatpush2.msra.mxu0 0.0
        %4296 = vmatprep.subr.mxu0 0.0
        %4297 = vmatpush2.msra.mxu0 0.0
        %4298 = vmatprep.subr.mxu0 0.0
        %4299 = vmatpush2.msra.mxu0 0.0
        %4300 = vmatprep.subr.mxu0 0.0
        %4301 = vmatpush2.msra.mxu0 0.0
        %4302 = vmatprep.subr.mxu0 0.0
        %4303 = vmatpush2.msra.mxu0 0.0
        %4304 = vmatprep.subr.mxu0 0.0
        %4305 = vmatpush2.msra.mxu0 0.0
        %4306 = vmatprep.subr.mxu0 0.0
        %4307 = vmatpush2.msra.mxu0 0.0
        %4308 = vmatprep.subr.mxu0 0.0
        %4309 = vmatpush2.msra.mxu0 0.0
        %4310 = vmatprep.subr.mxu0 0.0
        %4311 = vmatpush2.msra.mxu0 0.0
        %4312 = vmatprep.subr.mxu0 0.0
        %4313 = vmatpush2.msra.mxu0 0.0
        %4314 = vmatprep.subr.mxu0 0.0
        %4315 = vmatpush2.msra.mxu0 0.0
        %4316 = vmatprep.subr.mxu0 0.0
        %4317 = vmatpush2.msra.mxu0 0.0
        %4318 = vmatprep.subr.mxu0 0.0
        %4319 = vmatpush2.msra.mxu0 0.0
        %4320 = vmatprep.subr.mxu0 0.0
        %4321 = vmatpush2.msra.mxu0 0.0
        %4322 = vmatprep.mubr.f32.mxu0 0.0
        %4323 = vmatmul.mubr.f32.gmra.mxu0 %v4256
        %v4324 = vpop.f32.mrf.mxu0
        %v4325 = vadd.f32 0.0, %v4324
        %v4326 = vpop.f32.mrf.mxu0
        %4327 = vdwg.mxu0
        %v4328 = vadd.f32 %v3839, %v4325
        %s4329 = scalar_lea.vmem %s4, 224
        %v4330 = vld [vmem:[%s4329] sm:$0xff]
        %v4331 = vld [vmem:[%s4329 + $0x8] sm:$0xff]
        %v4332 = vld [vmem:[%s4329 + $0x10] sm:$0xff]
        %v4333 = vld [vmem:[%s4329 + $0x18] sm:$0xff]
        %s4334 = scalar_lea.vmem %s7, 7
        %v4335 = vld [vmem:[%s4334] sm:$0x1]
        %v4337 = vlaneseq
        %v4338 = vshrl.u32 %v4337, 7
        %v4339 = vsub.s32 0, %v4338
        %v4340 = vrot.slane %v4335, %v4339
        %4342 = vmatprep.subr.mxu0 0.0
        %4343 = vmatpush1.msra.mxu0 0.0
        %4344 = vmatprep.subr.mxu0 0.0
        %4345 = vmatpush1.msra.mxu0 0.0
        %4346 = vmatprep.subr.mxu0 0.0
        %4347 = vmatpush1.msra.mxu0 0.0
        %4348 = vmatprep.subr.mxu0 0.0
        %4349 = vmatpush1.msra.mxu0 0.0
        %4350 = vmatprep.subr.mxu0 0.0
        %4351 = vmatpush1.msra.mxu0 0.0
        %4352 = vmatprep.subr.mxu0 0.0
        %4353 = vmatpush1.msra.mxu0 0.0
        %4354 = vmatprep.subr.mxu0 0.0
        %4355 = vmatpush1.msra.mxu0 0.0
        %4356 = vmatprep.subr.mxu0 0.0
        %4357 = vmatpush1.msra.mxu0 0.0
        %4358 = vmatprep.subr.mxu0 0.0
        %4359 = vmatpush1.msra.mxu0 0.0
        %4360 = vmatprep.subr.mxu0 0.0
        %4361 = vmatpush1.msra.mxu0 0.0
        %4362 = vmatprep.subr.mxu0 0.0
        %4363 = vmatpush1.msra.mxu0 0.0
        %4364 = vmatprep.subr.mxu0 0.0
        %4365 = vmatpush1.msra.mxu0 0.0
        %4366 = vmatprep.subr.mxu0 0.0
        %4367 = vmatpush1.msra.mxu0 %v4333
        %4368 = vmatprep.subr.mxu0 0.0
        %4369 = vmatpush1.msra.mxu0 %v4332
        %4370 = vmatprep.subr.mxu0 0.0
        %4371 = vmatpush1.msra.mxu0 %v4331
        %4372 = vmatprep.subr.mxu0 0.0
        %4373 = vmatpush1.msra.mxu0 %v4330
        %4374 = vmatprep.subr.mxu0 0.0
        %4375 = vmatpush2.msra.mxu0 0.0
        %4376 = vmatprep.subr.mxu0 0.0
        %4377 = vmatpush2.msra.mxu0 0.0
        %4378 = vmatprep.subr.mxu0 0.0
        %4379 = vmatpush2.msra.mxu0 0.0
        %4380 = vmatprep.subr.mxu0 0.0
        %4381 = vmatpush2.msra.mxu0 0.0
        %4382 = vmatprep.subr.mxu0 0.0
        %4383 = vmatpush2.msra.mxu0 0.0
        %4384 = vmatprep.subr.mxu0 0.0
        %4385 = vmatpush2.msra.mxu0 0.0
        %4386 = vmatprep.subr.mxu0 0.0
        %4387 = vmatpush2.msra.mxu0 0.0
        %4388 = vmatprep.subr.mxu0 0.0
        %4389 = vmatpush2.msra.mxu0 0.0
        %4390 = vmatprep.subr.mxu0 0.0
        %4391 = vmatpush2.msra.mxu0 0.0
        %4392 = vmatprep.subr.mxu0 0.0
        %4393 = vmatpush2.msra.mxu0 0.0
        %4394 = vmatprep.subr.mxu0 0.0
        %4395 = vmatpush2.msra.mxu0 0.0
        %4396 = vmatprep.subr.mxu0 0.0
        %4397 = vmatpush2.msra.mxu0 0.0
        %4398 = vmatprep.subr.mxu0 0.0
        %4399 = vmatpush2.msra.mxu0 0.0
        %4400 = vmatprep.subr.mxu0 0.0
        %4401 = vmatpush2.msra.mxu0 0.0
        %4402 = vmatprep.subr.mxu0 0.0
        %4403 = vmatpush2.msra.mxu0 0.0
        %4404 = vmatprep.subr.mxu0 0.0
        %4405 = vmatpush2.msra.mxu0 0.0
        %4406 = vmatprep.mubr.f32.mxu0 0.0
        %4407 = vmatmul.mubr.f32.gmra.mxu0 %v2881
        %v4408 = vpop.f32.mrf.mxu0
        %v4409 = vadd.f32 %v4340, %v4408
        %v4410 = vpop.f32.mrf.mxu0
        %4411 = vdwg.mxu0
        %s4412 = scalar_lea.vmem %s5, 224
        %v4413 = vld [vmem:[%s4412] sm:$0xff]
        %v4414 = vld [vmem:[%s4412 + $0x8] sm:$0xff]
        %v4415 = vld [vmem:[%s4412 + $0x10] sm:$0xff]
        %v4416 = vld [vmem:[%s4412 + $0x18] sm:$0xff]
        %s4417 = scalar_lea.vmem %s8, 7
        %v4418 = vld [vmem:[%s4417] sm:$0x1]
        %v4420 = vlaneseq
        %v4421 = vshrl.u32 %v4420, 7
        %v4422 = vsub.s32 0, %v4421
        %v4423 = vrot.slane %v4418, %v4422
        %4425 = vmatprep.subr.mxu0 0.0
        %4426 = vmatpush1.msra.mxu0 0.0
        %4427 = vmatprep.subr.mxu0 0.0
        %4428 = vmatpush1.msra.mxu0 0.0
        %4429 = vmatprep.subr.mxu0 0.0
        %4430 = vmatpush1.msra.mxu0 0.0
        %4431 = vmatprep.subr.mxu0 0.0
        %4432 = vmatpush1.msra.mxu0 0.0
        %4433 = vmatprep.subr.mxu0 0.0
        %4434 = vmatpush1.msra.mxu0 0.0
        %4435 = vmatprep.subr.mxu0 0.0
        %4436 = vmatpush1.msra.mxu0 0.0
        %4437 = vmatprep.subr.mxu0 0.0
        %4438 = vmatpush1.msra.mxu0 0.0
        %4439 = vmatprep.subr.mxu0 0.0
        %4440 = vmatpush1.msra.mxu0 0.0
        %4441 = vmatprep.subr.mxu0 0.0
        %4442 = vmatpush1.msra.mxu0 0.0
        %4443 = vmatprep.subr.mxu0 0.0
        %4444 = vmatpush1.msra.mxu0 0.0
        %4445 = vmatprep.subr.mxu0 0.0
        %4446 = vmatpush1.msra.mxu0 0.0
        %4447 = vmatprep.subr.mxu0 0.0
        %4448 = vmatpush1.msra.mxu0 0.0
        %4449 = vmatprep.subr.mxu0 0.0
        %4450 = vmatpush1.msra.mxu0 %v4416
        %4451 = vmatprep.subr.mxu0 0.0
        %4452 = vmatpush1.msra.mxu0 %v4415
        %4453 = vmatprep.subr.mxu0 0.0
        %4454 = vmatpush1.msra.mxu0 %v4414
        %4455 = vmatprep.subr.mxu0 0.0
        %4456 = vmatpush1.msra.mxu0 %v4413
        %4457 = vmatprep.subr.mxu0 0.0
        %4458 = vmatpush2.msra.mxu0 0.0
        %4459 = vmatprep.subr.mxu0 0.0
        %4460 = vmatpush2.msra.mxu0 0.0
        %4461 = vmatprep.subr.mxu0 0.0
        %4462 = vmatpush2.msra.mxu0 0.0
        %4463 = vmatprep.subr.mxu0 0.0
        %4464 = vmatpush2.msra.mxu0 0.0
        %4465 = vmatprep.subr.mxu0 0.0
        %4466 = vmatpush2.msra.mxu0 0.0
        %4467 = vmatprep.subr.mxu0 0.0
        %4468 = vmatpush2.msra.mxu0 0.0
        %4469 = vmatprep.subr.mxu0 0.0
        %4470 = vmatpush2.msra.mxu0 0.0
        %4471 = vmatprep.subr.mxu0 0.0
        %4472 = vmatpush2.msra.mxu0 0.0
        %4473 = vmatprep.subr.mxu0 0.0
        %4474 = vmatpush2.msra.mxu0 0.0
        %4475 = vmatprep.subr.mxu0 0.0
        %4476 = vmatpush2.msra.mxu0 0.0
        %4477 = vmatprep.subr.mxu0 0.0
        %4478 = vmatpush2.msra.mxu0 0.0
        %4479 = vmatprep.subr.mxu0 0.0
        %4480 = vmatpush2.msra.mxu0 0.0
        %4481 = vmatprep.subr.mxu0 0.0
        %4482 = vmatpush2.msra.mxu0 0.0
        %4483 = vmatprep.subr.mxu0 0.0
        %4484 = vmatpush2.msra.mxu0 0.0
        %4485 = vmatprep.subr.mxu0 0.0
        %4486 = vmatpush2.msra.mxu0 0.0
        %4487 = vmatprep.subr.mxu0 0.0
        %4488 = vmatpush2.msra.mxu0 0.0
        %4489 = vmatprep.mubr.f32.mxu0 0.0
        %4490 = vmatmul.mubr.f32.gmra.mxu0 %v2881
        %v4491 = vpop.f32.mrf.mxu0
        %v4492 = vadd.f32 %v4423, %v4491
        %v4493 = vpop.f32.mrf.mxu0
        %4494 = vdwg.mxu0
        %s4495 = scalar_lea.vmem %s6, 224
        %v4496 = vld [vmem:[%s4495] sm:$0xff]
        %v4497 = vld [vmem:[%s4495 + $0x8] sm:$0xff]
        %v4498 = vld [vmem:[%s4495 + $0x10] sm:$0xff]
        %v4499 = vld [vmem:[%s4495 + $0x18] sm:$0xff]
        %s4500 = scalar_lea.vmem %s9, 7
        %v4501 = vld [vmem:[%s4500] sm:$0x1]
        %v4503 = vlaneseq
        %v4504 = vshrl.u32 %v4503, 7
        %v4505 = vsub.s32 0, %v4504
        %v4506 = vrot.slane %v4501, %v4505
        %4508 = vmatprep.subr.mxu0 0.0
        %4509 = vmatpush1.msra.mxu0 0.0
        %4510 = vmatprep.subr.mxu0 0.0
        %4511 = vmatpush1.msra.mxu0 0.0
        %4512 = vmatprep.subr.mxu0 0.0
        %4513 = vmatpush1.msra.mxu0 0.0
        %4514 = vmatprep.subr.mxu0 0.0
        %4515 = vmatpush1.msra.mxu0 0.0
        %4516 = vmatprep.subr.mxu0 0.0
        %4517 = vmatpush1.msra.mxu0 0.0
        %4518 = vmatprep.subr.mxu0 0.0
        %4519 = vmatpush1.msra.mxu0 0.0
        %4520 = vmatprep.subr.mxu0 0.0
        %4521 = vmatpush1.msra.mxu0 0.0
        %4522 = vmatprep.subr.mxu0 0.0
        %4523 = vmatpush1.msra.mxu0 0.0
        %4524 = vmatprep.subr.mxu0 0.0
        %4525 = vmatpush1.msra.mxu0 0.0
        %4526 = vmatprep.subr.mxu0 0.0
        %4527 = vmatpush1.msra.mxu0 0.0
        %4528 = vmatprep.subr.mxu0 0.0
        %4529 = vmatpush1.msra.mxu0 0.0
        %4530 = vmatprep.subr.mxu0 0.0
        %4531 = vmatpush1.msra.mxu0 0.0
        %4532 = vmatprep.subr.mxu0 0.0
        %4533 = vmatpush1.msra.mxu0 %v4499
        %4534 = vmatprep.subr.mxu0 0.0
        %4535 = vmatpush1.msra.mxu0 %v4498
        %4536 = vmatprep.subr.mxu0 0.0
        %4537 = vmatpush1.msra.mxu0 %v4497
        %4538 = vmatprep.subr.mxu0 0.0
        %4539 = vmatpush1.msra.mxu0 %v4496
        %4540 = vmatprep.subr.mxu0 0.0
        %4541 = vmatpush2.msra.mxu0 0.0
        %4542 = vmatprep.subr.mxu0 0.0
        %4543 = vmatpush2.msra.mxu0 0.0
        %4544 = vmatprep.subr.mxu0 0.0
        %4545 = vmatpush2.msra.mxu0 0.0
        %4546 = vmatprep.subr.mxu0 0.0
        %4547 = vmatpush2.msra.mxu0 0.0
        %4548 = vmatprep.subr.mxu0 0.0
        %4549 = vmatpush2.msra.mxu0 0.0
        %4550 = vmatprep.subr.mxu0 0.0
        %4551 = vmatpush2.msra.mxu0 0.0
        %4552 = vmatprep.subr.mxu0 0.0
        %4553 = vmatpush2.msra.mxu0 0.0
        %4554 = vmatprep.subr.mxu0 0.0
        %4555 = vmatpush2.msra.mxu0 0.0
        %4556 = vmatprep.subr.mxu0 0.0
        %4557 = vmatpush2.msra.mxu0 0.0
        %4558 = vmatprep.subr.mxu0 0.0
        %4559 = vmatpush2.msra.mxu0 0.0
        %4560 = vmatprep.subr.mxu0 0.0
        %4561 = vmatpush2.msra.mxu0 0.0
        %4562 = vmatprep.subr.mxu0 0.0
        %4563 = vmatpush2.msra.mxu0 0.0
        %4564 = vmatprep.subr.mxu0 0.0
        %4565 = vmatpush2.msra.mxu0 0.0
        %4566 = vmatprep.subr.mxu0 0.0
        %4567 = vmatpush2.msra.mxu0 0.0
        %4568 = vmatprep.subr.mxu0 0.0
        %4569 = vmatpush2.msra.mxu0 0.0
        %4570 = vmatprep.subr.mxu0 0.0
        %4571 = vmatpush2.msra.mxu0 0.0
        %4572 = vmatprep.mubr.f32.mxu0 0.0
        %4573 = vmatmul.mubr.f32.gmra.mxu0 %v2881
        %v4574 = vpop.f32.mrf.mxu0
        %v4575 = vadd.f32 %v4506, %v4574
        %v4576 = vpop.f32.mrf.mxu0
        %4577 = vdwg.mxu0
        %v4579 = vsel %vm918, %v4409, 0
        %v4582 = vsel %vm918, %v4492, 0
        %4584 = vmatprep.subr.mxu0 0.0
        %4585 = vmatpush1.xpose.msra.mxu0 0.0
        %4586 = vmatprep.subr.mxu0 0.0
        %4587 = vmatpush1.xpose.msra.mxu0 0.0
        %4588 = vmatprep.subr.mxu0 0.0
        %4589 = vmatpush1.xpose.msra.mxu0 0.0
        %4590 = vmatprep.subr.mxu0 0.0
        %4591 = vmatpush1.xpose.msra.mxu0 0.0
        %4592 = vmatprep.subr.mxu0 0.0
        %4593 = vmatpush1.xpose.msra.mxu0 0.0
        %4594 = vmatprep.subr.mxu0 0.0
        %4595 = vmatpush1.xpose.msra.mxu0 0.0
        %4596 = vmatprep.subr.mxu0 0.0
        %4597 = vmatpush1.xpose.msra.mxu0 0.0
        %4598 = vmatprep.subr.mxu0 0.0
        %4599 = vmatpush1.xpose.msra.mxu0 0.0
        %4600 = vmatprep.subr.mxu0 0.0
        %4601 = vmatpush1.xpose.msra.mxu0 0.0
        %4602 = vmatprep.subr.mxu0 0.0
        %4603 = vmatpush1.xpose.msra.mxu0 0.0
        %4604 = vmatprep.subr.mxu0 0.0
        %4605 = vmatpush1.xpose.msra.mxu0 0.0
        %4606 = vmatprep.subr.mxu0 0.0
        %4607 = vmatpush1.xpose.msra.mxu0 0.0
        %4608 = vmatprep.subr.mxu0 0.0
        %4609 = vmatpush1.xpose.msra.mxu0 0.0
        %4610 = vmatprep.subr.mxu0 0.0
        %4611 = vmatpush1.xpose.msra.mxu0 0.0
        %4612 = vmatprep.subr.mxu0 0.0
        %4613 = vmatpush1.xpose.msra.mxu0 0.0
        %4614 = vmatprep.subr.mxu0 0.0
        %4615 = vmatpush1.xpose.msra.mxu0 %v4582
        %4616 = vmatprep.subr.mxu0 0.0
        %4617 = vmatpush2.xpose.msra.mxu0 0.0
        %4618 = vmatprep.subr.mxu0 0.0
        %4619 = vmatpush2.xpose.msra.mxu0 0.0
        %4620 = vmatprep.subr.mxu0 0.0
        %4621 = vmatpush2.xpose.msra.mxu0 0.0
        %4622 = vmatprep.subr.mxu0 0.0
        %4623 = vmatpush2.xpose.msra.mxu0 0.0
        %4624 = vmatprep.subr.mxu0 0.0
        %4625 = vmatpush2.xpose.msra.mxu0 0.0
        %4626 = vmatprep.subr.mxu0 0.0
        %4627 = vmatpush2.xpose.msra.mxu0 0.0
        %4628 = vmatprep.subr.mxu0 0.0
        %4629 = vmatpush2.xpose.msra.mxu0 0.0
        %4630 = vmatprep.subr.mxu0 0.0
        %4631 = vmatpush2.xpose.msra.mxu0 0.0
        %4632 = vmatprep.subr.mxu0 0.0
        %4633 = vmatpush2.xpose.msra.mxu0 0.0
        %4634 = vmatprep.subr.mxu0 0.0
        %4635 = vmatpush2.xpose.msra.mxu0 0.0
        %4636 = vmatprep.subr.mxu0 0.0
        %4637 = vmatpush2.xpose.msra.mxu0 0.0
        %4638 = vmatprep.subr.mxu0 0.0
        %4639 = vmatpush2.xpose.msra.mxu0 0.0
        %4640 = vmatprep.subr.mxu0 0.0
        %4641 = vmatpush2.xpose.msra.mxu0 0.0
        %4642 = vmatprep.subr.mxu0 0.0
        %4643 = vmatpush2.xpose.msra.mxu0 0.0
        %4644 = vmatprep.subr.mxu0 0.0
        %4645 = vmatpush2.xpose.msra.mxu0 0.0
        %4646 = vmatprep.subr.mxu0 0.0
        %4647 = vmatpush2.xpose.msra.mxu0 0.0
        %4648 = vmatprep.mubr.f32.mxu0 0.0
        %4649 = vmatmul.mubr.f32.gmra.mxu0 %v4579
        %v4650 = vpop.f32.mrf.mxu0
        %v4651 = vadd.f32 0.0, %v4650
        %v4652 = vpop.f32.mrf.mxu0
        %4653 = vdwg.mxu0
        %v4654 = vmul.f32 %v4651, 0.35355338
        %v4655 = vadd.f32 %v4654, %v1000
        %v4656 = vsel %vm918, %v4655, -inf
        %4657 = vmax.xlane.f32.xlu0 %v4656
        %v4658 = vpop.xlane.xlu0 %4657
        %v4659 = vsub.f32 %v4655, %v4658
        %v4660 = vmul.f32 %v4659, 1.442695
        %v4661 = vpow.pop %v4660
        %v4662 = vsel %vm918, %v4661, 0.0
        %4663 = vadd.xlane.f32.xlu0 %v4662
        %v4664 = vpop.xlane.xlu0 %4663
        %v4665 = vrcp.pop %v4664
        %v4666 = vmul.f32 %v4661, %v4665
        %v4668 = vsel %vm918, %v4666, 0
        %4670 = vmatprep.subr.mxu0 0.0
        %4671 = vmatpush1.msra.mxu0 0.0
        %4672 = vmatprep.subr.mxu0 0.0
        %4673 = vmatpush1.msra.mxu0 0.0
        %4674 = vmatprep.subr.mxu0 0.0
        %4675 = vmatpush1.msra.mxu0 0.0
        %4676 = vmatprep.subr.mxu0 0.0
        %4677 = vmatpush1.msra.mxu0 0.0
        %4678 = vmatprep.subr.mxu0 0.0
        %4679 = vmatpush1.msra.mxu0 0.0
        %4680 = vmatprep.subr.mxu0 0.0
        %4681 = vmatpush1.msra.mxu0 0.0
        %4682 = vmatprep.subr.mxu0 0.0
        %4683 = vmatpush1.msra.mxu0 0.0
        %4684 = vmatprep.subr.mxu0 0.0
        %4685 = vmatpush1.msra.mxu0 0.0
        %4686 = vmatprep.subr.mxu0 0.0
        %4687 = vmatpush1.msra.mxu0 0.0
        %4688 = vmatprep.subr.mxu0 0.0
        %4689 = vmatpush1.msra.mxu0 0.0
        %4690 = vmatprep.subr.mxu0 0.0
        %4691 = vmatpush1.msra.mxu0 0.0
        %4692 = vmatprep.subr.mxu0 0.0
        %4693 = vmatpush1.msra.mxu0 0.0
        %4694 = vmatprep.subr.mxu0 0.0
        %4695 = vmatpush1.msra.mxu0 0.0
        %4696 = vmatprep.subr.mxu0 0.0
        %4697 = vmatpush1.msra.mxu0 0.0
        %4698 = vmatprep.subr.mxu0 0.0
        %4699 = vmatpush1.msra.mxu0 0.0
        %4700 = vmatprep.subr.mxu0 0.0
        %4701 = vmatpush1.msra.mxu0 %v4575
        %4702 = vmatprep.subr.mxu0 0.0
        %4703 = vmatpush2.msra.mxu0 0.0
        %4704 = vmatprep.subr.mxu0 0.0
        %4705 = vmatpush2.msra.mxu0 0.0
        %4706 = vmatprep.subr.mxu0 0.0
        %4707 = vmatpush2.msra.mxu0 0.0
        %4708 = vmatprep.subr.mxu0 0.0
        %4709 = vmatpush2.msra.mxu0 0.0
        %4710 = vmatprep.subr.mxu0 0.0
        %4711 = vmatpush2.msra.mxu0 0.0
        %4712 = vmatprep.subr.mxu0 0.0
        %4713 = vmatpush2.msra.mxu0 0.0
        %4714 = vmatprep.subr.mxu0 0.0
        %4715 = vmatpush2.msra.mxu0 0.0
        %4716 = vmatprep.subr.mxu0 0.0
        %4717 = vmatpush2.msra.mxu0 0.0
        %4718 = vmatprep.subr.mxu0 0.0
        %4719 = vmatpush2.msra.mxu0 0.0
        %4720 = vmatprep.subr.mxu0 0.0
        %4721 = vmatpush2.msra.mxu0 0.0
        %4722 = vmatprep.subr.mxu0 0.0
        %4723 = vmatpush2.msra.mxu0 0.0
        %4724 = vmatprep.subr.mxu0 0.0
        %4725 = vmatpush2.msra.mxu0 0.0
        %4726 = vmatprep.subr.mxu0 0.0
        %4727 = vmatpush2.msra.mxu0 0.0
        %4728 = vmatprep.subr.mxu0 0.0
        %4729 = vmatpush2.msra.mxu0 0.0
        %4730 = vmatprep.subr.mxu0 0.0
        %4731 = vmatpush2.msra.mxu0 0.0
        %4732 = vmatprep.subr.mxu0 0.0
        %4733 = vmatpush2.msra.mxu0 0.0
        %4734 = vmatprep.mubr.f32.mxu0 0.0
        %4735 = vmatmul.mubr.f32.gmra.mxu0 %v4668
        %v4736 = vpop.f32.mrf.mxu0
        %v4737 = vadd.f32 0.0, %v4736
        %v4738 = vpop.f32.mrf.mxu0
        %4739 = vdwg.mxu0
        %s4740 = scalar_lea.vmem %s10, 56
        %v4741 = vld [vmem:[%s4740] sm:$0xff]
        %v4743 = vsel %vm918, %v4737, 0
        %4745 = vmatprep.subr.mxu0 0.0
        %4746 = vmatpush1.msra.mxu0 0.0
        %4747 = vmatprep.subr.mxu0 0.0
        %4748 = vmatpush1.msra.mxu0 0.0
        %4749 = vmatprep.subr.mxu0 0.0
        %4750 = vmatpush1.msra.mxu0 0.0
        %4751 = vmatprep.subr.mxu0 0.0
        %4752 = vmatpush1.msra.mxu0 0.0
        %4753 = vmatprep.subr.mxu0 0.0
        %4754 = vmatpush1.msra.mxu0 0.0
        %4755 = vmatprep.subr.mxu0 0.0
        %4756 = vmatpush1.msra.mxu0 0.0
        %4757 = vmatprep.subr.mxu0 0.0
        %4758 = vmatpush1.msra.mxu0 0.0
        %4759 = vmatprep.subr.mxu0 0.0
        %4760 = vmatpush1.msra.mxu0 0.0
        %4761 = vmatprep.subr.mxu0 0.0
        %4762 = vmatpush1.msra.mxu0 0.0
        %4763 = vmatprep.subr.mxu0 0.0
        %4764 = vmatpush1.msra.mxu0 0.0
        %4765 = vmatprep.subr.mxu0 0.0
        %4766 = vmatpush1.msra.mxu0 0.0
        %4767 = vmatprep.subr.mxu0 0.0
        %4768 = vmatpush1.msra.mxu0 0.0
        %4769 = vmatprep.subr.mxu0 0.0
        %4770 = vmatpush1.msra.mxu0 0.0
        %4771 = vmatprep.subr.mxu0 0.0
        %4772 = vmatpush1.msra.mxu0 0.0
        %4773 = vmatprep.subr.mxu0 0.0
        %4774 = vmatpush1.msra.mxu0 0.0
        %4775 = vmatprep.subr.mxu0 0.0
        %4776 = vmatpush1.msra.mxu0 %v4741
        %4777 = vmatprep.subr.mxu0 0.0
        %4778 = vmatpush2.msra.mxu0 0.0
        %4779 = vmatprep.subr.mxu0 0.0
        %4780 = vmatpush2.msra.mxu0 0.0
        %4781 = vmatprep.subr.mxu0 0.0
        %4782 = vmatpush2.msra.mxu0 0.0
        %4783 = vmatprep.subr.mxu0 0.0
        %4784 = vmatpush2.msra.mxu0 0.0
        %4785 = vmatprep.subr.mxu0 0.0
        %4786 = vmatpush2.msra.mxu0 0.0
        %4787 = vmatprep.subr.mxu0 0.0
        %4788 = vmatpush2.msra.mxu0 0.0
        %4789 = vmatprep.subr.mxu0 0.0
        %4790 = vmatpush2.msra.mxu0 0.0
        %4791 = vmatprep.subr.mxu0 0.0
        %4792 = vmatpush2.msra.mxu0 0.0
        %4793 = vmatprep.subr.mxu0 0.0
        %4794 = vmatpush2.msra.mxu0 0.0
        %4795 = vmatprep.subr.mxu0 0.0
        %4796 = vmatpush2.msra.mxu0 0.0
        %4797 = vmatprep.subr.mxu0 0.0
        %4798 = vmatpush2.msra.mxu0 0.0
        %4799 = vmatprep.subr.mxu0 0.0
        %4800 = vmatpush2.msra.mxu0 0.0
        %4801 = vmatprep.subr.mxu0 0.0
        %4802 = vmatpush2.msra.mxu0 0.0
        %4803 = vmatprep.subr.mxu0 0.0
        %4804 = vmatpush2.msra.mxu0 0.0
        %4805 = vmatprep.subr.mxu0 0.0
        %4806 = vmatpush2.msra.mxu0 0.0
        %4807 = vmatprep.subr.mxu0 0.0
        %4808 = vmatpush2.msra.mxu0 0.0
        %4809 = vmatprep.mubr.f32.mxu0 0.0
        %4810 = vmatmul.mubr.f32.gmra.mxu0 %v4743
        %v4811 = vpop.f32.mrf.mxu0
        %v4812 = vadd.f32 0.0, %v4811
        %v4813 = vpop.f32.mrf.mxu0
        %4814 = vdwg.mxu0
        %v4815 = vadd.f32 %v4328, %v4812
        %s4816 = scalar_lea.vmem %s11, 1
        %v4817 = vld [vmem:[%s4816] sm:$0x1]
        %v4819 = vlaneseq
        %v4820 = vshrl.u32 %v4819, 7
        %v4821 = vsub.s32 0, %v4820
        %v4822 = vrot.slane %v4817, %v4821
        %v4824 = vadd.f32 %v4815, %v4822
        %v4825 = vadd.f32 %v4824, %v2866
        %s4826 = scalar_lea.vmem %s12, 1
        %v4827 = vld [vmem:[%s4826] sm:$0x1]
        %s4828 = scalar_lea.vmem %s13, 1
        %v4829 = vld [vmem:[%s4828] sm:$0x1]
        %v4830 = vsel %vm642, %v4825, 0.0
        %4831 = vadd.xlane.f32.xlu0 %v4830
        %v4832 = vpop.xlane.xlu0 %4831
        %v4833 = vmul.f32 %v4832, %v646
        %v4834 = vsub.f32 %v4825, %v4833
        %v4835 = vmul.f32 %v4834, %v4834
        %v4836 = vsel %vm642, %v4835, 0.0
        %4837 = vadd.xlane.f32.xlu0 %v4836
        %v4838 = vpop.xlane.xlu0 %4837
        %v4839 = vmul.f32 %v4838, %v646
        %v4840 = vadd.f32 %v4839, 1e-12
        %v4841 = vrsqrt.pop %v4840
        %v4842 = vmul.f32 %v4834, %v4841
        %v4844 = vlaneseq
        %v4845 = vshrl.u32 %v4844, 7
        %v4846 = vsub.s32 0, %v4845
        %v4847 = vrot.slane %v4827, %v4846
        %v4849 = vmul.f32 %v4842, %v4847
        %v4851 = vlaneseq
        %v4852 = vshrl.u32 %v4851, 7
        %v4853 = vsub.s32 0, %v4852
        %v4854 = vrot.slane %v4829, %v4853
        %v4856 = vadd.f32 %v4849, %v4854
        %s4857 = scalar_lea.vmem %s14, 32
        %v4858 = vld [vmem:[%s4857] sm:$0xff]
        %v4859 = vld [vmem:[%s4857 + $0x8] sm:$0xff]
        %v4860 = vld [vmem:[%s4857 + $0x10] sm:$0xff]
        %v4861 = vld [vmem:[%s4857 + $0x18] sm:$0xff]
        %s4862 = scalar_lea.vmem %s15, 1
        %v4863 = vld [vmem:[%s4862] sm:$0x1]
        %v4865 = vlaneseq
        %v4866 = vshrl.u32 %v4865, 7
        %v4867 = vsub.s32 0, %v4866
        %v4868 = vrot.slane %v4863, %v4867
        %v4871 = vsel %vm642, %v4856, 0
        %4873 = vmatprep.subr.mxu0 0.0
        %4874 = vmatpush1.msra.mxu0 0.0
        %4875 = vmatprep.subr.mxu0 0.0
        %4876 = vmatpush1.msra.mxu0 0.0
        %4877 = vmatprep.subr.mxu0 0.0
        %4878 = vmatpush1.msra.mxu0 0.0
        %4879 = vmatprep.subr.mxu0 0.0
        %4880 = vmatpush1.msra.mxu0 0.0
        %4881 = vmatprep.subr.mxu0 0.0
        %4882 = vmatpush1.msra.mxu0 0.0
        %4883 = vmatprep.subr.mxu0 0.0
        %4884 = vmatpush1.msra.mxu0 0.0
        %4885 = vmatprep.subr.mxu0 0.0
        %4886 = vmatpush1.msra.mxu0 0.0
        %4887 = vmatprep.subr.mxu0 0.0
        %4888 = vmatpush1.msra.mxu0 0.0
        %4889 = vmatprep.subr.mxu0 0.0
        %4890 = vmatpush1.msra.mxu0 0.0
        %4891 = vmatprep.subr.mxu0 0.0
        %4892 = vmatpush1.msra.mxu0 0.0
        %4893 = vmatprep.subr.mxu0 0.0
        %4894 = vmatpush1.msra.mxu0 0.0
        %4895 = vmatprep.subr.mxu0 0.0
        %4896 = vmatpush1.msra.mxu0 0.0
        %4897 = vmatprep.subr.mxu0 0.0
        %4898 = vmatpush1.msra.mxu0 %v4861
        %4899 = vmatprep.subr.mxu0 0.0
        %4900 = vmatpush1.msra.mxu0 %v4860
        %4901 = vmatprep.subr.mxu0 0.0
        %4902 = vmatpush1.msra.mxu0 %v4859
        %4903 = vmatprep.subr.mxu0 0.0
        %4904 = vmatpush1.msra.mxu0 %v4858
        %4905 = vmatprep.subr.mxu0 0.0
        %4906 = vmatpush2.msra.mxu0 0.0
        %4907 = vmatprep.subr.mxu0 0.0
        %4908 = vmatpush2.msra.mxu0 0.0
        %4909 = vmatprep.subr.mxu0 0.0
        %4910 = vmatpush2.msra.mxu0 0.0
        %4911 = vmatprep.subr.mxu0 0.0
        %4912 = vmatpush2.msra.mxu0 0.0
        %4913 = vmatprep.subr.mxu0 0.0
        %4914 = vmatpush2.msra.mxu0 0.0
        %4915 = vmatprep.subr.mxu0 0.0
        %4916 = vmatpush2.msra.mxu0 0.0
        %4917 = vmatprep.subr.mxu0 0.0
        %4918 = vmatpush2.msra.mxu0 0.0
        %4919 = vmatprep.subr.mxu0 0.0
        %4920 = vmatpush2.msra.mxu0 0.0
        %4921 = vmatprep.subr.mxu0 0.0
        %4922 = vmatpush2.msra.mxu0 0.0
        %4923 = vmatprep.subr.mxu0 0.0
        %4924 = vmatpush2.msra.mxu0 0.0
        %4925 = vmatprep.subr.mxu0 0.0
        %4926 = vmatpush2.msra.mxu0 0.0
        %4927 = vmatprep.subr.mxu0 0.0
        %4928 = vmatpush2.msra.mxu0 0.0
        %4929 = vmatprep.subr.mxu0 0.0
        %4930 = vmatpush2.msra.mxu0 0.0
        %4931 = vmatprep.subr.mxu0 0.0
        %4932 = vmatpush2.msra.mxu0 0.0
        %4933 = vmatprep.subr.mxu0 0.0
        %4934 = vmatpush2.msra.mxu0 0.0
        %4935 = vmatprep.subr.mxu0 0.0
        %4936 = vmatpush2.msra.mxu0 0.0
        %4937 = vmatprep.mubr.f32.mxu0 0.0
        %4938 = vmatmul.mubr.f32.gmra.mxu0 %v4871
        %v4939 = vpop.f32.mrf.mxu0
        %v4940 = vadd.f32 %v4868, %v4939
        %v4941 = vpop.f32.mrf.mxu0
        %4942 = vdwg.mxu0
        %v4943 = vmul.f32 %v4940, 0.5
        %v4944 = vmul.f32 %v4940, 0.70710677
        %v4945 = verf.f32.pop %v4944
        %v4946 = vadd.f32 %v4945, 1.0
        %v4947 = vmul.f32 %v4943, %v4946
        %s4948 = scalar_lea.vmem %s16, 64
        %v4949 = vld [vmem:[%s4948] sm:$0xff]
        %v4950 = vld [vmem:[%s4948 + $0x8] sm:$0xff]
        %v4951 = vld [vmem:[%s4948 + $0x10] sm:$0xff]
        %v4952 = vld [vmem:[%s4948 + $0x18] sm:$0xff]
        %v4953 = vld [vmem:[%s4948 + $0x20] sm:$0xff]
        %v4954 = vld [vmem:[%s4948 + $0x28] sm:$0xff]
        %v4955 = vld [vmem:[%s4948 + $0x30] sm:$0xff]
        %v4956 = vld [vmem:[%s4948 + $0x38] sm:$0xff]
        %s4957 = scalar_lea.vmem %s17, 1
        %v4958 = vld [vmem:[%s4957] sm:$0x1]
        %v4960 = vlaneseq
        %v4961 = vshrl.u32 %v4960, 7
        %v4962 = vsub.s32 0, %v4961
        %v4963 = vrot.slane %v4958, %v4962
        %v4966 = vsel %vm2763, %v4947, 0
        %4968 = vmatprep.subr.mxu0 0.0
        %4969 = vmatpush1.msra.mxu0 0.0
        %4970 = vmatprep.subr.mxu0 0.0
        %4971 = vmatpush1.msra.mxu0 0.0
        %4972 = vmatprep.subr.mxu0 0.0
        %4973 = vmatpush1.msra.mxu0 0.0
        %4974 = vmatprep.subr.mxu0 0.0
        %4975 = vmatpush1.msra.mxu0 0.0
        %4976 = vmatprep.subr.mxu0 0.0
        %4977 = vmatpush1.msra.mxu0 0.0
        %4978 = vmatprep.subr.mxu0 0.0
        %4979 = vmatpush1.msra.mxu0 0.0
        %4980 = vmatprep.subr.mxu0 0.0
        %4981 = vmatpush1.msra.mxu0 0.0
        %4982 = vmatprep.subr.mxu0 0.0
        %4983 = vmatpush1.msra.mxu0 0.0
        %4984 = vmatprep.subr.mxu0 0.0
        %4985 = vmatpush1.msra.mxu0 %v4956
        %4986 = vmatprep.subr.mxu0 0.0
        %4987 = vmatpush1.msra.mxu0 %v4955
        %4988 = vmatprep.subr.mxu0 0.0
        %4989 = vmatpush1.msra.mxu0 %v4954
        %4990 = vmatprep.subr.mxu0 0.0
        %4991 = vmatpush1.msra.mxu0 %v4953
        %4992 = vmatprep.subr.mxu0 0.0
        %4993 = vmatpush1.msra.mxu0 %v4952
        %4994 = vmatprep.subr.mxu0 0.0
        %4995 = vmatpush1.msra.mxu0 %v4951
        %4996 = vmatprep.subr.mxu0 0.0
        %4997 = vmatpush1.msra.mxu0 %v4950
        %4998 = vmatprep.subr.mxu0 0.0
        %4999 = vmatpush1.msra.mxu0 %v4949
        %5000 = vmatprep.subr.mxu0 0.0
        %5001 = vmatpush2.msra.mxu0 0.0
        %5002 = vmatprep.subr.mxu0 0.0
        %5003 = vmatpush2.msra.mxu0 0.0
        %5004 = vmatprep.subr.mxu0 0.0
        %5005 = vmatpush2.msra.mxu0 0.0
        %5006 = vmatprep.subr.mxu0 0.0
        %5007 = vmatpush2.msra.mxu0 0.0
        %5008 = vmatprep.subr.mxu0 0.0
        %5009 = vmatpush2.msra.mxu0 0.0
        %5010 = vmatprep.subr.mxu0 0.0
        %5011 = vmatpush2.msra.mxu0 0.0
        %5012 = vmatprep.subr.mxu0 0.0
        %5013 = vmatpush2.msra.mxu0 0.0
        %5014 = vmatprep.subr.mxu0 0.0
        %5015 = vmatpush2.msra.mxu0 0.0
        %5016 = vmatprep.subr.mxu0 0.0
        %5017 = vmatpush2.msra.mxu0 0.0
        %5018 = vmatprep.subr.mxu0 0.0
        %5019 = vmatpush2.msra.mxu0 0.0
        %5020 = vmatprep.subr.mxu0 0.0
        %5021 = vmatpush2.msra.mxu0 0.0
        %5022 = vmatprep.subr.mxu0 0.0
        %5023 = vmatpush2.msra.mxu0 0.0
        %5024 = vmatprep.subr.mxu0 0.0
        %5025 = vmatpush2.msra.mxu0 0.0
        %5026 = vmatprep.subr.mxu0 0.0
        %5027 = vmatpush2.msra.mxu0 0.0
        %5028 = vmatprep.subr.mxu0 0.0
        %5029 = vmatpush2.msra.mxu0 0.0
        %5030 = vmatprep.subr.mxu0 0.0
        %5031 = vmatpush2.msra.mxu0 0.0
        %5032 = vmatprep.mubr.f32.mxu0 0.0
        %5033 = vmatmul.mubr.f32.gmra.mxu0 %v4966
        %v5034 = vpop.f32.mrf.mxu0
        %v5035 = vadd.f32 %v4963, %v5034
        %v5036 = vpop.f32.mrf.mxu0
        %5037 = vdwg.mxu0
        %v5038 = vadd.f32 %v5035, %v4856
        %s5039 = scalar_lea.vmem %s18, 1
        %v5040 = vld [vmem:[%s5039] sm:$0x1]
        %s5041 = scalar_lea.vmem %s19, 1
        %v5042 = vld [vmem:[%s5041] sm:$0x1]
        %v5043 = vsel %vm642, %v5038, 0.0
        %5044 = vadd.xlane.f32.xlu0 %v5043
        %v5045 = vpop.xlane.xlu0 %5044
        %v5046 = vmul.f32 %v5045, %v646
        %v5047 = vsub.f32 %v5038, %v5046
        %v5048 = vmul.f32 %v5047, %v5047
        %v5049 = vsel %vm642, %v5048, 0.0
        %5050 = vadd.xlane.f32.xlu0 %v5049
        %v5051 = vpop.xlane.xlu0 %5050
        %v5052 = vmul.f32 %v5051, %v646
        %v5053 = vadd.f32 %v5052, 1e-12
        %v5054 = vrsqrt.pop %v5053
        %v5055 = vmul.f32 %v5047, %v5054
        %v5057 = vlaneseq
        %v5058 = vshrl.u32 %v5057, 7
        %v5059 = vsub.s32 0, %v5058
        %v5060 = vrot.slane %v5040, %v5059
        %v5062 = vmul.f32 %v5055, %v5060
        %v5064 = vlaneseq
        %v5065 = vshrl.u32 %v5064, 7
        %v5066 = vsub.s32 0, %v5065
        %v5067 = vrot.slane %v5042, %v5066
        %v5069 = vadd.f32 %v5062, %v5067
        %5070 = vst.msk [vmem:[%s631] sm:$0xff] %vm642, %v5069
        %s5071 = sand.u32 %s472, 1
        %s5072 = scalar_lea.sflag [#allocation3], %s5071
        %s5073 = sand.u32 %s472, 1
        %s5074 = smul.addr %s5073, 8
        %s5075 = scalar_lea.vmem [#allocation2], %s5074
        // Predicated region
        $region101: #{bert_forward.1} parent=99 // pred_check
          %p5076 = pneg %p482
        $region102: #{bert_forward.1} parent=99 // pred_check_branch
          %5078 = sbr.rel (%p5076) target = $region104
        $region103: #{bert_forward.1} parent=99 // pred_region
          %s5080 = ssub.s32 128, 128
          %5081 = vsyncadd %s5072, %s5080
          %s5082 = smul.addr %s34, 128
          %s5083 = scalar_lea.hbm %s20, %s5082
          %s5085 = sshll.u32 %s5075, 4
          %s5086 = int_to_ptr.vmem [resolvable:$true] %s5085
          %5088 = dma.vmem_to_hbm [thread:$0]  %s5086, 128, %s5083, %s5072
        $region104: #{bert_forward.1} parent=99 // pred_fallthru
          _
      $region100: #{bert_forward.1} parent=5 // pred_fallthru
        _
      %p5089 = scmp.le.s32.totalorder 2, %s29
      // Predicated region
      $region105: #{bert_forward.1} parent=5 // pred_check
        %p5090 = pneg %p5089
      $region106: #{bert_forward.1} parent=5 // pred_check_branch
        %5092 = sbr.rel (%p5090) target = $region108
      $region107: #{bert_forward.1} parent=5 // pred_region
        %s5093 = ssub.s32 %s29, 2
        // Predicated region
        $region109: #{bert_forward.1} parent=107 // pred_check
          %p5094 = pneg %p488
        $region110: #{bert_forward.1} parent=107 // pred_check_branch
          %5096 = sbr.rel (%p5094) target = $region112
        $region111: #{bert_forward.1} parent=107 // pred_region
          %s5097 = sand.u32 %s473, 1
          %s5098 = scalar_lea.sflag [#allocation3], %s5097
          %s5099 = sand.u32 %s473, 1
          %s5100 = smul.addr %s5099, 8
          %s5101 = scalar_lea.vmem [#allocation2], %s5100
          %5102 = dma.done %s5098, 128
        $region112: #{bert_forward.1} parent=107 // pred_fallthru
          _
      $region108: #{bert_forward.1} parent=5 // pred_fallthru
        _
    $region6: #{bert_forward.1} parent=1 // loop_footer
      %s33 = sadd.s32 1, %s29
    $region7: #{bert_forward.1} parent=1 // loop_footer_branch
      %28 = sbr.rel target = $region3
    $region8: #{bert_forward.1} parent=1 // loop_exit
      _
    %5103 = vsyncpa [#allocation3], 1
    %s5104 = scalar_lea.sflag [#allocation3], 1
    %5105 = vsyncpa %s5104, 1

</llo_original>
